<compile_context>
chip_gen: v7x
topology: tpu7x:2x2x1
jax: 0.10.0
libtpu: 0.0.40
codegen_flags: <defaults>
</compile_context>

<pallas_src>
import functools

import jax
import jax.numpy as jnp
import numpy as np
from jax.experimental import pallas as pl
from jax.experimental.pallas import tpu as pltpu


# ----------------------------------------------------------------------------
# Pallas kernels
# ----------------------------------------------------------------------------
def _conv3x3_compute(x_ref, w_ref, b_ref, H, W, slope, apply_act):
    """9-tap 3x3 conv on one padded image: bf16 taps x bf16 weights, f32 accum."""
    Cin = x_ref.shape[-1]
    Cout = w_ref.shape[-1]
    xt = x_ref[0]                                   # (H+2, W+2, Cin) bf16
    acc = jnp.zeros((H * W, Cout), jnp.float32)
    for dy in range(3):
        for dx in range(3):
            tap = xt[dy:dy + H, dx:dx + W, :].reshape(H * W, Cin)
            acc = acc + jnp.dot(tap, w_ref[dy, dx, :, :],
                                preferred_element_type=jnp.float32)
    y = acc + b_ref[...]                            # BN already folded into w/b
    if apply_act:
        y = jnp.where(y >= 0.0, y, slope * y)       # LeakyReLU(0.1)
    return y


def _conv3x3_kernel(x_ref, w_ref, b_ref, o_ref, *, H, W, slope, apply_act):
    y = _conv3x3_compute(x_ref, w_ref, b_ref, H, W, slope, apply_act)
    o_ref[0] = y.astype(o_ref.dtype)


def _conv3x3_res_kernel(x_ref, w_ref, b_ref, r_ref, o_ref, *, H, W, slope,
                        apply_act):
    # ResBlock: residual add AFTER cnn2's activation.
    y = _conv3x3_compute(x_ref, w_ref, b_ref, H, W, slope, apply_act)
    y = y + r_ref[0].astype(jnp.float32)
    o_ref[0] = y.astype(o_ref.dtype)


def _matmul_bias_kernel(x_ref, w_ref, b_ref, o_ref, acc_ref, *, slope, apply_act):
    # grid = (M tiles [parallel], K tiles [arbitrary]); f32 VMEM accumulator.
    k = pl.program_id(1)

    @pl.when(k == 0)
    def _():
        acc_ref[...] = jnp.zeros_like(acc_ref)

    acc_ref[...] += jnp.dot(x_ref[...], w_ref[...],
                            preferred_element_type=jnp.float32)

    @pl.when(k == pl.num_programs(1) - 1)
    def _():
        y = acc_ref[...] + b_ref[...]
        if apply_act:
            y = jnp.where(y >= 0.0, y, slope * y)
        o_ref[...] = y.astype(o_ref.dtype)


# ----------------------------------------------------------------------------
# Pallas wrappers
# ----------------------------------------------------------------------------
_VMEM_LIMIT = 32 * 1024 * 1024  # safe on v5e/v6e/v7x; above v5e's 16 MiB default


def _round_up(x, m):
    return ((x + m - 1) // m) * m


def fused_matmul(x2d, w, b, *, apply_act, slope=0.1, out_dtype=jnp.float32,
                 use_pallas=True):
    """y = [leaky_relu]((bf16(x2d) @ bf16(w)) + b), f32 accumulation."""
    M, K = x2d.shape
    Cout = w.shape[1]
    xb = x2d.astype(jnp.bfloat16)
    wb = w.astype(jnp.bfloat16)
    b2 = b.reshape(1, Cout).astype(jnp.float32)

    if not use_pallas:  # pure-JAX reference with identical dtype policy
        y = jnp.dot(xb, wb, preferred_element_type=jnp.float32) + b2
        if apply_act:
            y = jnp.where(y >= 0.0, y, slope * y)
        return y.astype(out_dtype)

    # Row tiling: multiple of 8, cap 512; try to give >=2 parallel steps (2 TCs).
    TM = min(512, _round_up(M, 8))
    if M >= 16 and _round_up(M, 8) // TM < 2:
        TM = max(8, _round_up(_round_up(M, 8) // 2, 8))
    Mp = _round_up(M, TM)
    if Mp != M:
        xb = jnp.pad(xb, ((0, Mp - M), (0, 0)))

    # K tiling: single full-K step when small, else 512-wide tiles (zero-padded).
    if K <= 1024:
        TK, Kp = K, K
    else:
        TK = 512
        Kp = _round_up(K, TK)
        xb = jnp.pad(xb, ((0, 0), (0, Kp - K)))
        wb = jnp.pad(wb, ((0, Kp - K), (0, 0)))

    grid = (Mp // TM, Kp // TK)
    kernel = functools.partial(_matmul_bias_kernel, slope=slope,
                               apply_act=apply_act)
    y = pl.pallas_call(
        kernel,
        out_shape=jax.ShapeDtypeStruct((Mp, Cout), out_dtype),
        grid=grid,
        in_specs=[
            pl.BlockSpec((TM, TK), lambda i, k: (i, k)),
            pl.BlockSpec((TK, Cout), lambda i, k: (k, 0)),
            pl.BlockSpec((1, Cout), lambda i, k: (0, 0)),
        ],
        out_specs=pl.BlockSpec((TM, Cout), lambda i, k: (i, 0)),
        scratch_shapes=[pltpu.VMEM((TM, Cout), jnp.float32)],
        compiler_params=pltpu.CompilerParams(
            dimension_semantics=("parallel", "arbitrary"),
            vmem_limit_bytes=_VMEM_LIMIT),
    )(xb, wb, b2)
    return y[:M] if Mp != M else y


def conv3x3_block(x, p, *, residual=None, apply_act=True, slope=0.1,
                  use_pallas=True):
    """Fused CNNBlock (3x3, stride 1, pad 1, BN folded, LeakyReLU) [+ residual]."""
    N, H, W, Cin = x.shape
    Cout = p["w"].shape[-1]
    xp = jnp.pad(x.astype(jnp.bfloat16), ((0, 0), (1, 1), (1, 1), (0, 0)))
    wb = p["w"].astype(jnp.bfloat16)
    b2 = p["b"].reshape(1, Cout).astype(jnp.float32)

    if not use_pallas:  # pure-JAX reference, same math / dtype policy
        acc = jnp.zeros((N * H * W, Cout), jnp.float32)
        for dy in range(3):
            for dx in range(3):
                tap = xp[:, dy:dy + H, dx:dx + W, :].reshape(N * H * W, Cin)
                acc = acc + jnp.dot(tap, wb[dy, dx],
                                    preferred_element_type=jnp.float32)
        y = acc + b2
        if apply_act:
            y = jnp.where(y >= 0.0, y, slope * y)
        if residual is not None:
            y = y + residual.reshape(N * H * W, Cout).astype(jnp.float32)
        return y.astype(jnp.bfloat16).reshape(N, H, W, Cout)

    in_specs = [
        pl.BlockSpec((1, H + 2, W + 2, Cin), lambda n: (n, 0, 0, 0)),
        pl.BlockSpec((3, 3, Cin, Cout), lambda n: (0, 0, 0, 0)),
        pl.BlockSpec((1, Cout), lambda n: (0, 0)),
    ]
    args = [xp, wb, b2]
    if residual is None:
        kernel = functools.partial(_conv3x3_kernel, H=H, W=W, slope=slope,
                                   apply_act=apply_act)
    else:
        kernel = functools.partial(_conv3x3_res_kernel, H=H, W=W, slope=slope,
                                   apply_act=apply_act)
        in_specs.append(pl.BlockSpec((1, H * W, Cout), lambda n: (n, 0, 0)))
        args.append(residual.astype(jnp.bfloat16).reshape(N, H * W, Cout))

    y3 = pl.pallas_call(
        kernel,
        out_shape=jax.ShapeDtypeStruct((N, H * W, Cout), jnp.bfloat16),
        grid=(N,),
        in_specs=in_specs,
        out_specs=pl.BlockSpec((1, H * W, Cout), lambda n: (n, 0, 0)),
        compiler_params=pltpu.CompilerParams(
            dimension_semantics=("parallel",),
            vmem_limit_bytes=_VMEM_LIMIT),
    )(*args)
    return y3.reshape(N, H, W, Cout)


def maxpool2x2(x):
    # MaxPool2d(2): max of 4 strided slices; XLA fuses this (no Pallas kernel,
    # no (4,M,C) materialization).
    return jnp.maximum(
        jnp.maximum(x[:, 0::2, 0::2, :], x[:, 0::2, 1::2, :]),
        jnp.maximum(x[:, 1::2, 0::2, :], x[:, 1::2, 1::2, :]))


# ----------------------------------------------------------------------------
# Model glue
# ----------------------------------------------------------------------------
def resblock_apply(x, p, *, use_pallas=True):
    cin = x.shape[-1]
    cout = p["cnn1"]["w"].shape[-1]
    if cin != cout:
        initial = conv3x3_block(x, p["dim_eq"], use_pallas=use_pallas)
    else:
        initial = x
    h = conv3x3_block(x, p["cnn1"], use_pallas=use_pallas)
    h = conv3x3_block(h, p["cnn2"], residual=initial, use_pallas=use_pallas)
    return h


def encoder_apply(x_nchw, params, *, use_pallas=True):
    # Accept NCHW like PyTorch; compute in NHWC, bf16 activations between layers.
    x = jnp.transpose(x_nchw, (0, 2, 3, 1)).astype(jnp.bfloat16)
    for p in params["res"]:
        x = resblock_apply(x, p, use_pallas=use_pallas)
        x = maxpool2x2(x)

    # Final 1x1 CNNBlock = channel matmul (BN folded) + LeakyReLU.
    N, H, W, Cin = x.shape
    Cout = params["final"]["w"].shape[-1]
    y2d = fused_matmul(x.reshape(N * H * W, Cin), params["final"]["w"],
                       params["final"]["b"], apply_act=True,
                       out_dtype=jnp.bfloat16, use_pallas=use_pallas)

    # NHWC flatten; fc weights are stored in NHWC flatten order (equivalent to
    # permuting the PyTorch fc weight rows once at init -> no runtime transpose).
    flat = y2d.reshape(N, H * W * Cout)

    # Fuse fc_mu + fc_sigma into one lane-denser matmul.
    w_fc = jnp.concatenate([params["fc_mu"]["w"], params["fc_sigma"]["w"]], axis=1)
    b_fc = jnp.concatenate([params["fc_mu"]["b"], params["fc_sigma"]["b"]], axis=0)
    y = fused_matmul(flat, w_fc, b_fc, apply_act=False,
                     out_dtype=jnp.float32, use_pallas=use_pallas)
    latent = params["fc_mu"]["b"].shape[0]
    return y[:, :latent], y[:, latent:]


# ----------------------------------------------------------------------------
# Deterministic parameter init (shapes follow the PyTorch module __init__)
# ----------------------------------------------------------------------------
def init_cnnblock(key, cin, cout, ksize, eps=1e-3):
    ks = jax.random.split(key, 6)
    bound = 1.0 / np.sqrt(cin * ksize * ksize)
    # conv weight stored as (kh, kw, cin, cout) (PyTorch (cout,cin,kh,kw) permuted).
    w = jax.random.uniform(ks[0], (ksize, ksize, cin, cout), jnp.float32,
                           -bound, bound)
    b = jax.random.uniform(ks[1], (cout,), jnp.float32, -bound, bound)
    gamma = jax.random.uniform(ks[2], (cout,), jnp.float32, 0.5, 1.5)
    beta = jax.random.uniform(ks[3], (cout,), jnp.float32, -0.1, 0.1)
    rmean = jax.random.uniform(ks[4], (cout,), jnp.float32, -0.1, 0.1)
    rvar = jax.random.uniform(ks[5], (cout,), jnp.float32, 0.5, 1.5)
    scale = gamma / jnp.sqrt(rvar + eps)      # eval-mode BN folded into conv
    shift = beta - rmean * scale
    wf = w * scale                            # broadcast over cout
    bf = b * scale + shift
    if ksize == 1:
        wf = wf.reshape(cin, cout)
    return {"w": wf, "b": bf}


def init_linear(key, fin, fout):
    # Weight rows are in NHWC flatten order of the conv output (equivalent to a
    # one-time permutation of the PyTorch fc weight).
    k1, k2 = jax.random.split(key)
    bound = 1.0 / np.sqrt(fin)
    w = jax.random.uniform(k1, (fin, fout), jnp.float32, -bound, bound)
    b = jax.random.uniform(k2, (fout,), jnp.float32, -bound, bound)
    return {"w": w, "b": b}


def init_encoder(key, img_size, in_channels, latent_dim, downscale_blocks,
                 cnn_width):
    params = {"res": []}
    cw = cnn_width // (2 ** downscale_blocks)
    cin = in_channels
    keys = jax.random.split(key, 3 * downscale_blocks + 3)
    ki = 0
    for _ in range(downscale_blocks):
        params["res"].append({
            "cnn1": init_cnnblock(keys[ki], cin, cw, 3),
            "cnn2": init_cnnblock(keys[ki + 1], cw, cw, 3),
            "dim_eq": init_cnnblock(keys[ki + 2], cin, cw, 3),
        })
        ki += 3
        cin = cw
        cw *= 2
    params["final"] = init_cnnblock(keys[ki], cin, cw, 1)
    ki += 1
    res_size = img_size // (2 ** downscale_blocks)
    out_pixels = res_size * res_size * cw
    params["fc_mu"] = init_linear(keys[ki], out_pixels, latent_dim)
    ki += 1
    params["fc_sigma"] = init_linear(keys[ki], out_pixels, latent_dim)
    return params


# ----------------------------------------------------------------------------
if __name__ == "__main__":
    img_size, in_channels, latent_dim = 16, 4, 32
    downscale_blocks, cnn_width = 2, 16

    key = jax.random.PRNGKey(0)
    kp, kx = jax.random.split(key)
    params = init_encoder(kp, img_size, in_channels, latent_dim,
                          downscale_blocks, cnn_width)
    x = jax.random.normal(kx, (2, in_channels, img_size, img_size), jnp.float32)

    run = jax.jit(functools.partial(encoder_apply, use_pallas=True))
    mu, log_sigma = jax.block_until_ready(run(x, params))

    # pure-JAX reference with identical math / dtype policy
    mu_ref, ls_ref = encoder_apply(x, params, use_pallas=False)

    assert mu.shape == (2, latent_dim) and log_sigma.shape == (2, latent_dim)
    np.testing.assert_allclose(np.asarray(mu, dtype=np.float32),
                               np.asarray(mu_ref, dtype=np.float32),
                               rtol=1e-2, atol=1e-2)
    np.testing.assert_allclose(np.asarray(log_sigma, dtype=np.float32),
                               np.asarray(ls_ref, dtype=np.float32),
                               rtol=1e-2, atol=1e-2)
    print("KERNEL_OK")
</pallas_src>

<mosaic_0001>
module attributes {stable_mosaic.version = 11 : i64} {
  func.func @_conv3x3_res_kernel(%arg0: i32, %arg1: memref<1x18x18x4xbf16, #tpu.memory_space<vmem>>, %arg2: memref<3x3x4x4xbf16, #tpu.memory_space<vmem>>, %arg3: memref<1x4xf32, #tpu.memory_space<vmem>>, %arg4: memref<1x256x4xbf16, #tpu.memory_space<vmem>>, %arg5: memref<1x256x4xbf16, #tpu.memory_space<vmem>>) attributes {dimension_semantics = [#tpu.dimension_semantics<parallel>], iteration_bounds = array<i64: 2>, scalar_prefetch = 0 : i64, scratch_operands = 0 : i64, tpu.core_type = #tpu.core_type<tc>, window_params = [{transform_indices = @transform_0, window_bounds = array<i64: 1, 18, 18, 4>}, {pipeline_mode = #tpu.pipeline_mode<synchronous>, transform_indices = @transform_1, window_bounds = array<i64: 3, 3, 4, 4>}, {pipeline_mode = #tpu.pipeline_mode<synchronous>, transform_indices = @transform_2, window_bounds = array<i64: 1, 4>}, {transform_indices = @transform_3, window_bounds = array<i64: 1, 256, 4>}, {transform_indices = @transform_4, window_bounds = array<i64: 1, 256, 4>}]} {
    %c0 = arith.constant 0 : index
    %c0_0 = arith.constant 0 : index
    %c0_1 = arith.constant 0 : index
    %c0_2 = arith.constant 0 : index
    %0 = vector.load %arg1[%c0, %c0_0, %c0_1, %c0_2] : memref<1x18x18x4xbf16, #tpu.memory_space<vmem>>, vector<1x18x18x4xbf16>
    %1 = vector.shape_cast %0 : vector<1x18x18x4xbf16> to vector<18x18x4xbf16>
    %cst = arith.constant 0.000000e+00 : f32
    %2 = vector.broadcast %cst : f32 to vector<256x4xf32>
    %3 = vector.extract_strided_slice %1 {offsets = [0, 0, 0], sizes = [16, 16, 4], strides = [1, 1, 1]} : vector<18x18x4xbf16> to vector<16x16x4xbf16>
    %4 = vector.shape_cast %3 : vector<16x16x4xbf16> to vector<256x4xbf16>
    %c0_3 = arith.constant 0 : index
    %c0_4 = arith.constant 0 : index
    %c0_5 = arith.constant 0 : index
    %c0_6 = arith.constant 0 : index
    %5 = vector.load %arg2[%c0_3, %c0_4, %c0_5, %c0_6] : memref<3x3x4x4xbf16, #tpu.memory_space<vmem>>, vector<1x1x4x4xbf16>
    %6 = vector.shape_cast %5 : vector<1x1x4x4xbf16> to vector<4x4xbf16>
    %cst_7 = arith.constant dense<0.000000e+00> : vector<256x4xf32>
    %7 = tpu.matmul %4, %6, %cst_7 {dimension_numbers = #tpu.dot_dimension_numbers<[1], [0], [0], [1], [0, 0, 1, 1], [], []>} : vector<256x4xbf16>, vector<4x4xbf16>, vector<256x4xf32> -> vector<256x4xf32>
    %8 = arith.addf %2, %7 : vector<256x4xf32>
    %9 = vector.extract_strided_slice %1 {offsets = [0, 1, 0], sizes = [16, 16, 4], strides = [1, 1, 1]} : vector<18x18x4xbf16> to vector<16x16x4xbf16>
    %10 = vector.shape_cast %9 : vector<16x16x4xbf16> to vector<256x4xbf16>
    %c0_8 = arith.constant 0 : index
    %c1 = arith.constant 1 : index
    %c0_9 = arith.constant 0 : index
    %c0_10 = arith.constant 0 : index
    %11 = vector.load %arg2[%c0_8, %c1, %c0_9, %c0_10] : memref<3x3x4x4xbf16, #tpu.memory_space<vmem>>, vector<1x1x4x4xbf16>
    %12 = vector.shape_cast %11 : vector<1x1x4x4xbf16> to vector<4x4xbf16>
    %cst_11 = arith.constant dense<0.000000e+00> : vector<256x4xf32>
    %13 = tpu.matmul %10, %12, %cst_11 {dimension_numbers = #tpu.dot_dimension_numbers<[1], [0], [0], [1], [0, 0, 1, 1], [], []>} : vector<256x4xbf16>, vector<4x4xbf16>, vector<256x4xf32> -> vector<256x4xf32>
    %14 = arith.addf %8, %13 : vector<256x4xf32>
    %15 = vector.extract_strided_slice %1 {offsets = [0, 2, 0], sizes = [16, 16, 4], strides = [1, 1, 1]} : vector<18x18x4xbf16> to vector<16x16x4xbf16>
    %16 = vector.shape_cast %15 : vector<16x16x4xbf16> to vector<256x4xbf16>
    %c0_12 = arith.constant 0 : index
    %c2 = arith.constant 2 : index
    %c0_13 = arith.constant 0 : index
    %c0_14 = arith.constant 0 : index
    %17 = vector.load %arg2[%c0_12, %c2, %c0_13, %c0_14] : memref<3x3x4x4xbf16, #tpu.memory_space<vmem>>, vector<1x1x4x4xbf16>
    %18 = vector.shape_cast %17 : vector<1x1x4x4xbf16> to vector<4x4xbf16>
    %cst_15 = arith.constant dense<0.000000e+00> : vector<256x4xf32>
    %19 = tpu.matmul %16, %18, %cst_15 {dimension_numbers = #tpu.dot_dimension_numbers<[1], [0], [0], [1], [0, 0, 1, 1], [], []>} : vector<256x4xbf16>, vector<4x4xbf16>, vector<256x4xf32> -> vector<256x4xf32>
    %20 = arith.addf %14, %19 : vector<256x4xf32>
    %21 = vector.extract_strided_slice %1 {offsets = [1, 0, 0], sizes = [16, 16, 4], strides = [1, 1, 1]} : vector<18x18x4xbf16> to vector<16x16x4xbf16>
    %22 = vector.shape_cast %21 : vector<16x16x4xbf16> to vector<256x4xbf16>
    %c1_16 = arith.constant 1 : index
    %c0_17 = arith.constant 0 : index
    %c0_18 = arith.constant 0 : index
    %c0_19 = arith.constant 0 : index
    %23 = vector.load %arg2[%c1_16, %c0_17, %c0_18, %c0_19] : memref<3x3x4x4xbf16, #tpu.memory_space<vmem>>, vector<1x1x4x4xbf16>
    %24 = vector.shape_cast %23 : vector<1x1x4x4xbf16> to vector<4x4xbf16>
    %cst_20 = arith.constant dense<0.000000e+00> : vector<256x4xf32>
    %25 = tpu.matmul %22, %24, %cst_20 {dimension_numbers = #tpu.dot_dimension_numbers<[1], [0], [0], [1], [0, 0, 1, 1], [], []>} : vector<256x4xbf16>, vector<4x4xbf16>, vector<256x4xf32> -> vector<256x4xf32>
    %26 = arith.addf %20, %25 : vector<256x4xf32>
    %27 = vector.extract_strided_slice %1 {offsets = [1, 1, 0], sizes = [16, 16, 4], strides = [1, 1, 1]} : vector<18x18x4xbf16> to vector<16x16x4xbf16>
    %28 = vector.shape_cast %27 : vector<16x16x4xbf16> to vector<256x4xbf16>
    %c1_21 = arith.constant 1 : index
    %c1_22 = arith.constant 1 : index
    %c0_23 = arith.constant 0 : index
    %c0_24 = arith.constant 0 : index
    %29 = vector.load %arg2[%c1_21, %c1_22, %c0_23, %c0_24] : memref<3x3x4x4xbf16, #tpu.memory_space<vmem>>, vector<1x1x4x4xbf16>
    %30 = vector.shape_cast %29 : vector<1x1x4x4xbf16> to vector<4x4xbf16>
    %cst_25 = arith.constant dense<0.000000e+00> : vector<256x4xf32>
    %31 = tpu.matmul %28, %30, %cst_25 {dimension_numbers = #tpu.dot_dimension_numbers<[1], [0], [0], [1], [0, 0, 1, 1], [], []>} : vector<256x4xbf16>, vector<4x4xbf16>, vector<256x4xf32> -> vector<256x4xf32>
    %32 = arith.addf %26, %31 : vector<256x4xf32>
    %33 = vector.extract_strided_slice %1 {offsets = [1, 2, 0], sizes = [16, 16, 4], strides = [1, 1, 1]} : vector<18x18x4xbf16> to vector<16x16x4xbf16>
    %34 = vector.shape_cast %33 : vector<16x16x4xbf16> to vector<256x4xbf16>
    %c1_26 = arith.constant 1 : index
    %c2_27 = arith.constant 2 : index
    %c0_28 = arith.constant 0 : index
    %c0_29 = arith.constant 0 : index
    %35 = vector.load %arg2[%c1_26, %c2_27, %c0_28, %c0_29] : memref<3x3x4x4xbf16, #tpu.memory_space<vmem>>, vector<1x1x4x4xbf16>
    %36 = vector.shape_cast %35 : vector<1x1x4x4xbf16> to vector<4x4xbf16>
    %cst_30 = arith.constant dense<0.000000e+00> : vector<256x4xf32>
    %37 = tpu.matmul %34, %36, %cst_30 {dimension_numbers = #tpu.dot_dimension_numbers<[1], [0], [0], [1], [0, 0, 1, 1], [], []>} : vector<256x4xbf16>, vector<4x4xbf16>, vector<256x4xf32> -> vector<256x4xf32>
    %38 = arith.addf %32, %37 : vector<256x4xf32>
    %39 = vector.extract_strided_slice %1 {offsets = [2, 0, 0], sizes = [16, 16, 4], strides = [1, 1, 1]} : vector<18x18x4xbf16> to vector<16x16x4xbf16>
    %40 = vector.shape_cast %39 : vector<16x16x4xbf16> to vector<256x4xbf16>
    %c2_31 = arith.constant 2 : index
    %c0_32 = arith.constant 0 : index
    %c0_33 = arith.constant 0 : index
    %c0_34 = arith.constant 0 : index
    %41 = vector.load %arg2[%c2_31, %c0_32, %c0_33, %c0_34] : memref<3x3x4x4xbf16, #tpu.memory_space<vmem>>, vector<1x1x4x4xbf16>
    %42 = vector.shape_cast %41 : vector<1x1x4x4xbf16> to vector<4x4xbf16>
    %cst_35 = arith.constant dense<0.000000e+00> : vector<256x4xf32>
    %43 = tpu.matmul %40, %42, %cst_35 {dimension_numbers = #tpu.dot_dimension_numbers<[1], [0], [0], [1], [0, 0, 1, 1], [], []>} : vector<256x4xbf16>, vector<4x4xbf16>, vector<256x4xf32> -> vector<256x4xf32>
    %44 = arith.addf %38, %43 : vector<256x4xf32>
    %45 = vector.extract_strided_slice %1 {offsets = [2, 1, 0], sizes = [16, 16, 4], strides = [1, 1, 1]} : vector<18x18x4xbf16> to vector<16x16x4xbf16>
    %46 = vector.shape_cast %45 : vector<16x16x4xbf16> to vector<256x4xbf16>
    %c2_36 = arith.constant 2 : index
    %c1_37 = arith.constant 1 : index
    %c0_38 = arith.constant 0 : index
    %c0_39 = arith.constant 0 : index
    %47 = vector.load %arg2[%c2_36, %c1_37, %c0_38, %c0_39] : memref<3x3x4x4xbf16, #tpu.memory_space<vmem>>, vector<1x1x4x4xbf16>
    %48 = vector.shape_cast %47 : vector<1x1x4x4xbf16> to vector<4x4xbf16>
    %cst_40 = arith.constant dense<0.000000e+00> : vector<256x4xf32>
    %49 = tpu.matmul %46, %48, %cst_40 {dimension_numbers = #tpu.dot_dimension_numbers<[1], [0], [0], [1], [0, 0, 1, 1], [], []>} : vector<256x4xbf16>, vector<4x4xbf16>, vector<256x4xf32> -> vector<256x4xf32>
    %50 = arith.addf %44, %49 : vector<256x4xf32>
    %51 = vector.extract_strided_slice %1 {offsets = [2, 2, 0], sizes = [16, 16, 4], strides = [1, 1, 1]} : vector<18x18x4xbf16> to vector<16x16x4xbf16>
    %52 = vector.shape_cast %51 : vector<16x16x4xbf16> to vector<256x4xbf16>
    %c2_41 = arith.constant 2 : index
    %c2_42 = arith.constant 2 : index
    %c0_43 = arith.constant 0 : index
    %c0_44 = arith.constant 0 : index
    %53 = vector.load %arg2[%c2_41, %c2_42, %c0_43, %c0_44] : memref<3x3x4x4xbf16, #tpu.memory_space<vmem>>, vector<1x1x4x4xbf16>
    %54 = vector.shape_cast %53 : vector<1x1x4x4xbf16> to vector<4x4xbf16>
    %cst_45 = arith.constant dense<0.000000e+00> : vector<256x4xf32>
    %55 = tpu.matmul %52, %54, %cst_45 {dimension_numbers = #tpu.dot_dimension_numbers<[1], [0], [0], [1], [0, 0, 1, 1], [], []>} : vector<256x4xbf16>, vector<4x4xbf16>, vector<256x4xf32> -> vector<256x4xf32>
    %56 = arith.addf %50, %55 : vector<256x4xf32>
    %c0_46 = arith.constant 0 : index
    %c0_47 = arith.constant 0 : index
    %57 = vector.load %arg3[%c0_46, %c0_47] : memref<1x4xf32, #tpu.memory_space<vmem>>, vector<1x4xf32>
    %58 = vector.broadcast %57 : vector<1x4xf32> to vector<256x4xf32>
    %59 = arith.addf %56, %58 : vector<256x4xf32>
    %cst_48 = arith.constant 0.000000e+00 : f32
    %60 = vector.broadcast %cst_48 : f32 to vector<256x4xf32>
    %61 = arith.cmpf oge, %59, %60 : vector<256x4xf32>
    %cst_49 = arith.constant 1.000000e-01 : f32
    %62 = vector.broadcast %cst_49 : f32 to vector<256x4xf32>
    %63 = arith.mulf %62, %59 : vector<256x4xf32>
    %64 = arith.select %61, %59, %63 : vector<256x4xi1>, vector<256x4xf32>
    %c0_50 = arith.constant 0 : index
    %c0_51 = arith.constant 0 : index
    %c0_52 = arith.constant 0 : index
    %65 = vector.load %arg4[%c0_50, %c0_51, %c0_52] : memref<1x256x4xbf16, #tpu.memory_space<vmem>>, vector<1x256x4xbf16>
    %66 = vector.shape_cast %65 : vector<1x256x4xbf16> to vector<256x4xbf16>
    %67 = arith.extf %66 : vector<256x4xbf16> to vector<256x4xf32>
    %68 = arith.addf %64, %67 : vector<256x4xf32>
    %69 = arith.truncf %68 : vector<256x4xf32> to vector<256x4xbf16>
    %c0_53 = arith.constant 0 : index
    %c0_54 = arith.constant 0 : index
    %c0_55 = arith.constant 0 : index
    %70 = vector.load %arg5[%c0_53, %c0_54, %c0_55] : memref<1x256x4xbf16, #tpu.memory_space<vmem>>, vector<1x256x4xbf16>
    %71 = vector.shape_cast %70 : vector<1x256x4xbf16> to vector<256x4xbf16>
    %72 = vector.shape_cast %69 : vector<256x4xbf16> to vector<1x256x4xbf16>
    tpu.vector_store %arg5[%c0_53, %c0_54, %c0_55], %72 {strides = array<i32>} : memref<1x256x4xbf16, #tpu.memory_space<vmem>>, vector<1x256x4xbf16>,
    return
  }
  func.func @transform_0(%arg0: i32) -> (i32, i32, i32, i32) {
    %c0_i32 = arith.constant 0 : i32
    %c0_i32_0 = arith.constant 0 : i32
    %c0_i32_1 = arith.constant 0 : i32
    %c0_i32_2 = arith.constant 0 : i32
    return %arg0, %c0_i32, %c0_i32_0, %c0_i32_1 : i32, i32, i32, i32
  }
  func.func @transform_1(%arg0: i32) -> (i32, i32, i32, i32) {
    %c0_i32 = arith.constant 0 : i32
    %c0_i32_0 = arith.constant 0 : i32
    %c0_i32_1 = arith.constant 0 : i32
    %c0_i32_2 = arith.constant 0 : i32
    %c0_i32_3 = arith.constant 0 : i32
    return %c0_i32, %c0_i32_0, %c0_i32_1, %c0_i32_2 : i32, i32, i32, i32
  }
  func.func @transform_2(%arg0: i32) -> (i32, i32) {
    %c0_i32 = arith.constant 0 : i32
    %c0_i32_0 = arith.constant 0 : i32
    %c0_i32_1 = arith.constant 0 : i32
    return %c0_i32, %c0_i32_0 : i32, i32
  }
  func.func @transform_3(%arg0: i32) -> (i32, i32, i32) {
    %c0_i32 = arith.constant 0 : i32
    %c0_i32_0 = arith.constant 0 : i32
    %c0_i32_1 = arith.constant 0 : i32
    return %arg0, %c0_i32, %c0_i32_0 : i32, i32, i32
  }
  func.func @transform_4(%arg0: i32) -> (i32, i32, i32) {
    %c0_i32 = arith.constant 0 : i32
    %c0_i32_0 = arith.constant 0 : i32
    %c0_i32_1 = arith.constant 0 : i32
    return %arg0, %c0_i32, %c0_i32_0 : i32, i32, i32
  }
}

module attributes {stable_mosaic.version = 11 : i64} {
  func.func @_conv3x3_kernel(%arg0: i32, %arg1: memref<1x18x18x4xbf16, #tpu.memory_space<vmem>>, %arg2: memref<3x3x4x4xbf16, #tpu.memory_space<vmem>>, %arg3: memref<1x4xf32, #tpu.memory_space<vmem>>, %arg4: memref<1x256x4xbf16, #tpu.memory_space<vmem>>) attributes {dimension_semantics = [#tpu.dimension_semantics<parallel>], iteration_bounds = array<i64: 2>, scalar_prefetch = 0 : i64, scratch_operands = 0 : i64, tpu.core_type = #tpu.core_type<tc>, window_params = [{transform_indices = @transform_0, window_bounds = array<i64: 1, 18, 18, 4>}, {pipeline_mode = #tpu.pipeline_mode<synchronous>, transform_indices = @transform_1, window_bounds = array<i64: 3, 3, 4, 4>}, {pipeline_mode = #tpu.pipeline_mode<synchronous>, transform_indices = @transform_2, window_bounds = array<i64: 1, 4>}, {transform_indices = @transform_3, window_bounds = array<i64: 1, 256, 4>}]} {
    %c0 = arith.constant 0 : index
    %c0_0 = arith.constant 0 : index
    %c0_1 = arith.constant 0 : index
    %c0_2 = arith.constant 0 : index
    %0 = vector.load %arg1[%c0, %c0_0, %c0_1, %c0_2] : memref<1x18x18x4xbf16, #tpu.memory_space<vmem>>, vector<1x18x18x4xbf16>
    %1 = vector.shape_cast %0 : vector<1x18x18x4xbf16> to vector<18x18x4xbf16>
    %cst = arith.constant 0.000000e+00 : f32
    %2 = vector.broadcast %cst : f32 to vector<256x4xf32>
    %3 = vector.extract_strided_slice %1 {offsets = [0, 0, 0], sizes = [16, 16, 4], strides = [1, 1, 1]} : vector<18x18x4xbf16> to vector<16x16x4xbf16>
    %4 = vector.shape_cast %3 : vector<16x16x4xbf16> to vector<256x4xbf16>
    %c0_3 = arith.constant 0 : index
    %c0_4 = arith.constant 0 : index
    %c0_5 = arith.constant 0 : index
    %c0_6 = arith.constant 0 : index
    %5 = vector.load %arg2[%c0_3, %c0_4, %c0_5, %c0_6] : memref<3x3x4x4xbf16, #tpu.memory_space<vmem>>, vector<1x1x4x4xbf16>
    %6 = vector.shape_cast %5 : vector<1x1x4x4xbf16> to vector<4x4xbf16>
    %cst_7 = arith.constant dense<0.000000e+00> : vector<256x4xf32>
    %7 = tpu.matmul %4, %6, %cst_7 {dimension_numbers = #tpu.dot_dimension_numbers<[1], [0], [0], [1], [0, 0, 1, 1], [], []>} : vector<256x4xbf16>, vector<4x4xbf16>, vector<256x4xf32> -> vector<256x4xf32>
    %8 = arith.addf %2, %7 : vector<256x4xf32>
    %9 = vector.extract_strided_slice %1 {offsets = [0, 1, 0], sizes = [16, 16, 4], strides = [1, 1, 1]} : vector<18x18x4xbf16> to vector<16x16x4xbf16>
    %10 = vector.shape_cast %9 : vector<16x16x4xbf16> to vector<256x4xbf16>
    %c0_8 = arith.constant 0 : index
    %c1 = arith.constant 1 : index
    %c0_9 = arith.constant 0 : index
    %c0_10 = arith.constant 0 : index
    %11 = vector.load %arg2[%c0_8, %c1, %c0_9, %c0_10] : memref<3x3x4x4xbf16, #tpu.memory_space<vmem>>, vector<1x1x4x4xbf16>
    %12 = vector.shape_cast %11 : vector<1x1x4x4xbf16> to vector<4x4xbf16>
    %cst_11 = arith.constant dense<0.000000e+00> : vector<256x4xf32>
    %13 = tpu.matmul %10, %12, %cst_11 {dimension_numbers = #tpu.dot_dimension_numbers<[1], [0], [0], [1], [0, 0, 1, 1], [], []>} : vector<256x4xbf16>, vector<4x4xbf16>, vector<256x4xf32> -> vector<256x4xf32>
    %14 = arith.addf %8, %13 : vector<256x4xf32>
    %15 = vector.extract_strided_slice %1 {offsets = [0, 2, 0], sizes = [16, 16, 4], strides = [1, 1, 1]} : vector<18x18x4xbf16> to vector<16x16x4xbf16>
    %16 = vector.shape_cast %15 : vector<16x16x4xbf16> to vector<256x4xbf16>
    %c0_12 = arith.constant 0 : index
    %c2 = arith.constant 2 : index
    %c0_13 = arith.constant 0 : index
    %c0_14 = arith.constant 0 : index
    %17 = vector.load %arg2[%c0_12, %c2, %c0_13, %c0_14] : memref<3x3x4x4xbf16, #tpu.memory_space<vmem>>, vector<1x1x4x4xbf16>
    %18 = vector.shape_cast %17 : vector<1x1x4x4xbf16> to vector<4x4xbf16>
    %cst_15 = arith.constant dense<0.000000e+00> : vector<256x4xf32>
    %19 = tpu.matmul %16, %18, %cst_15 {dimension_numbers = #tpu.dot_dimension_numbers<[1], [0], [0], [1], [0, 0, 1, 1], [], []>} : vector<256x4xbf16>, vector<4x4xbf16>, vector<256x4xf32> -> vector<256x4xf32>
    %20 = arith.addf %14, %19 : vector<256x4xf32>
    %21 = vector.extract_strided_slice %1 {offsets = [1, 0, 0], sizes = [16, 16, 4], strides = [1, 1, 1]} : vector<18x18x4xbf16> to vector<16x16x4xbf16>
    %22 = vector.shape_cast %21 : vector<16x16x4xbf16> to vector<256x4xbf16>
    %c1_16 = arith.constant 1 : index
    %c0_17 = arith.constant 0 : index
    %c0_18 = arith.constant 0 : index
    %c0_19 = arith.constant 0 : index
    %23 = vector.load %arg2[%c1_16, %c0_17, %c0_18, %c0_19] : memref<3x3x4x4xbf16, #tpu.memory_space<vmem>>, vector<1x1x4x4xbf16>
    %24 = vector.shape_cast %23 : vector<1x1x4x4xbf16> to vector<4x4xbf16>
    %cst_20 = arith.constant dense<0.000000e+00> : vector<256x4xf32>
    %25 = tpu.matmul %22, %24, %cst_20 {dimension_numbers = #tpu.dot_dimension_numbers<[1], [0], [0], [1], [0, 0, 1, 1], [], []>} : vector<256x4xbf16>, vector<4x4xbf16>, vector<256x4xf32> -> vector<256x4xf32>
    %26 = arith.addf %20, %25 : vector<256x4xf32>
    %27 = vector.extract_strided_slice %1 {offsets = [1, 1, 0], sizes = [16, 16, 4], strides = [1, 1, 1]} : vector<18x18x4xbf16> to vector<16x16x4xbf16>
    %28 = vector.shape_cast %27 : vector<16x16x4xbf16> to vector<256x4xbf16>
    %c1_21 = arith.constant 1 : index
    %c1_22 = arith.constant 1 : index
    %c0_23 = arith.constant 0 : index
    %c0_24 = arith.constant 0 : index
    %29 = vector.load %arg2[%c1_21, %c1_22, %c0_23, %c0_24] : memref<3x3x4x4xbf16, #tpu.memory_space<vmem>>, vector<1x1x4x4xbf16>
    %30 = vector.shape_cast %29 : vector<1x1x4x4xbf16> to vector<4x4xbf16>
    %cst_25 = arith.constant dense<0.000000e+00> : vector<256x4xf32>
    %31 = tpu.matmul %28, %30, %cst_25 {dimension_numbers = #tpu.dot_dimension_numbers<[1], [0], [0], [1], [0, 0, 1, 1], [], []>} : vector<256x4xbf16>, vector<4x4xbf16>, vector<256x4xf32> -> vector<256x4xf32>
    %32 = arith.addf %26, %31 : vector<256x4xf32>
    %33 = vector.extract_strided_slice %1 {offsets = [1, 2, 0], sizes = [16, 16, 4], strides = [1, 1, 1]} : vector<18x18x4xbf16> to vector<16x16x4xbf16>
    %34 = vector.shape_cast %33 : vector<16x16x4xbf16> to vector<256x4xbf16>
    %c1_26 = arith.constant 1 : index
    %c2_27 = arith.constant 2 : index
    %c0_28 = arith.constant 0 : index
    %c0_29 = arith.constant 0 : index
    %35 = vector.load %arg2[%c1_26, %c2_27, %c0_28, %c0_29] : memref<3x3x4x4xbf16, #tpu.memory_space<vmem>>, vector<1x1x4x4xbf16>
    %36 = vector.shape_cast %35 : vector<1x1x4x4xbf16> to vector<4x4xbf16>
    %cst_30 = arith.constant dense<0.000000e+00> : vector<256x4xf32>
    %37 = tpu.matmul %34, %36, %cst_30 {dimension_numbers = #tpu.dot_dimension_numbers<[1], [0], [0], [1], [0, 0, 1, 1], [], []>} : vector<256x4xbf16>, vector<4x4xbf16>, vector<256x4xf32> -> vector<256x4xf32>
    %38 = arith.addf %32, %37 : vector<256x4xf32>
    %39 = vector.extract_strided_slice %1 {offsets = [2, 0, 0], sizes = [16, 16, 4], strides = [1, 1, 1]} : vector<18x18x4xbf16> to vector<16x16x4xbf16>
    %40 = vector.shape_cast %39 : vector<16x16x4xbf16> to vector<256x4xbf16>
    %c2_31 = arith.constant 2 : index
    %c0_32 = arith.constant 0 : index
    %c0_33 = arith.constant 0 : index
    %c0_34 = arith.constant 0 : index
    %41 = vector.load %arg2[%c2_31, %c0_32, %c0_33, %c0_34] : memref<3x3x4x4xbf16, #tpu.memory_space<vmem>>, vector<1x1x4x4xbf16>
    %42 = vector.shape_cast %41 : vector<1x1x4x4xbf16> to vector<4x4xbf16>
    %cst_35 = arith.constant dense<0.000000e+00> : vector<256x4xf32>
    %43 = tpu.matmul %40, %42, %cst_35 {dimension_numbers = #tpu.dot_dimension_numbers<[1], [0], [0], [1], [0, 0, 1, 1], [], []>} : vector<256x4xbf16>, vector<4x4xbf16>, vector<256x4xf32> -> vector<256x4xf32>
    %44 = arith.addf %38, %43 : vector<256x4xf32>
    %45 = vector.extract_strided_slice %1 {offsets = [2, 1, 0], sizes = [16, 16, 4], strides = [1, 1, 1]} : vector<18x18x4xbf16> to vector<16x16x4xbf16>
    %46 = vector.shape_cast %45 : vector<16x16x4xbf16> to vector<256x4xbf16>
    %c2_36 = arith.constant 2 : index
    %c1_37 = arith.constant 1 : index
    %c0_38 = arith.constant 0 : index
    %c0_39 = arith.constant 0 : index
    %47 = vector.load %arg2[%c2_36, %c1_37, %c0_38, %c0_39] : memref<3x3x4x4xbf16, #tpu.memory_space<vmem>>, vector<1x1x4x4xbf16>
    %48 = vector.shape_cast %47 : vector<1x1x4x4xbf16> to vector<4x4xbf16>
    %cst_40 = arith.constant dense<0.000000e+00> : vector<256x4xf32>
    %49 = tpu.matmul %46, %48, %cst_40 {dimension_numbers = #tpu.dot_dimension_numbers<[1], [0], [0], [1], [0, 0, 1, 1], [], []>} : vector<256x4xbf16>, vector<4x4xbf16>, vector<256x4xf32> -> vector<256x4xf32>
    %50 = arith.addf %44, %49 : vector<256x4xf32>
    %51 = vector.extract_strided_slice %1 {offsets = [2, 2, 0], sizes = [16, 16, 4], strides = [1, 1, 1]} : vector<18x18x4xbf16> to vector<16x16x4xbf16>
    %52 = vector.shape_cast %51 : vector<16x16x4xbf16> to vector<256x4xbf16>
    %c2_41 = arith.constant 2 : index
    %c2_42 = arith.constant 2 : index
    %c0_43 = arith.constant 0 : index
    %c0_44 = arith.constant 0 : index
    %53 = vector.load %arg2[%c2_41, %c2_42, %c0_43, %c0_44] : memref<3x3x4x4xbf16, #tpu.memory_space<vmem>>, vector<1x1x4x4xbf16>
    %54 = vector.shape_cast %53 : vector<1x1x4x4xbf16> to vector<4x4xbf16>
    %cst_45 = arith.constant dense<0.000000e+00> : vector<256x4xf32>
    %55 = tpu.matmul %52, %54, %cst_45 {dimension_numbers = #tpu.dot_dimension_numbers<[1], [0], [0], [1], [0, 0, 1, 1], [], []>} : vector<256x4xbf16>, vector<4x4xbf16>, vector<256x4xf32> -> vector<256x4xf32>
    %56 = arith.addf %50, %55 : vector<256x4xf32>
    %c0_46 = arith.constant 0 : index
    %c0_47 = arith.constant 0 : index
    %57 = vector.load %arg3[%c0_46, %c0_47] : memref<1x4xf32, #tpu.memory_space<vmem>>, vector<1x4xf32>
    %58 = vector.broadcast %57 : vector<1x4xf32> to vector<256x4xf32>
    %59 = arith.addf %56, %58 : vector<256x4xf32>
    %cst_48 = arith.constant 0.000000e+00 : f32
    %60 = vector.broadcast %cst_48 : f32 to vector<256x4xf32>
    %61 = arith.cmpf oge, %59, %60 : vector<256x4xf32>
    %cst_49 = arith.constant 1.000000e-01 : f32
    %62 = vector.broadcast %cst_49 : f32 to vector<256x4xf32>
    %63 = arith.mulf %62, %59 : vector<256x4xf32>
    %64 = arith.select %61, %59, %63 : vector<256x4xi1>, vector<256x4xf32>
    %65 = arith.truncf %64 : vector<256x4xf32> to vector<256x4xbf16>
    %c0_50 = arith.constant 0 : index
    %c0_51 = arith.constant 0 : index
    %c0_52 = arith.constant 0 : index
    %66 = vector.load %arg4[%c0_50, %c0_51, %c0_52] : memref<1x256x4xbf16, #tpu.memory_space<vmem>>, vector<1x256x4xbf16>
    %67 = vector.shape_cast %66 : vector<1x256x4xbf16> to vector<256x4xbf16>
    %68 = vector.shape_cast %65 : vector<256x4xbf16> to vector<1x256x4xbf16>
    tpu.vector_store %arg4[%c0_50, %c0_51, %c0_52], %68 {strides = array<i32>} : memref<1x256x4xbf16, #tpu.memory_space<vmem>>, vector<1x256x4xbf16>,
    return
  }
  func.func @transform_0(%arg0: i32) -> (i32, i32, i32, i32) {
    %c0_i32 = arith.constant 0 : i32
    %c0_i32_0 = arith.constant 0 : i32
    %c0_i32_1 = arith.constant 0 : i32
    %c0_i32_2 = arith.constant 0 : i32
    return %arg0, %c0_i32, %c0_i32_0, %c0_i32_1 : i32, i32, i32, i32
  }
  func.func @transform_1(%arg0: i32) -> (i32, i32, i32, i32) {
    %c0_i32 = arith.constant 0 : i32
    %c0_i32_0 = arith.constant 0 : i32
    %c0_i32_1 = arith.constant 0 : i32
    %c0_i32_2 = arith.constant 0 : i32
    %c0_i32_3 = arith.constant 0 : i32
    return %c0_i32, %c0_i32_0, %c0_i32_1, %c0_i32_2 : i32, i32, i32, i32
  }
  func.func @transform_2(%arg0: i32) -> (i32, i32) {
    %c0_i32 = arith.constant 0 : i32
    %c0_i32_0 = arith.constant 0 : i32
    %c0_i32_1 = arith.constant 0 : i32
    return %c0_i32, %c0_i32_0 : i32, i32
  }
  func.func @transform_3(%arg0: i32) -> (i32, i32, i32) {
    %c0_i32 = arith.constant 0 : i32
    %c0_i32_0 = arith.constant 0 : i32
    %c0_i32_1 = arith.constant 0 : i32
    return %arg0, %c0_i32, %c0_i32_0 : i32, i32, i32
  }
}

module attributes {stable_mosaic.version = 11 : i64} {
  func.func @_conv3x3_kernel(%arg0: i32, %arg1: memref<1x10x10x4xbf16, #tpu.memory_space<vmem>>, %arg2: memref<3x3x4x8xbf16, #tpu.memory_space<vmem>>, %arg3: memref<1x8xf32, #tpu.memory_space<vmem>>, %arg4: memref<1x64x8xbf16, #tpu.memory_space<vmem>>) attributes {dimension_semantics = [#tpu.dimension_semantics<parallel>], iteration_bounds = array<i64: 2>, scalar_prefetch = 0 : i64, scratch_operands = 0 : i64, tpu.core_type = #tpu.core_type<tc>, window_params = [{transform_indices = @transform_0, window_bounds = array<i64: 1, 10, 10, 4>}, {pipeline_mode = #tpu.pipeline_mode<synchronous>, transform_indices = @transform_1, window_bounds = array<i64: 3, 3, 4, 8>}, {pipeline_mode = #tpu.pipeline_mode<synchronous>, transform_indices = @transform_2, window_bounds = array<i64: 1, 8>}, {transform_indices = @transform_3, window_bounds = array<i64: 1, 64, 8>}]} {
    %c0 = arith.constant 0 : index
    %c0_0 = arith.constant 0 : index
    %c0_1 = arith.constant 0 : index
    %c0_2 = arith.constant 0 : index
    %0 = vector.load %arg1[%c0, %c0_0, %c0_1, %c0_2] : memref<1x10x10x4xbf16, #tpu.memory_space<vmem>>, vector<1x10x10x4xbf16>
    %1 = vector.shape_cast %0 : vector<1x10x10x4xbf16> to vector<10x10x4xbf16>
    %cst = arith.constant 0.000000e+00 : f32
    %2 = vector.broadcast %cst : f32 to vector<64x8xf32>
    %3 = vector.extract_strided_slice %1 {offsets = [0, 0, 0], sizes = [8, 8, 4], strides = [1, 1, 1]} : vector<10x10x4xbf16> to vector<8x8x4xbf16>
    %4 = vector.shape_cast %3 : vector<8x8x4xbf16> to vector<64x4xbf16>
    %c0_3 = arith.constant 0 : index
    %c0_4 = arith.constant 0 : index
    %c0_5 = arith.constant 0 : index
    %c0_6 = arith.constant 0 : index
    %5 = vector.load %arg2[%c0_3, %c0_4, %c0_5, %c0_6] : memref<3x3x4x8xbf16, #tpu.memory_space<vmem>>, vector<1x1x4x8xbf16>
    %6 = vector.shape_cast %5 : vector<1x1x4x8xbf16> to vector<4x8xbf16>
    %cst_7 = arith.constant dense<0.000000e+00> : vector<64x8xf32>
    %7 = tpu.matmul %4, %6, %cst_7 {dimension_numbers = #tpu.dot_dimension_numbers<[1], [0], [0], [1], [0, 0, 1, 1], [], []>} : vector<64x4xbf16>, vector<4x8xbf16>, vector<64x8xf32> -> vector<64x8xf32>
    %8 = arith.addf %2, %7 : vector<64x8xf32>
    %9 = vector.extract_strided_slice %1 {offsets = [0, 1, 0], sizes = [8, 8, 4], strides = [1, 1, 1]} : vector<10x10x4xbf16> to vector<8x8x4xbf16>
    %10 = vector.shape_cast %9 : vector<8x8x4xbf16> to vector<64x4xbf16>
    %c0_8 = arith.constant 0 : index
    %c1 = arith.constant 1 : index
    %c0_9 = arith.constant 0 : index
    %c0_10 = arith.constant 0 : index
    %11 = vector.load %arg2[%c0_8, %c1, %c0_9, %c0_10] : memref<3x3x4x8xbf16, #tpu.memory_space<vmem>>, vector<1x1x4x8xbf16>
    %12 = vector.shape_cast %11 : vector<1x1x4x8xbf16> to vector<4x8xbf16>
    %cst_11 = arith.constant dense<0.000000e+00> : vector<64x8xf32>
    %13 = tpu.matmul %10, %12, %cst_11 {dimension_numbers = #tpu.dot_dimension_numbers<[1], [0], [0], [1], [0, 0, 1, 1], [], []>} : vector<64x4xbf16>, vector<4x8xbf16>, vector<64x8xf32> -> vector<64x8xf32>
    %14 = arith.addf %8, %13 : vector<64x8xf32>
    %15 = vector.extract_strided_slice %1 {offsets = [0, 2, 0], sizes = [8, 8, 4], strides = [1, 1, 1]} : vector<10x10x4xbf16> to vector<8x8x4xbf16>
    %16 = vector.shape_cast %15 : vector<8x8x4xbf16> to vector<64x4xbf16>
    %c0_12 = arith.constant 0 : index
    %c2 = arith.constant 2 : index
    %c0_13 = arith.constant 0 : index
    %c0_14 = arith.constant 0 : index
    %17 = vector.load %arg2[%c0_12, %c2, %c0_13, %c0_14] : memref<3x3x4x8xbf16, #tpu.memory_space<vmem>>, vector<1x1x4x8xbf16>
    %18 = vector.shape_cast %17 : vector<1x1x4x8xbf16> to vector<4x8xbf16>
    %cst_15 = arith.constant dense<0.000000e+00> : vector<64x8xf32>
    %19 = tpu.matmul %16, %18, %cst_15 {dimension_numbers = #tpu.dot_dimension_numbers<[1], [0], [0], [1], [0, 0, 1, 1], [], []>} : vector<64x4xbf16>, vector<4x8xbf16>, vector<64x8xf32> -> vector<64x8xf32>
    %20 = arith.addf %14, %19 : vector<64x8xf32>
    %21 = vector.extract_strided_slice %1 {offsets = [1, 0, 0], sizes = [8, 8, 4], strides = [1, 1, 1]} : vector<10x10x4xbf16> to vector<8x8x4xbf16>
    %22 = vector.shape_cast %21 : vector<8x8x4xbf16> to vector<64x4xbf16>
    %c1_16 = arith.constant 1 : index
    %c0_17 = arith.constant 0 : index
    %c0_18 = arith.constant 0 : index
    %c0_19 = arith.constant 0 : index
    %23 = vector.load %arg2[%c1_16, %c0_17, %c0_18, %c0_19] : memref<3x3x4x8xbf16, #tpu.memory_space<vmem>>, vector<1x1x4x8xbf16>
    %24 = vector.shape_cast %23 : vector<1x1x4x8xbf16> to vector<4x8xbf16>
    %cst_20 = arith.constant dense<0.000000e+00> : vector<64x8xf32>
    %25 = tpu.matmul %22, %24, %cst_20 {dimension_numbers = #tpu.dot_dimension_numbers<[1], [0], [0], [1], [0, 0, 1, 1], [], []>} : vector<64x4xbf16>, vector<4x8xbf16>, vector<64x8xf32> -> vector<64x8xf32>
    %26 = arith.addf %20, %25 : vector<64x8xf32>
    %27 = vector.extract_strided_slice %1 {offsets = [1, 1, 0], sizes = [8, 8, 4], strides = [1, 1, 1]} : vector<10x10x4xbf16> to vector<8x8x4xbf16>
    %28 = vector.shape_cast %27 : vector<8x8x4xbf16> to vector<64x4xbf16>
    %c1_21 = arith.constant 1 : index
    %c1_22 = arith.constant 1 : index
    %c0_23 = arith.constant 0 : index
    %c0_24 = arith.constant 0 : index
    %29 = vector.load %arg2[%c1_21, %c1_22, %c0_23, %c0_24] : memref<3x3x4x8xbf16, #tpu.memory_space<vmem>>, vector<1x1x4x8xbf16>
    %30 = vector.shape_cast %29 : vector<1x1x4x8xbf16> to vector<4x8xbf16>
    %cst_25 = arith.constant dense<0.000000e+00> : vector<64x8xf32>
    %31 = tpu.matmul %28, %30, %cst_25 {dimension_numbers = #tpu.dot_dimension_numbers<[1], [0], [0], [1], [0, 0, 1, 1], [], []>} : vector<64x4xbf16>, vector<4x8xbf16>, vector<64x8xf32> -> vector<64x8xf32>
    %32 = arith.addf %26, %31 : vector<64x8xf32>
    %33 = vector.extract_strided_slice %1 {offsets = [1, 2, 0], sizes = [8, 8, 4], strides = [1, 1, 1]} : vector<10x10x4xbf16> to vector<8x8x4xbf16>
    %34 = vector.shape_cast %33 : vector<8x8x4xbf16> to vector<64x4xbf16>
    %c1_26 = arith.constant 1 : index
    %c2_27 = arith.constant 2 : index
    %c0_28 = arith.constant 0 : index
    %c0_29 = arith.constant 0 : index
    %35 = vector.load %arg2[%c1_26, %c2_27, %c0_28, %c0_29] : memref<3x3x4x8xbf16, #tpu.memory_space<vmem>>, vector<1x1x4x8xbf16>
    %36 = vector.shape_cast %35 : vector<1x1x4x8xbf16> to vector<4x8xbf16>
    %cst_30 = arith.constant dense<0.000000e+00> : vector<64x8xf32>
    %37 = tpu.matmul %34, %36, %cst_30 {dimension_numbers = #tpu.dot_dimension_numbers<[1], [0], [0], [1], [0, 0, 1, 1], [], []>} : vector<64x4xbf16>, vector<4x8xbf16>, vector<64x8xf32> -> vector<64x8xf32>
    %38 = arith.addf %32, %37 : vector<64x8xf32>
    %39 = vector.extract_strided_slice %1 {offsets = [2, 0, 0], sizes = [8, 8, 4], strides = [1, 1, 1]} : vector<10x10x4xbf16> to vector<8x8x4xbf16>
    %40 = vector.shape_cast %39 : vector<8x8x4xbf16> to vector<64x4xbf16>
    %c2_31 = arith.constant 2 : index
    %c0_32 = arith.constant 0 : index
    %c0_33 = arith.constant 0 : index
    %c0_34 = arith.constant 0 : index
    %41 = vector.load %arg2[%c2_31, %c0_32, %c0_33, %c0_34] : memref<3x3x4x8xbf16, #tpu.memory_space<vmem>>, vector<1x1x4x8xbf16>
    %42 = vector.shape_cast %41 : vector<1x1x4x8xbf16> to vector<4x8xbf16>
    %cst_35 = arith.constant dense<0.000000e+00> : vector<64x8xf32>
    %43 = tpu.matmul %40, %42, %cst_35 {dimension_numbers = #tpu.dot_dimension_numbers<[1], [0], [0], [1], [0, 0, 1, 1], [], []>} : vector<64x4xbf16>, vector<4x8xbf16>, vector<64x8xf32> -> vector<64x8xf32>
    %44 = arith.addf %38, %43 : vector<64x8xf32>
    %45 = vector.extract_strided_slice %1 {offsets = [2, 1, 0], sizes = [8, 8, 4], strides = [1, 1, 1]} : vector<10x10x4xbf16> to vector<8x8x4xbf16>
    %46 = vector.shape_cast %45 : vector<8x8x4xbf16> to vector<64x4xbf16>
    %c2_36 = arith.constant 2 : index
    %c1_37 = arith.constant 1 : index
    %c0_38 = arith.constant 0 : index
    %c0_39 = arith.constant 0 : index
    %47 = vector.load %arg2[%c2_36, %c1_37, %c0_38, %c0_39] : memref<3x3x4x8xbf16, #tpu.memory_space<vmem>>, vector<1x1x4x8xbf16>
    %48 = vector.shape_cast %47 : vector<1x1x4x8xbf16> to vector<4x8xbf16>
    %cst_40 = arith.constant dense<0.000000e+00> : vector<64x8xf32>
    %49 = tpu.matmul %46, %48, %cst_40 {dimension_numbers = #tpu.dot_dimension_numbers<[1], [0], [0], [1], [0, 0, 1, 1], [], []>} : vector<64x4xbf16>, vector<4x8xbf16>, vector<64x8xf32> -> vector<64x8xf32>
    %50 = arith.addf %44, %49 : vector<64x8xf32>
    %51 = vector.extract_strided_slice %1 {offsets = [2, 2, 0], sizes = [8, 8, 4], strides = [1, 1, 1]} : vector<10x10x4xbf16> to vector<8x8x4xbf16>
    %52 = vector.shape_cast %51 : vector<8x8x4xbf16> to vector<64x4xbf16>
    %c2_41 = arith.constant 2 : index
    %c2_42 = arith.constant 2 : index
    %c0_43 = arith.constant 0 : index
    %c0_44 = arith.constant 0 : index
    %53 = vector.load %arg2[%c2_41, %c2_42, %c0_43, %c0_44] : memref<3x3x4x8xbf16, #tpu.memory_space<vmem>>, vector<1x1x4x8xbf16>
    %54 = vector.shape_cast %53 : vector<1x1x4x8xbf16> to vector<4x8xbf16>
    %cst_45 = arith.constant dense<0.000000e+00> : vector<64x8xf32>
    %55 = tpu.matmul %52, %54, %cst_45 {dimension_numbers = #tpu.dot_dimension_numbers<[1], [0], [0], [1], [0, 0, 1, 1], [], []>} : vector<64x4xbf16>, vector<4x8xbf16>, vector<64x8xf32> -> vector<64x8xf32>
    %56 = arith.addf %50, %55 : vector<64x8xf32>
    %c0_46 = arith.constant 0 : index
    %c0_47 = arith.constant 0 : index
    %57 = vector.load %arg3[%c0_46, %c0_47] : memref<1x8xf32, #tpu.memory_space<vmem>>, vector<1x8xf32>
    %58 = vector.broadcast %57 : vector<1x8xf32> to vector<64x8xf32>
    %59 = arith.addf %56, %58 : vector<64x8xf32>
    %cst_48 = arith.constant 0.000000e+00 : f32
    %60 = vector.broadcast %cst_48 : f32 to vector<64x8xf32>
    %61 = arith.cmpf oge, %59, %60 : vector<64x8xf32>
    %cst_49 = arith.constant 1.000000e-01 : f32
    %62 = vector.broadcast %cst_49 : f32 to vector<64x8xf32>
    %63 = arith.mulf %62, %59 : vector<64x8xf32>
    %64 = arith.select %61, %59, %63 : vector<64x8xi1>, vector<64x8xf32>
    %65 = arith.truncf %64 : vector<64x8xf32> to vector<64x8xbf16>
    %c0_50 = arith.constant 0 : index
    %c0_51 = arith.constant 0 : index
    %c0_52 = arith.constant 0 : index
    %66 = vector.load %arg4[%c0_50, %c0_51, %c0_52] : memref<1x64x8xbf16, #tpu.memory_space<vmem>>, vector<1x64x8xbf16>
    %67 = vector.shape_cast %66 : vector<1x64x8xbf16> to vector<64x8xbf16>
    %68 = vector.shape_cast %65 : vector<64x8xbf16> to vector<1x64x8xbf16>
    tpu.vector_store %arg4[%c0_50, %c0_51, %c0_52], %68 {strides = array<i32>} : memref<1x64x8xbf16, #tpu.memory_space<vmem>>, vector<1x64x8xbf16>,
    return
  }
  func.func @transform_0(%arg0: i32) -> (i32, i32, i32, i32) {
    %c0_i32 = arith.constant 0 : i32
    %c0_i32_0 = arith.constant 0 : i32
    %c0_i32_1 = arith.constant 0 : i32
    %c0_i32_2 = arith.constant 0 : i32
    return %arg0, %c0_i32, %c0_i32_0, %c0_i32_1 : i32, i32, i32, i32
  }
  func.func @transform_1(%arg0: i32) -> (i32, i32, i32, i32) {
    %c0_i32 = arith.constant 0 : i32
    %c0_i32_0 = arith.constant 0 : i32
    %c0_i32_1 = arith.constant 0 : i32
    %c0_i32_2 = arith.constant 0 : i32
    %c0_i32_3 = arith.constant 0 : i32
    return %c0_i32, %c0_i32_0, %c0_i32_1, %c0_i32_2 : i32, i32, i32, i32
  }
  func.func @transform_2(%arg0: i32) -> (i32, i32) {
    %c0_i32 = arith.constant 0 : i32
    %c0_i32_0 = arith.constant 0 : i32
    %c0_i32_1 = arith.constant 0 : i32
    return %c0_i32, %c0_i32_0 : i32, i32
  }
  func.func @transform_3(%arg0: i32) -> (i32, i32, i32) {
    %c0_i32 = arith.constant 0 : i32
    %c0_i32_0 = arith.constant 0 : i32
    %c0_i32_1 = arith.constant 0 : i32
    return %arg0, %c0_i32, %c0_i32_0 : i32, i32, i32
  }
}

module attributes {stable_mosaic.version = 11 : i64} {
  func.func @_conv3x3_res_kernel(%arg0: i32, %arg1: memref<1x10x10x8xbf16, #tpu.memory_space<vmem>>, %arg2: memref<3x3x8x8xbf16, #tpu.memory_space<vmem>>, %arg3: memref<1x8xf32, #tpu.memory_space<vmem>>, %arg4: memref<1x64x8xbf16, #tpu.memory_space<vmem>>, %arg5: memref<1x64x8xbf16, #tpu.memory_space<vmem>>) attributes {dimension_semantics = [#tpu.dimension_semantics<parallel>], iteration_bounds = array<i64: 2>, scalar_prefetch = 0 : i64, scratch_operands = 0 : i64, tpu.core_type = #tpu.core_type<tc>, window_params = [{transform_indices = @transform_0, window_bounds = array<i64: 1, 10, 10, 8>}, {pipeline_mode = #tpu.pipeline_mode<synchronous>, transform_indices = @transform_1, window_bounds = array<i64: 3, 3, 8, 8>}, {pipeline_mode = #tpu.pipeline_mode<synchronous>, transform_indices = @transform_2, window_bounds = array<i64: 1, 8>}, {transform_indices = @transform_3, window_bounds = array<i64: 1, 64, 8>}, {transform_indices = @transform_4, window_bounds = array<i64: 1, 64, 8>}]} {
    %c0 = arith.constant 0 : index
    %c0_0 = arith.constant 0 : index
    %c0_1 = arith.constant 0 : index
    %c0_2 = arith.constant 0 : index
    %0 = vector.load %arg1[%c0, %c0_0, %c0_1, %c0_2] : memref<1x10x10x8xbf16, #tpu.memory_space<vmem>>, vector<1x10x10x8xbf16>
    %1 = vector.shape_cast %0 : vector<1x10x10x8xbf16> to vector<10x10x8xbf16>
    %cst = arith.constant 0.000000e+00 : f32
    %2 = vector.broadcast %cst : f32 to vector<64x8xf32>
    %3 = vector.extract_strided_slice %1 {offsets = [0, 0, 0], sizes = [8, 8, 8], strides = [1, 1, 1]} : vector<10x10x8xbf16> to vector<8x8x8xbf16>
    %4 = vector.shape_cast %3 : vector<8x8x8xbf16> to vector<64x8xbf16>
    %c0_3 = arith.constant 0 : index
    %c0_4 = arith.constant 0 : index
    %c0_5 = arith.constant 0 : index
    %c0_6 = arith.constant 0 : index
    %5 = vector.load %arg2[%c0_3, %c0_4, %c0_5, %c0_6] : memref<3x3x8x8xbf16, #tpu.memory_space<vmem>>, vector<1x1x8x8xbf16>
    %6 = vector.shape_cast %5 : vector<1x1x8x8xbf16> to vector<8x8xbf16>
    %cst_7 = arith.constant dense<0.000000e+00> : vector<64x8xf32>
    %7 = tpu.matmul %4, %6, %cst_7 {dimension_numbers = #tpu.dot_dimension_numbers<[1], [0], [0], [1], [0, 0, 1, 1], [], []>} : vector<64x8xbf16>, vector<8x8xbf16>, vector<64x8xf32> -> vector<64x8xf32>
    %8 = arith.addf %2, %7 : vector<64x8xf32>
    %9 = vector.extract_strided_slice %1 {offsets = [0, 1, 0], sizes = [8, 8, 8], strides = [1, 1, 1]} : vector<10x10x8xbf16> to vector<8x8x8xbf16>
    %10 = vector.shape_cast %9 : vector<8x8x8xbf16> to vector<64x8xbf16>
    %c0_8 = arith.constant 0 : index
    %c1 = arith.constant 1 : index
    %c0_9 = arith.constant 0 : index
    %c0_10 = arith.constant 0 : index
    %11 = vector.load %arg2[%c0_8, %c1, %c0_9, %c0_10] : memref<3x3x8x8xbf16, #tpu.memory_space<vmem>>, vector<1x1x8x8xbf16>
    %12 = vector.shape_cast %11 : vector<1x1x8x8xbf16> to vector<8x8xbf16>
    %cst_11 = arith.constant dense<0.000000e+00> : vector<64x8xf32>
    %13 = tpu.matmul %10, %12, %cst_11 {dimension_numbers = #tpu.dot_dimension_numbers<[1], [0], [0], [1], [0, 0, 1, 1], [], []>} : vector<64x8xbf16>, vector<8x8xbf16>, vector<64x8xf32> -> vector<64x8xf32>
    %14 = arith.addf %8, %13 : vector<64x8xf32>
    %15 = vector.extract_strided_slice %1 {offsets = [0, 2, 0], sizes = [8, 8, 8], strides = [1, 1, 1]} : vector<10x10x8xbf16> to vector<8x8x8xbf16>
    %16 = vector.shape_cast %15 : vector<8x8x8xbf16> to vector<64x8xbf16>
    %c0_12 = arith.constant 0 : index
    %c2 = arith.constant 2 : index
    %c0_13 = arith.constant 0 : index
    %c0_14 = arith.constant 0 : index
    %17 = vector.load %arg2[%c0_12, %c2, %c0_13, %c0_14] : memref<3x3x8x8xbf16, #tpu.memory_space<vmem>>, vector<1x1x8x8xbf16>
    %18 = vector.shape_cast %17 : vector<1x1x8x8xbf16> to vector<8x8xbf16>
    %cst_15 = arith.constant dense<0.000000e+00> : vector<64x8xf32>
    %19 = tpu.matmul %16, %18, %cst_15 {dimension_numbers = #tpu.dot_dimension_numbers<[1], [0], [0], [1], [0, 0, 1, 1], [], []>} : vector<64x8xbf16>, vector<8x8xbf16>, vector<64x8xf32> -> vector<64x8xf32>
    %20 = arith.addf %14, %19 : vector<64x8xf32>
    %21 = vector.extract_strided_slice %1 {offsets = [1, 0, 0], sizes = [8, 8, 8], strides = [1, 1, 1]} : vector<10x10x8xbf16> to vector<8x8x8xbf16>
    %22 = vector.shape_cast %21 : vector<8x8x8xbf16> to vector<64x8xbf16>
    %c1_16 = arith.constant 1 : index
    %c0_17 = arith.constant 0 : index
    %c0_18 = arith.constant 0 : index
    %c0_19 = arith.constant 0 : index
    %23 = vector.load %arg2[%c1_16, %c0_17, %c0_18, %c0_19] : memref<3x3x8x8xbf16, #tpu.memory_space<vmem>>, vector<1x1x8x8xbf16>
    %24 = vector.shape_cast %23 : vector<1x1x8x8xbf16> to vector<8x8xbf16>
    %cst_20 = arith.constant dense<0.000000e+00> : vector<64x8xf32>
    %25 = tpu.matmul %22, %24, %cst_20 {dimension_numbers = #tpu.dot_dimension_numbers<[1], [0], [0], [1], [0, 0, 1, 1], [], []>} : vector<64x8xbf16>, vector<8x8xbf16>, vector<64x8xf32> -> vector<64x8xf32>
    %26 = arith.addf %20, %25 : vector<64x8xf32>
    %27 = vector.extract_strided_slice %1 {offsets = [1, 1, 0], sizes = [8, 8, 8], strides = [1, 1, 1]} : vector<10x10x8xbf16> to vector<8x8x8xbf16>
    %28 = vector.shape_cast %27 : vector<8x8x8xbf16> to vector<64x8xbf16>
    %c1_21 = arith.constant 1 : index
    %c1_22 = arith.constant 1 : index
    %c0_23 = arith.constant 0 : index
    %c0_24 = arith.constant 0 : index
    %29 = vector.load %arg2[%c1_21, %c1_22, %c0_23, %c0_24] : memref<3x3x8x8xbf16, #tpu.memory_space<vmem>>, vector<1x1x8x8xbf16>
    %30 = vector.shape_cast %29 : vector<1x1x8x8xbf16> to vector<8x8xbf16>
    %cst_25 = arith.constant dense<0.000000e+00> : vector<64x8xf32>
    %31 = tpu.matmul %28, %30, %cst_25 {dimension_numbers = #tpu.dot_dimension_numbers<[1], [0], [0], [1], [0, 0, 1, 1], [], []>} : vector<64x8xbf16>, vector<8x8xbf16>, vector<64x8xf32> -> vector<64x8xf32>
    %32 = arith.addf %26, %31 : vector<64x8xf32>
    %33 = vector.extract_strided_slice %1 {offsets = [1, 2, 0], sizes = [8, 8, 8], strides = [1, 1, 1]} : vector<10x10x8xbf16> to vector<8x8x8xbf16>
    %34 = vector.shape_cast %33 : vector<8x8x8xbf16> to vector<64x8xbf16>
    %c1_26 = arith.constant 1 : index
    %c2_27 = arith.constant 2 : index
    %c0_28 = arith.constant 0 : index
    %c0_29 = arith.constant 0 : index
    %35 = vector.load %arg2[%c1_26, %c2_27, %c0_28, %c0_29] : memref<3x3x8x8xbf16, #tpu.memory_space<vmem>>, vector<1x1x8x8xbf16>
    %36 = vector.shape_cast %35 : vector<1x1x8x8xbf16> to vector<8x8xbf16>
    %cst_30 = arith.constant dense<0.000000e+00> : vector<64x8xf32>
    %37 = tpu.matmul %34, %36, %cst_30 {dimension_numbers = #tpu.dot_dimension_numbers<[1], [0], [0], [1], [0, 0, 1, 1], [], []>} : vector<64x8xbf16>, vector<8x8xbf16>, vector<64x8xf32> -> vector<64x8xf32>
    %38 = arith.addf %32, %37 : vector<64x8xf32>
    %39 = vector.extract_strided_slice %1 {offsets = [2, 0, 0], sizes = [8, 8, 8], strides = [1, 1, 1]} : vector<10x10x8xbf16> to vector<8x8x8xbf16>
    %40 = vector.shape_cast %39 : vector<8x8x8xbf16> to vector<64x8xbf16>
    %c2_31 = arith.constant 2 : index
    %c0_32 = arith.constant 0 : index
    %c0_33 = arith.constant 0 : index
    %c0_34 = arith.constant 0 : index
    %41 = vector.load %arg2[%c2_31, %c0_32, %c0_33, %c0_34] : memref<3x3x8x8xbf16, #tpu.memory_space<vmem>>, vector<1x1x8x8xbf16>
    %42 = vector.shape_cast %41 : vector<1x1x8x8xbf16> to vector<8x8xbf16>
    %cst_35 = arith.constant dense<0.000000e+00> : vector<64x8xf32>
    %43 = tpu.matmul %40, %42, %cst_35 {dimension_numbers = #tpu.dot_dimension_numbers<[1], [0], [0], [1], [0, 0, 1, 1], [], []>} : vector<64x8xbf16>, vector<8x8xbf16>, vector<64x8xf32> -> vector<64x8xf32>
    %44 = arith.addf %38, %43 : vector<64x8xf32>
    %45 = vector.extract_strided_slice %1 {offsets = [2, 1, 0], sizes = [8, 8, 8], strides = [1, 1, 1]} : vector<10x10x8xbf16> to vector<8x8x8xbf16>
    %46 = vector.shape_cast %45 : vector<8x8x8xbf16> to vector<64x8xbf16>
    %c2_36 = arith.constant 2 : index
    %c1_37 = arith.constant 1 : index
    %c0_38 = arith.constant 0 : index
    %c0_39 = arith.constant 0 : index
    %47 = vector.load %arg2[%c2_36, %c1_37, %c0_38, %c0_39] : memref<3x3x8x8xbf16, #tpu.memory_space<vmem>>, vector<1x1x8x8xbf16>
    %48 = vector.shape_cast %47 : vector<1x1x8x8xbf16> to vector<8x8xbf16>
    %cst_40 = arith.constant dense<0.000000e+00> : vector<64x8xf32>
    %49 = tpu.matmul %46, %48, %cst_40 {dimension_numbers = #tpu.dot_dimension_numbers<[1], [0], [0], [1], [0, 0, 1, 1], [], []>} : vector<64x8xbf16>, vector<8x8xbf16>, vector<64x8xf32> -> vector<64x8xf32>
    %50 = arith.addf %44, %49 : vector<64x8xf32>
    %51 = vector.extract_strided_slice %1 {offsets = [2, 2, 0], sizes = [8, 8, 8], strides = [1, 1, 1]} : vector<10x10x8xbf16> to vector<8x8x8xbf16>
    %52 = vector.shape_cast %51 : vector<8x8x8xbf16> to vector<64x8xbf16>
    %c2_41 = arith.constant 2 : index
    %c2_42 = arith.constant 2 : index
    %c0_43 = arith.constant 0 : index
    %c0_44 = arith.constant 0 : index
    %53 = vector.load %arg2[%c2_41, %c2_42, %c0_43, %c0_44] : memref<3x3x8x8xbf16, #tpu.memory_space<vmem>>, vector<1x1x8x8xbf16>
    %54 = vector.shape_cast %53 : vector<1x1x8x8xbf16> to vector<8x8xbf16>
    %cst_45 = arith.constant dense<0.000000e+00> : vector<64x8xf32>
    %55 = tpu.matmul %52, %54, %cst_45 {dimension_numbers = #tpu.dot_dimension_numbers<[1], [0], [0], [1], [0, 0, 1, 1], [], []>} : vector<64x8xbf16>, vector<8x8xbf16>, vector<64x8xf32> -> vector<64x8xf32>
    %56 = arith.addf %50, %55 : vector<64x8xf32>
    %c0_46 = arith.constant 0 : index
    %c0_47 = arith.constant 0 : index
    %57 = vector.load %arg3[%c0_46, %c0_47] : memref<1x8xf32, #tpu.memory_space<vmem>>, vector<1x8xf32>
    %58 = vector.broadcast %57 : vector<1x8xf32> to vector<64x8xf32>
    %59 = arith.addf %56, %58 : vector<64x8xf32>
    %cst_48 = arith.constant 0.000000e+00 : f32
    %60 = vector.broadcast %cst_48 : f32 to vector<64x8xf32>
    %61 = arith.cmpf oge, %59, %60 : vector<64x8xf32>
    %cst_49 = arith.constant 1.000000e-01 : f32
    %62 = vector.broadcast %cst_49 : f32 to vector<64x8xf32>
    %63 = arith.mulf %62, %59 : vector<64x8xf32>
    %64 = arith.select %61, %59, %63 : vector<64x8xi1>, vector<64x8xf32>
    %c0_50 = arith.constant 0 : index
    %c0_51 = arith.constant 0 : index
    %c0_52 = arith.constant 0 : index
    %65 = vector.load %arg4[%c0_50, %c0_51, %c0_52] : memref<1x64x8xbf16, #tpu.memory_space<vmem>>, vector<1x64x8xbf16>
    %66 = vector.shape_cast %65 : vector<1x64x8xbf16> to vector<64x8xbf16>
    %67 = arith.extf %66 : vector<64x8xbf16> to vector<64x8xf32>
    %68 = arith.addf %64, %67 : vector<64x8xf32>
    %69 = arith.truncf %68 : vector<64x8xf32> to vector<64x8xbf16>
    %c0_53 = arith.constant 0 : index
    %c0_54 = arith.constant 0 : index
    %c0_55 = arith.constant 0 : index
    %70 = vector.load %arg5[%c0_53, %c0_54, %c0_55] : memref<1x64x8xbf16, #tpu.memory_space<vmem>>, vector<1x64x8xbf16>
    %71 = vector.shape_cast %70 : vector<1x64x8xbf16> to vector<64x8xbf16>
    %72 = vector.shape_cast %69 : vector<64x8xbf16> to vector<1x64x8xbf16>
    tpu.vector_store %arg5[%c0_53, %c0_54, %c0_55], %72 {strides = array<i32>} : memref<1x64x8xbf16, #tpu.memory_space<vmem>>, vector<1x64x8xbf16>,
    return
  }
  func.func @transform_0(%arg0: i32) -> (i32, i32, i32, i32) {
    %c0_i32 = arith.constant 0 : i32
    %c0_i32_0 = arith.constant 0 : i32
    %c0_i32_1 = arith.constant 0 : i32
    %c0_i32_2 = arith.constant 0 : i32
    return %arg0, %c0_i32, %c0_i32_0, %c0_i32_1 : i32, i32, i32, i32
  }
  func.func @transform_1(%arg0: i32) -> (i32, i32, i32, i32) {
    %c0_i32 = arith.constant 0 : i32
    %c0_i32_0 = arith.constant 0 : i32
    %c0_i32_1 = arith.constant 0 : i32
    %c0_i32_2 = arith.constant 0 : i32
    %c0_i32_3 = arith.constant 0 : i32
    return %c0_i32, %c0_i32_0, %c0_i32_1, %c0_i32_2 : i32, i32, i32, i32
  }
  func.func @transform_2(%arg0: i32) -> (i32, i32) {
    %c0_i32 = arith.constant 0 : i32
    %c0_i32_0 = arith.constant 0 : i32
    %c0_i32_1 = arith.constant 0 : i32
    return %c0_i32, %c0_i32_0 : i32, i32
  }
  func.func @transform_3(%arg0: i32) -> (i32, i32, i32) {
    %c0_i32 = arith.constant 0 : i32
    %c0_i32_0 = arith.constant 0 : i32
    %c0_i32_1 = arith.constant 0 : i32
    return %arg0, %c0_i32, %c0_i32_0 : i32, i32, i32
  }
  func.func @transform_4(%arg0: i32) -> (i32, i32, i32) {
    %c0_i32 = arith.constant 0 : i32
    %c0_i32_0 = arith.constant 0 : i32
    %c0_i32_1 = arith.constant 0 : i32
    return %arg0, %c0_i32, %c0_i32_0 : i32, i32, i32
  }
}

module attributes {stable_mosaic.version = 11 : i64} {
  func.func @_matmul_bias_kernel(%arg0: i32, %arg1: i32, %arg2: memref<16x8xbf16, #tpu.memory_space<vmem>>, %arg3: memref<8x16xbf16, #tpu.memory_space<vmem>>, %arg4: memref<1x16xf32, #tpu.memory_space<vmem>>, %arg5: memref<16x16xbf16, #tpu.memory_space<vmem>>, %arg6: memref<16x16xf32, #tpu.memory_space<vmem>>) attributes {dimension_semantics = [#tpu.dimension_semantics<parallel>, #tpu.dimension_semantics<arbitrary>], iteration_bounds = array<i64: 2, 1>, scalar_prefetch = 0 : i64, scratch_operands = 1 : i64, tpu.core_type = #tpu.core_type<tc>, window_params = [{transform_indices = @transform_0, window_bounds = array<i64: 16, 8>}, {transform_indices = @transform_1, window_bounds = array<i64: 8, 16>}, {pipeline_mode = #tpu.pipeline_mode<synchronous>, transform_indices = @transform_2, window_bounds = array<i64: 1, 16>}, {transform_indices = @transform_3, window_bounds = array<i64: 16, 16>}]} {
    %c0_i32 = arith.constant 0 : i32
    %0 = arith.cmpi eq, %arg1, %c0_i32 : i32
    %1 = arith.extui %0 : i1 to i32
    %c0_i32_0 = arith.constant 0 : i32
    %2 = arith.cmpi ne, %1, %c0_i32_0 : i32
    scf.if %2 {
      %cst_10 = arith.constant 0.000000e+00 : f32
      %12 = vector.broadcast %cst_10 : f32 to vector<16x16xf32>
      %c0_11 = arith.constant 0 : index
      %c0_12 = arith.constant 0 : index
      %13 = vector.load %arg6[%c0_11, %c0_12] : memref<16x16xf32, #tpu.memory_space<vmem>>, vector<16x16xf32>
      tpu.vector_store %arg6[%c0_11, %c0_12], %12 {strides = array<i32>} : memref<16x16xf32, #tpu.memory_space<vmem>>, vector<16x16xf32>,
    } else {
    }
    %c0 = arith.constant 0 : index
    %c0_1 = arith.constant 0 : index
    %3 = vector.load %arg6[%c0, %c0_1] : memref<16x16xf32, #tpu.memory_space<vmem>>, vector<16x16xf32>
    %c0_2 = arith.constant 0 : index
    %c0_3 = arith.constant 0 : index
    %4 = vector.load %arg2[%c0_2, %c0_3] : memref<16x8xbf16, #tpu.memory_space<vmem>>, vector<16x8xbf16>
    %c0_4 = arith.constant 0 : index
    %c0_5 = arith.constant 0 : index
    %5 = vector.load %arg3[%c0_4, %c0_5] : memref<8x16xbf16, #tpu.memory_space<vmem>>, vector<8x16xbf16>
    %cst = arith.constant dense<0.000000e+00> : vector<16x16xf32>
    %6 = tpu.matmul %4, %5, %cst {dimension_numbers = #tpu.dot_dimension_numbers<[1], [0], [0], [1], [0, 0, 1, 1], [], []>} : vector<16x8xbf16>, vector<8x16xbf16>, vector<16x16xf32> -> vector<16x16xf32>
    %7 = arith.addf %3, %6 : vector<16x16xf32>
    %c0_6 = arith.constant 0 : index
    %c0_7 = arith.constant 0 : index
    %8 = vector.load %arg6[%c0_6, %c0_7] : memref<16x16xf32, #tpu.memory_space<vmem>>, vector<16x16xf32>
    tpu.vector_store %arg6[%c0_6, %c0_7], %7 {strides = array<i32>} : memref<16x16xf32, #tpu.memory_space<vmem>>, vector<16x16xf32>,
    %c0_i32_8 = arith.constant 0 : i32
    %9 = arith.cmpi eq, %arg1, %c0_i32_8 : i32
    %10 = arith.extui %9 : i1 to i32
    %c0_i32_9 = arith.constant 0 : i32
    %11 = arith.cmpi ne, %10, %c0_i32_9 : i32
    scf.if %11 {
      %c0_10 = arith.constant 0 : index
      %c0_11 = arith.constant 0 : index
      %12 = vector.load %arg6[%c0_10, %c0_11] : memref<16x16xf32, #tpu.memory_space<vmem>>, vector<16x16xf32>
      %c0_12 = arith.constant 0 : index
      %c0_13 = arith.constant 0 : index
      %13 = vector.load %arg4[%c0_12, %c0_13] : memref<1x16xf32, #tpu.memory_space<vmem>>, vector<1x16xf32>
      %14 = vector.broadcast %13 : vector<1x16xf32> to vector<16x16xf32>
      %15 = arith.addf %12, %14 : vector<16x16xf32>
      %cst_14 = arith.constant 0.000000e+00 : f32
      %16 = vector.broadcast %cst_14 : f32 to vector<16x16xf32>
      %17 = arith.cmpf oge, %15, %16 : vector<16x16xf32>
      %cst_15 = arith.constant 1.000000e-01 : f32
      %18 = vector.broadcast %cst_15 : f32 to vector<16x16xf32>
      %19 = arith.mulf %18, %15 : vector<16x16xf32>
      %20 = arith.select %17, %15, %19 : vector<16x16xi1>, vector<16x16xf32>
      %21 = arith.truncf %20 : vector<16x16xf32> to vector<16x16xbf16>
      %c0_16 = arith.constant 0 : index
      %c0_17 = arith.constant 0 : index
      %22 = vector.load %arg5[%c0_16, %c0_17] : memref<16x16xbf16, #tpu.memory_space<vmem>>, vector<16x16xbf16>
      tpu.vector_store %arg5[%c0_16, %c0_17], %21 {strides = array<i32>} : memref<16x16xbf16, #tpu.memory_space<vmem>>, vector<16x16xbf16>,
    } else {
    }
    return
  }
  func.func @transform_0(%arg0: i32, %arg1: i32) -> (i32, i32) {
    %c0_i32 = arith.constant 0 : i32
    return %arg0, %arg1 : i32, i32
  }
  func.func @transform_1(%arg0: i32, %arg1: i32) -> (i32, i32) {
    %c0_i32 = arith.constant 0 : i32
    %c0_i32_0 = arith.constant 0 : i32
    return %arg1, %c0_i32 : i32, i32
  }
  func.func @transform_2(%arg0: i32, %arg1: i32) -> (i32, i32) {
    %c0_i32 = arith.constant 0 : i32
    %c0_i32_0 = arith.constant 0 : i32
    %c0_i32_1 = arith.constant 0 : i32
    return %c0_i32, %c0_i32_0 : i32, i32
  }
  func.func @transform_3(%arg0: i32, %arg1: i32) -> (i32, i32) {
    %c0_i32 = arith.constant 0 : i32
    %c0_i32_0 = arith.constant 0 : i32
    return %arg0, %c0_i32 : i32, i32
  }
}

module attributes {stable_mosaic.version = 11 : i64} {
  func.func @_matmul_bias_kernel(%arg0: i32, %arg1: i32, %arg2: memref<8x256xbf16, #tpu.memory_space<vmem>>, %arg3: memref<256x64xbf16, #tpu.memory_space<vmem>>, %arg4: memref<1x64xf32, #tpu.memory_space<vmem>>, %arg5: memref<8x64xf32, #tpu.memory_space<vmem>>, %arg6: memref<8x64xf32, #tpu.memory_space<vmem>>) attributes {dimension_semantics = [#tpu.dimension_semantics<parallel>, #tpu.dimension_semantics<arbitrary>], iteration_bounds = array<i64: 1, 1>, scalar_prefetch = 0 : i64, scratch_operands = 1 : i64, tpu.core_type = #tpu.core_type<tc>, window_params = [{transform_indices = @transform_0, window_bounds = array<i64: 8, 256>}, {transform_indices = @transform_1, window_bounds = array<i64: 256, 64>}, {pipeline_mode = #tpu.pipeline_mode<synchronous>, transform_indices = @transform_2, window_bounds = array<i64: 1, 64>}, {transform_indices = @transform_3, window_bounds = array<i64: 8, 64>}]} {
    %c0_i32 = arith.constant 0 : i32
    %0 = arith.cmpi eq, %arg1, %c0_i32 : i32
    %1 = arith.extui %0 : i1 to i32
    %c0_i32_0 = arith.constant 0 : i32
    %2 = arith.cmpi ne, %1, %c0_i32_0 : i32
    scf.if %2 {
      %cst_10 = arith.constant 0.000000e+00 : f32
      %12 = vector.broadcast %cst_10 : f32 to vector<8x64xf32>
      %c0_11 = arith.constant 0 : index
      %c0_12 = arith.constant 0 : index
      %13 = vector.load %arg6[%c0_11, %c0_12] : memref<8x64xf32, #tpu.memory_space<vmem>>, vector<8x64xf32>
      tpu.vector_store %arg6[%c0_11, %c0_12], %12 {strides = array<i32>} : memref<8x64xf32, #tpu.memory_space<vmem>>, vector<8x64xf32>,
    } else {
    }
    %c0 = arith.constant 0 : index
    %c0_1 = arith.constant 0 : index
    %3 = vector.load %arg6[%c0, %c0_1] : memref<8x64xf32, #tpu.memory_space<vmem>>, vector<8x64xf32>
    %c0_2 = arith.constant 0 : index
    %c0_3 = arith.constant 0 : index
    %4 = vector.load %arg2[%c0_2, %c0_3] : memref<8x256xbf16, #tpu.memory_space<vmem>>, vector<8x256xbf16>
    %c0_4 = arith.constant 0 : index
    %c0_5 = arith.constant 0 : index
    %5 = vector.load %arg3[%c0_4, %c0_5] : memref<256x64xbf16, #tpu.memory_space<vmem>>, vector<256x64xbf16>
    %cst = arith.constant dense<0.000000e+00> : vector<8x64xf32>
    %6 = tpu.matmul %4, %5, %cst {dimension_numbers = #tpu.dot_dimension_numbers<[1], [0], [0], [1], [0, 0, 1, 1], [], []>} : vector<8x256xbf16>, vector<256x64xbf16>, vector<8x64xf32> -> vector<8x64xf32>
    %7 = arith.addf %3, %6 : vector<8x64xf32>
    %c0_6 = arith.constant 0 : index
    %c0_7 = arith.constant 0 : index
    %8 = vector.load %arg6[%c0_6, %c0_7] : memref<8x64xf32, #tpu.memory_space<vmem>>, vector<8x64xf32>
    tpu.vector_store %arg6[%c0_6, %c0_7], %7 {strides = array<i32>} : memref<8x64xf32, #tpu.memory_space<vmem>>, vector<8x64xf32>,
    %c0_i32_8 = arith.constant 0 : i32
    %9 = arith.cmpi eq, %arg1, %c0_i32_8 : i32
    %10 = arith.extui %9 : i1 to i32
    %c0_i32_9 = arith.constant 0 : i32
    %11 = arith.cmpi ne, %10, %c0_i32_9 : i32
    scf.if %11 {
      %c0_10 = arith.constant 0 : index
      %c0_11 = arith.constant 0 : index
      %12 = vector.load %arg6[%c0_10, %c0_11] : memref<8x64xf32, #tpu.memory_space<vmem>>, vector<8x64xf32>
      %c0_12 = arith.constant 0 : index
      %c0_13 = arith.constant 0 : index
      %13 = vector.load %arg4[%c0_12, %c0_13] : memref<1x64xf32, #tpu.memory_space<vmem>>, vector<1x64xf32>
      %14 = vector.broadcast %13 : vector<1x64xf32> to vector<8x64xf32>
      %15 = arith.addf %12, %14 : vector<8x64xf32>
      %c0_14 = arith.constant 0 : index
      %c0_15 = arith.constant 0 : index
      %16 = vector.load %arg5[%c0_14, %c0_15] : memref<8x64xf32, #tpu.memory_space<vmem>>, vector<8x64xf32>
      tpu.vector_store %arg5[%c0_14, %c0_15], %15 {strides = array<i32>} : memref<8x64xf32, #tpu.memory_space<vmem>>, vector<8x64xf32>,
    } else {
    }
    return
  }
  func.func @transform_0(%arg0: i32, %arg1: i32) -> (i32, i32) {
    %c0_i32 = arith.constant 0 : i32
    return %arg0, %arg1 : i32, i32
  }
  func.func @transform_1(%arg0: i32, %arg1: i32) -> (i32, i32) {
    %c0_i32 = arith.constant 0 : i32
    %c0_i32_0 = arith.constant 0 : i32
    return %arg1, %c0_i32 : i32, i32
  }
  func.func @transform_2(%arg0: i32, %arg1: i32) -> (i32, i32) {
    %c0_i32 = arith.constant 0 : i32
    %c0_i32_0 = arith.constant 0 : i32
    %c0_i32_1 = arith.constant 0 : i32
    return %c0_i32, %c0_i32_0 : i32, i32
  }
  func.func @transform_3(%arg0: i32, %arg1: i32) -> (i32, i32) {
    %c0_i32 = arith.constant 0 : i32
    %c0_i32_0 = arith.constant 0 : i32
    return %arg0, %c0_i32 : i32, i32
  }
}

</mosaic_0001>

<llo_original>
// kernel: encoder_apply.10
$region0: #{encoder_apply.10}
  #allocation0 [shape = 'u32[]', space=smem, size = 0x4, offset = 0x4, fixed_abs, tag = 'smem constant byte address 0x4 - core index']
  #allocation1 [shape = 'u32[144,128]{1,0:T(1,128)}', space=vmem, size = 0x12000, scoped, tag = 'internal scratch']
  %s0 = inlined_call_operand.vmem [shape: bf16[2,10,10,4], index: 0, kind: input, shape index: {}]
  %s1 = inlined_call_operand.vmem [shape: bf16[3,3,4,8], index: 1, kind: input, shape index: {}]
  %s2 = inlined_call_operand.vmem [shape: f32[1,8], index: 2, kind: input, shape index: {}]
  %s3 = inlined_call_operand.vmem [shape: bf16[2,64,8], index: 3, kind: output, shape index: {}]
  %s4 = sld [smem:[#allocation0]]
  $region45: #{encoder_apply.10} parent=0
    _
  %s6 = ssub.s32 1, %s4
  %s7 = scalar_select 0, %s6, %s4
  loop: start=0, step=1, limit=4
  $region2: #{encoder_apply.10} parent=0 // loop_pre_header
    _
  $region3: #{encoder_apply.10} parent=0 // loop_header
    %s9 = sphi 0, %s13
    %p10 = scmp.ge.s32.totalorder %s9, 4
    %s19 = sphi 0, %s21
    %s22 = sphi 0, %s19
    %s23 = sphi 0, %s22
    %s39 = sphi 0, %s23
    %s43 = sphi 0, %s43
    %s45 = sphi 0, %s43
    %s46 = sphi 0, %s45
    %s60 = sphi 0, %s46
    %s64 = sphi 0, %s64
    %s66 = sphi 0, %s64
    %s67 = sphi 0, %s66
    %s81 = sphi 0, %s67
    %s87 = sphi 0, %s89
    %s90 = sphi 0, %s87
    %s91 = sphi 0, %s90
    %s107 = sphi 0, %s91
  $region4: #{encoder_apply.10} parent=0 // loop_header_branch
    %12 = sbr.rel (%p10) target = $region8
  $region5: #{encoder_apply.10} parent=0 // loop_body
    %s14 = ssub.s32 %s9, 1
    %s15 = ssub.s32 %s9, 2
    %s16 = sadd.s32 %s9, 1
    %s17 = ssub.s32 %s9, %s16
    %p18 = scmp.eq.s32.totalorder %s17, 0
    %s20 = sadd.s32 %s19, 1
    %s21 = scalar_select %p18, %s19, %s20
    %p24 = pneg %p18
    %p25 = scmp.eq.s32.totalorder %s9, 1
    %p26 = por %p24, %p25
    %p27 = scmp.ne.s32.totalorder %s19, %s22
    %p28 = scmp.eq.s32.totalorder %s9, 0
    %p29 = por %p27, %p28
    %p30 = scmp.ne.s32.totalorder %s19, %s22
    %p31 = scmp.eq.s32.totalorder %s14, 1
    %p32 = por %p30, %p31
    %p33 = scmp.ne.s32.totalorder %s22, %s23
    %p34 = scmp.eq.s32.totalorder %s14, 0
    %p35 = por %p33, %p34
    %p36 = scmp.ne.s32.totalorder %s22, %s23
    %p37 = scmp.eq.s32.totalorder %s15, 1
    %p38 = por %p36, %p37
    %p40 = scmp.ne.s32.totalorder %s23, %s39
    %p41 = scmp.eq.s32.totalorder %s15, 0
    %p42 = por %p40, %p41
    %s44 = sadd.s32 %s43, 1
    %p47 = scmp.eq.s32.totalorder %s9, 1
    %p48 = scmp.ne.s32.totalorder %s43, %s45
    %p49 = scmp.eq.s32.totalorder %s9, 0
    %p50 = por %p48, %p49
    %p51 = scmp.ne.s32.totalorder %s43, %s45
    %p52 = scmp.eq.s32.totalorder %s14, 1
    %p53 = por %p51, %p52
    %p54 = scmp.ne.s32.totalorder %s45, %s46
    %p55 = scmp.eq.s32.totalorder %s14, 0
    %p56 = por %p54, %p55
    %p57 = scmp.ne.s32.totalorder %s45, %s46
    %p58 = scmp.eq.s32.totalorder %s15, 1
    %p59 = por %p57, %p58
    %p61 = scmp.ne.s32.totalorder %s46, %s60
    %p62 = scmp.eq.s32.totalorder %s15, 0
    %p63 = por %p61, %p62
    %s65 = sadd.s32 %s64, 1
    %p68 = scmp.eq.s32.totalorder %s9, 1
    %p69 = scmp.ne.s32.totalorder %s64, %s66
    %p70 = scmp.eq.s32.totalorder %s9, 0
    %p71 = por %p69, %p70
    %p72 = scmp.ne.s32.totalorder %s64, %s66
    %p73 = scmp.eq.s32.totalorder %s14, 1
    %p74 = por %p72, %p73
    %p75 = scmp.ne.s32.totalorder %s66, %s67
    %p76 = scmp.eq.s32.totalorder %s14, 0
    %p77 = por %p75, %p76
    %p78 = scmp.ne.s32.totalorder %s66, %s67
    %p79 = scmp.eq.s32.totalorder %s15, 1
    %p80 = por %p78, %p79
    %p82 = scmp.ne.s32.totalorder %s67, %s81
    %p83 = scmp.eq.s32.totalorder %s15, 0
    %p84 = por %p82, %p83
    %s85 = ssub.s32 %s9, %s16
    %p86 = scmp.eq.s32.totalorder %s85, 0
    %s88 = sadd.s32 %s87, 1
    %s89 = scalar_select %p86, %s87, %s88
    %p92 = pneg %p86
    %p93 = scmp.eq.s32.totalorder %s9, 1
    %p94 = por %p92, %p93
    %p95 = scmp.ne.s32.totalorder %s87, %s90
    %p96 = scmp.eq.s32.totalorder %s9, 0
    %p97 = por %p95, %p96
    %p98 = scmp.ne.s32.totalorder %s87, %s90
    %p99 = scmp.eq.s32.totalorder %s14, 1
    %p100 = por %p98, %p99
    %p101 = scmp.ne.s32.totalorder %s90, %s91
    %p102 = scmp.eq.s32.totalorder %s14, 0
    %p103 = por %p101, %p102
    %p104 = scmp.ne.s32.totalorder %s90, %s91
    %p105 = scmp.eq.s32.totalorder %s15, 1
    %p106 = por %p104, %p105
    %p108 = scmp.ne.s32.totalorder %s91, %s107
    %p109 = scmp.eq.s32.totalorder %s15, 0
    %p110 = por %p108, %p109
    %p111 = scmp.le.s32.totalorder 1, %s9
    %p112 = scmp.lt.s32.totalorder %s9, 3
    %p113 = pnand %p111, %p112
    %p114 = pneg %p113
    // Predicated region
    $region9: #{encoder_apply.10} parent=5 // pred_check
      _
    $region10: #{encoder_apply.10} parent=5 // pred_check_branch
      %116 = sbr.rel (%p113) target = $region12
    $region11: #{encoder_apply.10} parent=5 // pred_region
      %s117 = ssub.s32 %s9, 1
      // Predicated region
      $region13: #{encoder_apply.10} parent=11 // pred_check
        %p118 = pneg %p56
      $region14: #{encoder_apply.10} parent=11 // pred_check_branch
        %120 = sbr.rel (%p118) target = $region16
      $region15: #{encoder_apply.10} parent=11 // pred_region
        _
      $region16: #{encoder_apply.10} parent=11 // pred_fallthru
        _
      // Predicated region
      $region17: #{encoder_apply.10} parent=11 // pred_check
        %p121 = pneg %p77
      $region18: #{encoder_apply.10} parent=11 // pred_check_branch
        %123 = sbr.rel (%p121) target = $region20
      $region19: #{encoder_apply.10} parent=11 // pred_region
        _
      $region20: #{encoder_apply.10} parent=11 // pred_fallthru
        _
    $region12: #{encoder_apply.10} parent=5 // pred_fallthru
      _
    %p124 = scmp.lt.s32.totalorder %s9, 2
    // Predicated region
    $region21: #{encoder_apply.10} parent=5 // pred_check
      %p125 = pneg %p124
    $region22: #{encoder_apply.10} parent=5 // pred_check_branch
      %127 = sbr.rel (%p125) target = $region24
    $region23: #{encoder_apply.10} parent=5 // pred_region
      // Predicated region
      $region25: #{encoder_apply.10} parent=23 // pred_check
        %p128 = pneg %p29
      $region26: #{encoder_apply.10} parent=23 // pred_check_branch
        %130 = sbr.rel (%p128) target = $region28
      $region27: #{encoder_apply.10} parent=23 // pred_region
        %p131 = scmp.lt.s32.totalorder %s9, 1
        %s132 = scalar_select %p131, %s9, 1
        %s133 = smul.addr %s132, 20
        %s134 = smul.addr %s133, 4
        %s135 = scalar_lea.vmem %s0, %s134
      $region28: #{encoder_apply.10} parent=23 // pred_fallthru
        _
    $region24: #{encoder_apply.10} parent=5 // pred_fallthru
      _
    %p136 = scmp.le.s32.totalorder 1, %s9
    %p137 = scmp.lt.s32.totalorder %s9, 3
    %p138 = pnand %p136, %p137
    %p139 = pneg %p138
    // Predicated region
    $region29: #{encoder_apply.10} parent=5 // pred_check
      _
    $region30: #{encoder_apply.10} parent=5 // pred_check_branch
      %141 = sbr.rel (%p138) target = $region32
    $region31: #{encoder_apply.10} parent=5 // pred_region
      %s142 = ssub.s32 %s9, 1
      %p143 = scmp.lt.s32.totalorder %s14, 1
      %s144 = scalar_select %p143, %s14, 1
      %s145 = smul.addr %s144, 20
      %s146 = smul.addr %s145, 4
      %s147 = scalar_lea.vmem %s0, %s146
      %p148 = pneg %p35
      %p149 = pneg %p32
      %p150 = pneg %p56
      %p151 = pneg %p53
      %p152 = pneg %p77
      %p153 = pneg %p74
      %p154 = pneg %p103
      %p155 = pneg %p100
      %p156 = scmp.lt.s32.totalorder %s14, 1
      %s157 = scalar_select %p156, %s14, 1
      %s158 = smul.addr %s157, 8
      %s159 = smul.addr %s158, 4
      %s160 = scalar_lea.vmem %s3, %s159
      %p161 = scmp.lt.s32.totalorder %s14, 1
      %s162 = scalar_select %p161, %s14, 1
      %s163 = smul.addr %s162, 20
      %s164 = smul.addr %s163, 4
      %s165 = scalar_lea.vmem %s0, %s164
      %p166 = scmp.lt.s32.totalorder %s14, 1
      %s167 = scalar_select %p166, %s14, 1
      %s168 = smul.addr %s167, 8
      %s169 = smul.addr %s168, 4
      %s170 = scalar_lea.vmem %s3, %s169
      %v172 = vld [vmem:[%s165] sm:$0xf]
      %v173 = vld [vmem:[%s165 + $0x4] sm:$0x1]
      %v174 = vld [vmem:[%s165 + $0x8] sm:$0xf]
      %v175 = vld [vmem:[%s165 + $0xc] sm:$0x1]
      %v176 = vld [vmem:[%s165 + $0x10] sm:$0xf]
      %v177 = vld [vmem:[%s165 + $0x14] sm:$0x1]
      %v178 = vld [vmem:[%s165 + $0x18] sm:$0xf]
      %v179 = vld [vmem:[%s165 + $0x1c] sm:$0x1]
      %v180 = vld [vmem:[%s165 + $0x20] sm:$0xf]
      %v181 = vld [vmem:[%s165 + $0x24] sm:$0x1]
      %v182 = vld [vmem:[%s165 + $0x28] sm:$0xf]
      %v183 = vld [vmem:[%s165 + $0x2c] sm:$0x1]
      %v184 = vld [vmem:[%s165 + $0x30] sm:$0xf]
      %v185 = vld [vmem:[%s165 + $0x34] sm:$0x1]
      %v186 = vld [vmem:[%s165 + $0x38] sm:$0xf]
      %v187 = vld [vmem:[%s165 + $0x3c] sm:$0x1]
      %v188 = vld [vmem:[%s165 + $0x40] sm:$0xf]
      %v189 = vld [vmem:[%s165 + $0x44] sm:$0x1]
      %v190 = vld [vmem:[%s165 + $0x48] sm:$0xf]
      %v191 = vld [vmem:[%s165 + $0x4c] sm:$0x1]
      %v192 = vld [vmem:[%s1] sm:$0x3]
      %vm193 = vsmask.f32 3328
      %vm194 = vsmask.f32 7440
      %vm195 = vmor %vm193, %vm194
      %v197 = vshrl.u32 %v172, 16
      %v199 = vrot.slane %v197, 4
      %v200 = vshll.u32 %v172, 16
      %v202 = vrot.slane %v200, 5
      %v203 = vor.u32 %v199, %v202
      %v204 = vrot.slane %v203, 4
      %v206 = vshll.u32 %v173, 16
      %v208 = vrot.slane %v206, 5
      %v209 = vsel %vm195, %v204, %v208
      %v211 = vshrl.u32 %v174, 16
      %v213 = vrot.slane %v211, 4
      %v214 = vshll.u32 %v174, 16
      %v216 = vrot.slane %v214, 5
      %v217 = vor.u32 %v213, %v216
      %v218 = vrot.slane %v217, 4
      %v220 = vshll.u32 %v175, 16
      %v222 = vrot.slane %v220, 5
      %v223 = vsel %vm195, %v218, %v222
      %v225 = vshrl.u32 %v176, 16
      %v227 = vrot.slane %v225, 4
      %v228 = vshll.u32 %v176, 16
      %v230 = vrot.slane %v228, 5
      %v231 = vor.u32 %v227, %v230
      %v232 = vrot.slane %v231, 4
      %v234 = vshll.u32 %v177, 16
      %v236 = vrot.slane %v234, 5
      %v237 = vsel %vm195, %v232, %v236
      %v239 = vshrl.u32 %v178, 16
      %v241 = vrot.slane %v239, 4
      %v242 = vshll.u32 %v178, 16
      %v244 = vrot.slane %v242, 5
      %v245 = vor.u32 %v241, %v244
      %v246 = vrot.slane %v245, 4
      %v248 = vshll.u32 %v179, 16
      %v250 = vrot.slane %v248, 5
      %v251 = vsel %vm195, %v246, %v250
      %v253 = vshrl.u32 %v180, 16
      %v255 = vrot.slane %v253, 4
      %v256 = vshll.u32 %v180, 16
      %v258 = vrot.slane %v256, 5
      %v259 = vor.u32 %v255, %v258
      %v260 = vrot.slane %v259, 4
      %v262 = vshll.u32 %v181, 16
      %v264 = vrot.slane %v262, 5
      %v265 = vsel %vm195, %v260, %v264
      %v267 = vshrl.u32 %v182, 16
      %v269 = vrot.slane %v267, 4
      %v270 = vshll.u32 %v182, 16
      %v272 = vrot.slane %v270, 5
      %v273 = vor.u32 %v269, %v272
      %v274 = vrot.slane %v273, 4
      %v276 = vshll.u32 %v183, 16
      %v278 = vrot.slane %v276, 5
      %v279 = vsel %vm195, %v274, %v278
      %v281 = vshrl.u32 %v184, 16
      %v283 = vrot.slane %v281, 4
      %v284 = vshll.u32 %v184, 16
      %v286 = vrot.slane %v284, 5
      %v287 = vor.u32 %v283, %v286
      %v288 = vrot.slane %v287, 4
      %v290 = vshll.u32 %v185, 16
      %v292 = vrot.slane %v290, 5
      %v293 = vsel %vm195, %v288, %v292
      %v295 = vshrl.u32 %v186, 16
      %v297 = vrot.slane %v295, 4
      %v298 = vshll.u32 %v186, 16
      %v300 = vrot.slane %v298, 5
      %v301 = vor.u32 %v297, %v300
      %v302 = vrot.slane %v301, 4
      %v304 = vshll.u32 %v187, 16
      %v306 = vrot.slane %v304, 5
      %v307 = vsel %vm195, %v302, %v306
      %s308 = scalar_lea.vmem %s1, 2
      %v309 = vld [vmem:[%s308] sm:$0x3]
      %v310 = vunpack.c.l.b16 %v209
      %v311 = vunpack.c.l.b16 %v223
      %v312 = vunpack.c.l.b16 %v237
      %v313 = vunpack.c.l.b16 %v251
      %v314 = vunpack.c.l.b16 %v265
      %v315 = vunpack.c.l.b16 %v279
      %v316 = vunpack.c.l.b16 %v293
      %v317 = vunpack.c.l.b16 %v307
      %v318 = vpack.c.b16 %v311, %v310
      %v319 = vpack.c.b16 %v313, %v312
      %v320 = vpack.c.b16 %v315, %v314
      %v321 = vpack.c.b16 %v317, %v316
      %vm322 = vcmask 31744
      %v324 = vsel %vm322, %v318, 0
      %v327 = vsel %vm322, %v319, 0
      %v330 = vsel %vm322, %v320, 0
      %v333 = vsel %vm322, %v321, 0
      %vm335 = vcmask 1041408
      %v337 = vsel %vm335, %v309, 0
      %339 = vmatprep.subr.bf16.mxu0 0
      %340 = vmatpush1.bf16.msra.mxu0 %v337
      %341 = vmatprep.subr.bf16.mxu0 0
      %342 = vmatpush1.bf16.msra.mxu0 0
      %343 = vmatprep.subr.bf16.mxu0 0
      %344 = vmatpush1.bf16.msra.mxu0 0
      %345 = vmatprep.subr.bf16.mxu0 0
      %346 = vmatpush1.bf16.msra.mxu0 0
      %347 = vmatprep.subr.bf16.mxu0 0
      %348 = vmatpush1.bf16.msra.mxu0 0
      %349 = vmatprep.subr.bf16.mxu0 0
      %350 = vmatpush1.bf16.msra.mxu0 0
      %351 = vmatprep.subr.bf16.mxu0 0
      %352 = vmatpush1.bf16.msra.mxu0 0
      %353 = vmatprep.subr.bf16.mxu0 0
      %354 = vmatpush1.bf16.msra.mxu0 0
      %355 = vmatprep.subr.bf16.mxu0 0
      %356 = vmatpush1.bf16.msra.mxu0 0
      %357 = vmatprep.subr.bf16.mxu0 0
      %358 = vmatpush1.bf16.msra.mxu0 0
      %359 = vmatprep.subr.bf16.mxu0 0
      %360 = vmatpush1.bf16.msra.mxu0 0
      %361 = vmatprep.subr.bf16.mxu0 0
      %362 = vmatpush1.bf16.msra.mxu0 0
      %363 = vmatprep.subr.bf16.mxu0 0
      %364 = vmatpush1.bf16.msra.mxu0 0
      %365 = vmatprep.subr.bf16.mxu0 0
      %366 = vmatpush1.bf16.msra.mxu0 0
      %367 = vmatprep.subr.bf16.mxu0 0
      %368 = vmatpush1.bf16.msra.mxu0 0
      %369 = vmatprep.subr.bf16.mxu0 0
      %370 = vmatpush1.bf16.msra.mxu0 0
      %371 = vmatprep.mubr.bf16.mxu0 0
      %372 = vmatmul.mubr.bf16.gmra.mrb[0].mxu0 %v324
      %v373 = vpop.f32.mrb[0].mxu0
      %v374 = vadd.f32 0.0, %v373
      %v375 = vpop.f32.mrb[0].mxu0
      %v376 = vpop.f32.mrb[0].mxu0
      %v377 = vadd.f32 0.0, %v376
      %v378 = vpop.f32.mrb[0].mxu0
      %379 = vmatprep.mubr.bf16.mxu0 0
      %380 = vmatmul.mubr.bf16.gmra.mrb[0].mxu0 %v327
      %v381 = vpop.f32.mrb[0].mxu0
      %v382 = vadd.f32 0.0, %v381
      %v383 = vpop.f32.mrb[0].mxu0
      %v384 = vpop.f32.mrb[0].mxu0
      %v385 = vadd.f32 0.0, %v384
      %v386 = vpop.f32.mrb[0].mxu0
      %387 = vmatprep.mubr.bf16.mxu0 0
      %388 = vmatmul.mubr.bf16.gmra.mrb[0].mxu0 %v330
      %v389 = vpop.f32.mrb[0].mxu0
      %v390 = vadd.f32 0.0, %v389
      %v391 = vpop.f32.mrb[0].mxu0
      %v392 = vpop.f32.mrb[0].mxu0
      %v393 = vadd.f32 0.0, %v392
      %v394 = vpop.f32.mrb[0].mxu0
      %395 = vmatprep.mubr.bf16.mxu0 0
      %396 = vmatmul.mubr.bf16.gmra.mrb[0].mxu0 %v333
      %v397 = vpop.f32.mrb[0].mxu0
      %v398 = vadd.f32 0.0, %v397
      %v399 = vpop.f32.mrb[0].mxu0
      %v400 = vpop.f32.mrb[0].mxu0
      %v401 = vadd.f32 0.0, %v400
      %v402 = vpop.f32.mrb[0].mxu0
      %403 = vdwg.mxu0
      %v412 = vunpack.c.l.b16 %v172
      %v413 = vunpack.c.l.b16 %v174
      %v414 = vunpack.c.l.b16 %v176
      %v415 = vunpack.c.l.b16 %v178
      %v416 = vunpack.c.l.b16 %v180
      %v417 = vunpack.c.l.b16 %v182
      %v418 = vunpack.c.l.b16 %v184
      %v419 = vunpack.c.l.b16 %v186
      %v420 = vpack.c.b16 %v413, %v412
      %v421 = vpack.c.b16 %v415, %v414
      %v422 = vpack.c.b16 %v417, %v416
      %v423 = vpack.c.b16 %v419, %v418
      %v425 = vsel %vm322, %v420, 0
      %v428 = vsel %vm322, %v421, 0
      %v431 = vsel %vm322, %v422, 0
      %v434 = vsel %vm322, %v423, 0
      %v437 = vsel %vm335, %v192, 0
      %439 = vmatprep.subr.bf16.mxu0 0
      %440 = vmatpush1.bf16.msra.mxu0 %v437
      %441 = vmatprep.subr.bf16.mxu0 0
      %442 = vmatpush1.bf16.msra.mxu0 0
      %443 = vmatprep.subr.bf16.mxu0 0
      %444 = vmatpush1.bf16.msra.mxu0 0
      %445 = vmatprep.subr.bf16.mxu0 0
      %446 = vmatpush1.bf16.msra.mxu0 0
      %447 = vmatprep.subr.bf16.mxu0 0
      %448 = vmatpush1.bf16.msra.mxu0 0
      %449 = vmatprep.subr.bf16.mxu0 0
      %450 = vmatpush1.bf16.msra.mxu0 0
      %451 = vmatprep.subr.bf16.mxu0 0
      %452 = vmatpush1.bf16.msra.mxu0 0
      %453 = vmatprep.subr.bf16.mxu0 0
      %454 = vmatpush1.bf16.msra.mxu0 0
      %455 = vmatprep.subr.bf16.mxu0 0
      %456 = vmatpush1.bf16.msra.mxu0 0
      %457 = vmatprep.subr.bf16.mxu0 0
      %458 = vmatpush1.bf16.msra.mxu0 0
      %459 = vmatprep.subr.bf16.mxu0 0
      %460 = vmatpush1.bf16.msra.mxu0 0
      %461 = vmatprep.subr.bf16.mxu0 0
      %462 = vmatpush1.bf16.msra.mxu0 0
      %463 = vmatprep.subr.bf16.mxu0 0
      %464 = vmatpush1.bf16.msra.mxu0 0
      %465 = vmatprep.subr.bf16.mxu0 0
      %466 = vmatpush1.bf16.msra.mxu0 0
      %467 = vmatprep.subr.bf16.mxu0 0
      %468 = vmatpush1.bf16.msra.mxu0 0
      %469 = vmatprep.subr.bf16.mxu0 0
      %470 = vmatpush1.bf16.msra.mxu0 0
      %471 = vmatprep.mubr.bf16.mxu0 0
      %472 = vmatmul.mubr.bf16.gmra.mrb[0].mxu0 %v425
      %v473 = vpop.f32.mrb[0].mxu0
      %v474 = vadd.f32 %v374, %v473
      %v475 = vpop.f32.mrb[0].mxu0
      %v476 = vpop.f32.mrb[0].mxu0
      %v477 = vadd.f32 %v377, %v476
      %v478 = vpop.f32.mrb[0].mxu0
      %479 = vmatprep.mubr.bf16.mxu0 0
      %480 = vmatmul.mubr.bf16.gmra.mrb[0].mxu0 %v428
      %v481 = vpop.f32.mrb[0].mxu0
      %v482 = vadd.f32 %v382, %v481
      %v483 = vpop.f32.mrb[0].mxu0
      %v484 = vpop.f32.mrb[0].mxu0
      %v485 = vadd.f32 %v385, %v484
      %v486 = vpop.f32.mrb[0].mxu0
      %487 = vmatprep.mubr.bf16.mxu0 0
      %488 = vmatmul.mubr.bf16.gmra.mrb[0].mxu0 %v431
      %v489 = vpop.f32.mrb[0].mxu0
      %v490 = vadd.f32 %v390, %v489
      %v491 = vpop.f32.mrb[0].mxu0
      %v492 = vpop.f32.mrb[0].mxu0
      %v493 = vadd.f32 %v393, %v492
      %v494 = vpop.f32.mrb[0].mxu0
      %495 = vmatprep.mubr.bf16.mxu0 0
      %496 = vmatmul.mubr.bf16.gmra.mrb[0].mxu0 %v434
      %v497 = vpop.f32.mrb[0].mxu0
      %v498 = vadd.f32 %v398, %v497
      %v499 = vpop.f32.mrb[0].mxu0
      %v500 = vpop.f32.mrb[0].mxu0
      %v501 = vadd.f32 %v401, %v500
      %v502 = vpop.f32.mrb[0].mxu0
      %503 = vdwg.mxu0
      %vm512 = vcmask 1042432
      %vm513 = vcmask 1046532
      %vm514 = vmor %vm512, %vm513
      %v515 = vrot.slane %v172, 5
      %v516 = vrot.slane %v515, 4
      %v517 = vrot.slane %v173, 5
      %v518 = vsel %vm514, %v516, %v517
      %v519 = vrot.slane %v174, 5
      %v520 = vrot.slane %v519, 4
      %v521 = vrot.slane %v175, 5
      %v522 = vsel %vm514, %v520, %v521
      %v523 = vrot.slane %v176, 5
      %v524 = vrot.slane %v523, 4
      %v525 = vrot.slane %v177, 5
      %v526 = vsel %vm514, %v524, %v525
      %v527 = vrot.slane %v178, 5
      %v528 = vrot.slane %v527, 4
      %v529 = vrot.slane %v179, 5
      %v530 = vsel %vm514, %v528, %v529
      %v531 = vrot.slane %v180, 5
      %v532 = vrot.slane %v531, 4
      %v533 = vrot.slane %v181, 5
      %v534 = vsel %vm514, %v532, %v533
      %v535 = vrot.slane %v182, 5
      %v536 = vrot.slane %v535, 4
      %v537 = vrot.slane %v183, 5
      %v538 = vsel %vm514, %v536, %v537
      %v539 = vrot.slane %v184, 5
      %v540 = vrot.slane %v539, 4
      %v541 = vrot.slane %v185, 5
      %v542 = vsel %vm514, %v540, %v541
      %v543 = vrot.slane %v186, 5
      %v544 = vrot.slane %v543, 4
      %v545 = vrot.slane %v187, 5
      %v546 = vsel %vm514, %v544, %v545
      %s547 = scalar_lea.vmem %s1, 4
      %v548 = vld [vmem:[%s547] sm:$0x3]
      %v549 = vunpack.c.l.b16 %v518
      %v550 = vunpack.c.l.b16 %v522
      %v551 = vunpack.c.l.b16 %v526
      %v552 = vunpack.c.l.b16 %v530
      %v553 = vunpack.c.l.b16 %v534
      %v554 = vunpack.c.l.b16 %v538
      %v555 = vunpack.c.l.b16 %v542
      %v556 = vunpack.c.l.b16 %v546
      %v557 = vpack.c.b16 %v550, %v549
      %v558 = vpack.c.b16 %v552, %v551
      %v559 = vpack.c.b16 %v554, %v553
      %v560 = vpack.c.b16 %v556, %v555
      %v562 = vsel %vm322, %v557, 0
      %v565 = vsel %vm322, %v558, 0
      %v568 = vsel %vm322, %v559, 0
      %v571 = vsel %vm322, %v560, 0
      %v574 = vsel %vm335, %v548, 0
      %576 = vmatprep.subr.bf16.mxu0 0
      %577 = vmatpush1.bf16.msra.mxu0 %v574
      %578 = vmatprep.subr.bf16.mxu0 0
      %579 = vmatpush1.bf16.msra.mxu0 0
      %580 = vmatprep.subr.bf16.mxu0 0
      %581 = vmatpush1.bf16.msra.mxu0 0
      %582 = vmatprep.subr.bf16.mxu0 0
      %583 = vmatpush1.bf16.msra.mxu0 0
      %584 = vmatprep.subr.bf16.mxu0 0
      %585 = vmatpush1.bf16.msra.mxu0 0
      %586 = vmatprep.subr.bf16.mxu0 0
      %587 = vmatpush1.bf16.msra.mxu0 0
      %588 = vmatprep.subr.bf16.mxu0 0
      %589 = vmatpush1.bf16.msra.mxu0 0
      %590 = vmatprep.subr.bf16.mxu0 0
      %591 = vmatpush1.bf16.msra.mxu0 0
      %592 = vmatprep.subr.bf16.mxu0 0
      %593 = vmatpush1.bf16.msra.mxu0 0
      %594 = vmatprep.subr.bf16.mxu0 0
      %595 = vmatpush1.bf16.msra.mxu0 0
      %596 = vmatprep.subr.bf16.mxu0 0
      %597 = vmatpush1.bf16.msra.mxu0 0
      %598 = vmatprep.subr.bf16.mxu0 0
      %599 = vmatpush1.bf16.msra.mxu0 0
      %600 = vmatprep.subr.bf16.mxu0 0
      %601 = vmatpush1.bf16.msra.mxu0 0
      %602 = vmatprep.subr.bf16.mxu0 0
      %603 = vmatpush1.bf16.msra.mxu0 0
      %604 = vmatprep.subr.bf16.mxu0 0
      %605 = vmatpush1.bf16.msra.mxu0 0
      %606 = vmatprep.subr.bf16.mxu0 0
      %607 = vmatpush1.bf16.msra.mxu0 0
      %608 = vmatprep.mubr.bf16.mxu0 0
      %609 = vmatmul.mubr.bf16.gmra.mrb[0].mxu0 %v562
      %v610 = vpop.f32.mrb[0].mxu0
      %v611 = vadd.f32 0.0, %v610
      %v612 = vpop.f32.mrb[0].mxu0
      %v613 = vpop.f32.mrb[0].mxu0
      %v614 = vadd.f32 0.0, %v613
      %v615 = vpop.f32.mrb[0].mxu0
      %616 = vmatprep.mubr.bf16.mxu0 0
      %617 = vmatmul.mubr.bf16.gmra.mrb[0].mxu0 %v565
      %v618 = vpop.f32.mrb[0].mxu0
      %v619 = vadd.f32 0.0, %v618
      %v620 = vpop.f32.mrb[0].mxu0
      %v621 = vpop.f32.mrb[0].mxu0
      %v622 = vadd.f32 0.0, %v621
      %v623 = vpop.f32.mrb[0].mxu0
      %624 = vmatprep.mubr.bf16.mxu0 0
      %625 = vmatmul.mubr.bf16.gmra.mrb[0].mxu0 %v568
      %v626 = vpop.f32.mrb[0].mxu0
      %v627 = vadd.f32 0.0, %v626
      %v628 = vpop.f32.mrb[0].mxu0
      %v629 = vpop.f32.mrb[0].mxu0
      %v630 = vadd.f32 0.0, %v629
      %v631 = vpop.f32.mrb[0].mxu0
      %632 = vmatprep.mubr.bf16.mxu0 0
      %633 = vmatmul.mubr.bf16.gmra.mrb[0].mxu0 %v571
      %v634 = vpop.f32.mrb[0].mxu0
      %v635 = vadd.f32 0.0, %v634
      %v636 = vpop.f32.mrb[0].mxu0
      %v637 = vpop.f32.mrb[0].mxu0
      %v638 = vadd.f32 0.0, %v637
      %v639 = vpop.f32.mrb[0].mxu0
      %640 = vdwg.mxu0
      %v641 = vadd.f32 %v474, %v611
      %v642 = vadd.f32 %v477, %v614
      %v643 = vadd.f32 %v482, %v619
      %v644 = vadd.f32 %v485, %v622
      %v645 = vadd.f32 %v490, %v627
      %v646 = vadd.f32 %v493, %v630
      %v647 = vadd.f32 %v498, %v635
      %v648 = vadd.f32 %v501, %v638
      %s649 = scalar_lea.vmem %s1, 6
      %v650 = vld [vmem:[%s649] sm:$0x3]
      %v652 = vunpack.c.l.b16 %v188
      %v653 = vpack.c.b16 %v414, %v413
      %v654 = vpack.c.b16 %v416, %v415
      %v655 = vpack.c.b16 %v418, %v417
      %v656 = vpack.c.b16 %v652, %v419
      %v658 = vsel %vm322, %v653, 0
      %v661 = vsel %vm322, %v654, 0
      %v664 = vsel %vm322, %v655, 0
      %v667 = vsel %vm322, %v656, 0
      %v670 = vsel %vm335, %v650, 0
      %672 = vmatprep.subr.bf16.mxu0 0
      %673 = vmatpush1.bf16.msra.mxu0 %v670
      %674 = vmatprep.subr.bf16.mxu0 0
      %675 = vmatpush1.bf16.msra.mxu0 0
      %676 = vmatprep.subr.bf16.mxu0 0
      %677 = vmatpush1.bf16.msra.mxu0 0
      %678 = vmatprep.subr.bf16.mxu0 0
      %679 = vmatpush1.bf16.msra.mxu0 0
      %680 = vmatprep.subr.bf16.mxu0 0
      %681 = vmatpush1.bf16.msra.mxu0 0
      %682 = vmatprep.subr.bf16.mxu0 0
      %683 = vmatpush1.bf16.msra.mxu0 0
      %684 = vmatprep.subr.bf16.mxu0 0
      %685 = vmatpush1.bf16.msra.mxu0 0
      %686 = vmatprep.subr.bf16.mxu0 0
      %687 = vmatpush1.bf16.msra.mxu0 0
      %688 = vmatprep.subr.bf16.mxu0 0
      %689 = vmatpush1.bf16.msra.mxu0 0
      %690 = vmatprep.subr.bf16.mxu0 0
      %691 = vmatpush1.bf16.msra.mxu0 0
      %692 = vmatprep.subr.bf16.mxu0 0
      %693 = vmatpush1.bf16.msra.mxu0 0
      %694 = vmatprep.subr.bf16.mxu0 0
      %695 = vmatpush1.bf16.msra.mxu0 0
      %696 = vmatprep.subr.bf16.mxu0 0
      %697 = vmatpush1.bf16.msra.mxu0 0
      %698 = vmatprep.subr.bf16.mxu0 0
      %699 = vmatpush1.bf16.msra.mxu0 0
      %700 = vmatprep.subr.bf16.mxu0 0
      %701 = vmatpush1.bf16.msra.mxu0 0
      %702 = vmatprep.subr.bf16.mxu0 0
      %703 = vmatpush1.bf16.msra.mxu0 0
      %704 = vmatprep.mubr.bf16.mxu0 0
      %705 = vmatmul.mubr.bf16.gmra.mrb[0].mxu0 %v658
      %v706 = vpop.f32.mrb[0].mxu0
      %v707 = vadd.f32 0.0, %v706
      %v708 = vpop.f32.mrb[0].mxu0
      %v709 = vpop.f32.mrb[0].mxu0
      %v710 = vadd.f32 0.0, %v709
      %v711 = vpop.f32.mrb[0].mxu0
      %712 = vmatprep.mubr.bf16.mxu0 0
      %713 = vmatmul.mubr.bf16.gmra.mrb[0].mxu0 %v661
      %v714 = vpop.f32.mrb[0].mxu0
      %v715 = vadd.f32 0.0, %v714
      %v716 = vpop.f32.mrb[0].mxu0
      %v717 = vpop.f32.mrb[0].mxu0
      %v718 = vadd.f32 0.0, %v717
      %v719 = vpop.f32.mrb[0].mxu0
      %720 = vmatprep.mubr.bf16.mxu0 0
      %721 = vmatmul.mubr.bf16.gmra.mrb[0].mxu0 %v664
      %v722 = vpop.f32.mrb[0].mxu0
      %v723 = vadd.f32 0.0, %v722
      %v724 = vpop.f32.mrb[0].mxu0
      %v725 = vpop.f32.mrb[0].mxu0
      %v726 = vadd.f32 0.0, %v725
      %v727 = vpop.f32.mrb[0].mxu0
      %728 = vmatprep.mubr.bf16.mxu0 0
      %729 = vmatmul.mubr.bf16.gmra.mrb[0].mxu0 %v667
      %v730 = vpop.f32.mrb[0].mxu0
      %v731 = vadd.f32 0.0, %v730
      %v732 = vpop.f32.mrb[0].mxu0
      %v733 = vpop.f32.mrb[0].mxu0
      %v734 = vadd.f32 0.0, %v733
      %v735 = vpop.f32.mrb[0].mxu0
      %736 = vdwg.mxu0
      %v737 = vadd.f32 %v641, %v707
      %v738 = vadd.f32 %v642, %v710
      %v739 = vadd.f32 %v643, %v715
      %v740 = vadd.f32 %v644, %v718
      %v741 = vadd.f32 %v645, %v723
      %v742 = vadd.f32 %v646, %v726
      %v743 = vadd.f32 %v647, %v731
      %v744 = vadd.f32 %v648, %v734
      %v746 = vshrl.u32 %v188, 16
      %v748 = vrot.slane %v746, 4
      %v749 = vshll.u32 %v188, 16
      %v751 = vrot.slane %v749, 5
      %v752 = vor.u32 %v748, %v751
      %v753 = vrot.slane %v752, 4
      %v755 = vshll.u32 %v189, 16
      %v757 = vrot.slane %v755, 5
      %v758 = vsel %vm195, %v753, %v757
      %s759 = scalar_lea.vmem %s1, 8
      %v760 = vld [vmem:[%s759] sm:$0x3]
      %v761 = vunpack.c.l.b16 %v758
      %v762 = vpack.c.b16 %v312, %v311
      %v763 = vpack.c.b16 %v314, %v313
      %v764 = vpack.c.b16 %v316, %v315
      %v765 = vpack.c.b16 %v761, %v317
      %v767 = vsel %vm322, %v762, 0
      %v770 = vsel %vm322, %v763, 0
      %v773 = vsel %vm322, %v764, 0
      %v776 = vsel %vm322, %v765, 0
      %v779 = vsel %vm335, %v760, 0
      %781 = vmatprep.subr.bf16.mxu0 0
      %782 = vmatpush1.bf16.msra.mxu0 %v779
      %783 = vmatprep.subr.bf16.mxu0 0
      %784 = vmatpush1.bf16.msra.mxu0 0
      %785 = vmatprep.subr.bf16.mxu0 0
      %786 = vmatpush1.bf16.msra.mxu0 0
      %787 = vmatprep.subr.bf16.mxu0 0
      %788 = vmatpush1.bf16.msra.mxu0 0
      %789 = vmatprep.subr.bf16.mxu0 0
      %790 = vmatpush1.bf16.msra.mxu0 0
      %791 = vmatprep.subr.bf16.mxu0 0
      %792 = vmatpush1.bf16.msra.mxu0 0
      %793 = vmatprep.subr.bf16.mxu0 0
      %794 = vmatpush1.bf16.msra.mxu0 0
      %795 = vmatprep.subr.bf16.mxu0 0
      %796 = vmatpush1.bf16.msra.mxu0 0
      %797 = vmatprep.subr.bf16.mxu0 0
      %798 = vmatpush1.bf16.msra.mxu0 0
      %799 = vmatprep.subr.bf16.mxu0 0
      %800 = vmatpush1.bf16.msra.mxu0 0
      %801 = vmatprep.subr.bf16.mxu0 0
      %802 = vmatpush1.bf16.msra.mxu0 0
      %803 = vmatprep.subr.bf16.mxu0 0
      %804 = vmatpush1.bf16.msra.mxu0 0
      %805 = vmatprep.subr.bf16.mxu0 0
      %806 = vmatpush1.bf16.msra.mxu0 0
      %807 = vmatprep.subr.bf16.mxu0 0
      %808 = vmatpush1.bf16.msra.mxu0 0
      %809 = vmatprep.subr.bf16.mxu0 0
      %810 = vmatpush1.bf16.msra.mxu0 0
      %811 = vmatprep.subr.bf16.mxu0 0
      %812 = vmatpush1.bf16.msra.mxu0 0
      %813 = vmatprep.mubr.bf16.mxu0 0
      %814 = vmatmul.mubr.bf16.gmra.mrb[0].mxu0 %v767
      %v815 = vpop.f32.mrb[0].mxu0
      %v816 = vadd.f32 0.0, %v815
      %v817 = vpop.f32.mrb[0].mxu0
      %v818 = vpop.f32.mrb[0].mxu0
      %v819 = vadd.f32 0.0, %v818
      %v820 = vpop.f32.mrb[0].mxu0
      %821 = vmatprep.mubr.bf16.mxu0 0
      %822 = vmatmul.mubr.bf16.gmra.mrb[0].mxu0 %v770
      %v823 = vpop.f32.mrb[0].mxu0
      %v824 = vadd.f32 0.0, %v823
      %v825 = vpop.f32.mrb[0].mxu0
      %v826 = vpop.f32.mrb[0].mxu0
      %v827 = vadd.f32 0.0, %v826
      %v828 = vpop.f32.mrb[0].mxu0
      %829 = vmatprep.mubr.bf16.mxu0 0
      %830 = vmatmul.mubr.bf16.gmra.mrb[0].mxu0 %v773
      %v831 = vpop.f32.mrb[0].mxu0
      %v832 = vadd.f32 0.0, %v831
      %v833 = vpop.f32.mrb[0].mxu0
      %v834 = vpop.f32.mrb[0].mxu0
      %v835 = vadd.f32 0.0, %v834
      %v836 = vpop.f32.mrb[0].mxu0
      %837 = vmatprep.mubr.bf16.mxu0 0
      %838 = vmatmul.mubr.bf16.gmra.mrb[0].mxu0 %v776
      %v839 = vpop.f32.mrb[0].mxu0
      %v840 = vadd.f32 0.0, %v839
      %v841 = vpop.f32.mrb[0].mxu0
      %v842 = vpop.f32.mrb[0].mxu0
      %v843 = vadd.f32 0.0, %v842
      %v844 = vpop.f32.mrb[0].mxu0
      %845 = vdwg.mxu0
      %v846 = vadd.f32 %v737, %v816
      %v847 = vadd.f32 %v738, %v819
      %v848 = vadd.f32 %v739, %v824
      %v849 = vadd.f32 %v740, %v827
      %v850 = vadd.f32 %v741, %v832
      %v851 = vadd.f32 %v742, %v835
      %v852 = vadd.f32 %v743, %v840
      %v853 = vadd.f32 %v744, %v843
      %v855 = vrot.slane %v188, 5
      %v856 = vrot.slane %v855, 4
      %v857 = vrot.slane %v189, 5
      %v858 = vsel %vm514, %v856, %v857
      %s859 = scalar_lea.vmem %s1, 10
      %v860 = vld [vmem:[%s859] sm:$0x3]
      %v861 = vunpack.c.l.b16 %v858
      %v862 = vpack.c.b16 %v551, %v550
      %v863 = vpack.c.b16 %v553, %v552
      %v864 = vpack.c.b16 %v555, %v554
      %v865 = vpack.c.b16 %v861, %v556
      %v867 = vsel %vm322, %v862, 0
      %v870 = vsel %vm322, %v863, 0
      %v873 = vsel %vm322, %v864, 0
      %v876 = vsel %vm322, %v865, 0
      %v879 = vsel %vm335, %v860, 0
      %881 = vmatprep.subr.bf16.mxu0 0
      %882 = vmatpush1.bf16.msra.mxu0 %v879
      %883 = vmatprep.subr.bf16.mxu0 0
      %884 = vmatpush1.bf16.msra.mxu0 0
      %885 = vmatprep.subr.bf16.mxu0 0
      %886 = vmatpush1.bf16.msra.mxu0 0
      %887 = vmatprep.subr.bf16.mxu0 0
      %888 = vmatpush1.bf16.msra.mxu0 0
      %889 = vmatprep.subr.bf16.mxu0 0
      %890 = vmatpush1.bf16.msra.mxu0 0
      %891 = vmatprep.subr.bf16.mxu0 0
      %892 = vmatpush1.bf16.msra.mxu0 0
      %893 = vmatprep.subr.bf16.mxu0 0
      %894 = vmatpush1.bf16.msra.mxu0 0
      %895 = vmatprep.subr.bf16.mxu0 0
      %896 = vmatpush1.bf16.msra.mxu0 0
      %897 = vmatprep.subr.bf16.mxu0 0
      %898 = vmatpush1.bf16.msra.mxu0 0
      %899 = vmatprep.subr.bf16.mxu0 0
      %900 = vmatpush1.bf16.msra.mxu0 0
      %901 = vmatprep.subr.bf16.mxu0 0
      %902 = vmatpush1.bf16.msra.mxu0 0
      %903 = vmatprep.subr.bf16.mxu0 0
      %904 = vmatpush1.bf16.msra.mxu0 0
      %905 = vmatprep.subr.bf16.mxu0 0
      %906 = vmatpush1.bf16.msra.mxu0 0
      %907 = vmatprep.subr.bf16.mxu0 0
      %908 = vmatpush1.bf16.msra.mxu0 0
      %909 = vmatprep.subr.bf16.mxu0 0
      %910 = vmatpush1.bf16.msra.mxu0 0
      %911 = vmatprep.subr.bf16.mxu0 0
      %912 = vmatpush1.bf16.msra.mxu0 0
      %913 = vmatprep.mubr.bf16.mxu0 0
      %914 = vmatmul.mubr.bf16.gmra.mrb[0].mxu0 %v867
      %v915 = vpop.f32.mrb[0].mxu0
      %v916 = vadd.f32 0.0, %v915
      %v917 = vpop.f32.mrb[0].mxu0
      %v918 = vpop.f32.mrb[0].mxu0
      %v919 = vadd.f32 0.0, %v918
      %v920 = vpop.f32.mrb[0].mxu0
      %921 = vmatprep.mubr.bf16.mxu0 0
      %922 = vmatmul.mubr.bf16.gmra.mrb[0].mxu0 %v870
      %v923 = vpop.f32.mrb[0].mxu0
      %v924 = vadd.f32 0.0, %v923
      %v925 = vpop.f32.mrb[0].mxu0
      %v926 = vpop.f32.mrb[0].mxu0
      %v927 = vadd.f32 0.0, %v926
      %v928 = vpop.f32.mrb[0].mxu0
      %929 = vmatprep.mubr.bf16.mxu0 0
      %930 = vmatmul.mubr.bf16.gmra.mrb[0].mxu0 %v873
      %v931 = vpop.f32.mrb[0].mxu0
      %v932 = vadd.f32 0.0, %v931
      %v933 = vpop.f32.mrb[0].mxu0
      %v934 = vpop.f32.mrb[0].mxu0
      %v935 = vadd.f32 0.0, %v934
      %v936 = vpop.f32.mrb[0].mxu0
      %937 = vmatprep.mubr.bf16.mxu0 0
      %938 = vmatmul.mubr.bf16.gmra.mrb[0].mxu0 %v876
      %v939 = vpop.f32.mrb[0].mxu0
      %v940 = vadd.f32 0.0, %v939
      %v941 = vpop.f32.mrb[0].mxu0
      %v942 = vpop.f32.mrb[0].mxu0
      %v943 = vadd.f32 0.0, %v942
      %v944 = vpop.f32.mrb[0].mxu0
      %945 = vdwg.mxu0
      %v946 = vadd.f32 %v846, %v916
      %v947 = vadd.f32 %v847, %v919
      %v948 = vadd.f32 %v848, %v924
      %v949 = vadd.f32 %v849, %v927
      %v950 = vadd.f32 %v850, %v932
      %v951 = vadd.f32 %v851, %v935
      %v952 = vadd.f32 %v852, %v940
      %v953 = vadd.f32 %v853, %v943
      %s954 = scalar_lea.vmem %s1, 12
      %v955 = vld [vmem:[%s954] sm:$0x3]
      %v957 = vunpack.c.l.b16 %v190
      %v958 = vpack.c.b16 %v957, %v652
      %v960 = vsel %vm322, %v958, 0
      %v963 = vsel %vm335, %v955, 0
      %965 = vmatprep.subr.bf16.mxu0 0
      %966 = vmatpush1.bf16.msra.mxu0 %v963
      %967 = vmatprep.subr.bf16.mxu0 0
      %968 = vmatpush1.bf16.msra.mxu0 0
      %969 = vmatprep.subr.bf16.mxu0 0
      %970 = vmatpush1.bf16.msra.mxu0 0
      %971 = vmatprep.subr.bf16.mxu0 0
      %972 = vmatpush1.bf16.msra.mxu0 0
      %973 = vmatprep.subr.bf16.mxu0 0
      %974 = vmatpush1.bf16.msra.mxu0 0
      %975 = vmatprep.subr.bf16.mxu0 0
      %976 = vmatpush1.bf16.msra.mxu0 0
      %977 = vmatprep.subr.bf16.mxu0 0
      %978 = vmatpush1.bf16.msra.mxu0 0
      %979 = vmatprep.subr.bf16.mxu0 0
      %980 = vmatpush1.bf16.msra.mxu0 0
      %981 = vmatprep.subr.bf16.mxu0 0
      %982 = vmatpush1.bf16.msra.mxu0 0
      %983 = vmatprep.subr.bf16.mxu0 0
      %984 = vmatpush1.bf16.msra.mxu0 0
      %985 = vmatprep.subr.bf16.mxu0 0
      %986 = vmatpush1.bf16.msra.mxu0 0
      %987 = vmatprep.subr.bf16.mxu0 0
      %988 = vmatpush1.bf16.msra.mxu0 0
      %989 = vmatprep.subr.bf16.mxu0 0
      %990 = vmatpush1.bf16.msra.mxu0 0
      %991 = vmatprep.subr.bf16.mxu0 0
      %992 = vmatpush1.bf16.msra.mxu0 0
      %993 = vmatprep.subr.bf16.mxu0 0
      %994 = vmatpush1.bf16.msra.mxu0 0
      %995 = vmatprep.subr.bf16.mxu0 0
      %996 = vmatpush1.bf16.msra.mxu0 0
      %997 = vmatprep.mubr.bf16.mxu0 0
      %998 = vmatmul.mubr.bf16.gmra.mrb[0].mxu0 %v428
      %v999 = vpop.f32.mrb[0].mxu0
      %v1000 = vadd.f32 0.0, %v999
      %v1001 = vpop.f32.mrb[0].mxu0
      %v1002 = vpop.f32.mrb[0].mxu0
      %v1003 = vadd.f32 0.0, %v1002
      %v1004 = vpop.f32.mrb[0].mxu0
      %1005 = vmatprep.mubr.bf16.mxu0 0
      %1006 = vmatmul.mubr.bf16.gmra.mrb[0].mxu0 %v431
      %v1007 = vpop.f32.mrb[0].mxu0
      %v1008 = vadd.f32 0.0, %v1007
      %v1009 = vpop.f32.mrb[0].mxu0
      %v1010 = vpop.f32.mrb[0].mxu0
      %v1011 = vadd.f32 0.0, %v1010
      %v1012 = vpop.f32.mrb[0].mxu0
      %1013 = vmatprep.mubr.bf16.mxu0 0
      %1014 = vmatmul.mubr.bf16.gmra.mrb[0].mxu0 %v434
      %v1015 = vpop.f32.mrb[0].mxu0
      %v1016 = vadd.f32 0.0, %v1015
      %v1017 = vpop.f32.mrb[0].mxu0
      %v1018 = vpop.f32.mrb[0].mxu0
      %v1019 = vadd.f32 0.0, %v1018
      %v1020 = vpop.f32.mrb[0].mxu0
      %1021 = vmatprep.mubr.bf16.mxu0 0
      %1022 = vmatmul.mubr.bf16.gmra.mrb[0].mxu0 %v960
      %v1023 = vpop.f32.mrb[0].mxu0
      %v1024 = vadd.f32 0.0, %v1023
      %v1025 = vpop.f32.mrb[0].mxu0
      %v1026 = vpop.f32.mrb[0].mxu0
      %v1027 = vadd.f32 0.0, %v1026
      %v1028 = vpop.f32.mrb[0].mxu0
      %1029 = vdwg.mxu0
      %v1030 = vadd.f32 %v946, %v1000
      %v1031 = vadd.f32 %v947, %v1003
      %v1032 = vadd.f32 %v948, %v1008
      %v1033 = vadd.f32 %v949, %v1011
      %v1034 = vadd.f32 %v950, %v1016
      %v1035 = vadd.f32 %v951, %v1019
      %v1036 = vadd.f32 %v952, %v1024
      %v1037 = vadd.f32 %v953, %v1027
      %v1039 = vshrl.u32 %v190, 16
      %v1041 = vrot.slane %v1039, 4
      %v1042 = vshll.u32 %v190, 16
      %v1044 = vrot.slane %v1042, 5
      %v1045 = vor.u32 %v1041, %v1044
      %v1046 = vrot.slane %v1045, 4
      %v1048 = vshll.u32 %v191, 16
      %v1050 = vrot.slane %v1048, 5
      %v1051 = vsel %vm195, %v1046, %v1050
      %s1052 = scalar_lea.vmem %s1, 14
      %v1053 = vld [vmem:[%s1052] sm:$0x3]
      %v1054 = vunpack.c.l.b16 %v1051
      %v1055 = vpack.c.b16 %v1054, %v761
      %v1057 = vsel %vm322, %v1055, 0
      %v1060 = vsel %vm335, %v1053, 0
      %1062 = vmatprep.subr.bf16.mxu0 0
      %1063 = vmatpush1.bf16.msra.mxu0 %v1060
      %1064 = vmatprep.subr.bf16.mxu0 0
      %1065 = vmatpush1.bf16.msra.mxu0 0
      %1066 = vmatprep.subr.bf16.mxu0 0
      %1067 = vmatpush1.bf16.msra.mxu0 0
      %1068 = vmatprep.subr.bf16.mxu0 0
      %1069 = vmatpush1.bf16.msra.mxu0 0
      %1070 = vmatprep.subr.bf16.mxu0 0
      %1071 = vmatpush1.bf16.msra.mxu0 0
      %1072 = vmatprep.subr.bf16.mxu0 0
      %1073 = vmatpush1.bf16.msra.mxu0 0
      %1074 = vmatprep.subr.bf16.mxu0 0
      %1075 = vmatpush1.bf16.msra.mxu0 0
      %1076 = vmatprep.subr.bf16.mxu0 0
      %1077 = vmatpush1.bf16.msra.mxu0 0
      %1078 = vmatprep.subr.bf16.mxu0 0
      %1079 = vmatpush1.bf16.msra.mxu0 0
      %1080 = vmatprep.subr.bf16.mxu0 0
      %1081 = vmatpush1.bf16.msra.mxu0 0
      %1082 = vmatprep.subr.bf16.mxu0 0
      %1083 = vmatpush1.bf16.msra.mxu0 0
      %1084 = vmatprep.subr.bf16.mxu0 0
      %1085 = vmatpush1.bf16.msra.mxu0 0
      %1086 = vmatprep.subr.bf16.mxu0 0
      %1087 = vmatpush1.bf16.msra.mxu0 0
      %1088 = vmatprep.subr.bf16.mxu0 0
      %1089 = vmatpush1.bf16.msra.mxu0 0
      %1090 = vmatprep.subr.bf16.mxu0 0
      %1091 = vmatpush1.bf16.msra.mxu0 0
      %1092 = vmatprep.subr.bf16.mxu0 0
      %1093 = vmatpush1.bf16.msra.mxu0 0
      %1094 = vmatprep.mubr.bf16.mxu0 0
      %1095 = vmatmul.mubr.bf16.gmra.mrb[0].mxu0 %v327
      %v1096 = vpop.f32.mrb[0].mxu0
      %v1097 = vadd.f32 0.0, %v1096
      %v1098 = vpop.f32.mrb[0].mxu0
      %v1099 = vpop.f32.mrb[0].mxu0
      %v1100 = vadd.f32 0.0, %v1099
      %v1101 = vpop.f32.mrb[0].mxu0
      %1102 = vmatprep.mubr.bf16.mxu0 0
      %1103 = vmatmul.mubr.bf16.gmra.mrb[0].mxu0 %v330
      %v1104 = vpop.f32.mrb[0].mxu0
      %v1105 = vadd.f32 0.0, %v1104
      %v1106 = vpop.f32.mrb[0].mxu0
      %v1107 = vpop.f32.mrb[0].mxu0
      %v1108 = vadd.f32 0.0, %v1107
      %v1109 = vpop.f32.mrb[0].mxu0
      %1110 = vmatprep.mubr.bf16.mxu0 0
      %1111 = vmatmul.mubr.bf16.gmra.mrb[0].mxu0 %v333
      %v1112 = vpop.f32.mrb[0].mxu0
      %v1113 = vadd.f32 0.0, %v1112
      %v1114 = vpop.f32.mrb[0].mxu0
      %v1115 = vpop.f32.mrb[0].mxu0
      %v1116 = vadd.f32 0.0, %v1115
      %v1117 = vpop.f32.mrb[0].mxu0
      %1118 = vmatprep.mubr.bf16.mxu0 0
      %1119 = vmatmul.mubr.bf16.gmra.mrb[0].mxu0 %v1057
      %v1120 = vpop.f32.mrb[0].mxu0
      %v1121 = vadd.f32 0.0, %v1120
      %v1122 = vpop.f32.mrb[0].mxu0
      %v1123 = vpop.f32.mrb[0].mxu0
      %v1124 = vadd.f32 0.0, %v1123
      %v1125 = vpop.f32.mrb[0].mxu0
      %1126 = vdwg.mxu0
      %v1127 = vadd.f32 %v1030, %v1097
      %v1128 = vadd.f32 %v1031, %v1100
      %v1129 = vadd.f32 %v1032, %v1105
      %v1130 = vadd.f32 %v1033, %v1108
      %v1131 = vadd.f32 %v1034, %v1113
      %v1132 = vadd.f32 %v1035, %v1116
      %v1133 = vadd.f32 %v1036, %v1121
      %v1134 = vadd.f32 %v1037, %v1124
      %v1136 = vrot.slane %v190, 5
      %v1137 = vrot.slane %v1136, 4
      %v1138 = vrot.slane %v191, 5
      %v1139 = vsel %vm514, %v1137, %v1138
      %s1140 = scalar_lea.vmem %s1, 16
      %v1141 = vld [vmem:[%s1140] sm:$0x3]
      %v1142 = vunpack.c.l.b16 %v1139
      %v1143 = vpack.c.b16 %v1142, %v861
      %v1145 = vsel %vm322, %v1143, 0
      %v1148 = vsel %vm335, %v1141, 0
      %1150 = vmatprep.subr.bf16.mxu0 0
      %1151 = vmatpush1.bf16.msra.mxu0 %v1148
      %1152 = vmatprep.subr.bf16.mxu0 0
      %1153 = vmatpush1.bf16.msra.mxu0 0
      %1154 = vmatprep.subr.bf16.mxu0 0
      %1155 = vmatpush1.bf16.msra.mxu0 0
      %1156 = vmatprep.subr.bf16.mxu0 0
      %1157 = vmatpush1.bf16.msra.mxu0 0
      %1158 = vmatprep.subr.bf16.mxu0 0
      %1159 = vmatpush1.bf16.msra.mxu0 0
      %1160 = vmatprep.subr.bf16.mxu0 0
      %1161 = vmatpush1.bf16.msra.mxu0 0
      %1162 = vmatprep.subr.bf16.mxu0 0
      %1163 = vmatpush1.bf16.msra.mxu0 0
      %1164 = vmatprep.subr.bf16.mxu0 0
      %1165 = vmatpush1.bf16.msra.mxu0 0
      %1166 = vmatprep.subr.bf16.mxu0 0
      %1167 = vmatpush1.bf16.msra.mxu0 0
      %1168 = vmatprep.subr.bf16.mxu0 0
      %1169 = vmatpush1.bf16.msra.mxu0 0
      %1170 = vmatprep.subr.bf16.mxu0 0
      %1171 = vmatpush1.bf16.msra.mxu0 0
      %1172 = vmatprep.subr.bf16.mxu0 0
      %1173 = vmatpush1.bf16.msra.mxu0 0
      %1174 = vmatprep.subr.bf16.mxu0 0
      %1175 = vmatpush1.bf16.msra.mxu0 0
      %1176 = vmatprep.subr.bf16.mxu0 0
      %1177 = vmatpush1.bf16.msra.mxu0 0
      %1178 = vmatprep.subr.bf16.mxu0 0
      %1179 = vmatpush1.bf16.msra.mxu0 0
      %1180 = vmatprep.subr.bf16.mxu0 0
      %1181 = vmatpush1.bf16.msra.mxu0 0
      %1182 = vmatprep.mubr.bf16.mxu0 0
      %1183 = vmatmul.mubr.bf16.gmra.mrb[0].mxu0 %v565
      %v1184 = vpop.f32.mrb[0].mxu0
      %v1185 = vadd.f32 0.0, %v1184
      %v1186 = vpop.f32.mrb[0].mxu0
      %v1187 = vpop.f32.mrb[0].mxu0
      %v1188 = vadd.f32 0.0, %v1187
      %v1189 = vpop.f32.mrb[0].mxu0
      %1190 = vmatprep.mubr.bf16.mxu0 0
      %1191 = vmatmul.mubr.bf16.gmra.mrb[0].mxu0 %v568
      %v1192 = vpop.f32.mrb[0].mxu0
      %v1193 = vadd.f32 0.0, %v1192
      %v1194 = vpop.f32.mrb[0].mxu0
      %v1195 = vpop.f32.mrb[0].mxu0
      %v1196 = vadd.f32 0.0, %v1195
      %v1197 = vpop.f32.mrb[0].mxu0
      %1198 = vmatprep.mubr.bf16.mxu0 0
      %1199 = vmatmul.mubr.bf16.gmra.mrb[0].mxu0 %v571
      %v1200 = vpop.f32.mrb[0].mxu0
      %v1201 = vadd.f32 0.0, %v1200
      %v1202 = vpop.f32.mrb[0].mxu0
      %v1203 = vpop.f32.mrb[0].mxu0
      %v1204 = vadd.f32 0.0, %v1203
      %v1205 = vpop.f32.mrb[0].mxu0
      %1206 = vmatprep.mubr.bf16.mxu0 0
      %1207 = vmatmul.mubr.bf16.gmra.mrb[0].mxu0 %v1145
      %v1208 = vpop.f32.mrb[0].mxu0
      %v1209 = vadd.f32 0.0, %v1208
      %v1210 = vpop.f32.mrb[0].mxu0
      %v1211 = vpop.f32.mrb[0].mxu0
      %v1212 = vadd.f32 0.0, %v1211
      %v1213 = vpop.f32.mrb[0].mxu0
      %1214 = vdwg.mxu0
      %v1215 = vadd.f32 %v1127, %v1185
      %v1216 = vadd.f32 %v1128, %v1188
      %v1217 = vadd.f32 %v1129, %v1193
      %v1218 = vadd.f32 %v1130, %v1196
      %v1219 = vadd.f32 %v1131, %v1201
      %v1220 = vadd.f32 %v1132, %v1204
      %v1221 = vadd.f32 %v1133, %v1209
      %v1222 = vadd.f32 %v1134, %v1212
      %v1223 = vld [vmem:[%s2] sm:$0x1]
      %v1225 = vlaneseq
      %v1226 = vshrl.u32 %v1225, 7
      %v1227 = vsub.s32 0, %v1226
      %v1228 = vrot.slane %v1223, %v1227
      %v1230 = vadd.f32 %v1215, %v1228
      %v1231 = vadd.f32 %v1216, %v1228
      %v1232 = vadd.f32 %v1217, %v1228
      %v1233 = vadd.f32 %v1218, %v1228
      %v1234 = vadd.f32 %v1219, %v1228
      %v1235 = vadd.f32 %v1220, %v1228
      %v1236 = vadd.f32 %v1221, %v1228
      %v1237 = vadd.f32 %v1222, %v1228
      %vm1238 = vcmp.ge.f32.partialorder %v1230, 0.0
      %vm1239 = vcmp.ge.f32.partialorder %v1231, 0.0
      %vm1240 = vcmp.ge.f32.partialorder %v1232, 0.0
      %vm1241 = vcmp.ge.f32.partialorder %v1233, 0.0
      %vm1242 = vcmp.ge.f32.partialorder %v1234, 0.0
      %vm1243 = vcmp.ge.f32.partialorder %v1235, 0.0
      %vm1244 = vcmp.ge.f32.partialorder %v1236, 0.0
      %vm1245 = vcmp.ge.f32.partialorder %v1237, 0.0
      %v1246 = vmul.f32 %v1230, 0.1
      %v1247 = vmul.f32 %v1231, 0.1
      %v1248 = vmul.f32 %v1232, 0.1
      %v1249 = vmul.f32 %v1233, 0.1
      %v1250 = vmul.f32 %v1234, 0.1
      %v1251 = vmul.f32 %v1235, 0.1
      %v1252 = vmul.f32 %v1236, 0.1
      %v1253 = vmul.f32 %v1237, 0.1
      %v1254 = vsel %vm1238, %v1230, %v1246
      %v1255 = vsel %vm1239, %v1231, %v1247
      %v1256 = vsel %vm1240, %v1232, %v1248
      %v1257 = vsel %vm1241, %v1233, %v1249
      %v1258 = vsel %vm1242, %v1234, %v1250
      %v1259 = vsel %vm1243, %v1235, %v1251
      %v1260 = vsel %vm1244, %v1236, %v1252
      %v1261 = vsel %vm1245, %v1237, %v1253
      %v1262 = vpack.c.bf16 %v1255, %v1254
      %v1263 = vpack.c.bf16 %v1257, %v1256
      %v1264 = vpack.c.bf16 %v1259, %v1258
      %v1265 = vpack.c.bf16 %v1261, %v1260
      %v1270 = vunpack.c.l.b16 %v1262
      %v1271 = vunpack.c.h.b16 %v1262
      %v1272 = vunpack.c.l.b16 %v1263
      %v1273 = vunpack.c.h.b16 %v1263
      %v1274 = vunpack.c.l.b16 %v1264
      %v1275 = vunpack.c.h.b16 %v1264
      %v1276 = vunpack.c.l.b16 %v1265
      %v1277 = vunpack.c.h.b16 %v1265
      %v1278 = vpack.c.b16 %v1270, %v1270
      %v1279 = vpack.c.b16 %v1271, %v1271
      %v1280 = vpack.c.b16 %v1272, %v1272
      %v1281 = vpack.c.b16 %v1273, %v1273
      %v1282 = vpack.c.b16 %v1274, %v1274
      %v1283 = vpack.c.b16 %v1275, %v1275
      %v1284 = vpack.c.b16 %v1276, %v1276
      %v1285 = vpack.c.b16 %v1277, %v1277
      %vm1294 = vcmask 60416
      %1295 = vst.msk [vmem:[%s170] sm:$0xf] %vm1294, %v1278
      %1296 = vst.msk [vmem:[%s170 + $0x4] sm:$0xf] %vm1294, %v1279
      %1297 = vst.msk [vmem:[%s170 + $0x8] sm:$0xf] %vm1294, %v1280
      %1298 = vst.msk [vmem:[%s170 + $0xc] sm:$0xf] %vm1294, %v1281
      %1299 = vst.msk [vmem:[%s170 + $0x10] sm:$0xf] %vm1294, %v1282
      %1300 = vst.msk [vmem:[%s170 + $0x14] sm:$0xf] %vm1294, %v1283
      %1301 = vst.msk [vmem:[%s170 + $0x18] sm:$0xf] %vm1294, %v1284
      %1302 = vst.msk [vmem:[%s170 + $0x1c] sm:$0xf] %vm1294, %v1285
      %p1303 = scmp.lt.s32.totalorder %s14, 1
      %s1304 = scalar_select %p1303, %s14, 1
      %s1305 = smul.addr %s1304, 8
      %s1306 = smul.addr %s1305, 4
      %s1307 = scalar_lea.vmem %s3, %s1306
      // Predicated region
      $region33: #{encoder_apply.10} parent=31 // pred_check
        %p1308 = pneg %p100
      $region34: #{encoder_apply.10} parent=31 // pred_check_branch
        %1310 = sbr.rel (%p1308) target = $region36
      $region35: #{encoder_apply.10} parent=31 // pred_region
        _
      $region36: #{encoder_apply.10} parent=31 // pred_fallthru
        _
    $region32: #{encoder_apply.10} parent=5 // pred_fallthru
      _
    %p1311 = scmp.le.s32.totalorder 2, %s9
    // Predicated region
    $region37: #{encoder_apply.10} parent=5 // pred_check
      %p1312 = pneg %p1311
    $region38: #{encoder_apply.10} parent=5 // pred_check_branch
      %1314 = sbr.rel (%p1312) target = $region40
    $region39: #{encoder_apply.10} parent=5 // pred_region
      %s1315 = ssub.s32 %s9, 2
      // Predicated region
      $region41: #{encoder_apply.10} parent=39 // pred_check
        %p1316 = pneg %p106
      $region42: #{encoder_apply.10} parent=39 // pred_check_branch
        %1318 = sbr.rel (%p1316) target = $region44
      $region43: #{encoder_apply.10} parent=39 // pred_region
        %p1319 = scmp.lt.s32.totalorder %s15, 1
        %s1320 = scalar_select %p1319, %s15, 1
        %s1321 = smul.addr %s1320, 8
        %s1322 = smul.addr %s1321, 4
        %s1323 = scalar_lea.vmem %s3, %s1322
      $region44: #{encoder_apply.10} parent=39 // pred_fallthru
        _
    $region40: #{encoder_apply.10} parent=5 // pred_fallthru
      _
  $region6: #{encoder_apply.10} parent=0 // loop_footer
    %s13 = sadd.s32 1, %s9
  $region7: #{encoder_apply.10} parent=0 // loop_footer_branch
    %8 = sbr.rel target = $region3
  $region8: #{encoder_apply.10} parent=0 // loop_exit
    _

// kernel: encoder_apply.11
$region0: #{encoder_apply.11}
  #allocation0 [shape = 'u32[]', space=smem, size = 0x4, offset = 0x4, fixed_abs, tag = 'smem constant byte address 0x4 - core index']
  #allocation1 [shape = 'u32[144,128]{1,0:T(1,128)}', space=vmem, size = 0x12000, scoped, tag = 'internal scratch']
  %s0 = inlined_call_operand.vmem [shape: bf16[2,10,10,8], index: 0, kind: input, shape index: {}]
  %s1 = inlined_call_operand.vmem [shape: bf16[3,3,8,8], index: 1, kind: input, shape index: {}]
  %s2 = inlined_call_operand.vmem [shape: f32[1,8], index: 2, kind: input, shape index: {}]
  %s3 = inlined_call_operand.vmem [shape: bf16[2,64,8], index: 3, kind: input, shape index: {}]
  %s4 = inlined_call_operand.vmem [shape: bf16[2,64,8], index: 4, kind: output, shape index: {}]
  %s5 = sld [smem:[#allocation0]]
  $region49: #{encoder_apply.11} parent=0
    _
  %s7 = ssub.s32 1, %s5
  %s8 = scalar_select 0, %s7, %s5
  loop: start=0, step=1, limit=4
  $region2: #{encoder_apply.11} parent=0 // loop_pre_header
    _
  $region3: #{encoder_apply.11} parent=0 // loop_header
    %s10 = sphi 0, %s14
    %p11 = scmp.ge.s32.totalorder %s10, 4
    %s20 = sphi 0, %s22
    %s23 = sphi 0, %s20
    %s24 = sphi 0, %s23
    %s40 = sphi 0, %s24
    %s44 = sphi 0, %s44
    %s46 = sphi 0, %s44
    %s47 = sphi 0, %s46
    %s61 = sphi 0, %s47
    %s65 = sphi 0, %s65
    %s67 = sphi 0, %s65
    %s68 = sphi 0, %s67
    %s82 = sphi 0, %s68
    %s88 = sphi 0, %s90
    %s91 = sphi 0, %s88
    %s92 = sphi 0, %s91
    %s108 = sphi 0, %s92
    %s114 = sphi 0, %s116
    %s117 = sphi 0, %s114
    %s118 = sphi 0, %s117
    %s134 = sphi 0, %s118
  $region4: #{encoder_apply.11} parent=0 // loop_header_branch
    %13 = sbr.rel (%p11) target = $region8
  $region5: #{encoder_apply.11} parent=0 // loop_body
    %s15 = ssub.s32 %s10, 1
    %s16 = ssub.s32 %s10, 2
    %s17 = sadd.s32 %s10, 1
    %s18 = ssub.s32 %s10, %s17
    %p19 = scmp.eq.s32.totalorder %s18, 0
    %s21 = sadd.s32 %s20, 1
    %s22 = scalar_select %p19, %s20, %s21
    %p25 = pneg %p19
    %p26 = scmp.eq.s32.totalorder %s10, 1
    %p27 = por %p25, %p26
    %p28 = scmp.ne.s32.totalorder %s20, %s23
    %p29 = scmp.eq.s32.totalorder %s10, 0
    %p30 = por %p28, %p29
    %p31 = scmp.ne.s32.totalorder %s20, %s23
    %p32 = scmp.eq.s32.totalorder %s15, 1
    %p33 = por %p31, %p32
    %p34 = scmp.ne.s32.totalorder %s23, %s24
    %p35 = scmp.eq.s32.totalorder %s15, 0
    %p36 = por %p34, %p35
    %p37 = scmp.ne.s32.totalorder %s23, %s24
    %p38 = scmp.eq.s32.totalorder %s16, 1
    %p39 = por %p37, %p38
    %p41 = scmp.ne.s32.totalorder %s24, %s40
    %p42 = scmp.eq.s32.totalorder %s16, 0
    %p43 = por %p41, %p42
    %s45 = sadd.s32 %s44, 1
    %p48 = scmp.eq.s32.totalorder %s10, 1
    %p49 = scmp.ne.s32.totalorder %s44, %s46
    %p50 = scmp.eq.s32.totalorder %s10, 0
    %p51 = por %p49, %p50
    %p52 = scmp.ne.s32.totalorder %s44, %s46
    %p53 = scmp.eq.s32.totalorder %s15, 1
    %p54 = por %p52, %p53
    %p55 = scmp.ne.s32.totalorder %s46, %s47
    %p56 = scmp.eq.s32.totalorder %s15, 0
    %p57 = por %p55, %p56
    %p58 = scmp.ne.s32.totalorder %s46, %s47
    %p59 = scmp.eq.s32.totalorder %s16, 1
    %p60 = por %p58, %p59
    %p62 = scmp.ne.s32.totalorder %s47, %s61
    %p63 = scmp.eq.s32.totalorder %s16, 0
    %p64 = por %p62, %p63
    %s66 = sadd.s32 %s65, 1
    %p69 = scmp.eq.s32.totalorder %s10, 1
    %p70 = scmp.ne.s32.totalorder %s65, %s67
    %p71 = scmp.eq.s32.totalorder %s10, 0
    %p72 = por %p70, %p71
    %p73 = scmp.ne.s32.totalorder %s65, %s67
    %p74 = scmp.eq.s32.totalorder %s15, 1
    %p75 = por %p73, %p74
    %p76 = scmp.ne.s32.totalorder %s67, %s68
    %p77 = scmp.eq.s32.totalorder %s15, 0
    %p78 = por %p76, %p77
    %p79 = scmp.ne.s32.totalorder %s67, %s68
    %p80 = scmp.eq.s32.totalorder %s16, 1
    %p81 = por %p79, %p80
    %p83 = scmp.ne.s32.totalorder %s68, %s82
    %p84 = scmp.eq.s32.totalorder %s16, 0
    %p85 = por %p83, %p84
    %s86 = ssub.s32 %s10, %s17
    %p87 = scmp.eq.s32.totalorder %s86, 0
    %s89 = sadd.s32 %s88, 1
    %s90 = scalar_select %p87, %s88, %s89
    %p93 = pneg %p87
    %p94 = scmp.eq.s32.totalorder %s10, 1
    %p95 = por %p93, %p94
    %p96 = scmp.ne.s32.totalorder %s88, %s91
    %p97 = scmp.eq.s32.totalorder %s10, 0
    %p98 = por %p96, %p97
    %p99 = scmp.ne.s32.totalorder %s88, %s91
    %p100 = scmp.eq.s32.totalorder %s15, 1
    %p101 = por %p99, %p100
    %p102 = scmp.ne.s32.totalorder %s91, %s92
    %p103 = scmp.eq.s32.totalorder %s15, 0
    %p104 = por %p102, %p103
    %p105 = scmp.ne.s32.totalorder %s91, %s92
    %p106 = scmp.eq.s32.totalorder %s16, 1
    %p107 = por %p105, %p106
    %p109 = scmp.ne.s32.totalorder %s92, %s108
    %p110 = scmp.eq.s32.totalorder %s16, 0
    %p111 = por %p109, %p110
    %s112 = ssub.s32 %s10, %s17
    %p113 = scmp.eq.s32.totalorder %s112, 0
    %s115 = sadd.s32 %s114, 1
    %s116 = scalar_select %p113, %s114, %s115
    %p119 = pneg %p113
    %p120 = scmp.eq.s32.totalorder %s10, 1
    %p121 = por %p119, %p120
    %p122 = scmp.ne.s32.totalorder %s114, %s117
    %p123 = scmp.eq.s32.totalorder %s10, 0
    %p124 = por %p122, %p123
    %p125 = scmp.ne.s32.totalorder %s114, %s117
    %p126 = scmp.eq.s32.totalorder %s15, 1
    %p127 = por %p125, %p126
    %p128 = scmp.ne.s32.totalorder %s117, %s118
    %p129 = scmp.eq.s32.totalorder %s15, 0
    %p130 = por %p128, %p129
    %p131 = scmp.ne.s32.totalorder %s117, %s118
    %p132 = scmp.eq.s32.totalorder %s16, 1
    %p133 = por %p131, %p132
    %p135 = scmp.ne.s32.totalorder %s118, %s134
    %p136 = scmp.eq.s32.totalorder %s16, 0
    %p137 = por %p135, %p136
    %p138 = scmp.le.s32.totalorder 1, %s10
    %p139 = scmp.lt.s32.totalorder %s10, 3
    %p140 = pnand %p138, %p139
    %p141 = pneg %p140
    // Predicated region
    $region9: #{encoder_apply.11} parent=5 // pred_check
      _
    $region10: #{encoder_apply.11} parent=5 // pred_check_branch
      %143 = sbr.rel (%p140) target = $region12
    $region11: #{encoder_apply.11} parent=5 // pred_region
      %s144 = ssub.s32 %s10, 1
      // Predicated region
      $region13: #{encoder_apply.11} parent=11 // pred_check
        %p145 = pneg %p57
      $region14: #{encoder_apply.11} parent=11 // pred_check_branch
        %147 = sbr.rel (%p145) target = $region16
      $region15: #{encoder_apply.11} parent=11 // pred_region
        _
      $region16: #{encoder_apply.11} parent=11 // pred_fallthru
        _
      // Predicated region
      $region17: #{encoder_apply.11} parent=11 // pred_check
        %p148 = pneg %p78
      $region18: #{encoder_apply.11} parent=11 // pred_check_branch
        %150 = sbr.rel (%p148) target = $region20
      $region19: #{encoder_apply.11} parent=11 // pred_region
        _
      $region20: #{encoder_apply.11} parent=11 // pred_fallthru
        _
    $region12: #{encoder_apply.11} parent=5 // pred_fallthru
      _
    %p151 = scmp.lt.s32.totalorder %s10, 2
    // Predicated region
    $region21: #{encoder_apply.11} parent=5 // pred_check
      %p152 = pneg %p151
    $region22: #{encoder_apply.11} parent=5 // pred_check_branch
      %154 = sbr.rel (%p152) target = $region24
    $region23: #{encoder_apply.11} parent=5 // pred_region
      // Predicated region
      $region25: #{encoder_apply.11} parent=23 // pred_check
        %p155 = pneg %p30
      $region26: #{encoder_apply.11} parent=23 // pred_check_branch
        %157 = sbr.rel (%p155) target = $region28
      $region27: #{encoder_apply.11} parent=23 // pred_region
        %p158 = scmp.lt.s32.totalorder %s10, 1
        %s159 = scalar_select %p158, %s10, 1
        %s160 = smul.addr %s159, 20
        %s161 = smul.addr %s160, 4
        %s162 = scalar_lea.vmem %s0, %s161
      $region28: #{encoder_apply.11} parent=23 // pred_fallthru
        _
      // Predicated region
      $region29: #{encoder_apply.11} parent=23 // pred_check
        %p163 = pneg %p98
      $region30: #{encoder_apply.11} parent=23 // pred_check_branch
        %165 = sbr.rel (%p163) target = $region32
      $region31: #{encoder_apply.11} parent=23 // pred_region
        %p166 = scmp.lt.s32.totalorder %s10, 1
        %s167 = scalar_select %p166, %s10, 1
        %s168 = smul.addr %s167, 8
        %s169 = smul.addr %s168, 4
        %s170 = scalar_lea.vmem %s3, %s169
      $region32: #{encoder_apply.11} parent=23 // pred_fallthru
        _
    $region24: #{encoder_apply.11} parent=5 // pred_fallthru
      _
    %p171 = scmp.le.s32.totalorder 1, %s10
    %p172 = scmp.lt.s32.totalorder %s10, 3
    %p173 = pnand %p171, %p172
    %p174 = pneg %p173
    // Predicated region
    $region33: #{encoder_apply.11} parent=5 // pred_check
      _
    $region34: #{encoder_apply.11} parent=5 // pred_check_branch
      %176 = sbr.rel (%p173) target = $region36
    $region35: #{encoder_apply.11} parent=5 // pred_region
      %s177 = ssub.s32 %s10, 1
      %p178 = scmp.lt.s32.totalorder %s15, 1
      %s179 = scalar_select %p178, %s15, 1
      %s180 = smul.addr %s179, 20
      %s181 = smul.addr %s180, 4
      %s182 = scalar_lea.vmem %s0, %s181
      %p183 = pneg %p36
      %p184 = pneg %p33
      %p185 = pneg %p57
      %p186 = pneg %p54
      %p187 = pneg %p78
      %p188 = pneg %p75
      %p189 = scmp.lt.s32.totalorder %s15, 1
      %s190 = scalar_select %p189, %s15, 1
      %s191 = smul.addr %s190, 8
      %s192 = smul.addr %s191, 4
      %s193 = scalar_lea.vmem %s3, %s192
      %p194 = pneg %p104
      %p195 = pneg %p101
      %p196 = pneg %p130
      %p197 = pneg %p127
      %p198 = scmp.lt.s32.totalorder %s15, 1
      %s199 = scalar_select %p198, %s15, 1
      %s200 = smul.addr %s199, 8
      %s201 = smul.addr %s200, 4
      %s202 = scalar_lea.vmem %s4, %s201
      %p203 = scmp.lt.s32.totalorder %s15, 1
      %s204 = scalar_select %p203, %s15, 1
      %s205 = smul.addr %s204, 20
      %s206 = smul.addr %s205, 4
      %s207 = scalar_lea.vmem %s0, %s206
      %p208 = scmp.lt.s32.totalorder %s15, 1
      %s209 = scalar_select %p208, %s15, 1
      %s210 = smul.addr %s209, 8
      %s211 = smul.addr %s210, 4
      %s212 = scalar_lea.vmem %s3, %s211
      %p213 = scmp.lt.s32.totalorder %s15, 1
      %s214 = scalar_select %p213, %s15, 1
      %s215 = smul.addr %s214, 8
      %s216 = smul.addr %s215, 4
      %s217 = scalar_lea.vmem %s4, %s216
      %v219 = vld [vmem:[%s207] sm:$0xf]
      %v220 = vld [vmem:[%s207 + $0x4] sm:$0x1]
      %v221 = vld [vmem:[%s207 + $0x8] sm:$0xf]
      %v222 = vld [vmem:[%s207 + $0xc] sm:$0x1]
      %v223 = vld [vmem:[%s207 + $0x10] sm:$0xf]
      %v224 = vld [vmem:[%s207 + $0x14] sm:$0x1]
      %v225 = vld [vmem:[%s207 + $0x18] sm:$0xf]
      %v226 = vld [vmem:[%s207 + $0x1c] sm:$0x1]
      %v227 = vld [vmem:[%s207 + $0x20] sm:$0xf]
      %v228 = vld [vmem:[%s207 + $0x24] sm:$0x1]
      %v229 = vld [vmem:[%s207 + $0x28] sm:$0xf]
      %v230 = vld [vmem:[%s207 + $0x2c] sm:$0x1]
      %v231 = vld [vmem:[%s207 + $0x30] sm:$0xf]
      %v232 = vld [vmem:[%s207 + $0x34] sm:$0x1]
      %v233 = vld [vmem:[%s207 + $0x38] sm:$0xf]
      %v234 = vld [vmem:[%s207 + $0x3c] sm:$0x1]
      %v235 = vld [vmem:[%s207 + $0x40] sm:$0xf]
      %v236 = vld [vmem:[%s207 + $0x44] sm:$0x1]
      %v237 = vld [vmem:[%s207 + $0x48] sm:$0xf]
      %v238 = vld [vmem:[%s207 + $0x4c] sm:$0x1]
      %v239 = vld [vmem:[%s1] sm:$0xf]
      %vm240 = vsmask.f32 3328
      %vm241 = vsmask.f32 7440
      %vm242 = vmor %vm240, %vm241
      %v244 = vshrl.u32 %v219, 16
      %v246 = vrot.slane %v244, 4
      %v247 = vshll.u32 %v219, 16
      %v249 = vrot.slane %v247, 5
      %v250 = vor.u32 %v246, %v249
      %v251 = vrot.slane %v250, 4
      %v253 = vshll.u32 %v220, 16
      %v255 = vrot.slane %v253, 5
      %v256 = vsel %vm242, %v251, %v255
      %v258 = vshrl.u32 %v221, 16
      %v260 = vrot.slane %v258, 4
      %v261 = vshll.u32 %v221, 16
      %v263 = vrot.slane %v261, 5
      %v264 = vor.u32 %v260, %v263
      %v265 = vrot.slane %v264, 4
      %v267 = vshll.u32 %v222, 16
      %v269 = vrot.slane %v267, 5
      %v270 = vsel %vm242, %v265, %v269
      %v272 = vshrl.u32 %v223, 16
      %v274 = vrot.slane %v272, 4
      %v275 = vshll.u32 %v223, 16
      %v277 = vrot.slane %v275, 5
      %v278 = vor.u32 %v274, %v277
      %v279 = vrot.slane %v278, 4
      %v281 = vshll.u32 %v224, 16
      %v283 = vrot.slane %v281, 5
      %v284 = vsel %vm242, %v279, %v283
      %v286 = vshrl.u32 %v225, 16
      %v288 = vrot.slane %v286, 4
      %v289 = vshll.u32 %v225, 16
      %v291 = vrot.slane %v289, 5
      %v292 = vor.u32 %v288, %v291
      %v293 = vrot.slane %v292, 4
      %v295 = vshll.u32 %v226, 16
      %v297 = vrot.slane %v295, 5
      %v298 = vsel %vm242, %v293, %v297
      %v300 = vshrl.u32 %v227, 16
      %v302 = vrot.slane %v300, 4
      %v303 = vshll.u32 %v227, 16
      %v305 = vrot.slane %v303, 5
      %v306 = vor.u32 %v302, %v305
      %v307 = vrot.slane %v306, 4
      %v309 = vshll.u32 %v228, 16
      %v311 = vrot.slane %v309, 5
      %v312 = vsel %vm242, %v307, %v311
      %v314 = vshrl.u32 %v229, 16
      %v316 = vrot.slane %v314, 4
      %v317 = vshll.u32 %v229, 16
      %v319 = vrot.slane %v317, 5
      %v320 = vor.u32 %v316, %v319
      %v321 = vrot.slane %v320, 4
      %v323 = vshll.u32 %v230, 16
      %v325 = vrot.slane %v323, 5
      %v326 = vsel %vm242, %v321, %v325
      %v328 = vshrl.u32 %v231, 16
      %v330 = vrot.slane %v328, 4
      %v331 = vshll.u32 %v231, 16
      %v333 = vrot.slane %v331, 5
      %v334 = vor.u32 %v330, %v333
      %v335 = vrot.slane %v334, 4
      %v337 = vshll.u32 %v232, 16
      %v339 = vrot.slane %v337, 5
      %v340 = vsel %vm242, %v335, %v339
      %v342 = vshrl.u32 %v233, 16
      %v344 = vrot.slane %v342, 4
      %v345 = vshll.u32 %v233, 16
      %v347 = vrot.slane %v345, 5
      %v348 = vor.u32 %v344, %v347
      %v349 = vrot.slane %v348, 4
      %v351 = vshll.u32 %v234, 16
      %v353 = vrot.slane %v351, 5
      %v354 = vsel %vm242, %v349, %v353
      %s355 = scalar_lea.vmem %s1, 4
      %v356 = vld [vmem:[%s355] sm:$0xf]
      %v357 = vunpack.c.l.b16 %v256
      %v358 = vunpack.c.l.b16 %v270
      %v359 = vunpack.c.l.b16 %v284
      %v360 = vunpack.c.l.b16 %v298
      %v361 = vunpack.c.l.b16 %v312
      %v362 = vunpack.c.l.b16 %v326
      %v363 = vunpack.c.l.b16 %v340
      %v364 = vunpack.c.l.b16 %v354
      %v365 = vpack.c.b16 %v358, %v357
      %v366 = vpack.c.b16 %v360, %v359
      %v367 = vpack.c.b16 %v362, %v361
      %v368 = vpack.c.b16 %v364, %v363
      %vm369 = vcmask 64512
      %v371 = vsel %vm369, %v365, 0
      %v374 = vsel %vm369, %v366, 0
      %v377 = vsel %vm369, %v367, 0
      %v380 = vsel %vm369, %v368, 0
      %vm382 = vcmask 1043456
      %v384 = vsel %vm382, %v356, 0
      %386 = vmatprep.subr.bf16.mxu0 0
      %387 = vmatpush1.bf16.msra.mxu0 %v384
      %388 = vmatprep.subr.bf16.mxu0 0
      %389 = vmatpush1.bf16.msra.mxu0 0
      %390 = vmatprep.subr.bf16.mxu0 0
      %391 = vmatpush1.bf16.msra.mxu0 0
      %392 = vmatprep.subr.bf16.mxu0 0
      %393 = vmatpush1.bf16.msra.mxu0 0
      %394 = vmatprep.subr.bf16.mxu0 0
      %395 = vmatpush1.bf16.msra.mxu0 0
      %396 = vmatprep.subr.bf16.mxu0 0
      %397 = vmatpush1.bf16.msra.mxu0 0
      %398 = vmatprep.subr.bf16.mxu0 0
      %399 = vmatpush1.bf16.msra.mxu0 0
      %400 = vmatprep.subr.bf16.mxu0 0
      %401 = vmatpush1.bf16.msra.mxu0 0
      %402 = vmatprep.subr.bf16.mxu0 0
      %403 = vmatpush1.bf16.msra.mxu0 0
      %404 = vmatprep.subr.bf16.mxu0 0
      %405 = vmatpush1.bf16.msra.mxu0 0
      %406 = vmatprep.subr.bf16.mxu0 0
      %407 = vmatpush1.bf16.msra.mxu0 0
      %408 = vmatprep.subr.bf16.mxu0 0
      %409 = vmatpush1.bf16.msra.mxu0 0
      %410 = vmatprep.subr.bf16.mxu0 0
      %411 = vmatpush1.bf16.msra.mxu0 0
      %412 = vmatprep.subr.bf16.mxu0 0
      %413 = vmatpush1.bf16.msra.mxu0 0
      %414 = vmatprep.subr.bf16.mxu0 0
      %415 = vmatpush1.bf16.msra.mxu0 0
      %416 = vmatprep.subr.bf16.mxu0 0
      %417 = vmatpush1.bf16.msra.mxu0 0
      %418 = vmatprep.mubr.bf16.mxu0 0
      %419 = vmatmul.mubr.bf16.gmra.mrb[0].mxu0 %v371
      %v420 = vpop.f32.mrb[0].mxu0
      %v421 = vadd.f32 0.0, %v420
      %v422 = vpop.f32.mrb[0].mxu0
      %v423 = vpop.f32.mrb[0].mxu0
      %v424 = vadd.f32 0.0, %v423
      %v425 = vpop.f32.mrb[0].mxu0
      %426 = vmatprep.mubr.bf16.mxu0 0
      %427 = vmatmul.mubr.bf16.gmra.mrb[0].mxu0 %v374
      %v428 = vpop.f32.mrb[0].mxu0
      %v429 = vadd.f32 0.0, %v428
      %v430 = vpop.f32.mrb[0].mxu0
      %v431 = vpop.f32.mrb[0].mxu0
      %v432 = vadd.f32 0.0, %v431
      %v433 = vpop.f32.mrb[0].mxu0
      %434 = vmatprep.mubr.bf16.mxu0 0
      %435 = vmatmul.mubr.bf16.gmra.mrb[0].mxu0 %v377
      %v436 = vpop.f32.mrb[0].mxu0
      %v437 = vadd.f32 0.0, %v436
      %v438 = vpop.f32.mrb[0].mxu0
      %v439 = vpop.f32.mrb[0].mxu0
      %v440 = vadd.f32 0.0, %v439
      %v441 = vpop.f32.mrb[0].mxu0
      %442 = vmatprep.mubr.bf16.mxu0 0
      %443 = vmatmul.mubr.bf16.gmra.mrb[0].mxu0 %v380
      %v444 = vpop.f32.mrb[0].mxu0
      %v445 = vadd.f32 0.0, %v444
      %v446 = vpop.f32.mrb[0].mxu0
      %v447 = vpop.f32.mrb[0].mxu0
      %v448 = vadd.f32 0.0, %v447
      %v449 = vpop.f32.mrb[0].mxu0
      %450 = vdwg.mxu0
      %v459 = vunpack.c.l.b16 %v219
      %v460 = vunpack.c.l.b16 %v221
      %v461 = vunpack.c.l.b16 %v223
      %v462 = vunpack.c.l.b16 %v225
      %v463 = vunpack.c.l.b16 %v227
      %v464 = vunpack.c.l.b16 %v229
      %v465 = vunpack.c.l.b16 %v231
      %v466 = vunpack.c.l.b16 %v233
      %v467 = vpack.c.b16 %v460, %v459
      %v468 = vpack.c.b16 %v462, %v461
      %v469 = vpack.c.b16 %v464, %v463
      %v470 = vpack.c.b16 %v466, %v465
      %v472 = vsel %vm369, %v467, 0
      %v475 = vsel %vm369, %v468, 0
      %v478 = vsel %vm369, %v469, 0
      %v481 = vsel %vm369, %v470, 0
      %v484 = vsel %vm382, %v239, 0
      %486 = vmatprep.subr.bf16.mxu0 0
      %487 = vmatpush1.bf16.msra.mxu0 %v484
      %488 = vmatprep.subr.bf16.mxu0 0
      %489 = vmatpush1.bf16.msra.mxu0 0
      %490 = vmatprep.subr.bf16.mxu0 0
      %491 = vmatpush1.bf16.msra.mxu0 0
      %492 = vmatprep.subr.bf16.mxu0 0
      %493 = vmatpush1.bf16.msra.mxu0 0
      %494 = vmatprep.subr.bf16.mxu0 0
      %495 = vmatpush1.bf16.msra.mxu0 0
      %496 = vmatprep.subr.bf16.mxu0 0
      %497 = vmatpush1.bf16.msra.mxu0 0
      %498 = vmatprep.subr.bf16.mxu0 0
      %499 = vmatpush1.bf16.msra.mxu0 0
      %500 = vmatprep.subr.bf16.mxu0 0
      %501 = vmatpush1.bf16.msra.mxu0 0
      %502 = vmatprep.subr.bf16.mxu0 0
      %503 = vmatpush1.bf16.msra.mxu0 0
      %504 = vmatprep.subr.bf16.mxu0 0
      %505 = vmatpush1.bf16.msra.mxu0 0
      %506 = vmatprep.subr.bf16.mxu0 0
      %507 = vmatpush1.bf16.msra.mxu0 0
      %508 = vmatprep.subr.bf16.mxu0 0
      %509 = vmatpush1.bf16.msra.mxu0 0
      %510 = vmatprep.subr.bf16.mxu0 0
      %511 = vmatpush1.bf16.msra.mxu0 0
      %512 = vmatprep.subr.bf16.mxu0 0
      %513 = vmatpush1.bf16.msra.mxu0 0
      %514 = vmatprep.subr.bf16.mxu0 0
      %515 = vmatpush1.bf16.msra.mxu0 0
      %516 = vmatprep.subr.bf16.mxu0 0
      %517 = vmatpush1.bf16.msra.mxu0 0
      %518 = vmatprep.mubr.bf16.mxu0 0
      %519 = vmatmul.mubr.bf16.gmra.mrb[0].mxu0 %v472
      %v520 = vpop.f32.mrb[0].mxu0
      %v521 = vadd.f32 %v421, %v520
      %v522 = vpop.f32.mrb[0].mxu0
      %v523 = vpop.f32.mrb[0].mxu0
      %v524 = vadd.f32 %v424, %v523
      %v525 = vpop.f32.mrb[0].mxu0
      %526 = vmatprep.mubr.bf16.mxu0 0
      %527 = vmatmul.mubr.bf16.gmra.mrb[0].mxu0 %v475
      %v528 = vpop.f32.mrb[0].mxu0
      %v529 = vadd.f32 %v429, %v528
      %v530 = vpop.f32.mrb[0].mxu0
      %v531 = vpop.f32.mrb[0].mxu0
      %v532 = vadd.f32 %v432, %v531
      %v533 = vpop.f32.mrb[0].mxu0
      %534 = vmatprep.mubr.bf16.mxu0 0
      %535 = vmatmul.mubr.bf16.gmra.mrb[0].mxu0 %v478
      %v536 = vpop.f32.mrb[0].mxu0
      %v537 = vadd.f32 %v437, %v536
      %v538 = vpop.f32.mrb[0].mxu0
      %v539 = vpop.f32.mrb[0].mxu0
      %v540 = vadd.f32 %v440, %v539
      %v541 = vpop.f32.mrb[0].mxu0
      %542 = vmatprep.mubr.bf16.mxu0 0
      %543 = vmatmul.mubr.bf16.gmra.mrb[0].mxu0 %v481
      %v544 = vpop.f32.mrb[0].mxu0
      %v545 = vadd.f32 %v445, %v544
      %v546 = vpop.f32.mrb[0].mxu0
      %v547 = vpop.f32.mrb[0].mxu0
      %v548 = vadd.f32 %v448, %v547
      %v549 = vpop.f32.mrb[0].mxu0
      %550 = vdwg.mxu0
      %vm559 = vcmask 1042432
      %vm560 = vcmask 1046532
      %vm561 = vmor %vm559, %vm560
      %v562 = vrot.slane %v219, 5
      %v563 = vrot.slane %v562, 4
      %v564 = vrot.slane %v220, 5
      %v565 = vsel %vm561, %v563, %v564
      %v566 = vrot.slane %v221, 5
      %v567 = vrot.slane %v566, 4
      %v568 = vrot.slane %v222, 5
      %v569 = vsel %vm561, %v567, %v568
      %v570 = vrot.slane %v223, 5
      %v571 = vrot.slane %v570, 4
      %v572 = vrot.slane %v224, 5
      %v573 = vsel %vm561, %v571, %v572
      %v574 = vrot.slane %v225, 5
      %v575 = vrot.slane %v574, 4
      %v576 = vrot.slane %v226, 5
      %v577 = vsel %vm561, %v575, %v576
      %v578 = vrot.slane %v227, 5
      %v579 = vrot.slane %v578, 4
      %v580 = vrot.slane %v228, 5
      %v581 = vsel %vm561, %v579, %v580
      %v582 = vrot.slane %v229, 5
      %v583 = vrot.slane %v582, 4
      %v584 = vrot.slane %v230, 5
      %v585 = vsel %vm561, %v583, %v584
      %v586 = vrot.slane %v231, 5
      %v587 = vrot.slane %v586, 4
      %v588 = vrot.slane %v232, 5
      %v589 = vsel %vm561, %v587, %v588
      %v590 = vrot.slane %v233, 5
      %v591 = vrot.slane %v590, 4
      %v592 = vrot.slane %v234, 5
      %v593 = vsel %vm561, %v591, %v592
      %s594 = scalar_lea.vmem %s1, 8
      %v595 = vld [vmem:[%s594] sm:$0xf]
      %v596 = vunpack.c.l.b16 %v565
      %v597 = vunpack.c.l.b16 %v569
      %v598 = vunpack.c.l.b16 %v573
      %v599 = vunpack.c.l.b16 %v577
      %v600 = vunpack.c.l.b16 %v581
      %v601 = vunpack.c.l.b16 %v585
      %v602 = vunpack.c.l.b16 %v589
      %v603 = vunpack.c.l.b16 %v593
      %v604 = vpack.c.b16 %v597, %v596
      %v605 = vpack.c.b16 %v599, %v598
      %v606 = vpack.c.b16 %v601, %v600
      %v607 = vpack.c.b16 %v603, %v602
      %v609 = vsel %vm369, %v604, 0
      %v612 = vsel %vm369, %v605, 0
      %v615 = vsel %vm369, %v606, 0
      %v618 = vsel %vm369, %v607, 0
      %v621 = vsel %vm382, %v595, 0
      %623 = vmatprep.subr.bf16.mxu0 0
      %624 = vmatpush1.bf16.msra.mxu0 %v621
      %625 = vmatprep.subr.bf16.mxu0 0
      %626 = vmatpush1.bf16.msra.mxu0 0
      %627 = vmatprep.subr.bf16.mxu0 0
      %628 = vmatpush1.bf16.msra.mxu0 0
      %629 = vmatprep.subr.bf16.mxu0 0
      %630 = vmatpush1.bf16.msra.mxu0 0
      %631 = vmatprep.subr.bf16.mxu0 0
      %632 = vmatpush1.bf16.msra.mxu0 0
      %633 = vmatprep.subr.bf16.mxu0 0
      %634 = vmatpush1.bf16.msra.mxu0 0
      %635 = vmatprep.subr.bf16.mxu0 0
      %636 = vmatpush1.bf16.msra.mxu0 0
      %637 = vmatprep.subr.bf16.mxu0 0
      %638 = vmatpush1.bf16.msra.mxu0 0
      %639 = vmatprep.subr.bf16.mxu0 0
      %640 = vmatpush1.bf16.msra.mxu0 0
      %641 = vmatprep.subr.bf16.mxu0 0
      %642 = vmatpush1.bf16.msra.mxu0 0
      %643 = vmatprep.subr.bf16.mxu0 0
      %644 = vmatpush1.bf16.msra.mxu0 0
      %645 = vmatprep.subr.bf16.mxu0 0
      %646 = vmatpush1.bf16.msra.mxu0 0
      %647 = vmatprep.subr.bf16.mxu0 0
      %648 = vmatpush1.bf16.msra.mxu0 0
      %649 = vmatprep.subr.bf16.mxu0 0
      %650 = vmatpush1.bf16.msra.mxu0 0
      %651 = vmatprep.subr.bf16.mxu0 0
      %652 = vmatpush1.bf16.msra.mxu0 0
      %653 = vmatprep.subr.bf16.mxu0 0
      %654 = vmatpush1.bf16.msra.mxu0 0
      %655 = vmatprep.mubr.bf16.mxu0 0
      %656 = vmatmul.mubr.bf16.gmra.mrb[0].mxu0 %v609
      %v657 = vpop.f32.mrb[0].mxu0
      %v658 = vadd.f32 0.0, %v657
      %v659 = vpop.f32.mrb[0].mxu0
      %v660 = vpop.f32.mrb[0].mxu0
      %v661 = vadd.f32 0.0, %v660
      %v662 = vpop.f32.mrb[0].mxu0
      %663 = vmatprep.mubr.bf16.mxu0 0
      %664 = vmatmul.mubr.bf16.gmra.mrb[0].mxu0 %v612
      %v665 = vpop.f32.mrb[0].mxu0
      %v666 = vadd.f32 0.0, %v665
      %v667 = vpop.f32.mrb[0].mxu0
      %v668 = vpop.f32.mrb[0].mxu0
      %v669 = vadd.f32 0.0, %v668
      %v670 = vpop.f32.mrb[0].mxu0
      %671 = vmatprep.mubr.bf16.mxu0 0
      %672 = vmatmul.mubr.bf16.gmra.mrb[0].mxu0 %v615
      %v673 = vpop.f32.mrb[0].mxu0
      %v674 = vadd.f32 0.0, %v673
      %v675 = vpop.f32.mrb[0].mxu0
      %v676 = vpop.f32.mrb[0].mxu0
      %v677 = vadd.f32 0.0, %v676
      %v678 = vpop.f32.mrb[0].mxu0
      %679 = vmatprep.mubr.bf16.mxu0 0
      %680 = vmatmul.mubr.bf16.gmra.mrb[0].mxu0 %v618
      %v681 = vpop.f32.mrb[0].mxu0
      %v682 = vadd.f32 0.0, %v681
      %v683 = vpop.f32.mrb[0].mxu0
      %v684 = vpop.f32.mrb[0].mxu0
      %v685 = vadd.f32 0.0, %v684
      %v686 = vpop.f32.mrb[0].mxu0
      %687 = vdwg.mxu0
      %v688 = vadd.f32 %v521, %v658
      %v689 = vadd.f32 %v524, %v661
      %v690 = vadd.f32 %v529, %v666
      %v691 = vadd.f32 %v532, %v669
      %v692 = vadd.f32 %v537, %v674
      %v693 = vadd.f32 %v540, %v677
      %v694 = vadd.f32 %v545, %v682
      %v695 = vadd.f32 %v548, %v685
      %s696 = scalar_lea.vmem %s1, 12
      %v697 = vld [vmem:[%s696] sm:$0xf]
      %v699 = vunpack.c.l.b16 %v235
      %v700 = vpack.c.b16 %v461, %v460
      %v701 = vpack.c.b16 %v463, %v462
      %v702 = vpack.c.b16 %v465, %v464
      %v703 = vpack.c.b16 %v699, %v466
      %v705 = vsel %vm369, %v700, 0
      %v708 = vsel %vm369, %v701, 0
      %v711 = vsel %vm369, %v702, 0
      %v714 = vsel %vm369, %v703, 0
      %v717 = vsel %vm382, %v697, 0
      %719 = vmatprep.subr.bf16.mxu0 0
      %720 = vmatpush1.bf16.msra.mxu0 %v717
      %721 = vmatprep.subr.bf16.mxu0 0
      %722 = vmatpush1.bf16.msra.mxu0 0
      %723 = vmatprep.subr.bf16.mxu0 0
      %724 = vmatpush1.bf16.msra.mxu0 0
      %725 = vmatprep.subr.bf16.mxu0 0
      %726 = vmatpush1.bf16.msra.mxu0 0
      %727 = vmatprep.subr.bf16.mxu0 0
      %728 = vmatpush1.bf16.msra.mxu0 0
      %729 = vmatprep.subr.bf16.mxu0 0
      %730 = vmatpush1.bf16.msra.mxu0 0
      %731 = vmatprep.subr.bf16.mxu0 0
      %732 = vmatpush1.bf16.msra.mxu0 0
      %733 = vmatprep.subr.bf16.mxu0 0
      %734 = vmatpush1.bf16.msra.mxu0 0
      %735 = vmatprep.subr.bf16.mxu0 0
      %736 = vmatpush1.bf16.msra.mxu0 0
      %737 = vmatprep.subr.bf16.mxu0 0
      %738 = vmatpush1.bf16.msra.mxu0 0
      %739 = vmatprep.subr.bf16.mxu0 0
      %740 = vmatpush1.bf16.msra.mxu0 0
      %741 = vmatprep.subr.bf16.mxu0 0
      %742 = vmatpush1.bf16.msra.mxu0 0
      %743 = vmatprep.subr.bf16.mxu0 0
      %744 = vmatpush1.bf16.msra.mxu0 0
      %745 = vmatprep.subr.bf16.mxu0 0
      %746 = vmatpush1.bf16.msra.mxu0 0
      %747 = vmatprep.subr.bf16.mxu0 0
      %748 = vmatpush1.bf16.msra.mxu0 0
      %749 = vmatprep.subr.bf16.mxu0 0
      %750 = vmatpush1.bf16.msra.mxu0 0
      %751 = vmatprep.mubr.bf16.mxu0 0
      %752 = vmatmul.mubr.bf16.gmra.mrb[0].mxu0 %v705
      %v753 = vpop.f32.mrb[0].mxu0
      %v754 = vadd.f32 0.0, %v753
      %v755 = vpop.f32.mrb[0].mxu0
      %v756 = vpop.f32.mrb[0].mxu0
      %v757 = vadd.f32 0.0, %v756
      %v758 = vpop.f32.mrb[0].mxu0
      %759 = vmatprep.mubr.bf16.mxu0 0
      %760 = vmatmul.mubr.bf16.gmra.mrb[0].mxu0 %v708
      %v761 = vpop.f32.mrb[0].mxu0
      %v762 = vadd.f32 0.0, %v761
      %v763 = vpop.f32.mrb[0].mxu0
      %v764 = vpop.f32.mrb[0].mxu0
      %v765 = vadd.f32 0.0, %v764
      %v766 = vpop.f32.mrb[0].mxu0
      %767 = vmatprep.mubr.bf16.mxu0 0
      %768 = vmatmul.mubr.bf16.gmra.mrb[0].mxu0 %v711
      %v769 = vpop.f32.mrb[0].mxu0
      %v770 = vadd.f32 0.0, %v769
      %v771 = vpop.f32.mrb[0].mxu0
      %v772 = vpop.f32.mrb[0].mxu0
      %v773 = vadd.f32 0.0, %v772
      %v774 = vpop.f32.mrb[0].mxu0
      %775 = vmatprep.mubr.bf16.mxu0 0
      %776 = vmatmul.mubr.bf16.gmra.mrb[0].mxu0 %v714
      %v777 = vpop.f32.mrb[0].mxu0
      %v778 = vadd.f32 0.0, %v777
      %v779 = vpop.f32.mrb[0].mxu0
      %v780 = vpop.f32.mrb[0].mxu0
      %v781 = vadd.f32 0.0, %v780
      %v782 = vpop.f32.mrb[0].mxu0
      %783 = vdwg.mxu0
      %v784 = vadd.f32 %v688, %v754
      %v785 = vadd.f32 %v689, %v757
      %v786 = vadd.f32 %v690, %v762
      %v787 = vadd.f32 %v691, %v765
      %v788 = vadd.f32 %v692, %v770
      %v789 = vadd.f32 %v693, %v773
      %v790 = vadd.f32 %v694, %v778
      %v791 = vadd.f32 %v695, %v781
      %v793 = vshrl.u32 %v235, 16
      %v795 = vrot.slane %v793, 4
      %v796 = vshll.u32 %v235, 16
      %v798 = vrot.slane %v796, 5
      %v799 = vor.u32 %v795, %v798
      %v800 = vrot.slane %v799, 4
      %v802 = vshll.u32 %v236, 16
      %v804 = vrot.slane %v802, 5
      %v805 = vsel %vm242, %v800, %v804
      %s806 = scalar_lea.vmem %s1, 16
      %v807 = vld [vmem:[%s806] sm:$0xf]
      %v808 = vunpack.c.l.b16 %v805
      %v809 = vpack.c.b16 %v359, %v358
      %v810 = vpack.c.b16 %v361, %v360
      %v811 = vpack.c.b16 %v363, %v362
      %v812 = vpack.c.b16 %v808, %v364
      %v814 = vsel %vm369, %v809, 0
      %v817 = vsel %vm369, %v810, 0
      %v820 = vsel %vm369, %v811, 0
      %v823 = vsel %vm369, %v812, 0
      %v826 = vsel %vm382, %v807, 0
      %828 = vmatprep.subr.bf16.mxu0 0
      %829 = vmatpush1.bf16.msra.mxu0 %v826
      %830 = vmatprep.subr.bf16.mxu0 0
      %831 = vmatpush1.bf16.msra.mxu0 0
      %832 = vmatprep.subr.bf16.mxu0 0
      %833 = vmatpush1.bf16.msra.mxu0 0
      %834 = vmatprep.subr.bf16.mxu0 0
      %835 = vmatpush1.bf16.msra.mxu0 0
      %836 = vmatprep.subr.bf16.mxu0 0
      %837 = vmatpush1.bf16.msra.mxu0 0
      %838 = vmatprep.subr.bf16.mxu0 0
      %839 = vmatpush1.bf16.msra.mxu0 0
      %840 = vmatprep.subr.bf16.mxu0 0
      %841 = vmatpush1.bf16.msra.mxu0 0
      %842 = vmatprep.subr.bf16.mxu0 0
      %843 = vmatpush1.bf16.msra.mxu0 0
      %844 = vmatprep.subr.bf16.mxu0 0
      %845 = vmatpush1.bf16.msra.mxu0 0
      %846 = vmatprep.subr.bf16.mxu0 0
      %847 = vmatpush1.bf16.msra.mxu0 0
      %848 = vmatprep.subr.bf16.mxu0 0
      %849 = vmatpush1.bf16.msra.mxu0 0
      %850 = vmatprep.subr.bf16.mxu0 0
      %851 = vmatpush1.bf16.msra.mxu0 0
      %852 = vmatprep.subr.bf16.mxu0 0
      %853 = vmatpush1.bf16.msra.mxu0 0
      %854 = vmatprep.subr.bf16.mxu0 0
      %855 = vmatpush1.bf16.msra.mxu0 0
      %856 = vmatprep.subr.bf16.mxu0 0
      %857 = vmatpush1.bf16.msra.mxu0 0
      %858 = vmatprep.subr.bf16.mxu0 0
      %859 = vmatpush1.bf16.msra.mxu0 0
      %860 = vmatprep.mubr.bf16.mxu0 0
      %861 = vmatmul.mubr.bf16.gmra.mrb[0].mxu0 %v814
      %v862 = vpop.f32.mrb[0].mxu0
      %v863 = vadd.f32 0.0, %v862
      %v864 = vpop.f32.mrb[0].mxu0
      %v865 = vpop.f32.mrb[0].mxu0
      %v866 = vadd.f32 0.0, %v865
      %v867 = vpop.f32.mrb[0].mxu0
      %868 = vmatprep.mubr.bf16.mxu0 0
      %869 = vmatmul.mubr.bf16.gmra.mrb[0].mxu0 %v817
      %v870 = vpop.f32.mrb[0].mxu0
      %v871 = vadd.f32 0.0, %v870
      %v872 = vpop.f32.mrb[0].mxu0
      %v873 = vpop.f32.mrb[0].mxu0
      %v874 = vadd.f32 0.0, %v873
      %v875 = vpop.f32.mrb[0].mxu0
      %876 = vmatprep.mubr.bf16.mxu0 0
      %877 = vmatmul.mubr.bf16.gmra.mrb[0].mxu0 %v820
      %v878 = vpop.f32.mrb[0].mxu0
      %v879 = vadd.f32 0.0, %v878
      %v880 = vpop.f32.mrb[0].mxu0
      %v881 = vpop.f32.mrb[0].mxu0
      %v882 = vadd.f32 0.0, %v881
      %v883 = vpop.f32.mrb[0].mxu0
      %884 = vmatprep.mubr.bf16.mxu0 0
      %885 = vmatmul.mubr.bf16.gmra.mrb[0].mxu0 %v823
      %v886 = vpop.f32.mrb[0].mxu0
      %v887 = vadd.f32 0.0, %v886
      %v888 = vpop.f32.mrb[0].mxu0
      %v889 = vpop.f32.mrb[0].mxu0
      %v890 = vadd.f32 0.0, %v889
      %v891 = vpop.f32.mrb[0].mxu0
      %892 = vdwg.mxu0
      %v893 = vadd.f32 %v784, %v863
      %v894 = vadd.f32 %v785, %v866
      %v895 = vadd.f32 %v786, %v871
      %v896 = vadd.f32 %v787, %v874
      %v897 = vadd.f32 %v788, %v879
      %v898 = vadd.f32 %v789, %v882
      %v899 = vadd.f32 %v790, %v887
      %v900 = vadd.f32 %v791, %v890
      %v902 = vrot.slane %v235, 5
      %v903 = vrot.slane %v902, 4
      %v904 = vrot.slane %v236, 5
      %v905 = vsel %vm561, %v903, %v904
      %s906 = scalar_lea.vmem %s1, 20
      %v907 = vld [vmem:[%s906] sm:$0xf]
      %v908 = vunpack.c.l.b16 %v905
      %v909 = vpack.c.b16 %v598, %v597
      %v910 = vpack.c.b16 %v600, %v599
      %v911 = vpack.c.b16 %v602, %v601
      %v912 = vpack.c.b16 %v908, %v603
      %v914 = vsel %vm369, %v909, 0
      %v917 = vsel %vm369, %v910, 0
      %v920 = vsel %vm369, %v911, 0
      %v923 = vsel %vm369, %v912, 0
      %v926 = vsel %vm382, %v907, 0
      %928 = vmatprep.subr.bf16.mxu0 0
      %929 = vmatpush1.bf16.msra.mxu0 %v926
      %930 = vmatprep.subr.bf16.mxu0 0
      %931 = vmatpush1.bf16.msra.mxu0 0
      %932 = vmatprep.subr.bf16.mxu0 0
      %933 = vmatpush1.bf16.msra.mxu0 0
      %934 = vmatprep.subr.bf16.mxu0 0
      %935 = vmatpush1.bf16.msra.mxu0 0
      %936 = vmatprep.subr.bf16.mxu0 0
      %937 = vmatpush1.bf16.msra.mxu0 0
      %938 = vmatprep.subr.bf16.mxu0 0
      %939 = vmatpush1.bf16.msra.mxu0 0
      %940 = vmatprep.subr.bf16.mxu0 0
      %941 = vmatpush1.bf16.msra.mxu0 0
      %942 = vmatprep.subr.bf16.mxu0 0
      %943 = vmatpush1.bf16.msra.mxu0 0
      %944 = vmatprep.subr.bf16.mxu0 0
      %945 = vmatpush1.bf16.msra.mxu0 0
      %946 = vmatprep.subr.bf16.mxu0 0
      %947 = vmatpush1.bf16.msra.mxu0 0
      %948 = vmatprep.subr.bf16.mxu0 0
      %949 = vmatpush1.bf16.msra.mxu0 0
      %950 = vmatprep.subr.bf16.mxu0 0
      %951 = vmatpush1.bf16.msra.mxu0 0
      %952 = vmatprep.subr.bf16.mxu0 0
      %953 = vmatpush1.bf16.msra.mxu0 0
      %954 = vmatprep.subr.bf16.mxu0 0
      %955 = vmatpush1.bf16.msra.mxu0 0
      %956 = vmatprep.subr.bf16.mxu0 0
      %957 = vmatpush1.bf16.msra.mxu0 0
      %958 = vmatprep.subr.bf16.mxu0 0
      %959 = vmatpush1.bf16.msra.mxu0 0
      %960 = vmatprep.mubr.bf16.mxu0 0
      %961 = vmatmul.mubr.bf16.gmra.mrb[0].mxu0 %v914
      %v962 = vpop.f32.mrb[0].mxu0
      %v963 = vadd.f32 0.0, %v962
      %v964 = vpop.f32.mrb[0].mxu0
      %v965 = vpop.f32.mrb[0].mxu0
      %v966 = vadd.f32 0.0, %v965
      %v967 = vpop.f32.mrb[0].mxu0
      %968 = vmatprep.mubr.bf16.mxu0 0
      %969 = vmatmul.mubr.bf16.gmra.mrb[0].mxu0 %v917
      %v970 = vpop.f32.mrb[0].mxu0
      %v971 = vadd.f32 0.0, %v970
      %v972 = vpop.f32.mrb[0].mxu0
      %v973 = vpop.f32.mrb[0].mxu0
      %v974 = vadd.f32 0.0, %v973
      %v975 = vpop.f32.mrb[0].mxu0
      %976 = vmatprep.mubr.bf16.mxu0 0
      %977 = vmatmul.mubr.bf16.gmra.mrb[0].mxu0 %v920
      %v978 = vpop.f32.mrb[0].mxu0
      %v979 = vadd.f32 0.0, %v978
      %v980 = vpop.f32.mrb[0].mxu0
      %v981 = vpop.f32.mrb[0].mxu0
      %v982 = vadd.f32 0.0, %v981
      %v983 = vpop.f32.mrb[0].mxu0
      %984 = vmatprep.mubr.bf16.mxu0 0
      %985 = vmatmul.mubr.bf16.gmra.mrb[0].mxu0 %v923
      %v986 = vpop.f32.mrb[0].mxu0
      %v987 = vadd.f32 0.0, %v986
      %v988 = vpop.f32.mrb[0].mxu0
      %v989 = vpop.f32.mrb[0].mxu0
      %v990 = vadd.f32 0.0, %v989
      %v991 = vpop.f32.mrb[0].mxu0
      %992 = vdwg.mxu0
      %v993 = vadd.f32 %v893, %v963
      %v994 = vadd.f32 %v894, %v966
      %v995 = vadd.f32 %v895, %v971
      %v996 = vadd.f32 %v896, %v974
      %v997 = vadd.f32 %v897, %v979
      %v998 = vadd.f32 %v898, %v982
      %v999 = vadd.f32 %v899, %v987
      %v1000 = vadd.f32 %v900, %v990
      %s1001 = scalar_lea.vmem %s1, 24
      %v1002 = vld [vmem:[%s1001] sm:$0xf]
      %v1004 = vunpack.c.l.b16 %v237
      %v1005 = vpack.c.b16 %v1004, %v699
      %v1007 = vsel %vm369, %v1005, 0
      %v1010 = vsel %vm382, %v1002, 0
      %1012 = vmatprep.subr.bf16.mxu0 0
      %1013 = vmatpush1.bf16.msra.mxu0 %v1010
      %1014 = vmatprep.subr.bf16.mxu0 0
      %1015 = vmatpush1.bf16.msra.mxu0 0
      %1016 = vmatprep.subr.bf16.mxu0 0
      %1017 = vmatpush1.bf16.msra.mxu0 0
      %1018 = vmatprep.subr.bf16.mxu0 0
      %1019 = vmatpush1.bf16.msra.mxu0 0
      %1020 = vmatprep.subr.bf16.mxu0 0
      %1021 = vmatpush1.bf16.msra.mxu0 0
      %1022 = vmatprep.subr.bf16.mxu0 0
      %1023 = vmatpush1.bf16.msra.mxu0 0
      %1024 = vmatprep.subr.bf16.mxu0 0
      %1025 = vmatpush1.bf16.msra.mxu0 0
      %1026 = vmatprep.subr.bf16.mxu0 0
      %1027 = vmatpush1.bf16.msra.mxu0 0
      %1028 = vmatprep.subr.bf16.mxu0 0
      %1029 = vmatpush1.bf16.msra.mxu0 0
      %1030 = vmatprep.subr.bf16.mxu0 0
      %1031 = vmatpush1.bf16.msra.mxu0 0
      %1032 = vmatprep.subr.bf16.mxu0 0
      %1033 = vmatpush1.bf16.msra.mxu0 0
      %1034 = vmatprep.subr.bf16.mxu0 0
      %1035 = vmatpush1.bf16.msra.mxu0 0
      %1036 = vmatprep.subr.bf16.mxu0 0
      %1037 = vmatpush1.bf16.msra.mxu0 0
      %1038 = vmatprep.subr.bf16.mxu0 0
      %1039 = vmatpush1.bf16.msra.mxu0 0
      %1040 = vmatprep.subr.bf16.mxu0 0
      %1041 = vmatpush1.bf16.msra.mxu0 0
      %1042 = vmatprep.subr.bf16.mxu0 0
      %1043 = vmatpush1.bf16.msra.mxu0 0
      %1044 = vmatprep.mubr.bf16.mxu0 0
      %1045 = vmatmul.mubr.bf16.gmra.mrb[0].mxu0 %v475
      %v1046 = vpop.f32.mrb[0].mxu0
      %v1047 = vadd.f32 0.0, %v1046
      %v1048 = vpop.f32.mrb[0].mxu0
      %v1049 = vpop.f32.mrb[0].mxu0
      %v1050 = vadd.f32 0.0, %v1049
      %v1051 = vpop.f32.mrb[0].mxu0
      %1052 = vmatprep.mubr.bf16.mxu0 0
      %1053 = vmatmul.mubr.bf16.gmra.mrb[0].mxu0 %v478
      %v1054 = vpop.f32.mrb[0].mxu0
      %v1055 = vadd.f32 0.0, %v1054
      %v1056 = vpop.f32.mrb[0].mxu0
      %v1057 = vpop.f32.mrb[0].mxu0
      %v1058 = vadd.f32 0.0, %v1057
      %v1059 = vpop.f32.mrb[0].mxu0
      %1060 = vmatprep.mubr.bf16.mxu0 0
      %1061 = vmatmul.mubr.bf16.gmra.mrb[0].mxu0 %v481
      %v1062 = vpop.f32.mrb[0].mxu0
      %v1063 = vadd.f32 0.0, %v1062
      %v1064 = vpop.f32.mrb[0].mxu0
      %v1065 = vpop.f32.mrb[0].mxu0
      %v1066 = vadd.f32 0.0, %v1065
      %v1067 = vpop.f32.mrb[0].mxu0
      %1068 = vmatprep.mubr.bf16.mxu0 0
      %1069 = vmatmul.mubr.bf16.gmra.mrb[0].mxu0 %v1007
      %v1070 = vpop.f32.mrb[0].mxu0
      %v1071 = vadd.f32 0.0, %v1070
      %v1072 = vpop.f32.mrb[0].mxu0
      %v1073 = vpop.f32.mrb[0].mxu0
      %v1074 = vadd.f32 0.0, %v1073
      %v1075 = vpop.f32.mrb[0].mxu0
      %1076 = vdwg.mxu0
      %v1077 = vadd.f32 %v993, %v1047
      %v1078 = vadd.f32 %v994, %v1050
      %v1079 = vadd.f32 %v995, %v1055
      %v1080 = vadd.f32 %v996, %v1058
      %v1081 = vadd.f32 %v997, %v1063
      %v1082 = vadd.f32 %v998, %v1066
      %v1083 = vadd.f32 %v999, %v1071
      %v1084 = vadd.f32 %v1000, %v1074
      %v1086 = vshrl.u32 %v237, 16
      %v1088 = vrot.slane %v1086, 4
      %v1089 = vshll.u32 %v237, 16
      %v1091 = vrot.slane %v1089, 5
      %v1092 = vor.u32 %v1088, %v1091
      %v1093 = vrot.slane %v1092, 4
      %v1095 = vshll.u32 %v238, 16
      %v1097 = vrot.slane %v1095, 5
      %v1098 = vsel %vm242, %v1093, %v1097
      %s1099 = scalar_lea.vmem %s1, 28
      %v1100 = vld [vmem:[%s1099] sm:$0xf]
      %v1101 = vunpack.c.l.b16 %v1098
      %v1102 = vpack.c.b16 %v1101, %v808
      %v1104 = vsel %vm369, %v1102, 0
      %v1107 = vsel %vm382, %v1100, 0
      %1109 = vmatprep.subr.bf16.mxu0 0
      %1110 = vmatpush1.bf16.msra.mxu0 %v1107
      %1111 = vmatprep.subr.bf16.mxu0 0
      %1112 = vmatpush1.bf16.msra.mxu0 0
      %1113 = vmatprep.subr.bf16.mxu0 0
      %1114 = vmatpush1.bf16.msra.mxu0 0
      %1115 = vmatprep.subr.bf16.mxu0 0
      %1116 = vmatpush1.bf16.msra.mxu0 0
      %1117 = vmatprep.subr.bf16.mxu0 0
      %1118 = vmatpush1.bf16.msra.mxu0 0
      %1119 = vmatprep.subr.bf16.mxu0 0
      %1120 = vmatpush1.bf16.msra.mxu0 0
      %1121 = vmatprep.subr.bf16.mxu0 0
      %1122 = vmatpush1.bf16.msra.mxu0 0
      %1123 = vmatprep.subr.bf16.mxu0 0
      %1124 = vmatpush1.bf16.msra.mxu0 0
      %1125 = vmatprep.subr.bf16.mxu0 0
      %1126 = vmatpush1.bf16.msra.mxu0 0
      %1127 = vmatprep.subr.bf16.mxu0 0
      %1128 = vmatpush1.bf16.msra.mxu0 0
      %1129 = vmatprep.subr.bf16.mxu0 0
      %1130 = vmatpush1.bf16.msra.mxu0 0
      %1131 = vmatprep.subr.bf16.mxu0 0
      %1132 = vmatpush1.bf16.msra.mxu0 0
      %1133 = vmatprep.subr.bf16.mxu0 0
      %1134 = vmatpush1.bf16.msra.mxu0 0
      %1135 = vmatprep.subr.bf16.mxu0 0
      %1136 = vmatpush1.bf16.msra.mxu0 0
      %1137 = vmatprep.subr.bf16.mxu0 0
      %1138 = vmatpush1.bf16.msra.mxu0 0
      %1139 = vmatprep.subr.bf16.mxu0 0
      %1140 = vmatpush1.bf16.msra.mxu0 0
      %1141 = vmatprep.mubr.bf16.mxu0 0
      %1142 = vmatmul.mubr.bf16.gmra.mrb[0].mxu0 %v374
      %v1143 = vpop.f32.mrb[0].mxu0
      %v1144 = vadd.f32 0.0, %v1143
      %v1145 = vpop.f32.mrb[0].mxu0
      %v1146 = vpop.f32.mrb[0].mxu0
      %v1147 = vadd.f32 0.0, %v1146
      %v1148 = vpop.f32.mrb[0].mxu0
      %1149 = vmatprep.mubr.bf16.mxu0 0
      %1150 = vmatmul.mubr.bf16.gmra.mrb[0].mxu0 %v377
      %v1151 = vpop.f32.mrb[0].mxu0
      %v1152 = vadd.f32 0.0, %v1151
      %v1153 = vpop.f32.mrb[0].mxu0
      %v1154 = vpop.f32.mrb[0].mxu0
      %v1155 = vadd.f32 0.0, %v1154
      %v1156 = vpop.f32.mrb[0].mxu0
      %1157 = vmatprep.mubr.bf16.mxu0 0
      %1158 = vmatmul.mubr.bf16.gmra.mrb[0].mxu0 %v380
      %v1159 = vpop.f32.mrb[0].mxu0
      %v1160 = vadd.f32 0.0, %v1159
      %v1161 = vpop.f32.mrb[0].mxu0
      %v1162 = vpop.f32.mrb[0].mxu0
      %v1163 = vadd.f32 0.0, %v1162
      %v1164 = vpop.f32.mrb[0].mxu0
      %1165 = vmatprep.mubr.bf16.mxu0 0
      %1166 = vmatmul.mubr.bf16.gmra.mrb[0].mxu0 %v1104
      %v1167 = vpop.f32.mrb[0].mxu0
      %v1168 = vadd.f32 0.0, %v1167
      %v1169 = vpop.f32.mrb[0].mxu0
      %v1170 = vpop.f32.mrb[0].mxu0
      %v1171 = vadd.f32 0.0, %v1170
      %v1172 = vpop.f32.mrb[0].mxu0
      %1173 = vdwg.mxu0
      %v1174 = vadd.f32 %v1077, %v1144
      %v1175 = vadd.f32 %v1078, %v1147
      %v1176 = vadd.f32 %v1079, %v1152
      %v1177 = vadd.f32 %v1080, %v1155
      %v1178 = vadd.f32 %v1081, %v1160
      %v1179 = vadd.f32 %v1082, %v1163
      %v1180 = vadd.f32 %v1083, %v1168
      %v1181 = vadd.f32 %v1084, %v1171
      %v1183 = vrot.slane %v237, 5
      %v1184 = vrot.slane %v1183, 4
      %v1185 = vrot.slane %v238, 5
      %v1186 = vsel %vm561, %v1184, %v1185
      %s1187 = scalar_lea.vmem %s1, 32
      %v1188 = vld [vmem:[%s1187] sm:$0xf]
      %v1189 = vunpack.c.l.b16 %v1186
      %v1190 = vpack.c.b16 %v1189, %v908
      %v1192 = vsel %vm369, %v1190, 0
      %v1195 = vsel %vm382, %v1188, 0
      %1197 = vmatprep.subr.bf16.mxu0 0
      %1198 = vmatpush1.bf16.msra.mxu0 %v1195
      %1199 = vmatprep.subr.bf16.mxu0 0
      %1200 = vmatpush1.bf16.msra.mxu0 0
      %1201 = vmatprep.subr.bf16.mxu0 0
      %1202 = vmatpush1.bf16.msra.mxu0 0
      %1203 = vmatprep.subr.bf16.mxu0 0
      %1204 = vmatpush1.bf16.msra.mxu0 0
      %1205 = vmatprep.subr.bf16.mxu0 0
      %1206 = vmatpush1.bf16.msra.mxu0 0
      %1207 = vmatprep.subr.bf16.mxu0 0
      %1208 = vmatpush1.bf16.msra.mxu0 0
      %1209 = vmatprep.subr.bf16.mxu0 0
      %1210 = vmatpush1.bf16.msra.mxu0 0
      %1211 = vmatprep.subr.bf16.mxu0 0
      %1212 = vmatpush1.bf16.msra.mxu0 0
      %1213 = vmatprep.subr.bf16.mxu0 0
      %1214 = vmatpush1.bf16.msra.mxu0 0
      %1215 = vmatprep.subr.bf16.mxu0 0
      %1216 = vmatpush1.bf16.msra.mxu0 0
      %1217 = vmatprep.subr.bf16.mxu0 0
      %1218 = vmatpush1.bf16.msra.mxu0 0
      %1219 = vmatprep.subr.bf16.mxu0 0
      %1220 = vmatpush1.bf16.msra.mxu0 0
      %1221 = vmatprep.subr.bf16.mxu0 0
      %1222 = vmatpush1.bf16.msra.mxu0 0
      %1223 = vmatprep.subr.bf16.mxu0 0
      %1224 = vmatpush1.bf16.msra.mxu0 0
      %1225 = vmatprep.subr.bf16.mxu0 0
      %1226 = vmatpush1.bf16.msra.mxu0 0
      %1227 = vmatprep.subr.bf16.mxu0 0
      %1228 = vmatpush1.bf16.msra.mxu0 0
      %1229 = vmatprep.mubr.bf16.mxu0 0
      %1230 = vmatmul.mubr.bf16.gmra.mrb[0].mxu0 %v612
      %v1231 = vpop.f32.mrb[0].mxu0
      %v1232 = vadd.f32 0.0, %v1231
      %v1233 = vpop.f32.mrb[0].mxu0
      %v1234 = vpop.f32.mrb[0].mxu0
      %v1235 = vadd.f32 0.0, %v1234
      %v1236 = vpop.f32.mrb[0].mxu0
      %1237 = vmatprep.mubr.bf16.mxu0 0
      %1238 = vmatmul.mubr.bf16.gmra.mrb[0].mxu0 %v615
      %v1239 = vpop.f32.mrb[0].mxu0
      %v1240 = vadd.f32 0.0, %v1239
      %v1241 = vpop.f32.mrb[0].mxu0
      %v1242 = vpop.f32.mrb[0].mxu0
      %v1243 = vadd.f32 0.0, %v1242
      %v1244 = vpop.f32.mrb[0].mxu0
      %1245 = vmatprep.mubr.bf16.mxu0 0
      %1246 = vmatmul.mubr.bf16.gmra.mrb[0].mxu0 %v618
      %v1247 = vpop.f32.mrb[0].mxu0
      %v1248 = vadd.f32 0.0, %v1247
      %v1249 = vpop.f32.mrb[0].mxu0
      %v1250 = vpop.f32.mrb[0].mxu0
      %v1251 = vadd.f32 0.0, %v1250
      %v1252 = vpop.f32.mrb[0].mxu0
      %1253 = vmatprep.mubr.bf16.mxu0 0
      %1254 = vmatmul.mubr.bf16.gmra.mrb[0].mxu0 %v1192
      %v1255 = vpop.f32.mrb[0].mxu0
      %v1256 = vadd.f32 0.0, %v1255
      %v1257 = vpop.f32.mrb[0].mxu0
      %v1258 = vpop.f32.mrb[0].mxu0
      %v1259 = vadd.f32 0.0, %v1258
      %v1260 = vpop.f32.mrb[0].mxu0
      %1261 = vdwg.mxu0
      %v1262 = vadd.f32 %v1174, %v1232
      %v1263 = vadd.f32 %v1175, %v1235
      %v1264 = vadd.f32 %v1176, %v1240
      %v1265 = vadd.f32 %v1177, %v1243
      %v1266 = vadd.f32 %v1178, %v1248
      %v1267 = vadd.f32 %v1179, %v1251
      %v1268 = vadd.f32 %v1180, %v1256
      %v1269 = vadd.f32 %v1181, %v1259
      %v1270 = vld [vmem:[%s2] sm:$0x1]
      %v1272 = vlaneseq
      %v1273 = vshrl.u32 %v1272, 7
      %v1274 = vsub.s32 0, %v1273
      %v1275 = vrot.slane %v1270, %v1274
      %v1277 = vadd.f32 %v1262, %v1275
      %v1278 = vadd.f32 %v1263, %v1275
      %v1279 = vadd.f32 %v1264, %v1275
      %v1280 = vadd.f32 %v1265, %v1275
      %v1281 = vadd.f32 %v1266, %v1275
      %v1282 = vadd.f32 %v1267, %v1275
      %v1283 = vadd.f32 %v1268, %v1275
      %v1284 = vadd.f32 %v1269, %v1275
      %vm1285 = vcmp.ge.f32.partialorder %v1277, 0.0
      %vm1286 = vcmp.ge.f32.partialorder %v1278, 0.0
      %vm1287 = vcmp.ge.f32.partialorder %v1279, 0.0
      %vm1288 = vcmp.ge.f32.partialorder %v1280, 0.0
      %vm1289 = vcmp.ge.f32.partialorder %v1281, 0.0
      %vm1290 = vcmp.ge.f32.partialorder %v1282, 0.0
      %vm1291 = vcmp.ge.f32.partialorder %v1283, 0.0
      %vm1292 = vcmp.ge.f32.partialorder %v1284, 0.0
      %v1293 = vmul.f32 %v1277, 0.1
      %v1294 = vmul.f32 %v1278, 0.1
      %v1295 = vmul.f32 %v1279, 0.1
      %v1296 = vmul.f32 %v1280, 0.1
      %v1297 = vmul.f32 %v1281, 0.1
      %v1298 = vmul.f32 %v1282, 0.1
      %v1299 = vmul.f32 %v1283, 0.1
      %v1300 = vmul.f32 %v1284, 0.1
      %v1301 = vsel %vm1285, %v1277, %v1293
      %v1302 = vsel %vm1286, %v1278, %v1294
      %v1303 = vsel %vm1287, %v1279, %v1295
      %v1304 = vsel %vm1288, %v1280, %v1296
      %v1305 = vsel %vm1289, %v1281, %v1297
      %v1306 = vsel %vm1290, %v1282, %v1298
      %v1307 = vsel %vm1291, %v1283, %v1299
      %v1308 = vsel %vm1292, %v1284, %v1300
      %v1309 = vld [vmem:[%s212] sm:$0xf]
      %v1310 = vld [vmem:[%s212 + $0x4] sm:$0xf]
      %v1311 = vld [vmem:[%s212 + $0x8] sm:$0xf]
      %v1312 = vld [vmem:[%s212 + $0xc] sm:$0xf]
      %v1313 = vld [vmem:[%s212 + $0x10] sm:$0xf]
      %v1314 = vld [vmem:[%s212 + $0x14] sm:$0xf]
      %v1315 = vld [vmem:[%s212 + $0x18] sm:$0xf]
      %v1316 = vld [vmem:[%s212 + $0x1c] sm:$0xf]
      %v1317 = vunpack.c.l.bf16 %v1309
      %v1318 = vunpack.c.l.bf16 %v1310
      %v1319 = vunpack.c.l.bf16 %v1311
      %v1320 = vunpack.c.l.bf16 %v1312
      %v1321 = vunpack.c.l.bf16 %v1313
      %v1322 = vunpack.c.l.bf16 %v1314
      %v1323 = vunpack.c.l.bf16 %v1315
      %v1324 = vunpack.c.l.bf16 %v1316
      %v1325 = vadd.f32 %v1301, %v1317
      %v1326 = vadd.f32 %v1302, %v1318
      %v1327 = vadd.f32 %v1303, %v1319
      %v1328 = vadd.f32 %v1304, %v1320
      %v1329 = vadd.f32 %v1305, %v1321
      %v1330 = vadd.f32 %v1306, %v1322
      %v1331 = vadd.f32 %v1307, %v1323
      %v1332 = vadd.f32 %v1308, %v1324
      %v1333 = vpack.c.bf16 %v1326, %v1325
      %v1334 = vpack.c.bf16 %v1328, %v1327
      %v1335 = vpack.c.bf16 %v1330, %v1329
      %v1336 = vpack.c.bf16 %v1332, %v1331
      %v1341 = vunpack.c.l.b16 %v1333
      %v1342 = vunpack.c.h.b16 %v1333
      %v1343 = vunpack.c.l.b16 %v1334
      %v1344 = vunpack.c.h.b16 %v1334
      %v1345 = vunpack.c.l.b16 %v1335
      %v1346 = vunpack.c.h.b16 %v1335
      %v1347 = vunpack.c.l.b16 %v1336
      %v1348 = vunpack.c.h.b16 %v1336
      %v1349 = vpack.c.b16 %v1341, %v1341
      %v1350 = vpack.c.b16 %v1342, %v1342
      %v1351 = vpack.c.b16 %v1343, %v1343
      %v1352 = vpack.c.b16 %v1344, %v1344
      %v1353 = vpack.c.b16 %v1345, %v1345
      %v1354 = vpack.c.b16 %v1346, %v1346
      %v1355 = vpack.c.b16 %v1347, %v1347
      %v1356 = vpack.c.b16 %v1348, %v1348
      %vm1365 = vcmask 60416
      %1366 = vst.msk [vmem:[%s217] sm:$0xf] %vm1365, %v1349
      %1367 = vst.msk [vmem:[%s217 + $0x4] sm:$0xf] %vm1365, %v1350
      %1368 = vst.msk [vmem:[%s217 + $0x8] sm:$0xf] %vm1365, %v1351
      %1369 = vst.msk [vmem:[%s217 + $0xc] sm:$0xf] %vm1365, %v1352
      %1370 = vst.msk [vmem:[%s217 + $0x10] sm:$0xf] %vm1365, %v1353
      %1371 = vst.msk [vmem:[%s217 + $0x14] sm:$0xf] %vm1365, %v1354
      %1372 = vst.msk [vmem:[%s217 + $0x18] sm:$0xf] %vm1365, %v1355
      %1373 = vst.msk [vmem:[%s217 + $0x1c] sm:$0xf] %vm1365, %v1356
      %p1374 = scmp.lt.s32.totalorder %s15, 1
      %s1375 = scalar_select %p1374, %s15, 1
      %s1376 = smul.addr %s1375, 8
      %s1377 = smul.addr %s1376, 4
      %s1378 = scalar_lea.vmem %s4, %s1377
      // Predicated region
      $region37: #{encoder_apply.11} parent=35 // pred_check
        %p1379 = pneg %p127
      $region38: #{encoder_apply.11} parent=35 // pred_check_branch
        %1381 = sbr.rel (%p1379) target = $region40
      $region39: #{encoder_apply.11} parent=35 // pred_region
        _
      $region40: #{encoder_apply.11} parent=35 // pred_fallthru
        _
    $region36: #{encoder_apply.11} parent=5 // pred_fallthru
      _
    %p1382 = scmp.le.s32.totalorder 2, %s10
    // Predicated region
    $region41: #{encoder_apply.11} parent=5 // pred_check
      %p1383 = pneg %p1382
    $region42: #{encoder_apply.11} parent=5 // pred_check_branch
      %1385 = sbr.rel (%p1383) target = $region44
    $region43: #{encoder_apply.11} parent=5 // pred_region
      %s1386 = ssub.s32 %s10, 2
      // Predicated region
      $region45: #{encoder_apply.11} parent=43 // pred_check
        %p1387 = pneg %p133
      $region46: #{encoder_apply.11} parent=43 // pred_check_branch
        %1389 = sbr.rel (%p1387) target = $region48
      $region47: #{encoder_apply.11} parent=43 // pred_region
        %p1390 = scmp.lt.s32.totalorder %s16, 1
        %s1391 = scalar_select %p1390, %s16, 1
        %s1392 = smul.addr %s1391, 8
        %s1393 = smul.addr %s1392, 4
        %s1394 = scalar_lea.vmem %s4, %s1393
      $region48: #{encoder_apply.11} parent=43 // pred_fallthru
        _
    $region44: #{encoder_apply.11} parent=5 // pred_fallthru
      _
  $region6: #{encoder_apply.11} parent=0 // loop_footer
    %s14 = sadd.s32 1, %s10
  $region7: #{encoder_apply.11} parent=0 // loop_footer_branch
    %9 = sbr.rel target = $region3
  $region8: #{encoder_apply.11} parent=0 // loop_exit
    _

// kernel: encoder_apply.7
$region0: #{encoder_apply.7}
  #allocation0 [shape = 'u32[]', space=smem, size = 0x4, offset = 0x4, fixed_abs, tag = 'smem constant byte address 0x4 - core index']
  #allocation1 [shape = 'u32[144,128]{1,0:T(1,128)}', space=vmem, size = 0x12000, scoped, tag = 'internal scratch']
  %s0 = inlined_call_operand.vmem [shape: bf16[2,18,18,4], index: 0, kind: input, shape index: {}]
  %s1 = inlined_call_operand.vmem [shape: bf16[3,3,4,4], index: 1, kind: input, shape index: {}]
  %s2 = inlined_call_operand.vmem [shape: f32[1,4], index: 2, kind: input, shape index: {}]
  %s3 = inlined_call_operand.vmem [shape: bf16[2,256,4], index: 3, kind: output, shape index: {}]
  %s4 = sld [smem:[#allocation0]]
  $region45: #{encoder_apply.7} parent=0
    _
  %s6 = ssub.s32 1, %s4
  %s7 = scalar_select 0, %s6, %s4
  loop: start=0, step=1, limit=4
  $region2: #{encoder_apply.7} parent=0 // loop_pre_header
    _
  $region3: #{encoder_apply.7} parent=0 // loop_header
    %s9 = sphi 0, %s13
    %p10 = scmp.ge.s32.totalorder %s9, 4
    %s19 = sphi 0, %s21
    %s22 = sphi 0, %s19
    %s23 = sphi 0, %s22
    %s39 = sphi 0, %s23
    %s43 = sphi 0, %s43
    %s45 = sphi 0, %s43
    %s46 = sphi 0, %s45
    %s60 = sphi 0, %s46
    %s64 = sphi 0, %s64
    %s66 = sphi 0, %s64
    %s67 = sphi 0, %s66
    %s81 = sphi 0, %s67
    %s87 = sphi 0, %s89
    %s90 = sphi 0, %s87
    %s91 = sphi 0, %s90
    %s107 = sphi 0, %s91
  $region4: #{encoder_apply.7} parent=0 // loop_header_branch
    %12 = sbr.rel (%p10) target = $region8
  $region5: #{encoder_apply.7} parent=0 // loop_body
    %s14 = ssub.s32 %s9, 1
    %s15 = ssub.s32 %s9, 2
    %s16 = sadd.s32 %s9, 1
    %s17 = ssub.s32 %s9, %s16
    %p18 = scmp.eq.s32.totalorder %s17, 0
    %s20 = sadd.s32 %s19, 1
    %s21 = scalar_select %p18, %s19, %s20
    %p24 = pneg %p18
    %p25 = scmp.eq.s32.totalorder %s9, 1
    %p26 = por %p24, %p25
    %p27 = scmp.ne.s32.totalorder %s19, %s22
    %p28 = scmp.eq.s32.totalorder %s9, 0
    %p29 = por %p27, %p28
    %p30 = scmp.ne.s32.totalorder %s19, %s22
    %p31 = scmp.eq.s32.totalorder %s14, 1
    %p32 = por %p30, %p31
    %p33 = scmp.ne.s32.totalorder %s22, %s23
    %p34 = scmp.eq.s32.totalorder %s14, 0
    %p35 = por %p33, %p34
    %p36 = scmp.ne.s32.totalorder %s22, %s23
    %p37 = scmp.eq.s32.totalorder %s15, 1
    %p38 = por %p36, %p37
    %p40 = scmp.ne.s32.totalorder %s23, %s39
    %p41 = scmp.eq.s32.totalorder %s15, 0
    %p42 = por %p40, %p41
    %s44 = sadd.s32 %s43, 1
    %p47 = scmp.eq.s32.totalorder %s9, 1
    %p48 = scmp.ne.s32.totalorder %s43, %s45
    %p49 = scmp.eq.s32.totalorder %s9, 0
    %p50 = por %p48, %p49
    %p51 = scmp.ne.s32.totalorder %s43, %s45
    %p52 = scmp.eq.s32.totalorder %s14, 1
    %p53 = por %p51, %p52
    %p54 = scmp.ne.s32.totalorder %s45, %s46
    %p55 = scmp.eq.s32.totalorder %s14, 0
    %p56 = por %p54, %p55
    %p57 = scmp.ne.s32.totalorder %s45, %s46
    %p58 = scmp.eq.s32.totalorder %s15, 1
    %p59 = por %p57, %p58
    %p61 = scmp.ne.s32.totalorder %s46, %s60
    %p62 = scmp.eq.s32.totalorder %s15, 0
    %p63 = por %p61, %p62
    %s65 = sadd.s32 %s64, 1
    %p68 = scmp.eq.s32.totalorder %s9, 1
    %p69 = scmp.ne.s32.totalorder %s64, %s66
    %p70 = scmp.eq.s32.totalorder %s9, 0
    %p71 = por %p69, %p70
    %p72 = scmp.ne.s32.totalorder %s64, %s66
    %p73 = scmp.eq.s32.totalorder %s14, 1
    %p74 = por %p72, %p73
    %p75 = scmp.ne.s32.totalorder %s66, %s67
    %p76 = scmp.eq.s32.totalorder %s14, 0
    %p77 = por %p75, %p76
    %p78 = scmp.ne.s32.totalorder %s66, %s67
    %p79 = scmp.eq.s32.totalorder %s15, 1
    %p80 = por %p78, %p79
    %p82 = scmp.ne.s32.totalorder %s67, %s81
    %p83 = scmp.eq.s32.totalorder %s15, 0
    %p84 = por %p82, %p83
    %s85 = ssub.s32 %s9, %s16
    %p86 = scmp.eq.s32.totalorder %s85, 0
    %s88 = sadd.s32 %s87, 1
    %s89 = scalar_select %p86, %s87, %s88
    %p92 = pneg %p86
    %p93 = scmp.eq.s32.totalorder %s9, 1
    %p94 = por %p92, %p93
    %p95 = scmp.ne.s32.totalorder %s87, %s90
    %p96 = scmp.eq.s32.totalorder %s9, 0
    %p97 = por %p95, %p96
    %p98 = scmp.ne.s32.totalorder %s87, %s90
    %p99 = scmp.eq.s32.totalorder %s14, 1
    %p100 = por %p98, %p99
    %p101 = scmp.ne.s32.totalorder %s90, %s91
    %p102 = scmp.eq.s32.totalorder %s14, 0
    %p103 = por %p101, %p102
    %p104 = scmp.ne.s32.totalorder %s90, %s91
    %p105 = scmp.eq.s32.totalorder %s15, 1
    %p106 = por %p104, %p105
    %p108 = scmp.ne.s32.totalorder %s91, %s107
    %p109 = scmp.eq.s32.totalorder %s15, 0
    %p110 = por %p108, %p109
    %p111 = scmp.le.s32.totalorder 1, %s9
    %p112 = scmp.lt.s32.totalorder %s9, 3
    %p113 = pnand %p111, %p112
    %p114 = pneg %p113
    // Predicated region
    $region9: #{encoder_apply.7} parent=5 // pred_check
      _
    $region10: #{encoder_apply.7} parent=5 // pred_check_branch
      %116 = sbr.rel (%p113) target = $region12
    $region11: #{encoder_apply.7} parent=5 // pred_region
      %s117 = ssub.s32 %s9, 1
      // Predicated region
      $region13: #{encoder_apply.7} parent=11 // pred_check
        %p118 = pneg %p56
      $region14: #{encoder_apply.7} parent=11 // pred_check_branch
        %120 = sbr.rel (%p118) target = $region16
      $region15: #{encoder_apply.7} parent=11 // pred_region
        _
      $region16: #{encoder_apply.7} parent=11 // pred_fallthru
        _
      // Predicated region
      $region17: #{encoder_apply.7} parent=11 // pred_check
        %p121 = pneg %p77
      $region18: #{encoder_apply.7} parent=11 // pred_check_branch
        %123 = sbr.rel (%p121) target = $region20
      $region19: #{encoder_apply.7} parent=11 // pred_region
        _
      $region20: #{encoder_apply.7} parent=11 // pred_fallthru
        _
    $region12: #{encoder_apply.7} parent=5 // pred_fallthru
      _
    %p124 = scmp.lt.s32.totalorder %s9, 2
    // Predicated region
    $region21: #{encoder_apply.7} parent=5 // pred_check
      %p125 = pneg %p124
    $region22: #{encoder_apply.7} parent=5 // pred_check_branch
      %127 = sbr.rel (%p125) target = $region24
    $region23: #{encoder_apply.7} parent=5 // pred_region
      // Predicated region
      $region25: #{encoder_apply.7} parent=23 // pred_check
        %p128 = pneg %p29
      $region26: #{encoder_apply.7} parent=23 // pred_check_branch
        %130 = sbr.rel (%p128) target = $region28
      $region27: #{encoder_apply.7} parent=23 // pred_region
        %p131 = scmp.lt.s32.totalorder %s9, 1
        %s132 = scalar_select %p131, %s9, 1
        %s133 = smul.addr %s132, 54
        %s134 = smul.addr %s133, 4
        %s135 = scalar_lea.vmem %s0, %s134
      $region28: #{encoder_apply.7} parent=23 // pred_fallthru
        _
    $region24: #{encoder_apply.7} parent=5 // pred_fallthru
      _
    %p136 = scmp.le.s32.totalorder 1, %s9
    %p137 = scmp.lt.s32.totalorder %s9, 3
    %p138 = pnand %p136, %p137
    %p139 = pneg %p138
    // Predicated region
    $region29: #{encoder_apply.7} parent=5 // pred_check
      _
    $region30: #{encoder_apply.7} parent=5 // pred_check_branch
      %141 = sbr.rel (%p138) target = $region32
    $region31: #{encoder_apply.7} parent=5 // pred_region
      %s142 = ssub.s32 %s9, 1
      %p143 = scmp.lt.s32.totalorder %s14, 1
      %s144 = scalar_select %p143, %s14, 1
      %s145 = smul.addr %s144, 54
      %s146 = smul.addr %s145, 4
      %s147 = scalar_lea.vmem %s0, %s146
      %p148 = pneg %p35
      %p149 = pneg %p32
      %p150 = pneg %p56
      %p151 = pneg %p53
      %p152 = pneg %p77
      %p153 = pneg %p74
      %p154 = pneg %p103
      %p155 = pneg %p100
      %p156 = scmp.lt.s32.totalorder %s14, 1
      %s157 = scalar_select %p156, %s14, 1
      %s158 = smul.addr %s157, 32
      %s159 = smul.addr %s158, 4
      %s160 = scalar_lea.vmem %s3, %s159
      %p161 = scmp.lt.s32.totalorder %s14, 1
      %s162 = scalar_select %p161, %s14, 1
      %s163 = smul.addr %s162, 54
      %s164 = smul.addr %s163, 4
      %s165 = scalar_lea.vmem %s0, %s164
      %p166 = scmp.lt.s32.totalorder %s14, 1
      %s167 = scalar_select %p166, %s14, 1
      %s168 = smul.addr %s167, 32
      %s169 = smul.addr %s168, 4
      %s170 = scalar_lea.vmem %s3, %s169
      %v172 = vld [vmem:[%s165] sm:$0xf]
      %v173 = vld [vmem:[%s165 + $0x4] sm:$0xf]
      %v174 = vld [vmem:[%s165 + $0x8] sm:$0x1]
      %v175 = vld [vmem:[%s165 + $0xc] sm:$0xf]
      %v176 = vld [vmem:[%s165 + $0x10] sm:$0xf]
      %v177 = vld [vmem:[%s165 + $0x14] sm:$0x1]
      %v178 = vld [vmem:[%s165 + $0x18] sm:$0xf]
      %v179 = vld [vmem:[%s165 + $0x1c] sm:$0xf]
      %v180 = vld [vmem:[%s165 + $0x20] sm:$0x1]
      %v181 = vld [vmem:[%s165 + $0x24] sm:$0xf]
      %v182 = vld [vmem:[%s165 + $0x28] sm:$0xf]
      %v183 = vld [vmem:[%s165 + $0x2c] sm:$0x1]
      %v184 = vld [vmem:[%s165 + $0x30] sm:$0xf]
      %v185 = vld [vmem:[%s165 + $0x34] sm:$0xf]
      %v186 = vld [vmem:[%s165 + $0x38] sm:$0x1]
      %v187 = vld [vmem:[%s165 + $0x3c] sm:$0xf]
      %v188 = vld [vmem:[%s165 + $0x40] sm:$0xf]
      %v189 = vld [vmem:[%s165 + $0x44] sm:$0x1]
      %v190 = vld [vmem:[%s165 + $0x48] sm:$0xf]
      %v191 = vld [vmem:[%s165 + $0x4c] sm:$0xf]
      %v192 = vld [vmem:[%s165 + $0x50] sm:$0x1]
      %v193 = vld [vmem:[%s165 + $0x54] sm:$0xf]
      %v194 = vld [vmem:[%s165 + $0x58] sm:$0xf]
      %v195 = vld [vmem:[%s165 + $0x5c] sm:$0x1]
      %v196 = vld [vmem:[%s165 + $0x60] sm:$0xf]
      %v197 = vld [vmem:[%s165 + $0x64] sm:$0xf]
      %v198 = vld [vmem:[%s165 + $0x68] sm:$0x1]
      %v199 = vld [vmem:[%s165 + $0x6c] sm:$0xf]
      %v200 = vld [vmem:[%s165 + $0x70] sm:$0xf]
      %v201 = vld [vmem:[%s165 + $0x74] sm:$0x1]
      %v202 = vld [vmem:[%s165 + $0x78] sm:$0xf]
      %v203 = vld [vmem:[%s165 + $0x7c] sm:$0xf]
      %v204 = vld [vmem:[%s165 + $0x80] sm:$0x1]
      %v205 = vld [vmem:[%s165 + $0x84] sm:$0xf]
      %v206 = vld [vmem:[%s165 + $0x88] sm:$0xf]
      %v207 = vld [vmem:[%s165 + $0x8c] sm:$0x1]
      %v208 = vld [vmem:[%s165 + $0x90] sm:$0xf]
      %v209 = vld [vmem:[%s165 + $0x94] sm:$0xf]
      %v210 = vld [vmem:[%s165 + $0x98] sm:$0x1]
      %v211 = vld [vmem:[%s165 + $0x9c] sm:$0xf]
      %v212 = vld [vmem:[%s165 + $0xa0] sm:$0xf]
      %v213 = vld [vmem:[%s165 + $0xa4] sm:$0x1]
      %v214 = vld [vmem:[%s165 + $0xa8] sm:$0xf]
      %v215 = vld [vmem:[%s165 + $0xac] sm:$0xf]
      %v216 = vld [vmem:[%s165 + $0xb0] sm:$0x1]
      %v217 = vld [vmem:[%s165 + $0xb4] sm:$0xf]
      %v218 = vld [vmem:[%s165 + $0xb8] sm:$0xf]
      %v219 = vld [vmem:[%s165 + $0xbc] sm:$0x1]
      %v220 = vld [vmem:[%s165 + $0xc0] sm:$0xf]
      %v221 = vld [vmem:[%s165 + $0xc4] sm:$0xf]
      %v222 = vld [vmem:[%s165 + $0xc8] sm:$0x1]
      %v223 = vld [vmem:[%s165 + $0xcc] sm:$0xf]
      %v224 = vld [vmem:[%s165 + $0xd0] sm:$0xf]
      %v225 = vld [vmem:[%s165 + $0xd4] sm:$0x1]
      %v226 = vld [vmem:[%s1] sm:$0x3]
      %vm227 = vsmask.f32 3328
      %vm228 = vsmask.f32 7440
      %vm229 = vmor %vm227, %vm228
      %v231 = vshrl.u32 %v172, 16
      %v233 = vrot.slane %v231, 4
      %v234 = vshll.u32 %v172, 16
      %v236 = vrot.slane %v234, 5
      %v237 = vor.u32 %v233, %v236
      %v238 = vrot.slane %v237, 4
      %v240 = vshll.u32 %v173, 16
      %v242 = vrot.slane %v240, 5
      %v243 = vsel %vm229, %v238, %v242
      %v244 = vshrl.u32 %v173, 16
      %v246 = vrot.slane %v244, 4
      %v247 = vor.u32 %v246, %v242
      %v248 = vrot.slane %v247, 4
      %v250 = vshll.u32 %v174, 16
      %v252 = vrot.slane %v250, 5
      %v253 = vsel %vm229, %v248, %v252
      %v255 = vshrl.u32 %v175, 16
      %v257 = vrot.slane %v255, 4
      %v258 = vshll.u32 %v175, 16
      %v260 = vrot.slane %v258, 5
      %v261 = vor.u32 %v257, %v260
      %v262 = vrot.slane %v261, 4
      %v264 = vshll.u32 %v176, 16
      %v266 = vrot.slane %v264, 5
      %v267 = vsel %vm229, %v262, %v266
      %v268 = vshrl.u32 %v176, 16
      %v270 = vrot.slane %v268, 4
      %v271 = vor.u32 %v270, %v266
      %v272 = vrot.slane %v271, 4
      %v274 = vshll.u32 %v177, 16
      %v276 = vrot.slane %v274, 5
      %v277 = vsel %vm229, %v272, %v276
      %v279 = vshrl.u32 %v178, 16
      %v281 = vrot.slane %v279, 4
      %v282 = vshll.u32 %v178, 16
      %v284 = vrot.slane %v282, 5
      %v285 = vor.u32 %v281, %v284
      %v286 = vrot.slane %v285, 4
      %v288 = vshll.u32 %v179, 16
      %v290 = vrot.slane %v288, 5
      %v291 = vsel %vm229, %v286, %v290
      %v292 = vshrl.u32 %v179, 16
      %v294 = vrot.slane %v292, 4
      %v295 = vor.u32 %v294, %v290
      %v296 = vrot.slane %v295, 4
      %v298 = vshll.u32 %v180, 16
      %v300 = vrot.slane %v298, 5
      %v301 = vsel %vm229, %v296, %v300
      %v303 = vshrl.u32 %v181, 16
      %v305 = vrot.slane %v303, 4
      %v306 = vshll.u32 %v181, 16
      %v308 = vrot.slane %v306, 5
      %v309 = vor.u32 %v305, %v308
      %v310 = vrot.slane %v309, 4
      %v312 = vshll.u32 %v182, 16
      %v314 = vrot.slane %v312, 5
      %v315 = vsel %vm229, %v310, %v314
      %v316 = vshrl.u32 %v182, 16
      %v318 = vrot.slane %v316, 4
      %v319 = vor.u32 %v318, %v314
      %v320 = vrot.slane %v319, 4
      %v322 = vshll.u32 %v183, 16
      %v324 = vrot.slane %v322, 5
      %v325 = vsel %vm229, %v320, %v324
      %v327 = vshrl.u32 %v184, 16
      %v329 = vrot.slane %v327, 4
      %v330 = vshll.u32 %v184, 16
      %v332 = vrot.slane %v330, 5
      %v333 = vor.u32 %v329, %v332
      %v334 = vrot.slane %v333, 4
      %v336 = vshll.u32 %v185, 16
      %v338 = vrot.slane %v336, 5
      %v339 = vsel %vm229, %v334, %v338
      %v340 = vshrl.u32 %v185, 16
      %v342 = vrot.slane %v340, 4
      %v343 = vor.u32 %v342, %v338
      %v344 = vrot.slane %v343, 4
      %v346 = vshll.u32 %v186, 16
      %v348 = vrot.slane %v346, 5
      %v349 = vsel %vm229, %v344, %v348
      %v351 = vshrl.u32 %v187, 16
      %v353 = vrot.slane %v351, 4
      %v354 = vshll.u32 %v187, 16
      %v356 = vrot.slane %v354, 5
      %v357 = vor.u32 %v353, %v356
      %v358 = vrot.slane %v357, 4
      %v360 = vshll.u32 %v188, 16
      %v362 = vrot.slane %v360, 5
      %v363 = vsel %vm229, %v358, %v362
      %v364 = vshrl.u32 %v188, 16
      %v366 = vrot.slane %v364, 4
      %v367 = vor.u32 %v366, %v362
      %v368 = vrot.slane %v367, 4
      %v370 = vshll.u32 %v189, 16
      %v372 = vrot.slane %v370, 5
      %v373 = vsel %vm229, %v368, %v372
      %v375 = vshrl.u32 %v190, 16
      %v377 = vrot.slane %v375, 4
      %v378 = vshll.u32 %v190, 16
      %v380 = vrot.slane %v378, 5
      %v381 = vor.u32 %v377, %v380
      %v382 = vrot.slane %v381, 4
      %v384 = vshll.u32 %v191, 16
      %v386 = vrot.slane %v384, 5
      %v387 = vsel %vm229, %v382, %v386
      %v388 = vshrl.u32 %v191, 16
      %v390 = vrot.slane %v388, 4
      %v391 = vor.u32 %v390, %v386
      %v392 = vrot.slane %v391, 4
      %v394 = vshll.u32 %v192, 16
      %v396 = vrot.slane %v394, 5
      %v397 = vsel %vm229, %v392, %v396
      %v399 = vshrl.u32 %v193, 16
      %v401 = vrot.slane %v399, 4
      %v402 = vshll.u32 %v193, 16
      %v404 = vrot.slane %v402, 5
      %v405 = vor.u32 %v401, %v404
      %v406 = vrot.slane %v405, 4
      %v408 = vshll.u32 %v194, 16
      %v410 = vrot.slane %v408, 5
      %v411 = vsel %vm229, %v406, %v410
      %v412 = vshrl.u32 %v194, 16
      %v414 = vrot.slane %v412, 4
      %v415 = vor.u32 %v414, %v410
      %v416 = vrot.slane %v415, 4
      %v418 = vshll.u32 %v195, 16
      %v420 = vrot.slane %v418, 5
      %v421 = vsel %vm229, %v416, %v420
      %v423 = vshrl.u32 %v196, 16
      %v425 = vrot.slane %v423, 4
      %v426 = vshll.u32 %v196, 16
      %v428 = vrot.slane %v426, 5
      %v429 = vor.u32 %v425, %v428
      %v430 = vrot.slane %v429, 4
      %v432 = vshll.u32 %v197, 16
      %v434 = vrot.slane %v432, 5
      %v435 = vsel %vm229, %v430, %v434
      %v436 = vshrl.u32 %v197, 16
      %v438 = vrot.slane %v436, 4
      %v439 = vor.u32 %v438, %v434
      %v440 = vrot.slane %v439, 4
      %v442 = vshll.u32 %v198, 16
      %v444 = vrot.slane %v442, 5
      %v445 = vsel %vm229, %v440, %v444
      %v447 = vshrl.u32 %v199, 16
      %v449 = vrot.slane %v447, 4
      %v450 = vshll.u32 %v199, 16
      %v452 = vrot.slane %v450, 5
      %v453 = vor.u32 %v449, %v452
      %v454 = vrot.slane %v453, 4
      %v456 = vshll.u32 %v200, 16
      %v458 = vrot.slane %v456, 5
      %v459 = vsel %vm229, %v454, %v458
      %v460 = vshrl.u32 %v200, 16
      %v462 = vrot.slane %v460, 4
      %v463 = vor.u32 %v462, %v458
      %v464 = vrot.slane %v463, 4
      %v466 = vshll.u32 %v201, 16
      %v468 = vrot.slane %v466, 5
      %v469 = vsel %vm229, %v464, %v468
      %v471 = vshrl.u32 %v202, 16
      %v473 = vrot.slane %v471, 4
      %v474 = vshll.u32 %v202, 16
      %v476 = vrot.slane %v474, 5
      %v477 = vor.u32 %v473, %v476
      %v478 = vrot.slane %v477, 4
      %v480 = vshll.u32 %v203, 16
      %v482 = vrot.slane %v480, 5
      %v483 = vsel %vm229, %v478, %v482
      %v484 = vshrl.u32 %v203, 16
      %v486 = vrot.slane %v484, 4
      %v487 = vor.u32 %v486, %v482
      %v488 = vrot.slane %v487, 4
      %v490 = vshll.u32 %v204, 16
      %v492 = vrot.slane %v490, 5
      %v493 = vsel %vm229, %v488, %v492
      %v495 = vshrl.u32 %v205, 16
      %v497 = vrot.slane %v495, 4
      %v498 = vshll.u32 %v205, 16
      %v500 = vrot.slane %v498, 5
      %v501 = vor.u32 %v497, %v500
      %v502 = vrot.slane %v501, 4
      %v504 = vshll.u32 %v206, 16
      %v506 = vrot.slane %v504, 5
      %v507 = vsel %vm229, %v502, %v506
      %v508 = vshrl.u32 %v206, 16
      %v510 = vrot.slane %v508, 4
      %v511 = vor.u32 %v510, %v506
      %v512 = vrot.slane %v511, 4
      %v514 = vshll.u32 %v207, 16
      %v516 = vrot.slane %v514, 5
      %v517 = vsel %vm229, %v512, %v516
      %v519 = vshrl.u32 %v208, 16
      %v521 = vrot.slane %v519, 4
      %v522 = vshll.u32 %v208, 16
      %v524 = vrot.slane %v522, 5
      %v525 = vor.u32 %v521, %v524
      %v526 = vrot.slane %v525, 4
      %v528 = vshll.u32 %v209, 16
      %v530 = vrot.slane %v528, 5
      %v531 = vsel %vm229, %v526, %v530
      %v532 = vshrl.u32 %v209, 16
      %v534 = vrot.slane %v532, 4
      %v535 = vor.u32 %v534, %v530
      %v536 = vrot.slane %v535, 4
      %v538 = vshll.u32 %v210, 16
      %v540 = vrot.slane %v538, 5
      %v541 = vsel %vm229, %v536, %v540
      %v543 = vshrl.u32 %v211, 16
      %v545 = vrot.slane %v543, 4
      %v546 = vshll.u32 %v211, 16
      %v548 = vrot.slane %v546, 5
      %v549 = vor.u32 %v545, %v548
      %v550 = vrot.slane %v549, 4
      %v552 = vshll.u32 %v212, 16
      %v554 = vrot.slane %v552, 5
      %v555 = vsel %vm229, %v550, %v554
      %v556 = vshrl.u32 %v212, 16
      %v558 = vrot.slane %v556, 4
      %v559 = vor.u32 %v558, %v554
      %v560 = vrot.slane %v559, 4
      %v562 = vshll.u32 %v213, 16
      %v564 = vrot.slane %v562, 5
      %v565 = vsel %vm229, %v560, %v564
      %v567 = vshrl.u32 %v214, 16
      %v569 = vrot.slane %v567, 4
      %v570 = vshll.u32 %v214, 16
      %v572 = vrot.slane %v570, 5
      %v573 = vor.u32 %v569, %v572
      %v574 = vrot.slane %v573, 4
      %v576 = vshll.u32 %v215, 16
      %v578 = vrot.slane %v576, 5
      %v579 = vsel %vm229, %v574, %v578
      %v580 = vshrl.u32 %v215, 16
      %v582 = vrot.slane %v580, 4
      %v583 = vor.u32 %v582, %v578
      %v584 = vrot.slane %v583, 4
      %v586 = vshll.u32 %v216, 16
      %v588 = vrot.slane %v586, 5
      %v589 = vsel %vm229, %v584, %v588
      %v591 = vshrl.u32 %v217, 16
      %v593 = vrot.slane %v591, 4
      %v594 = vshll.u32 %v217, 16
      %v596 = vrot.slane %v594, 5
      %v597 = vor.u32 %v593, %v596
      %v598 = vrot.slane %v597, 4
      %v600 = vshll.u32 %v218, 16
      %v602 = vrot.slane %v600, 5
      %v603 = vsel %vm229, %v598, %v602
      %v604 = vshrl.u32 %v218, 16
      %v606 = vrot.slane %v604, 4
      %v607 = vor.u32 %v606, %v602
      %v608 = vrot.slane %v607, 4
      %v610 = vshll.u32 %v219, 16
      %v612 = vrot.slane %v610, 5
      %v613 = vsel %vm229, %v608, %v612
      %s614 = scalar_lea.vmem %s1, 2
      %v615 = vld [vmem:[%s614] sm:$0x3]
      %v616 = vunpack.c.l.b16 %v243
      %v617 = vunpack.c.l.b16 %v253
      %v618 = vunpack.c.l.b16 %v267
      %v619 = vunpack.c.l.b16 %v277
      %v620 = vunpack.c.l.b16 %v291
      %v621 = vunpack.c.l.b16 %v301
      %v622 = vunpack.c.l.b16 %v315
      %v623 = vunpack.c.l.b16 %v325
      %v624 = vunpack.c.l.b16 %v339
      %v625 = vunpack.c.l.b16 %v349
      %v626 = vunpack.c.l.b16 %v363
      %v627 = vunpack.c.l.b16 %v373
      %v628 = vunpack.c.l.b16 %v387
      %v629 = vunpack.c.l.b16 %v397
      %v630 = vunpack.c.l.b16 %v411
      %v631 = vunpack.c.l.b16 %v421
      %v632 = vunpack.c.l.b16 %v435
      %v633 = vunpack.c.l.b16 %v445
      %v634 = vunpack.c.l.b16 %v459
      %v635 = vunpack.c.l.b16 %v469
      %v636 = vunpack.c.l.b16 %v483
      %v637 = vunpack.c.l.b16 %v493
      %v638 = vunpack.c.l.b16 %v507
      %v639 = vunpack.c.l.b16 %v517
      %v640 = vunpack.c.l.b16 %v531
      %v641 = vunpack.c.l.b16 %v541
      %v642 = vunpack.c.l.b16 %v555
      %v643 = vunpack.c.l.b16 %v565
      %v644 = vunpack.c.l.b16 %v579
      %v645 = vunpack.c.l.b16 %v589
      %v646 = vunpack.c.l.b16 %v603
      %v647 = vunpack.c.l.b16 %v613
      %v648 = vpack.c.b16 %v617, %v616
      %v649 = vpack.c.b16 %v619, %v618
      %v650 = vpack.c.b16 %v621, %v620
      %v651 = vpack.c.b16 %v623, %v622
      %v652 = vpack.c.b16 %v625, %v624
      %v653 = vpack.c.b16 %v627, %v626
      %v654 = vpack.c.b16 %v629, %v628
      %v655 = vpack.c.b16 %v631, %v630
      %v656 = vpack.c.b16 %v633, %v632
      %v657 = vpack.c.b16 %v635, %v634
      %v658 = vpack.c.b16 %v637, %v636
      %v659 = vpack.c.b16 %v639, %v638
      %v660 = vpack.c.b16 %v641, %v640
      %v661 = vpack.c.b16 %v643, %v642
      %v662 = vpack.c.b16 %v645, %v644
      %v663 = vpack.c.b16 %v647, %v646
      %vm664 = vcmask 31744
      %v666 = vsel %vm664, %v648, 0
      %v669 = vsel %vm664, %v649, 0
      %v672 = vsel %vm664, %v650, 0
      %v675 = vsel %vm664, %v651, 0
      %v678 = vsel %vm664, %v652, 0
      %v681 = vsel %vm664, %v653, 0
      %v684 = vsel %vm664, %v654, 0
      %v687 = vsel %vm664, %v655, 0
      %v690 = vsel %vm664, %v656, 0
      %v693 = vsel %vm664, %v657, 0
      %v696 = vsel %vm664, %v658, 0
      %v699 = vsel %vm664, %v659, 0
      %v702 = vsel %vm664, %v660, 0
      %v705 = vsel %vm664, %v661, 0
      %v708 = vsel %vm664, %v662, 0
      %v711 = vsel %vm664, %v663, 0
      %vm713 = vcmask 1041408
      %v715 = vsel %vm713, %v615, 0
      %717 = vmatprep.subr.bf16.mxu0 0
      %718 = vmatpush1.bf16.msra.mxu0 %v715
      %719 = vmatprep.subr.bf16.mxu0 0
      %720 = vmatpush1.bf16.msra.mxu0 0
      %721 = vmatprep.subr.bf16.mxu0 0
      %722 = vmatpush1.bf16.msra.mxu0 0
      %723 = vmatprep.subr.bf16.mxu0 0
      %724 = vmatpush1.bf16.msra.mxu0 0
      %725 = vmatprep.subr.bf16.mxu0 0
      %726 = vmatpush1.bf16.msra.mxu0 0
      %727 = vmatprep.subr.bf16.mxu0 0
      %728 = vmatpush1.bf16.msra.mxu0 0
      %729 = vmatprep.subr.bf16.mxu0 0
      %730 = vmatpush1.bf16.msra.mxu0 0
      %731 = vmatprep.subr.bf16.mxu0 0
      %732 = vmatpush1.bf16.msra.mxu0 0
      %733 = vmatprep.subr.bf16.mxu0 0
      %734 = vmatpush1.bf16.msra.mxu0 0
      %735 = vmatprep.subr.bf16.mxu0 0
      %736 = vmatpush1.bf16.msra.mxu0 0
      %737 = vmatprep.subr.bf16.mxu0 0
      %738 = vmatpush1.bf16.msra.mxu0 0
      %739 = vmatprep.subr.bf16.mxu0 0
      %740 = vmatpush1.bf16.msra.mxu0 0
      %741 = vmatprep.subr.bf16.mxu0 0
      %742 = vmatpush1.bf16.msra.mxu0 0
      %743 = vmatprep.subr.bf16.mxu0 0
      %744 = vmatpush1.bf16.msra.mxu0 0
      %745 = vmatprep.subr.bf16.mxu0 0
      %746 = vmatpush1.bf16.msra.mxu0 0
      %747 = vmatprep.subr.bf16.mxu0 0
      %748 = vmatpush1.bf16.msra.mxu0 0
      %749 = vmatprep.mubr.bf16.mxu0 0
      %750 = vmatmul.mubr.bf16.gmra.mrb[0].mxu0 %v666
      %v751 = vpop.f32.mrb[0].mxu0
      %v752 = vadd.f32 0.0, %v751
      %v753 = vpop.f32.mrb[0].mxu0
      %v754 = vpop.f32.mrb[0].mxu0
      %v755 = vadd.f32 0.0, %v754
      %v756 = vpop.f32.mrb[0].mxu0
      %757 = vmatprep.mubr.bf16.mxu0 0
      %758 = vmatmul.mubr.bf16.gmra.mrb[0].mxu0 %v669
      %v759 = vpop.f32.mrb[0].mxu0
      %v760 = vadd.f32 0.0, %v759
      %v761 = vpop.f32.mrb[0].mxu0
      %v762 = vpop.f32.mrb[0].mxu0
      %v763 = vadd.f32 0.0, %v762
      %v764 = vpop.f32.mrb[0].mxu0
      %765 = vmatprep.mubr.bf16.mxu0 0
      %766 = vmatmul.mubr.bf16.gmra.mrb[0].mxu0 %v672
      %v767 = vpop.f32.mrb[0].mxu0
      %v768 = vadd.f32 0.0, %v767
      %v769 = vpop.f32.mrb[0].mxu0
      %v770 = vpop.f32.mrb[0].mxu0
      %v771 = vadd.f32 0.0, %v770
      %v772 = vpop.f32.mrb[0].mxu0
      %773 = vmatprep.mubr.bf16.mxu0 0
      %774 = vmatmul.mubr.bf16.gmra.mrb[0].mxu0 %v675
      %v775 = vpop.f32.mrb[0].mxu0
      %v776 = vadd.f32 0.0, %v775
      %v777 = vpop.f32.mrb[0].mxu0
      %v778 = vpop.f32.mrb[0].mxu0
      %v779 = vadd.f32 0.0, %v778
      %v780 = vpop.f32.mrb[0].mxu0
      %781 = vmatprep.mubr.bf16.mxu0 0
      %782 = vmatmul.mubr.bf16.gmra.mrb[0].mxu0 %v678
      %v783 = vpop.f32.mrb[0].mxu0
      %v784 = vadd.f32 0.0, %v783
      %v785 = vpop.f32.mrb[0].mxu0
      %v786 = vpop.f32.mrb[0].mxu0
      %v787 = vadd.f32 0.0, %v786
      %v788 = vpop.f32.mrb[0].mxu0
      %789 = vmatprep.mubr.bf16.mxu0 0
      %790 = vmatmul.mubr.bf16.gmra.mrb[0].mxu0 %v681
      %v791 = vpop.f32.mrb[0].mxu0
      %v792 = vadd.f32 0.0, %v791
      %v793 = vpop.f32.mrb[0].mxu0
      %v794 = vpop.f32.mrb[0].mxu0
      %v795 = vadd.f32 0.0, %v794
      %v796 = vpop.f32.mrb[0].mxu0
      %797 = vmatprep.mubr.bf16.mxu0 0
      %798 = vmatmul.mubr.bf16.gmra.mrb[0].mxu0 %v684
      %v799 = vpop.f32.mrb[0].mxu0
      %v800 = vadd.f32 0.0, %v799
      %v801 = vpop.f32.mrb[0].mxu0
      %v802 = vpop.f32.mrb[0].mxu0
      %v803 = vadd.f32 0.0, %v802
      %v804 = vpop.f32.mrb[0].mxu0
      %805 = vmatprep.mubr.bf16.mxu0 0
      %806 = vmatmul.mubr.bf16.gmra.mrb[0].mxu0 %v687
      %v807 = vpop.f32.mrb[0].mxu0
      %v808 = vadd.f32 0.0, %v807
      %v809 = vpop.f32.mrb[0].mxu0
      %v810 = vpop.f32.mrb[0].mxu0
      %v811 = vadd.f32 0.0, %v810
      %v812 = vpop.f32.mrb[0].mxu0
      %813 = vmatprep.mubr.bf16.mxu0 0
      %814 = vmatmul.mubr.bf16.gmra.mrb[0].mxu0 %v690
      %v815 = vpop.f32.mrb[0].mxu0
      %v816 = vadd.f32 0.0, %v815
      %v817 = vpop.f32.mrb[0].mxu0
      %v818 = vpop.f32.mrb[0].mxu0
      %v819 = vadd.f32 0.0, %v818
      %v820 = vpop.f32.mrb[0].mxu0
      %821 = vmatprep.mubr.bf16.mxu0 0
      %822 = vmatmul.mubr.bf16.gmra.mrb[0].mxu0 %v693
      %v823 = vpop.f32.mrb[0].mxu0
      %v824 = vadd.f32 0.0, %v823
      %v825 = vpop.f32.mrb[0].mxu0
      %v826 = vpop.f32.mrb[0].mxu0
      %v827 = vadd.f32 0.0, %v826
      %v828 = vpop.f32.mrb[0].mxu0
      %829 = vmatprep.mubr.bf16.mxu0 0
      %830 = vmatmul.mubr.bf16.gmra.mrb[0].mxu0 %v696
      %v831 = vpop.f32.mrb[0].mxu0
      %v832 = vadd.f32 0.0, %v831
      %v833 = vpop.f32.mrb[0].mxu0
      %v834 = vpop.f32.mrb[0].mxu0
      %v835 = vadd.f32 0.0, %v834
      %v836 = vpop.f32.mrb[0].mxu0
      %837 = vmatprep.mubr.bf16.mxu0 0
      %838 = vmatmul.mubr.bf16.gmra.mrb[0].mxu0 %v699
      %v839 = vpop.f32.mrb[0].mxu0
      %v840 = vadd.f32 0.0, %v839
      %v841 = vpop.f32.mrb[0].mxu0
      %v842 = vpop.f32.mrb[0].mxu0
      %v843 = vadd.f32 0.0, %v842
      %v844 = vpop.f32.mrb[0].mxu0
      %845 = vmatprep.mubr.bf16.mxu0 0
      %846 = vmatmul.mubr.bf16.gmra.mrb[0].mxu0 %v702
      %v847 = vpop.f32.mrb[0].mxu0
      %v848 = vadd.f32 0.0, %v847
      %v849 = vpop.f32.mrb[0].mxu0
      %v850 = vpop.f32.mrb[0].mxu0
      %v851 = vadd.f32 0.0, %v850
      %v852 = vpop.f32.mrb[0].mxu0
      %853 = vmatprep.mubr.bf16.mxu0 0
      %854 = vmatmul.mubr.bf16.gmra.mrb[0].mxu0 %v705
      %v855 = vpop.f32.mrb[0].mxu0
      %v856 = vadd.f32 0.0, %v855
      %v857 = vpop.f32.mrb[0].mxu0
      %v858 = vpop.f32.mrb[0].mxu0
      %v859 = vadd.f32 0.0, %v858
      %v860 = vpop.f32.mrb[0].mxu0
      %861 = vmatprep.mubr.bf16.mxu0 0
      %862 = vmatmul.mubr.bf16.gmra.mrb[0].mxu0 %v708
      %v863 = vpop.f32.mrb[0].mxu0
      %v864 = vadd.f32 0.0, %v863
      %v865 = vpop.f32.mrb[0].mxu0
      %v866 = vpop.f32.mrb[0].mxu0
      %v867 = vadd.f32 0.0, %v866
      %v868 = vpop.f32.mrb[0].mxu0
      %869 = vmatprep.mubr.bf16.mxu0 0
      %870 = vmatmul.mubr.bf16.gmra.mrb[0].mxu0 %v711
      %v871 = vpop.f32.mrb[0].mxu0
      %v872 = vadd.f32 0.0, %v871
      %v873 = vpop.f32.mrb[0].mxu0
      %v874 = vpop.f32.mrb[0].mxu0
      %v875 = vadd.f32 0.0, %v874
      %v876 = vpop.f32.mrb[0].mxu0
      %877 = vdwg.mxu0
      %v910 = vunpack.c.l.b16 %v172
      %v911 = vunpack.c.l.b16 %v173
      %v912 = vunpack.c.l.b16 %v175
      %v913 = vunpack.c.l.b16 %v176
      %v914 = vunpack.c.l.b16 %v178
      %v915 = vunpack.c.l.b16 %v179
      %v916 = vunpack.c.l.b16 %v181
      %v917 = vunpack.c.l.b16 %v182
      %v918 = vunpack.c.l.b16 %v184
      %v919 = vunpack.c.l.b16 %v185
      %v920 = vunpack.c.l.b16 %v187
      %v921 = vunpack.c.l.b16 %v188
      %v922 = vunpack.c.l.b16 %v190
      %v923 = vunpack.c.l.b16 %v191
      %v924 = vunpack.c.l.b16 %v193
      %v925 = vunpack.c.l.b16 %v194
      %v926 = vunpack.c.l.b16 %v196
      %v927 = vunpack.c.l.b16 %v197
      %v928 = vunpack.c.l.b16 %v199
      %v929 = vunpack.c.l.b16 %v200
      %v930 = vunpack.c.l.b16 %v202
      %v931 = vunpack.c.l.b16 %v203
      %v932 = vunpack.c.l.b16 %v205
      %v933 = vunpack.c.l.b16 %v206
      %v934 = vunpack.c.l.b16 %v208
      %v935 = vunpack.c.l.b16 %v209
      %v936 = vunpack.c.l.b16 %v211
      %v937 = vunpack.c.l.b16 %v212
      %v938 = vunpack.c.l.b16 %v214
      %v939 = vunpack.c.l.b16 %v215
      %v940 = vunpack.c.l.b16 %v217
      %v941 = vunpack.c.l.b16 %v218
      %v942 = vpack.c.b16 %v911, %v910
      %v943 = vpack.c.b16 %v913, %v912
      %v944 = vpack.c.b16 %v915, %v914
      %v945 = vpack.c.b16 %v917, %v916
      %v946 = vpack.c.b16 %v919, %v918
      %v947 = vpack.c.b16 %v921, %v920
      %v948 = vpack.c.b16 %v923, %v922
      %v949 = vpack.c.b16 %v925, %v924
      %v950 = vpack.c.b16 %v927, %v926
      %v951 = vpack.c.b16 %v929, %v928
      %v952 = vpack.c.b16 %v931, %v930
      %v953 = vpack.c.b16 %v933, %v932
      %v954 = vpack.c.b16 %v935, %v934
      %v955 = vpack.c.b16 %v937, %v936
      %v956 = vpack.c.b16 %v939, %v938
      %v957 = vpack.c.b16 %v941, %v940
      %v959 = vsel %vm664, %v942, 0
      %v962 = vsel %vm664, %v943, 0
      %v965 = vsel %vm664, %v944, 0
      %v968 = vsel %vm664, %v945, 0
      %v971 = vsel %vm664, %v946, 0
      %v974 = vsel %vm664, %v947, 0
      %v977 = vsel %vm664, %v948, 0
      %v980 = vsel %vm664, %v949, 0
      %v983 = vsel %vm664, %v950, 0
      %v986 = vsel %vm664, %v951, 0
      %v989 = vsel %vm664, %v952, 0
      %v992 = vsel %vm664, %v953, 0
      %v995 = vsel %vm664, %v954, 0
      %v998 = vsel %vm664, %v955, 0
      %v1001 = vsel %vm664, %v956, 0
      %v1004 = vsel %vm664, %v957, 0
      %v1007 = vsel %vm713, %v226, 0
      %1009 = vmatprep.subr.bf16.mxu0 0
      %1010 = vmatpush1.bf16.msra.mxu0 %v1007
      %1011 = vmatprep.subr.bf16.mxu0 0
      %1012 = vmatpush1.bf16.msra.mxu0 0
      %1013 = vmatprep.subr.bf16.mxu0 0
      %1014 = vmatpush1.bf16.msra.mxu0 0
      %1015 = vmatprep.subr.bf16.mxu0 0
      %1016 = vmatpush1.bf16.msra.mxu0 0
      %1017 = vmatprep.subr.bf16.mxu0 0
      %1018 = vmatpush1.bf16.msra.mxu0 0
      %1019 = vmatprep.subr.bf16.mxu0 0
      %1020 = vmatpush1.bf16.msra.mxu0 0
      %1021 = vmatprep.subr.bf16.mxu0 0
      %1022 = vmatpush1.bf16.msra.mxu0 0
      %1023 = vmatprep.subr.bf16.mxu0 0
      %1024 = vmatpush1.bf16.msra.mxu0 0
      %1025 = vmatprep.subr.bf16.mxu0 0
      %1026 = vmatpush1.bf16.msra.mxu0 0
      %1027 = vmatprep.subr.bf16.mxu0 0
      %1028 = vmatpush1.bf16.msra.mxu0 0
      %1029 = vmatprep.subr.bf16.mxu0 0
      %1030 = vmatpush1.bf16.msra.mxu0 0
      %1031 = vmatprep.subr.bf16.mxu0 0
      %1032 = vmatpush1.bf16.msra.mxu0 0
      %1033 = vmatprep.subr.bf16.mxu0 0
      %1034 = vmatpush1.bf16.msra.mxu0 0
      %1035 = vmatprep.subr.bf16.mxu0 0
      %1036 = vmatpush1.bf16.msra.mxu0 0
      %1037 = vmatprep.subr.bf16.mxu0 0
      %1038 = vmatpush1.bf16.msra.mxu0 0
      %1039 = vmatprep.subr.bf16.mxu0 0
      %1040 = vmatpush1.bf16.msra.mxu0 0
      %1041 = vmatprep.mubr.bf16.mxu0 0
      %1042 = vmatmul.mubr.bf16.gmra.mrb[0].mxu0 %v959
      %v1043 = vpop.f32.mrb[0].mxu0
      %v1044 = vadd.f32 %v752, %v1043
      %v1045 = vpop.f32.mrb[0].mxu0
      %v1046 = vpop.f32.mrb[0].mxu0
      %v1047 = vadd.f32 %v755, %v1046
      %v1048 = vpop.f32.mrb[0].mxu0
      %1049 = vmatprep.mubr.bf16.mxu0 0
      %1050 = vmatmul.mubr.bf16.gmra.mrb[0].mxu0 %v962
      %v1051 = vpop.f32.mrb[0].mxu0
      %v1052 = vadd.f32 %v760, %v1051
      %v1053 = vpop.f32.mrb[0].mxu0
      %v1054 = vpop.f32.mrb[0].mxu0
      %v1055 = vadd.f32 %v763, %v1054
      %v1056 = vpop.f32.mrb[0].mxu0
      %1057 = vmatprep.mubr.bf16.mxu0 0
      %1058 = vmatmul.mubr.bf16.gmra.mrb[0].mxu0 %v965
      %v1059 = vpop.f32.mrb[0].mxu0
      %v1060 = vadd.f32 %v768, %v1059
      %v1061 = vpop.f32.mrb[0].mxu0
      %v1062 = vpop.f32.mrb[0].mxu0
      %v1063 = vadd.f32 %v771, %v1062
      %v1064 = vpop.f32.mrb[0].mxu0
      %1065 = vmatprep.mubr.bf16.mxu0 0
      %1066 = vmatmul.mubr.bf16.gmra.mrb[0].mxu0 %v968
      %v1067 = vpop.f32.mrb[0].mxu0
      %v1068 = vadd.f32 %v776, %v1067
      %v1069 = vpop.f32.mrb[0].mxu0
      %v1070 = vpop.f32.mrb[0].mxu0
      %v1071 = vadd.f32 %v779, %v1070
      %v1072 = vpop.f32.mrb[0].mxu0
      %1073 = vmatprep.mubr.bf16.mxu0 0
      %1074 = vmatmul.mubr.bf16.gmra.mrb[0].mxu0 %v971
      %v1075 = vpop.f32.mrb[0].mxu0
      %v1076 = vadd.f32 %v784, %v1075
      %v1077 = vpop.f32.mrb[0].mxu0
      %v1078 = vpop.f32.mrb[0].mxu0
      %v1079 = vadd.f32 %v787, %v1078
      %v1080 = vpop.f32.mrb[0].mxu0
      %1081 = vmatprep.mubr.bf16.mxu0 0
      %1082 = vmatmul.mubr.bf16.gmra.mrb[0].mxu0 %v974
      %v1083 = vpop.f32.mrb[0].mxu0
      %v1084 = vadd.f32 %v792, %v1083
      %v1085 = vpop.f32.mrb[0].mxu0
      %v1086 = vpop.f32.mrb[0].mxu0
      %v1087 = vadd.f32 %v795, %v1086
      %v1088 = vpop.f32.mrb[0].mxu0
      %1089 = vmatprep.mubr.bf16.mxu0 0
      %1090 = vmatmul.mubr.bf16.gmra.mrb[0].mxu0 %v977
      %v1091 = vpop.f32.mrb[0].mxu0
      %v1092 = vadd.f32 %v800, %v1091
      %v1093 = vpop.f32.mrb[0].mxu0
      %v1094 = vpop.f32.mrb[0].mxu0
      %v1095 = vadd.f32 %v803, %v1094
      %v1096 = vpop.f32.mrb[0].mxu0
      %1097 = vmatprep.mubr.bf16.mxu0 0
      %1098 = vmatmul.mubr.bf16.gmra.mrb[0].mxu0 %v980
      %v1099 = vpop.f32.mrb[0].mxu0
      %v1100 = vadd.f32 %v808, %v1099
      %v1101 = vpop.f32.mrb[0].mxu0
      %v1102 = vpop.f32.mrb[0].mxu0
      %v1103 = vadd.f32 %v811, %v1102
      %v1104 = vpop.f32.mrb[0].mxu0
      %1105 = vmatprep.mubr.bf16.mxu0 0
      %1106 = vmatmul.mubr.bf16.gmra.mrb[0].mxu0 %v983
      %v1107 = vpop.f32.mrb[0].mxu0
      %v1108 = vadd.f32 %v816, %v1107
      %v1109 = vpop.f32.mrb[0].mxu0
      %v1110 = vpop.f32.mrb[0].mxu0
      %v1111 = vadd.f32 %v819, %v1110
      %v1112 = vpop.f32.mrb[0].mxu0
      %1113 = vmatprep.mubr.bf16.mxu0 0
      %1114 = vmatmul.mubr.bf16.gmra.mrb[0].mxu0 %v986
      %v1115 = vpop.f32.mrb[0].mxu0
      %v1116 = vadd.f32 %v824, %v1115
      %v1117 = vpop.f32.mrb[0].mxu0
      %v1118 = vpop.f32.mrb[0].mxu0
      %v1119 = vadd.f32 %v827, %v1118
      %v1120 = vpop.f32.mrb[0].mxu0
      %1121 = vmatprep.mubr.bf16.mxu0 0
      %1122 = vmatmul.mubr.bf16.gmra.mrb[0].mxu0 %v989
      %v1123 = vpop.f32.mrb[0].mxu0
      %v1124 = vadd.f32 %v832, %v1123
      %v1125 = vpop.f32.mrb[0].mxu0
      %v1126 = vpop.f32.mrb[0].mxu0
      %v1127 = vadd.f32 %v835, %v1126
      %v1128 = vpop.f32.mrb[0].mxu0
      %1129 = vmatprep.mubr.bf16.mxu0 0
      %1130 = vmatmul.mubr.bf16.gmra.mrb[0].mxu0 %v992
      %v1131 = vpop.f32.mrb[0].mxu0
      %v1132 = vadd.f32 %v840, %v1131
      %v1133 = vpop.f32.mrb[0].mxu0
      %v1134 = vpop.f32.mrb[0].mxu0
      %v1135 = vadd.f32 %v843, %v1134
      %v1136 = vpop.f32.mrb[0].mxu0
      %1137 = vmatprep.mubr.bf16.mxu0 0
      %1138 = vmatmul.mubr.bf16.gmra.mrb[0].mxu0 %v995
      %v1139 = vpop.f32.mrb[0].mxu0
      %v1140 = vadd.f32 %v848, %v1139
      %v1141 = vpop.f32.mrb[0].mxu0
      %v1142 = vpop.f32.mrb[0].mxu0
      %v1143 = vadd.f32 %v851, %v1142
      %v1144 = vpop.f32.mrb[0].mxu0
      %1145 = vmatprep.mubr.bf16.mxu0 0
      %1146 = vmatmul.mubr.bf16.gmra.mrb[0].mxu0 %v998
      %v1147 = vpop.f32.mrb[0].mxu0
      %v1148 = vadd.f32 %v856, %v1147
      %v1149 = vpop.f32.mrb[0].mxu0
      %v1150 = vpop.f32.mrb[0].mxu0
      %v1151 = vadd.f32 %v859, %v1150
      %v1152 = vpop.f32.mrb[0].mxu0
      %1153 = vmatprep.mubr.bf16.mxu0 0
      %1154 = vmatmul.mubr.bf16.gmra.mrb[0].mxu0 %v1001
      %v1155 = vpop.f32.mrb[0].mxu0
      %v1156 = vadd.f32 %v864, %v1155
      %v1157 = vpop.f32.mrb[0].mxu0
      %v1158 = vpop.f32.mrb[0].mxu0
      %v1159 = vadd.f32 %v867, %v1158
      %v1160 = vpop.f32.mrb[0].mxu0
      %1161 = vmatprep.mubr.bf16.mxu0 0
      %1162 = vmatmul.mubr.bf16.gmra.mrb[0].mxu0 %v1004
      %v1163 = vpop.f32.mrb[0].mxu0
      %v1164 = vadd.f32 %v872, %v1163
      %v1165 = vpop.f32.mrb[0].mxu0
      %v1166 = vpop.f32.mrb[0].mxu0
      %v1167 = vadd.f32 %v875, %v1166
      %v1168 = vpop.f32.mrb[0].mxu0
      %1169 = vdwg.mxu0
      %vm1186 = vcmask 1042432
      %vm1187 = vcmask 1046532
      %vm1188 = vmor %vm1186, %vm1187
      %v1189 = vrot.slane %v172, 5
      %v1190 = vrot.slane %v1189, 4
      %v1191 = vrot.slane %v173, 5
      %v1192 = vsel %vm1188, %v1190, %v1191
      %v1193 = vrot.slane %v1191, 4
      %v1194 = vrot.slane %v174, 5
      %v1195 = vsel %vm1188, %v1193, %v1194
      %v1196 = vrot.slane %v175, 5
      %v1197 = vrot.slane %v1196, 4
      %v1198 = vrot.slane %v176, 5
      %v1199 = vsel %vm1188, %v1197, %v1198
      %v1200 = vrot.slane %v1198, 4
      %v1201 = vrot.slane %v177, 5
      %v1202 = vsel %vm1188, %v1200, %v1201
      %v1203 = vrot.slane %v178, 5
      %v1204 = vrot.slane %v1203, 4
      %v1205 = vrot.slane %v179, 5
      %v1206 = vsel %vm1188, %v1204, %v1205
      %v1207 = vrot.slane %v1205, 4
      %v1208 = vrot.slane %v180, 5
      %v1209 = vsel %vm1188, %v1207, %v1208
      %v1210 = vrot.slane %v181, 5
      %v1211 = vrot.slane %v1210, 4
      %v1212 = vrot.slane %v182, 5
      %v1213 = vsel %vm1188, %v1211, %v1212
      %v1214 = vrot.slane %v1212, 4
      %v1215 = vrot.slane %v183, 5
      %v1216 = vsel %vm1188, %v1214, %v1215
      %v1217 = vrot.slane %v184, 5
      %v1218 = vrot.slane %v1217, 4
      %v1219 = vrot.slane %v185, 5
      %v1220 = vsel %vm1188, %v1218, %v1219
      %v1221 = vrot.slane %v1219, 4
      %v1222 = vrot.slane %v186, 5
      %v1223 = vsel %vm1188, %v1221, %v1222
      %v1224 = vrot.slane %v187, 5
      %v1225 = vrot.slane %v1224, 4
      %v1226 = vrot.slane %v188, 5
      %v1227 = vsel %vm1188, %v1225, %v1226
      %v1228 = vrot.slane %v1226, 4
      %v1229 = vrot.slane %v189, 5
      %v1230 = vsel %vm1188, %v1228, %v1229
      %v1231 = vrot.slane %v190, 5
      %v1232 = vrot.slane %v1231, 4
      %v1233 = vrot.slane %v191, 5
      %v1234 = vsel %vm1188, %v1232, %v1233
      %v1235 = vrot.slane %v1233, 4
      %v1236 = vrot.slane %v192, 5
      %v1237 = vsel %vm1188, %v1235, %v1236
      %v1238 = vrot.slane %v193, 5
      %v1239 = vrot.slane %v1238, 4
      %v1240 = vrot.slane %v194, 5
      %v1241 = vsel %vm1188, %v1239, %v1240
      %v1242 = vrot.slane %v1240, 4
      %v1243 = vrot.slane %v195, 5
      %v1244 = vsel %vm1188, %v1242, %v1243
      %v1245 = vrot.slane %v196, 5
      %v1246 = vrot.slane %v1245, 4
      %v1247 = vrot.slane %v197, 5
      %v1248 = vsel %vm1188, %v1246, %v1247
      %v1249 = vrot.slane %v1247, 4
      %v1250 = vrot.slane %v198, 5
      %v1251 = vsel %vm1188, %v1249, %v1250
      %v1252 = vrot.slane %v199, 5
      %v1253 = vrot.slane %v1252, 4
      %v1254 = vrot.slane %v200, 5
      %v1255 = vsel %vm1188, %v1253, %v1254
      %v1256 = vrot.slane %v1254, 4
      %v1257 = vrot.slane %v201, 5
      %v1258 = vsel %vm1188, %v1256, %v1257
      %v1259 = vrot.slane %v202, 5
      %v1260 = vrot.slane %v1259, 4
      %v1261 = vrot.slane %v203, 5
      %v1262 = vsel %vm1188, %v1260, %v1261
      %v1263 = vrot.slane %v1261, 4
      %v1264 = vrot.slane %v204, 5
      %v1265 = vsel %vm1188, %v1263, %v1264
      %v1266 = vrot.slane %v205, 5
      %v1267 = vrot.slane %v1266, 4
      %v1268 = vrot.slane %v206, 5
      %v1269 = vsel %vm1188, %v1267, %v1268
      %v1270 = vrot.slane %v1268, 4
      %v1271 = vrot.slane %v207, 5
      %v1272 = vsel %vm1188, %v1270, %v1271
      %v1273 = vrot.slane %v208, 5
      %v1274 = vrot.slane %v1273, 4
      %v1275 = vrot.slane %v209, 5
      %v1276 = vsel %vm1188, %v1274, %v1275
      %v1277 = vrot.slane %v1275, 4
      %v1278 = vrot.slane %v210, 5
      %v1279 = vsel %vm1188, %v1277, %v1278
      %v1280 = vrot.slane %v211, 5
      %v1281 = vrot.slane %v1280, 4
      %v1282 = vrot.slane %v212, 5
      %v1283 = vsel %vm1188, %v1281, %v1282
      %v1284 = vrot.slane %v1282, 4
      %v1285 = vrot.slane %v213, 5
      %v1286 = vsel %vm1188, %v1284, %v1285
      %v1287 = vrot.slane %v214, 5
      %v1288 = vrot.slane %v1287, 4
      %v1289 = vrot.slane %v215, 5
      %v1290 = vsel %vm1188, %v1288, %v1289
      %v1291 = vrot.slane %v1289, 4
      %v1292 = vrot.slane %v216, 5
      %v1293 = vsel %vm1188, %v1291, %v1292
      %v1294 = vrot.slane %v217, 5
      %v1295 = vrot.slane %v1294, 4
      %v1296 = vrot.slane %v218, 5
      %v1297 = vsel %vm1188, %v1295, %v1296
      %v1298 = vrot.slane %v1296, 4
      %v1299 = vrot.slane %v219, 5
      %v1300 = vsel %vm1188, %v1298, %v1299
      %s1301 = scalar_lea.vmem %s1, 4
      %v1302 = vld [vmem:[%s1301] sm:$0x3]
      %v1303 = vunpack.c.l.b16 %v1192
      %v1304 = vunpack.c.l.b16 %v1195
      %v1305 = vunpack.c.l.b16 %v1199
      %v1306 = vunpack.c.l.b16 %v1202
      %v1307 = vunpack.c.l.b16 %v1206
      %v1308 = vunpack.c.l.b16 %v1209
      %v1309 = vunpack.c.l.b16 %v1213
      %v1310 = vunpack.c.l.b16 %v1216
      %v1311 = vunpack.c.l.b16 %v1220
      %v1312 = vunpack.c.l.b16 %v1223
      %v1313 = vunpack.c.l.b16 %v1227
      %v1314 = vunpack.c.l.b16 %v1230
      %v1315 = vunpack.c.l.b16 %v1234
      %v1316 = vunpack.c.l.b16 %v1237
      %v1317 = vunpack.c.l.b16 %v1241
      %v1318 = vunpack.c.l.b16 %v1244
      %v1319 = vunpack.c.l.b16 %v1248
      %v1320 = vunpack.c.l.b16 %v1251
      %v1321 = vunpack.c.l.b16 %v1255
      %v1322 = vunpack.c.l.b16 %v1258
      %v1323 = vunpack.c.l.b16 %v1262
      %v1324 = vunpack.c.l.b16 %v1265
      %v1325 = vunpack.c.l.b16 %v1269
      %v1326 = vunpack.c.l.b16 %v1272
      %v1327 = vunpack.c.l.b16 %v1276
      %v1328 = vunpack.c.l.b16 %v1279
      %v1329 = vunpack.c.l.b16 %v1283
      %v1330 = vunpack.c.l.b16 %v1286
      %v1331 = vunpack.c.l.b16 %v1290
      %v1332 = vunpack.c.l.b16 %v1293
      %v1333 = vunpack.c.l.b16 %v1297
      %v1334 = vunpack.c.l.b16 %v1300
      %v1335 = vpack.c.b16 %v1304, %v1303
      %v1336 = vpack.c.b16 %v1306, %v1305
      %v1337 = vpack.c.b16 %v1308, %v1307
      %v1338 = vpack.c.b16 %v1310, %v1309
      %v1339 = vpack.c.b16 %v1312, %v1311
      %v1340 = vpack.c.b16 %v1314, %v1313
      %v1341 = vpack.c.b16 %v1316, %v1315
      %v1342 = vpack.c.b16 %v1318, %v1317
      %v1343 = vpack.c.b16 %v1320, %v1319
      %v1344 = vpack.c.b16 %v1322, %v1321
      %v1345 = vpack.c.b16 %v1324, %v1323
      %v1346 = vpack.c.b16 %v1326, %v1325
      %v1347 = vpack.c.b16 %v1328, %v1327
      %v1348 = vpack.c.b16 %v1330, %v1329
      %v1349 = vpack.c.b16 %v1332, %v1331
      %v1350 = vpack.c.b16 %v1334, %v1333
      %v1352 = vsel %vm664, %v1335, 0
      %v1355 = vsel %vm664, %v1336, 0
      %v1358 = vsel %vm664, %v1337, 0
      %v1361 = vsel %vm664, %v1338, 0
      %v1364 = vsel %vm664, %v1339, 0
      %v1367 = vsel %vm664, %v1340, 0
      %v1370 = vsel %vm664, %v1341, 0
      %v1373 = vsel %vm664, %v1342, 0
      %v1376 = vsel %vm664, %v1343, 0
      %v1379 = vsel %vm664, %v1344, 0
      %v1382 = vsel %vm664, %v1345, 0
      %v1385 = vsel %vm664, %v1346, 0
      %v1388 = vsel %vm664, %v1347, 0
      %v1391 = vsel %vm664, %v1348, 0
      %v1394 = vsel %vm664, %v1349, 0
      %v1397 = vsel %vm664, %v1350, 0
      %v1400 = vsel %vm713, %v1302, 0
      %1402 = vmatprep.subr.bf16.mxu0 0
      %1403 = vmatpush1.bf16.msra.mxu0 %v1400
      %1404 = vmatprep.subr.bf16.mxu0 0
      %1405 = vmatpush1.bf16.msra.mxu0 0
      %1406 = vmatprep.subr.bf16.mxu0 0
      %1407 = vmatpush1.bf16.msra.mxu0 0
      %1408 = vmatprep.subr.bf16.mxu0 0
      %1409 = vmatpush1.bf16.msra.mxu0 0
      %1410 = vmatprep.subr.bf16.mxu0 0
      %1411 = vmatpush1.bf16.msra.mxu0 0
      %1412 = vmatprep.subr.bf16.mxu0 0
      %1413 = vmatpush1.bf16.msra.mxu0 0
      %1414 = vmatprep.subr.bf16.mxu0 0
      %1415 = vmatpush1.bf16.msra.mxu0 0
      %1416 = vmatprep.subr.bf16.mxu0 0
      %1417 = vmatpush1.bf16.msra.mxu0 0
      %1418 = vmatprep.subr.bf16.mxu0 0
      %1419 = vmatpush1.bf16.msra.mxu0 0
      %1420 = vmatprep.subr.bf16.mxu0 0
      %1421 = vmatpush1.bf16.msra.mxu0 0
      %1422 = vmatprep.subr.bf16.mxu0 0
      %1423 = vmatpush1.bf16.msra.mxu0 0
      %1424 = vmatprep.subr.bf16.mxu0 0
      %1425 = vmatpush1.bf16.msra.mxu0 0
      %1426 = vmatprep.subr.bf16.mxu0 0
      %1427 = vmatpush1.bf16.msra.mxu0 0
      %1428 = vmatprep.subr.bf16.mxu0 0
      %1429 = vmatpush1.bf16.msra.mxu0 0
      %1430 = vmatprep.subr.bf16.mxu0 0
      %1431 = vmatpush1.bf16.msra.mxu0 0
      %1432 = vmatprep.subr.bf16.mxu0 0
      %1433 = vmatpush1.bf16.msra.mxu0 0
      %1434 = vmatprep.mubr.bf16.mxu0 0
      %1435 = vmatmul.mubr.bf16.gmra.mrb[0].mxu0 %v1352
      %v1436 = vpop.f32.mrb[0].mxu0
      %v1437 = vadd.f32 0.0, %v1436
      %v1438 = vpop.f32.mrb[0].mxu0
      %v1439 = vpop.f32.mrb[0].mxu0
      %v1440 = vadd.f32 0.0, %v1439
      %v1441 = vpop.f32.mrb[0].mxu0
      %1442 = vmatprep.mubr.bf16.mxu0 0
      %1443 = vmatmul.mubr.bf16.gmra.mrb[0].mxu0 %v1355
      %v1444 = vpop.f32.mrb[0].mxu0
      %v1445 = vadd.f32 0.0, %v1444
      %v1446 = vpop.f32.mrb[0].mxu0
      %v1447 = vpop.f32.mrb[0].mxu0
      %v1448 = vadd.f32 0.0, %v1447
      %v1449 = vpop.f32.mrb[0].mxu0
      %1450 = vmatprep.mubr.bf16.mxu0 0
      %1451 = vmatmul.mubr.bf16.gmra.mrb[0].mxu0 %v1358
      %v1452 = vpop.f32.mrb[0].mxu0
      %v1453 = vadd.f32 0.0, %v1452
      %v1454 = vpop.f32.mrb[0].mxu0
      %v1455 = vpop.f32.mrb[0].mxu0
      %v1456 = vadd.f32 0.0, %v1455
      %v1457 = vpop.f32.mrb[0].mxu0
      %1458 = vmatprep.mubr.bf16.mxu0 0
      %1459 = vmatmul.mubr.bf16.gmra.mrb[0].mxu0 %v1361
      %v1460 = vpop.f32.mrb[0].mxu0
      %v1461 = vadd.f32 0.0, %v1460
      %v1462 = vpop.f32.mrb[0].mxu0
      %v1463 = vpop.f32.mrb[0].mxu0
      %v1464 = vadd.f32 0.0, %v1463
      %v1465 = vpop.f32.mrb[0].mxu0
      %1466 = vmatprep.mubr.bf16.mxu0 0
      %1467 = vmatmul.mubr.bf16.gmra.mrb[0].mxu0 %v1364
      %v1468 = vpop.f32.mrb[0].mxu0
      %v1469 = vadd.f32 0.0, %v1468
      %v1470 = vpop.f32.mrb[0].mxu0
      %v1471 = vpop.f32.mrb[0].mxu0
      %v1472 = vadd.f32 0.0, %v1471
      %v1473 = vpop.f32.mrb[0].mxu0
      %1474 = vmatprep.mubr.bf16.mxu0 0
      %1475 = vmatmul.mubr.bf16.gmra.mrb[0].mxu0 %v1367
      %v1476 = vpop.f32.mrb[0].mxu0
      %v1477 = vadd.f32 0.0, %v1476
      %v1478 = vpop.f32.mrb[0].mxu0
      %v1479 = vpop.f32.mrb[0].mxu0
      %v1480 = vadd.f32 0.0, %v1479
      %v1481 = vpop.f32.mrb[0].mxu0
      %1482 = vmatprep.mubr.bf16.mxu0 0
      %1483 = vmatmul.mubr.bf16.gmra.mrb[0].mxu0 %v1370
      %v1484 = vpop.f32.mrb[0].mxu0
      %v1485 = vadd.f32 0.0, %v1484
      %v1486 = vpop.f32.mrb[0].mxu0
      %v1487 = vpop.f32.mrb[0].mxu0
      %v1488 = vadd.f32 0.0, %v1487
      %v1489 = vpop.f32.mrb[0].mxu0
      %1490 = vmatprep.mubr.bf16.mxu0 0
      %1491 = vmatmul.mubr.bf16.gmra.mrb[0].mxu0 %v1373
      %v1492 = vpop.f32.mrb[0].mxu0
      %v1493 = vadd.f32 0.0, %v1492
      %v1494 = vpop.f32.mrb[0].mxu0
      %v1495 = vpop.f32.mrb[0].mxu0
      %v1496 = vadd.f32 0.0, %v1495
      %v1497 = vpop.f32.mrb[0].mxu0
      %1498 = vmatprep.mubr.bf16.mxu0 0
      %1499 = vmatmul.mubr.bf16.gmra.mrb[0].mxu0 %v1376
      %v1500 = vpop.f32.mrb[0].mxu0
      %v1501 = vadd.f32 0.0, %v1500
      %v1502 = vpop.f32.mrb[0].mxu0
      %v1503 = vpop.f32.mrb[0].mxu0
      %v1504 = vadd.f32 0.0, %v1503
      %v1505 = vpop.f32.mrb[0].mxu0
      %1506 = vmatprep.mubr.bf16.mxu0 0
      %1507 = vmatmul.mubr.bf16.gmra.mrb[0].mxu0 %v1379
      %v1508 = vpop.f32.mrb[0].mxu0
      %v1509 = vadd.f32 0.0, %v1508
      %v1510 = vpop.f32.mrb[0].mxu0
      %v1511 = vpop.f32.mrb[0].mxu0
      %v1512 = vadd.f32 0.0, %v1511
      %v1513 = vpop.f32.mrb[0].mxu0
      %1514 = vmatprep.mubr.bf16.mxu0 0
      %1515 = vmatmul.mubr.bf16.gmra.mrb[0].mxu0 %v1382
      %v1516 = vpop.f32.mrb[0].mxu0
      %v1517 = vadd.f32 0.0, %v1516
      %v1518 = vpop.f32.mrb[0].mxu0
      %v1519 = vpop.f32.mrb[0].mxu0
      %v1520 = vadd.f32 0.0, %v1519
      %v1521 = vpop.f32.mrb[0].mxu0
      %1522 = vmatprep.mubr.bf16.mxu0 0
      %1523 = vmatmul.mubr.bf16.gmra.mrb[0].mxu0 %v1385
      %v1524 = vpop.f32.mrb[0].mxu0
      %v1525 = vadd.f32 0.0, %v1524
      %v1526 = vpop.f32.mrb[0].mxu0
      %v1527 = vpop.f32.mrb[0].mxu0
      %v1528 = vadd.f32 0.0, %v1527
      %v1529 = vpop.f32.mrb[0].mxu0
      %1530 = vmatprep.mubr.bf16.mxu0 0
      %1531 = vmatmul.mubr.bf16.gmra.mrb[0].mxu0 %v1388
      %v1532 = vpop.f32.mrb[0].mxu0
      %v1533 = vadd.f32 0.0, %v1532
      %v1534 = vpop.f32.mrb[0].mxu0
      %v1535 = vpop.f32.mrb[0].mxu0
      %v1536 = vadd.f32 0.0, %v1535
      %v1537 = vpop.f32.mrb[0].mxu0
      %1538 = vmatprep.mubr.bf16.mxu0 0
      %1539 = vmatmul.mubr.bf16.gmra.mrb[0].mxu0 %v1391
      %v1540 = vpop.f32.mrb[0].mxu0
      %v1541 = vadd.f32 0.0, %v1540
      %v1542 = vpop.f32.mrb[0].mxu0
      %v1543 = vpop.f32.mrb[0].mxu0
      %v1544 = vadd.f32 0.0, %v1543
      %v1545 = vpop.f32.mrb[0].mxu0
      %1546 = vmatprep.mubr.bf16.mxu0 0
      %1547 = vmatmul.mubr.bf16.gmra.mrb[0].mxu0 %v1394
      %v1548 = vpop.f32.mrb[0].mxu0
      %v1549 = vadd.f32 0.0, %v1548
      %v1550 = vpop.f32.mrb[0].mxu0
      %v1551 = vpop.f32.mrb[0].mxu0
      %v1552 = vadd.f32 0.0, %v1551
      %v1553 = vpop.f32.mrb[0].mxu0
      %1554 = vmatprep.mubr.bf16.mxu0 0
      %1555 = vmatmul.mubr.bf16.gmra.mrb[0].mxu0 %v1397
      %v1556 = vpop.f32.mrb[0].mxu0
      %v1557 = vadd.f32 0.0, %v1556
      %v1558 = vpop.f32.mrb[0].mxu0
      %v1559 = vpop.f32.mrb[0].mxu0
      %v1560 = vadd.f32 0.0, %v1559
      %v1561 = vpop.f32.mrb[0].mxu0
      %1562 = vdwg.mxu0
      %v1563 = vadd.f32 %v1044, %v1437
      %v1564 = vadd.f32 %v1047, %v1440
      %v1565 = vadd.f32 %v1052, %v1445
      %v1566 = vadd.f32 %v1055, %v1448
      %v1567 = vadd.f32 %v1060, %v1453
      %v1568 = vadd.f32 %v1063, %v1456
      %v1569 = vadd.f32 %v1068, %v1461
      %v1570 = vadd.f32 %v1071, %v1464
      %v1571 = vadd.f32 %v1076, %v1469
      %v1572 = vadd.f32 %v1079, %v1472
      %v1573 = vadd.f32 %v1084, %v1477
      %v1574 = vadd.f32 %v1087, %v1480
      %v1575 = vadd.f32 %v1092, %v1485
      %v1576 = vadd.f32 %v1095, %v1488
      %v1577 = vadd.f32 %v1100, %v1493
      %v1578 = vadd.f32 %v1103, %v1496
      %v1579 = vadd.f32 %v1108, %v1501
      %v1580 = vadd.f32 %v1111, %v1504
      %v1581 = vadd.f32 %v1116, %v1509
      %v1582 = vadd.f32 %v1119, %v1512
      %v1583 = vadd.f32 %v1124, %v1517
      %v1584 = vadd.f32 %v1127, %v1520
      %v1585 = vadd.f32 %v1132, %v1525
      %v1586 = vadd.f32 %v1135, %v1528
      %v1587 = vadd.f32 %v1140, %v1533
      %v1588 = vadd.f32 %v1143, %v1536
      %v1589 = vadd.f32 %v1148, %v1541
      %v1590 = vadd.f32 %v1151, %v1544
      %v1591 = vadd.f32 %v1156, %v1549
      %v1592 = vadd.f32 %v1159, %v1552
      %v1593 = vadd.f32 %v1164, %v1557
      %v1594 = vadd.f32 %v1167, %v1560
      %s1595 = scalar_lea.vmem %s1, 6
      %v1596 = vld [vmem:[%s1595] sm:$0x3]
      %v1599 = vunpack.c.l.b16 %v220
      %v1600 = vunpack.c.l.b16 %v221
      %v1601 = vpack.c.b16 %v1600, %v1599
      %v1603 = vsel %vm664, %v1601, 0
      %v1606 = vsel %vm713, %v1596, 0
      %1608 = vmatprep.subr.bf16.mxu0 0
      %1609 = vmatpush1.bf16.msra.mxu0 %v1606
      %1610 = vmatprep.subr.bf16.mxu0 0
      %1611 = vmatpush1.bf16.msra.mxu0 0
      %1612 = vmatprep.subr.bf16.mxu0 0
      %1613 = vmatpush1.bf16.msra.mxu0 0
      %1614 = vmatprep.subr.bf16.mxu0 0
      %1615 = vmatpush1.bf16.msra.mxu0 0
      %1616 = vmatprep.subr.bf16.mxu0 0
      %1617 = vmatpush1.bf16.msra.mxu0 0
      %1618 = vmatprep.subr.bf16.mxu0 0
      %1619 = vmatpush1.bf16.msra.mxu0 0
      %1620 = vmatprep.subr.bf16.mxu0 0
      %1621 = vmatpush1.bf16.msra.mxu0 0
      %1622 = vmatprep.subr.bf16.mxu0 0
      %1623 = vmatpush1.bf16.msra.mxu0 0
      %1624 = vmatprep.subr.bf16.mxu0 0
      %1625 = vmatpush1.bf16.msra.mxu0 0
      %1626 = vmatprep.subr.bf16.mxu0 0
      %1627 = vmatpush1.bf16.msra.mxu0 0
      %1628 = vmatprep.subr.bf16.mxu0 0
      %1629 = vmatpush1.bf16.msra.mxu0 0
      %1630 = vmatprep.subr.bf16.mxu0 0
      %1631 = vmatpush1.bf16.msra.mxu0 0
      %1632 = vmatprep.subr.bf16.mxu0 0
      %1633 = vmatpush1.bf16.msra.mxu0 0
      %1634 = vmatprep.subr.bf16.mxu0 0
      %1635 = vmatpush1.bf16.msra.mxu0 0
      %1636 = vmatprep.subr.bf16.mxu0 0
      %1637 = vmatpush1.bf16.msra.mxu0 0
      %1638 = vmatprep.subr.bf16.mxu0 0
      %1639 = vmatpush1.bf16.msra.mxu0 0
      %1640 = vmatprep.mubr.bf16.mxu0 0
      %1641 = vmatmul.mubr.bf16.gmra.mrb[0].mxu0 %v962
      %v1642 = vpop.f32.mrb[0].mxu0
      %v1643 = vadd.f32 0.0, %v1642
      %v1644 = vpop.f32.mrb[0].mxu0
      %v1645 = vpop.f32.mrb[0].mxu0
      %v1646 = vadd.f32 0.0, %v1645
      %v1647 = vpop.f32.mrb[0].mxu0
      %1648 = vmatprep.mubr.bf16.mxu0 0
      %1649 = vmatmul.mubr.bf16.gmra.mrb[0].mxu0 %v965
      %v1650 = vpop.f32.mrb[0].mxu0
      %v1651 = vadd.f32 0.0, %v1650
      %v1652 = vpop.f32.mrb[0].mxu0
      %v1653 = vpop.f32.mrb[0].mxu0
      %v1654 = vadd.f32 0.0, %v1653
      %v1655 = vpop.f32.mrb[0].mxu0
      %1656 = vmatprep.mubr.bf16.mxu0 0
      %1657 = vmatmul.mubr.bf16.gmra.mrb[0].mxu0 %v968
      %v1658 = vpop.f32.mrb[0].mxu0
      %v1659 = vadd.f32 0.0, %v1658
      %v1660 = vpop.f32.mrb[0].mxu0
      %v1661 = vpop.f32.mrb[0].mxu0
      %v1662 = vadd.f32 0.0, %v1661
      %v1663 = vpop.f32.mrb[0].mxu0
      %1664 = vmatprep.mubr.bf16.mxu0 0
      %1665 = vmatmul.mubr.bf16.gmra.mrb[0].mxu0 %v971
      %v1666 = vpop.f32.mrb[0].mxu0
      %v1667 = vadd.f32 0.0, %v1666
      %v1668 = vpop.f32.mrb[0].mxu0
      %v1669 = vpop.f32.mrb[0].mxu0
      %v1670 = vadd.f32 0.0, %v1669
      %v1671 = vpop.f32.mrb[0].mxu0
      %1672 = vmatprep.mubr.bf16.mxu0 0
      %1673 = vmatmul.mubr.bf16.gmra.mrb[0].mxu0 %v974
      %v1674 = vpop.f32.mrb[0].mxu0
      %v1675 = vadd.f32 0.0, %v1674
      %v1676 = vpop.f32.mrb[0].mxu0
      %v1677 = vpop.f32.mrb[0].mxu0
      %v1678 = vadd.f32 0.0, %v1677
      %v1679 = vpop.f32.mrb[0].mxu0
      %1680 = vmatprep.mubr.bf16.mxu0 0
      %1681 = vmatmul.mubr.bf16.gmra.mrb[0].mxu0 %v977
      %v1682 = vpop.f32.mrb[0].mxu0
      %v1683 = vadd.f32 0.0, %v1682
      %v1684 = vpop.f32.mrb[0].mxu0
      %v1685 = vpop.f32.mrb[0].mxu0
      %v1686 = vadd.f32 0.0, %v1685
      %v1687 = vpop.f32.mrb[0].mxu0
      %1688 = vmatprep.mubr.bf16.mxu0 0
      %1689 = vmatmul.mubr.bf16.gmra.mrb[0].mxu0 %v980
      %v1690 = vpop.f32.mrb[0].mxu0
      %v1691 = vadd.f32 0.0, %v1690
      %v1692 = vpop.f32.mrb[0].mxu0
      %v1693 = vpop.f32.mrb[0].mxu0
      %v1694 = vadd.f32 0.0, %v1693
      %v1695 = vpop.f32.mrb[0].mxu0
      %1696 = vmatprep.mubr.bf16.mxu0 0
      %1697 = vmatmul.mubr.bf16.gmra.mrb[0].mxu0 %v983
      %v1698 = vpop.f32.mrb[0].mxu0
      %v1699 = vadd.f32 0.0, %v1698
      %v1700 = vpop.f32.mrb[0].mxu0
      %v1701 = vpop.f32.mrb[0].mxu0
      %v1702 = vadd.f32 0.0, %v1701
      %v1703 = vpop.f32.mrb[0].mxu0
      %1704 = vmatprep.mubr.bf16.mxu0 0
      %1705 = vmatmul.mubr.bf16.gmra.mrb[0].mxu0 %v986
      %v1706 = vpop.f32.mrb[0].mxu0
      %v1707 = vadd.f32 0.0, %v1706
      %v1708 = vpop.f32.mrb[0].mxu0
      %v1709 = vpop.f32.mrb[0].mxu0
      %v1710 = vadd.f32 0.0, %v1709
      %v1711 = vpop.f32.mrb[0].mxu0
      %1712 = vmatprep.mubr.bf16.mxu0 0
      %1713 = vmatmul.mubr.bf16.gmra.mrb[0].mxu0 %v989
      %v1714 = vpop.f32.mrb[0].mxu0
      %v1715 = vadd.f32 0.0, %v1714
      %v1716 = vpop.f32.mrb[0].mxu0
      %v1717 = vpop.f32.mrb[0].mxu0
      %v1718 = vadd.f32 0.0, %v1717
      %v1719 = vpop.f32.mrb[0].mxu0
      %1720 = vmatprep.mubr.bf16.mxu0 0
      %1721 = vmatmul.mubr.bf16.gmra.mrb[0].mxu0 %v992
      %v1722 = vpop.f32.mrb[0].mxu0
      %v1723 = vadd.f32 0.0, %v1722
      %v1724 = vpop.f32.mrb[0].mxu0
      %v1725 = vpop.f32.mrb[0].mxu0
      %v1726 = vadd.f32 0.0, %v1725
      %v1727 = vpop.f32.mrb[0].mxu0
      %1728 = vmatprep.mubr.bf16.mxu0 0
      %1729 = vmatmul.mubr.bf16.gmra.mrb[0].mxu0 %v995
      %v1730 = vpop.f32.mrb[0].mxu0
      %v1731 = vadd.f32 0.0, %v1730
      %v1732 = vpop.f32.mrb[0].mxu0
      %v1733 = vpop.f32.mrb[0].mxu0
      %v1734 = vadd.f32 0.0, %v1733
      %v1735 = vpop.f32.mrb[0].mxu0
      %1736 = vmatprep.mubr.bf16.mxu0 0
      %1737 = vmatmul.mubr.bf16.gmra.mrb[0].mxu0 %v998
      %v1738 = vpop.f32.mrb[0].mxu0
      %v1739 = vadd.f32 0.0, %v1738
      %v1740 = vpop.f32.mrb[0].mxu0
      %v1741 = vpop.f32.mrb[0].mxu0
      %v1742 = vadd.f32 0.0, %v1741
      %v1743 = vpop.f32.mrb[0].mxu0
      %1744 = vmatprep.mubr.bf16.mxu0 0
      %1745 = vmatmul.mubr.bf16.gmra.mrb[0].mxu0 %v1001
      %v1746 = vpop.f32.mrb[0].mxu0
      %v1747 = vadd.f32 0.0, %v1746
      %v1748 = vpop.f32.mrb[0].mxu0
      %v1749 = vpop.f32.mrb[0].mxu0
      %v1750 = vadd.f32 0.0, %v1749
      %v1751 = vpop.f32.mrb[0].mxu0
      %1752 = vmatprep.mubr.bf16.mxu0 0
      %1753 = vmatmul.mubr.bf16.gmra.mrb[0].mxu0 %v1004
      %v1754 = vpop.f32.mrb[0].mxu0
      %v1755 = vadd.f32 0.0, %v1754
      %v1756 = vpop.f32.mrb[0].mxu0
      %v1757 = vpop.f32.mrb[0].mxu0
      %v1758 = vadd.f32 0.0, %v1757
      %v1759 = vpop.f32.mrb[0].mxu0
      %1760 = vmatprep.mubr.bf16.mxu0 0
      %1761 = vmatmul.mubr.bf16.gmra.mrb[0].mxu0 %v1603
      %v1762 = vpop.f32.mrb[0].mxu0
      %v1763 = vadd.f32 0.0, %v1762
      %v1764 = vpop.f32.mrb[0].mxu0
      %v1765 = vpop.f32.mrb[0].mxu0
      %v1766 = vadd.f32 0.0, %v1765
      %v1767 = vpop.f32.mrb[0].mxu0
      %1768 = vdwg.mxu0
      %v1769 = vadd.f32 %v1563, %v1643
      %v1770 = vadd.f32 %v1564, %v1646
      %v1771 = vadd.f32 %v1565, %v1651
      %v1772 = vadd.f32 %v1566, %v1654
      %v1773 = vadd.f32 %v1567, %v1659
      %v1774 = vadd.f32 %v1568, %v1662
      %v1775 = vadd.f32 %v1569, %v1667
      %v1776 = vadd.f32 %v1570, %v1670
      %v1777 = vadd.f32 %v1571, %v1675
      %v1778 = vadd.f32 %v1572, %v1678
      %v1779 = vadd.f32 %v1573, %v1683
      %v1780 = vadd.f32 %v1574, %v1686
      %v1781 = vadd.f32 %v1575, %v1691
      %v1782 = vadd.f32 %v1576, %v1694
      %v1783 = vadd.f32 %v1577, %v1699
      %v1784 = vadd.f32 %v1578, %v1702
      %v1785 = vadd.f32 %v1579, %v1707
      %v1786 = vadd.f32 %v1580, %v1710
      %v1787 = vadd.f32 %v1581, %v1715
      %v1788 = vadd.f32 %v1582, %v1718
      %v1789 = vadd.f32 %v1583, %v1723
      %v1790 = vadd.f32 %v1584, %v1726
      %v1791 = vadd.f32 %v1585, %v1731
      %v1792 = vadd.f32 %v1586, %v1734
      %v1793 = vadd.f32 %v1587, %v1739
      %v1794 = vadd.f32 %v1588, %v1742
      %v1795 = vadd.f32 %v1589, %v1747
      %v1796 = vadd.f32 %v1590, %v1750
      %v1797 = vadd.f32 %v1591, %v1755
      %v1798 = vadd.f32 %v1592, %v1758
      %v1799 = vadd.f32 %v1593, %v1763
      %v1800 = vadd.f32 %v1594, %v1766
      %v1802 = vshrl.u32 %v220, 16
      %v1804 = vrot.slane %v1802, 4
      %v1805 = vshll.u32 %v220, 16
      %v1807 = vrot.slane %v1805, 5
      %v1808 = vor.u32 %v1804, %v1807
      %v1809 = vrot.slane %v1808, 4
      %v1811 = vshll.u32 %v221, 16
      %v1813 = vrot.slane %v1811, 5
      %v1814 = vsel %vm229, %v1809, %v1813
      %v1815 = vshrl.u32 %v221, 16
      %v1817 = vrot.slane %v1815, 4
      %v1818 = vor.u32 %v1817, %v1813
      %v1819 = vrot.slane %v1818, 4
      %v1821 = vshll.u32 %v222, 16
      %v1823 = vrot.slane %v1821, 5
      %v1824 = vsel %vm229, %v1819, %v1823
      %s1825 = scalar_lea.vmem %s1, 8
      %v1826 = vld [vmem:[%s1825] sm:$0x3]
      %v1827 = vunpack.c.l.b16 %v1814
      %v1828 = vunpack.c.l.b16 %v1824
      %v1829 = vpack.c.b16 %v1828, %v1827
      %v1831 = vsel %vm664, %v1829, 0
      %v1834 = vsel %vm713, %v1826, 0
      %1836 = vmatprep.subr.bf16.mxu0 0
      %1837 = vmatpush1.bf16.msra.mxu0 %v1834
      %1838 = vmatprep.subr.bf16.mxu0 0
      %1839 = vmatpush1.bf16.msra.mxu0 0
      %1840 = vmatprep.subr.bf16.mxu0 0
      %1841 = vmatpush1.bf16.msra.mxu0 0
      %1842 = vmatprep.subr.bf16.mxu0 0
      %1843 = vmatpush1.bf16.msra.mxu0 0
      %1844 = vmatprep.subr.bf16.mxu0 0
      %1845 = vmatpush1.bf16.msra.mxu0 0
      %1846 = vmatprep.subr.bf16.mxu0 0
      %1847 = vmatpush1.bf16.msra.mxu0 0
      %1848 = vmatprep.subr.bf16.mxu0 0
      %1849 = vmatpush1.bf16.msra.mxu0 0
      %1850 = vmatprep.subr.bf16.mxu0 0
      %1851 = vmatpush1.bf16.msra.mxu0 0
      %1852 = vmatprep.subr.bf16.mxu0 0
      %1853 = vmatpush1.bf16.msra.mxu0 0
      %1854 = vmatprep.subr.bf16.mxu0 0
      %1855 = vmatpush1.bf16.msra.mxu0 0
      %1856 = vmatprep.subr.bf16.mxu0 0
      %1857 = vmatpush1.bf16.msra.mxu0 0
      %1858 = vmatprep.subr.bf16.mxu0 0
      %1859 = vmatpush1.bf16.msra.mxu0 0
      %1860 = vmatprep.subr.bf16.mxu0 0
      %1861 = vmatpush1.bf16.msra.mxu0 0
      %1862 = vmatprep.subr.bf16.mxu0 0
      %1863 = vmatpush1.bf16.msra.mxu0 0
      %1864 = vmatprep.subr.bf16.mxu0 0
      %1865 = vmatpush1.bf16.msra.mxu0 0
      %1866 = vmatprep.subr.bf16.mxu0 0
      %1867 = vmatpush1.bf16.msra.mxu0 0
      %1868 = vmatprep.mubr.bf16.mxu0 0
      %1869 = vmatmul.mubr.bf16.gmra.mrb[0].mxu0 %v669
      %v1870 = vpop.f32.mrb[0].mxu0
      %v1871 = vadd.f32 0.0, %v1870
      %v1872 = vpop.f32.mrb[0].mxu0
      %v1873 = vpop.f32.mrb[0].mxu0
      %v1874 = vadd.f32 0.0, %v1873
      %v1875 = vpop.f32.mrb[0].mxu0
      %1876 = vmatprep.mubr.bf16.mxu0 0
      %1877 = vmatmul.mubr.bf16.gmra.mrb[0].mxu0 %v672
      %v1878 = vpop.f32.mrb[0].mxu0
      %v1879 = vadd.f32 0.0, %v1878
      %v1880 = vpop.f32.mrb[0].mxu0
      %v1881 = vpop.f32.mrb[0].mxu0
      %v1882 = vadd.f32 0.0, %v1881
      %v1883 = vpop.f32.mrb[0].mxu0
      %1884 = vmatprep.mubr.bf16.mxu0 0
      %1885 = vmatmul.mubr.bf16.gmra.mrb[0].mxu0 %v675
      %v1886 = vpop.f32.mrb[0].mxu0
      %v1887 = vadd.f32 0.0, %v1886
      %v1888 = vpop.f32.mrb[0].mxu0
      %v1889 = vpop.f32.mrb[0].mxu0
      %v1890 = vadd.f32 0.0, %v1889
      %v1891 = vpop.f32.mrb[0].mxu0
      %1892 = vmatprep.mubr.bf16.mxu0 0
      %1893 = vmatmul.mubr.bf16.gmra.mrb[0].mxu0 %v678
      %v1894 = vpop.f32.mrb[0].mxu0
      %v1895 = vadd.f32 0.0, %v1894
      %v1896 = vpop.f32.mrb[0].mxu0
      %v1897 = vpop.f32.mrb[0].mxu0
      %v1898 = vadd.f32 0.0, %v1897
      %v1899 = vpop.f32.mrb[0].mxu0
      %1900 = vmatprep.mubr.bf16.mxu0 0
      %1901 = vmatmul.mubr.bf16.gmra.mrb[0].mxu0 %v681
      %v1902 = vpop.f32.mrb[0].mxu0
      %v1903 = vadd.f32 0.0, %v1902
      %v1904 = vpop.f32.mrb[0].mxu0
      %v1905 = vpop.f32.mrb[0].mxu0
      %v1906 = vadd.f32 0.0, %v1905
      %v1907 = vpop.f32.mrb[0].mxu0
      %1908 = vmatprep.mubr.bf16.mxu0 0
      %1909 = vmatmul.mubr.bf16.gmra.mrb[0].mxu0 %v684
      %v1910 = vpop.f32.mrb[0].mxu0
      %v1911 = vadd.f32 0.0, %v1910
      %v1912 = vpop.f32.mrb[0].mxu0
      %v1913 = vpop.f32.mrb[0].mxu0
      %v1914 = vadd.f32 0.0, %v1913
      %v1915 = vpop.f32.mrb[0].mxu0
      %1916 = vmatprep.mubr.bf16.mxu0 0
      %1917 = vmatmul.mubr.bf16.gmra.mrb[0].mxu0 %v687
      %v1918 = vpop.f32.mrb[0].mxu0
      %v1919 = vadd.f32 0.0, %v1918
      %v1920 = vpop.f32.mrb[0].mxu0
      %v1921 = vpop.f32.mrb[0].mxu0
      %v1922 = vadd.f32 0.0, %v1921
      %v1923 = vpop.f32.mrb[0].mxu0
      %1924 = vmatprep.mubr.bf16.mxu0 0
      %1925 = vmatmul.mubr.bf16.gmra.mrb[0].mxu0 %v690
      %v1926 = vpop.f32.mrb[0].mxu0
      %v1927 = vadd.f32 0.0, %v1926
      %v1928 = vpop.f32.mrb[0].mxu0
      %v1929 = vpop.f32.mrb[0].mxu0
      %v1930 = vadd.f32 0.0, %v1929
      %v1931 = vpop.f32.mrb[0].mxu0
      %1932 = vmatprep.mubr.bf16.mxu0 0
      %1933 = vmatmul.mubr.bf16.gmra.mrb[0].mxu0 %v693
      %v1934 = vpop.f32.mrb[0].mxu0
      %v1935 = vadd.f32 0.0, %v1934
      %v1936 = vpop.f32.mrb[0].mxu0
      %v1937 = vpop.f32.mrb[0].mxu0
      %v1938 = vadd.f32 0.0, %v1937
      %v1939 = vpop.f32.mrb[0].mxu0
      %1940 = vmatprep.mubr.bf16.mxu0 0
      %1941 = vmatmul.mubr.bf16.gmra.mrb[0].mxu0 %v696
      %v1942 = vpop.f32.mrb[0].mxu0
      %v1943 = vadd.f32 0.0, %v1942
      %v1944 = vpop.f32.mrb[0].mxu0
      %v1945 = vpop.f32.mrb[0].mxu0
      %v1946 = vadd.f32 0.0, %v1945
      %v1947 = vpop.f32.mrb[0].mxu0
      %1948 = vmatprep.mubr.bf16.mxu0 0
      %1949 = vmatmul.mubr.bf16.gmra.mrb[0].mxu0 %v699
      %v1950 = vpop.f32.mrb[0].mxu0
      %v1951 = vadd.f32 0.0, %v1950
      %v1952 = vpop.f32.mrb[0].mxu0
      %v1953 = vpop.f32.mrb[0].mxu0
      %v1954 = vadd.f32 0.0, %v1953
      %v1955 = vpop.f32.mrb[0].mxu0
      %1956 = vmatprep.mubr.bf16.mxu0 0
      %1957 = vmatmul.mubr.bf16.gmra.mrb[0].mxu0 %v702
      %v1958 = vpop.f32.mrb[0].mxu0
      %v1959 = vadd.f32 0.0, %v1958
      %v1960 = vpop.f32.mrb[0].mxu0
      %v1961 = vpop.f32.mrb[0].mxu0
      %v1962 = vadd.f32 0.0, %v1961
      %v1963 = vpop.f32.mrb[0].mxu0
      %1964 = vmatprep.mubr.bf16.mxu0 0
      %1965 = vmatmul.mubr.bf16.gmra.mrb[0].mxu0 %v705
      %v1966 = vpop.f32.mrb[0].mxu0
      %v1967 = vadd.f32 0.0, %v1966
      %v1968 = vpop.f32.mrb[0].mxu0
      %v1969 = vpop.f32.mrb[0].mxu0
      %v1970 = vadd.f32 0.0, %v1969
      %v1971 = vpop.f32.mrb[0].mxu0
      %1972 = vmatprep.mubr.bf16.mxu0 0
      %1973 = vmatmul.mubr.bf16.gmra.mrb[0].mxu0 %v708
      %v1974 = vpop.f32.mrb[0].mxu0
      %v1975 = vadd.f32 0.0, %v1974
      %v1976 = vpop.f32.mrb[0].mxu0
      %v1977 = vpop.f32.mrb[0].mxu0
      %v1978 = vadd.f32 0.0, %v1977
      %v1979 = vpop.f32.mrb[0].mxu0
      %1980 = vmatprep.mubr.bf16.mxu0 0
      %1981 = vmatmul.mubr.bf16.gmra.mrb[0].mxu0 %v711
      %v1982 = vpop.f32.mrb[0].mxu0
      %v1983 = vadd.f32 0.0, %v1982
      %v1984 = vpop.f32.mrb[0].mxu0
      %v1985 = vpop.f32.mrb[0].mxu0
      %v1986 = vadd.f32 0.0, %v1985
      %v1987 = vpop.f32.mrb[0].mxu0
      %1988 = vmatprep.mubr.bf16.mxu0 0
      %1989 = vmatmul.mubr.bf16.gmra.mrb[0].mxu0 %v1831
      %v1990 = vpop.f32.mrb[0].mxu0
      %v1991 = vadd.f32 0.0, %v1990
      %v1992 = vpop.f32.mrb[0].mxu0
      %v1993 = vpop.f32.mrb[0].mxu0
      %v1994 = vadd.f32 0.0, %v1993
      %v1995 = vpop.f32.mrb[0].mxu0
      %1996 = vdwg.mxu0
      %v1997 = vadd.f32 %v1769, %v1871
      %v1998 = vadd.f32 %v1770, %v1874
      %v1999 = vadd.f32 %v1771, %v1879
      %v2000 = vadd.f32 %v1772, %v1882
      %v2001 = vadd.f32 %v1773, %v1887
      %v2002 = vadd.f32 %v1774, %v1890
      %v2003 = vadd.f32 %v1775, %v1895
      %v2004 = vadd.f32 %v1776, %v1898
      %v2005 = vadd.f32 %v1777, %v1903
      %v2006 = vadd.f32 %v1778, %v1906
      %v2007 = vadd.f32 %v1779, %v1911
      %v2008 = vadd.f32 %v1780, %v1914
      %v2009 = vadd.f32 %v1781, %v1919
      %v2010 = vadd.f32 %v1782, %v1922
      %v2011 = vadd.f32 %v1783, %v1927
      %v2012 = vadd.f32 %v1784, %v1930
      %v2013 = vadd.f32 %v1785, %v1935
      %v2014 = vadd.f32 %v1786, %v1938
      %v2015 = vadd.f32 %v1787, %v1943
      %v2016 = vadd.f32 %v1788, %v1946
      %v2017 = vadd.f32 %v1789, %v1951
      %v2018 = vadd.f32 %v1790, %v1954
      %v2019 = vadd.f32 %v1791, %v1959
      %v2020 = vadd.f32 %v1792, %v1962
      %v2021 = vadd.f32 %v1793, %v1967
      %v2022 = vadd.f32 %v1794, %v1970
      %v2023 = vadd.f32 %v1795, %v1975
      %v2024 = vadd.f32 %v1796, %v1978
      %v2025 = vadd.f32 %v1797, %v1983
      %v2026 = vadd.f32 %v1798, %v1986
      %v2027 = vadd.f32 %v1799, %v1991
      %v2028 = vadd.f32 %v1800, %v1994
      %v2030 = vrot.slane %v220, 5
      %v2031 = vrot.slane %v2030, 4
      %v2032 = vrot.slane %v221, 5
      %v2033 = vsel %vm1188, %v2031, %v2032
      %v2034 = vrot.slane %v2032, 4
      %v2035 = vrot.slane %v222, 5
      %v2036 = vsel %vm1188, %v2034, %v2035
      %s2037 = scalar_lea.vmem %s1, 10
      %v2038 = vld [vmem:[%s2037] sm:$0x3]
      %v2039 = vunpack.c.l.b16 %v2033
      %v2040 = vunpack.c.l.b16 %v2036
      %v2041 = vpack.c.b16 %v2040, %v2039
      %v2043 = vsel %vm664, %v2041, 0
      %v2046 = vsel %vm713, %v2038, 0
      %2048 = vmatprep.subr.bf16.mxu0 0
      %2049 = vmatpush1.bf16.msra.mxu0 %v2046
      %2050 = vmatprep.subr.bf16.mxu0 0
      %2051 = vmatpush1.bf16.msra.mxu0 0
      %2052 = vmatprep.subr.bf16.mxu0 0
      %2053 = vmatpush1.bf16.msra.mxu0 0
      %2054 = vmatprep.subr.bf16.mxu0 0
      %2055 = vmatpush1.bf16.msra.mxu0 0
      %2056 = vmatprep.subr.bf16.mxu0 0
      %2057 = vmatpush1.bf16.msra.mxu0 0
      %2058 = vmatprep.subr.bf16.mxu0 0
      %2059 = vmatpush1.bf16.msra.mxu0 0
      %2060 = vmatprep.subr.bf16.mxu0 0
      %2061 = vmatpush1.bf16.msra.mxu0 0
      %2062 = vmatprep.subr.bf16.mxu0 0
      %2063 = vmatpush1.bf16.msra.mxu0 0
      %2064 = vmatprep.subr.bf16.mxu0 0
      %2065 = vmatpush1.bf16.msra.mxu0 0
      %2066 = vmatprep.subr.bf16.mxu0 0
      %2067 = vmatpush1.bf16.msra.mxu0 0
      %2068 = vmatprep.subr.bf16.mxu0 0
      %2069 = vmatpush1.bf16.msra.mxu0 0
      %2070 = vmatprep.subr.bf16.mxu0 0
      %2071 = vmatpush1.bf16.msra.mxu0 0
      %2072 = vmatprep.subr.bf16.mxu0 0
      %2073 = vmatpush1.bf16.msra.mxu0 0
      %2074 = vmatprep.subr.bf16.mxu0 0
      %2075 = vmatpush1.bf16.msra.mxu0 0
      %2076 = vmatprep.subr.bf16.mxu0 0
      %2077 = vmatpush1.bf16.msra.mxu0 0
      %2078 = vmatprep.subr.bf16.mxu0 0
      %2079 = vmatpush1.bf16.msra.mxu0 0
      %2080 = vmatprep.mubr.bf16.mxu0 0
      %2081 = vmatmul.mubr.bf16.gmra.mrb[0].mxu0 %v1355
      %v2082 = vpop.f32.mrb[0].mxu0
      %v2083 = vadd.f32 0.0, %v2082
      %v2084 = vpop.f32.mrb[0].mxu0
      %v2085 = vpop.f32.mrb[0].mxu0
      %v2086 = vadd.f32 0.0, %v2085
      %v2087 = vpop.f32.mrb[0].mxu0
      %2088 = vmatprep.mubr.bf16.mxu0 0
      %2089 = vmatmul.mubr.bf16.gmra.mrb[0].mxu0 %v1358
      %v2090 = vpop.f32.mrb[0].mxu0
      %v2091 = vadd.f32 0.0, %v2090
      %v2092 = vpop.f32.mrb[0].mxu0
      %v2093 = vpop.f32.mrb[0].mxu0
      %v2094 = vadd.f32 0.0, %v2093
      %v2095 = vpop.f32.mrb[0].mxu0
      %2096 = vmatprep.mubr.bf16.mxu0 0
      %2097 = vmatmul.mubr.bf16.gmra.mrb[0].mxu0 %v1361
      %v2098 = vpop.f32.mrb[0].mxu0
      %v2099 = vadd.f32 0.0, %v2098
      %v2100 = vpop.f32.mrb[0].mxu0
      %v2101 = vpop.f32.mrb[0].mxu0
      %v2102 = vadd.f32 0.0, %v2101
      %v2103 = vpop.f32.mrb[0].mxu0
      %2104 = vmatprep.mubr.bf16.mxu0 0
      %2105 = vmatmul.mubr.bf16.gmra.mrb[0].mxu0 %v1364
      %v2106 = vpop.f32.mrb[0].mxu0
      %v2107 = vadd.f32 0.0, %v2106
      %v2108 = vpop.f32.mrb[0].mxu0
      %v2109 = vpop.f32.mrb[0].mxu0
      %v2110 = vadd.f32 0.0, %v2109
      %v2111 = vpop.f32.mrb[0].mxu0
      %2112 = vmatprep.mubr.bf16.mxu0 0
      %2113 = vmatmul.mubr.bf16.gmra.mrb[0].mxu0 %v1367
      %v2114 = vpop.f32.mrb[0].mxu0
      %v2115 = vadd.f32 0.0, %v2114
      %v2116 = vpop.f32.mrb[0].mxu0
      %v2117 = vpop.f32.mrb[0].mxu0
      %v2118 = vadd.f32 0.0, %v2117
      %v2119 = vpop.f32.mrb[0].mxu0
      %2120 = vmatprep.mubr.bf16.mxu0 0
      %2121 = vmatmul.mubr.bf16.gmra.mrb[0].mxu0 %v1370
      %v2122 = vpop.f32.mrb[0].mxu0
      %v2123 = vadd.f32 0.0, %v2122
      %v2124 = vpop.f32.mrb[0].mxu0
      %v2125 = vpop.f32.mrb[0].mxu0
      %v2126 = vadd.f32 0.0, %v2125
      %v2127 = vpop.f32.mrb[0].mxu0
      %2128 = vmatprep.mubr.bf16.mxu0 0
      %2129 = vmatmul.mubr.bf16.gmra.mrb[0].mxu0 %v1373
      %v2130 = vpop.f32.mrb[0].mxu0
      %v2131 = vadd.f32 0.0, %v2130
      %v2132 = vpop.f32.mrb[0].mxu0
      %v2133 = vpop.f32.mrb[0].mxu0
      %v2134 = vadd.f32 0.0, %v2133
      %v2135 = vpop.f32.mrb[0].mxu0
      %2136 = vmatprep.mubr.bf16.mxu0 0
      %2137 = vmatmul.mubr.bf16.gmra.mrb[0].mxu0 %v1376
      %v2138 = vpop.f32.mrb[0].mxu0
      %v2139 = vadd.f32 0.0, %v2138
      %v2140 = vpop.f32.mrb[0].mxu0
      %v2141 = vpop.f32.mrb[0].mxu0
      %v2142 = vadd.f32 0.0, %v2141
      %v2143 = vpop.f32.mrb[0].mxu0
      %2144 = vmatprep.mubr.bf16.mxu0 0
      %2145 = vmatmul.mubr.bf16.gmra.mrb[0].mxu0 %v1379
      %v2146 = vpop.f32.mrb[0].mxu0
      %v2147 = vadd.f32 0.0, %v2146
      %v2148 = vpop.f32.mrb[0].mxu0
      %v2149 = vpop.f32.mrb[0].mxu0
      %v2150 = vadd.f32 0.0, %v2149
      %v2151 = vpop.f32.mrb[0].mxu0
      %2152 = vmatprep.mubr.bf16.mxu0 0
      %2153 = vmatmul.mubr.bf16.gmra.mrb[0].mxu0 %v1382
      %v2154 = vpop.f32.mrb[0].mxu0
      %v2155 = vadd.f32 0.0, %v2154
      %v2156 = vpop.f32.mrb[0].mxu0
      %v2157 = vpop.f32.mrb[0].mxu0
      %v2158 = vadd.f32 0.0, %v2157
      %v2159 = vpop.f32.mrb[0].mxu0
      %2160 = vmatprep.mubr.bf16.mxu0 0
      %2161 = vmatmul.mubr.bf16.gmra.mrb[0].mxu0 %v1385
      %v2162 = vpop.f32.mrb[0].mxu0
      %v2163 = vadd.f32 0.0, %v2162
      %v2164 = vpop.f32.mrb[0].mxu0
      %v2165 = vpop.f32.mrb[0].mxu0
      %v2166 = vadd.f32 0.0, %v2165
      %v2167 = vpop.f32.mrb[0].mxu0
      %2168 = vmatprep.mubr.bf16.mxu0 0
      %2169 = vmatmul.mubr.bf16.gmra.mrb[0].mxu0 %v1388
      %v2170 = vpop.f32.mrb[0].mxu0
      %v2171 = vadd.f32 0.0, %v2170
      %v2172 = vpop.f32.mrb[0].mxu0
      %v2173 = vpop.f32.mrb[0].mxu0
      %v2174 = vadd.f32 0.0, %v2173
      %v2175 = vpop.f32.mrb[0].mxu0
      %2176 = vmatprep.mubr.bf16.mxu0 0
      %2177 = vmatmul.mubr.bf16.gmra.mrb[0].mxu0 %v1391
      %v2178 = vpop.f32.mrb[0].mxu0
      %v2179 = vadd.f32 0.0, %v2178
      %v2180 = vpop.f32.mrb[0].mxu0
      %v2181 = vpop.f32.mrb[0].mxu0
      %v2182 = vadd.f32 0.0, %v2181
      %v2183 = vpop.f32.mrb[0].mxu0
      %2184 = vmatprep.mubr.bf16.mxu0 0
      %2185 = vmatmul.mubr.bf16.gmra.mrb[0].mxu0 %v1394
      %v2186 = vpop.f32.mrb[0].mxu0
      %v2187 = vadd.f32 0.0, %v2186
      %v2188 = vpop.f32.mrb[0].mxu0
      %v2189 = vpop.f32.mrb[0].mxu0
      %v2190 = vadd.f32 0.0, %v2189
      %v2191 = vpop.f32.mrb[0].mxu0
      %2192 = vmatprep.mubr.bf16.mxu0 0
      %2193 = vmatmul.mubr.bf16.gmra.mrb[0].mxu0 %v1397
      %v2194 = vpop.f32.mrb[0].mxu0
      %v2195 = vadd.f32 0.0, %v2194
      %v2196 = vpop.f32.mrb[0].mxu0
      %v2197 = vpop.f32.mrb[0].mxu0
      %v2198 = vadd.f32 0.0, %v2197
      %v2199 = vpop.f32.mrb[0].mxu0
      %2200 = vmatprep.mubr.bf16.mxu0 0
      %2201 = vmatmul.mubr.bf16.gmra.mrb[0].mxu0 %v2043
      %v2202 = vpop.f32.mrb[0].mxu0
      %v2203 = vadd.f32 0.0, %v2202
      %v2204 = vpop.f32.mrb[0].mxu0
      %v2205 = vpop.f32.mrb[0].mxu0
      %v2206 = vadd.f32 0.0, %v2205
      %v2207 = vpop.f32.mrb[0].mxu0
      %2208 = vdwg.mxu0
      %v2209 = vadd.f32 %v1997, %v2083
      %v2210 = vadd.f32 %v1998, %v2086
      %v2211 = vadd.f32 %v1999, %v2091
      %v2212 = vadd.f32 %v2000, %v2094
      %v2213 = vadd.f32 %v2001, %v2099
      %v2214 = vadd.f32 %v2002, %v2102
      %v2215 = vadd.f32 %v2003, %v2107
      %v2216 = vadd.f32 %v2004, %v2110
      %v2217 = vadd.f32 %v2005, %v2115
      %v2218 = vadd.f32 %v2006, %v2118
      %v2219 = vadd.f32 %v2007, %v2123
      %v2220 = vadd.f32 %v2008, %v2126
      %v2221 = vadd.f32 %v2009, %v2131
      %v2222 = vadd.f32 %v2010, %v2134
      %v2223 = vadd.f32 %v2011, %v2139
      %v2224 = vadd.f32 %v2012, %v2142
      %v2225 = vadd.f32 %v2013, %v2147
      %v2226 = vadd.f32 %v2014, %v2150
      %v2227 = vadd.f32 %v2015, %v2155
      %v2228 = vadd.f32 %v2016, %v2158
      %v2229 = vadd.f32 %v2017, %v2163
      %v2230 = vadd.f32 %v2018, %v2166
      %v2231 = vadd.f32 %v2019, %v2171
      %v2232 = vadd.f32 %v2020, %v2174
      %v2233 = vadd.f32 %v2021, %v2179
      %v2234 = vadd.f32 %v2022, %v2182
      %v2235 = vadd.f32 %v2023, %v2187
      %v2236 = vadd.f32 %v2024, %v2190
      %v2237 = vadd.f32 %v2025, %v2195
      %v2238 = vadd.f32 %v2026, %v2198
      %v2239 = vadd.f32 %v2027, %v2203
      %v2240 = vadd.f32 %v2028, %v2206
      %s2241 = scalar_lea.vmem %s1, 12
      %v2242 = vld [vmem:[%s2241] sm:$0x3]
      %v2245 = vunpack.c.l.b16 %v223
      %v2246 = vunpack.c.l.b16 %v224
      %v2247 = vpack.c.b16 %v2246, %v2245
      %v2249 = vsel %vm664, %v2247, 0
      %v2252 = vsel %vm713, %v2242, 0
      %2254 = vmatprep.subr.bf16.mxu0 0
      %2255 = vmatpush1.bf16.msra.mxu0 %v2252
      %2256 = vmatprep.subr.bf16.mxu0 0
      %2257 = vmatpush1.bf16.msra.mxu0 0
      %2258 = vmatprep.subr.bf16.mxu0 0
      %2259 = vmatpush1.bf16.msra.mxu0 0
      %2260 = vmatprep.subr.bf16.mxu0 0
      %2261 = vmatpush1.bf16.msra.mxu0 0
      %2262 = vmatprep.subr.bf16.mxu0 0
      %2263 = vmatpush1.bf16.msra.mxu0 0
      %2264 = vmatprep.subr.bf16.mxu0 0
      %2265 = vmatpush1.bf16.msra.mxu0 0
      %2266 = vmatprep.subr.bf16.mxu0 0
      %2267 = vmatpush1.bf16.msra.mxu0 0
      %2268 = vmatprep.subr.bf16.mxu0 0
      %2269 = vmatpush1.bf16.msra.mxu0 0
      %2270 = vmatprep.subr.bf16.mxu0 0
      %2271 = vmatpush1.bf16.msra.mxu0 0
      %2272 = vmatprep.subr.bf16.mxu0 0
      %2273 = vmatpush1.bf16.msra.mxu0 0
      %2274 = vmatprep.subr.bf16.mxu0 0
      %2275 = vmatpush1.bf16.msra.mxu0 0
      %2276 = vmatprep.subr.bf16.mxu0 0
      %2277 = vmatpush1.bf16.msra.mxu0 0
      %2278 = vmatprep.subr.bf16.mxu0 0
      %2279 = vmatpush1.bf16.msra.mxu0 0
      %2280 = vmatprep.subr.bf16.mxu0 0
      %2281 = vmatpush1.bf16.msra.mxu0 0
      %2282 = vmatprep.subr.bf16.mxu0 0
      %2283 = vmatpush1.bf16.msra.mxu0 0
      %2284 = vmatprep.subr.bf16.mxu0 0
      %2285 = vmatpush1.bf16.msra.mxu0 0
      %2286 = vmatprep.mubr.bf16.mxu0 0
      %2287 = vmatmul.mubr.bf16.gmra.mrb[0].mxu0 %v965
      %v2288 = vpop.f32.mrb[0].mxu0
      %v2289 = vadd.f32 0.0, %v2288
      %v2290 = vpop.f32.mrb[0].mxu0
      %v2291 = vpop.f32.mrb[0].mxu0
      %v2292 = vadd.f32 0.0, %v2291
      %v2293 = vpop.f32.mrb[0].mxu0
      %2294 = vmatprep.mubr.bf16.mxu0 0
      %2295 = vmatmul.mubr.bf16.gmra.mrb[0].mxu0 %v968
      %v2296 = vpop.f32.mrb[0].mxu0
      %v2297 = vadd.f32 0.0, %v2296
      %v2298 = vpop.f32.mrb[0].mxu0
      %v2299 = vpop.f32.mrb[0].mxu0
      %v2300 = vadd.f32 0.0, %v2299
      %v2301 = vpop.f32.mrb[0].mxu0
      %2302 = vmatprep.mubr.bf16.mxu0 0
      %2303 = vmatmul.mubr.bf16.gmra.mrb[0].mxu0 %v971
      %v2304 = vpop.f32.mrb[0].mxu0
      %v2305 = vadd.f32 0.0, %v2304
      %v2306 = vpop.f32.mrb[0].mxu0
      %v2307 = vpop.f32.mrb[0].mxu0
      %v2308 = vadd.f32 0.0, %v2307
      %v2309 = vpop.f32.mrb[0].mxu0
      %2310 = vmatprep.mubr.bf16.mxu0 0
      %2311 = vmatmul.mubr.bf16.gmra.mrb[0].mxu0 %v974
      %v2312 = vpop.f32.mrb[0].mxu0
      %v2313 = vadd.f32 0.0, %v2312
      %v2314 = vpop.f32.mrb[0].mxu0
      %v2315 = vpop.f32.mrb[0].mxu0
      %v2316 = vadd.f32 0.0, %v2315
      %v2317 = vpop.f32.mrb[0].mxu0
      %2318 = vmatprep.mubr.bf16.mxu0 0
      %2319 = vmatmul.mubr.bf16.gmra.mrb[0].mxu0 %v977
      %v2320 = vpop.f32.mrb[0].mxu0
      %v2321 = vadd.f32 0.0, %v2320
      %v2322 = vpop.f32.mrb[0].mxu0
      %v2323 = vpop.f32.mrb[0].mxu0
      %v2324 = vadd.f32 0.0, %v2323
      %v2325 = vpop.f32.mrb[0].mxu0
      %2326 = vmatprep.mubr.bf16.mxu0 0
      %2327 = vmatmul.mubr.bf16.gmra.mrb[0].mxu0 %v980
      %v2328 = vpop.f32.mrb[0].mxu0
      %v2329 = vadd.f32 0.0, %v2328
      %v2330 = vpop.f32.mrb[0].mxu0
      %v2331 = vpop.f32.mrb[0].mxu0
      %v2332 = vadd.f32 0.0, %v2331
      %v2333 = vpop.f32.mrb[0].mxu0
      %2334 = vmatprep.mubr.bf16.mxu0 0
      %2335 = vmatmul.mubr.bf16.gmra.mrb[0].mxu0 %v983
      %v2336 = vpop.f32.mrb[0].mxu0
      %v2337 = vadd.f32 0.0, %v2336
      %v2338 = vpop.f32.mrb[0].mxu0
      %v2339 = vpop.f32.mrb[0].mxu0
      %v2340 = vadd.f32 0.0, %v2339
      %v2341 = vpop.f32.mrb[0].mxu0
      %2342 = vmatprep.mubr.bf16.mxu0 0
      %2343 = vmatmul.mubr.bf16.gmra.mrb[0].mxu0 %v986
      %v2344 = vpop.f32.mrb[0].mxu0
      %v2345 = vadd.f32 0.0, %v2344
      %v2346 = vpop.f32.mrb[0].mxu0
      %v2347 = vpop.f32.mrb[0].mxu0
      %v2348 = vadd.f32 0.0, %v2347
      %v2349 = vpop.f32.mrb[0].mxu0
      %2350 = vmatprep.mubr.bf16.mxu0 0
      %2351 = vmatmul.mubr.bf16.gmra.mrb[0].mxu0 %v989
      %v2352 = vpop.f32.mrb[0].mxu0
      %v2353 = vadd.f32 0.0, %v2352
      %v2354 = vpop.f32.mrb[0].mxu0
      %v2355 = vpop.f32.mrb[0].mxu0
      %v2356 = vadd.f32 0.0, %v2355
      %v2357 = vpop.f32.mrb[0].mxu0
      %2358 = vmatprep.mubr.bf16.mxu0 0
      %2359 = vmatmul.mubr.bf16.gmra.mrb[0].mxu0 %v992
      %v2360 = vpop.f32.mrb[0].mxu0
      %v2361 = vadd.f32 0.0, %v2360
      %v2362 = vpop.f32.mrb[0].mxu0
      %v2363 = vpop.f32.mrb[0].mxu0
      %v2364 = vadd.f32 0.0, %v2363
      %v2365 = vpop.f32.mrb[0].mxu0
      %2366 = vmatprep.mubr.bf16.mxu0 0
      %2367 = vmatmul.mubr.bf16.gmra.mrb[0].mxu0 %v995
      %v2368 = vpop.f32.mrb[0].mxu0
      %v2369 = vadd.f32 0.0, %v2368
      %v2370 = vpop.f32.mrb[0].mxu0
      %v2371 = vpop.f32.mrb[0].mxu0
      %v2372 = vadd.f32 0.0, %v2371
      %v2373 = vpop.f32.mrb[0].mxu0
      %2374 = vmatprep.mubr.bf16.mxu0 0
      %2375 = vmatmul.mubr.bf16.gmra.mrb[0].mxu0 %v998
      %v2376 = vpop.f32.mrb[0].mxu0
      %v2377 = vadd.f32 0.0, %v2376
      %v2378 = vpop.f32.mrb[0].mxu0
      %v2379 = vpop.f32.mrb[0].mxu0
      %v2380 = vadd.f32 0.0, %v2379
      %v2381 = vpop.f32.mrb[0].mxu0
      %2382 = vmatprep.mubr.bf16.mxu0 0
      %2383 = vmatmul.mubr.bf16.gmra.mrb[0].mxu0 %v1001
      %v2384 = vpop.f32.mrb[0].mxu0
      %v2385 = vadd.f32 0.0, %v2384
      %v2386 = vpop.f32.mrb[0].mxu0
      %v2387 = vpop.f32.mrb[0].mxu0
      %v2388 = vadd.f32 0.0, %v2387
      %v2389 = vpop.f32.mrb[0].mxu0
      %2390 = vmatprep.mubr.bf16.mxu0 0
      %2391 = vmatmul.mubr.bf16.gmra.mrb[0].mxu0 %v1004
      %v2392 = vpop.f32.mrb[0].mxu0
      %v2393 = vadd.f32 0.0, %v2392
      %v2394 = vpop.f32.mrb[0].mxu0
      %v2395 = vpop.f32.mrb[0].mxu0
      %v2396 = vadd.f32 0.0, %v2395
      %v2397 = vpop.f32.mrb[0].mxu0
      %2398 = vmatprep.mubr.bf16.mxu0 0
      %2399 = vmatmul.mubr.bf16.gmra.mrb[0].mxu0 %v1603
      %v2400 = vpop.f32.mrb[0].mxu0
      %v2401 = vadd.f32 0.0, %v2400
      %v2402 = vpop.f32.mrb[0].mxu0
      %v2403 = vpop.f32.mrb[0].mxu0
      %v2404 = vadd.f32 0.0, %v2403
      %v2405 = vpop.f32.mrb[0].mxu0
      %2406 = vmatprep.mubr.bf16.mxu0 0
      %2407 = vmatmul.mubr.bf16.gmra.mrb[0].mxu0 %v2249
      %v2408 = vpop.f32.mrb[0].mxu0
      %v2409 = vadd.f32 0.0, %v2408
      %v2410 = vpop.f32.mrb[0].mxu0
      %v2411 = vpop.f32.mrb[0].mxu0
      %v2412 = vadd.f32 0.0, %v2411
      %v2413 = vpop.f32.mrb[0].mxu0
      %2414 = vdwg.mxu0
      %v2415 = vadd.f32 %v2209, %v2289
      %v2416 = vadd.f32 %v2210, %v2292
      %v2417 = vadd.f32 %v2211, %v2297
      %v2418 = vadd.f32 %v2212, %v2300
      %v2419 = vadd.f32 %v2213, %v2305
      %v2420 = vadd.f32 %v2214, %v2308
      %v2421 = vadd.f32 %v2215, %v2313
      %v2422 = vadd.f32 %v2216, %v2316
      %v2423 = vadd.f32 %v2217, %v2321
      %v2424 = vadd.f32 %v2218, %v2324
      %v2425 = vadd.f32 %v2219, %v2329
      %v2426 = vadd.f32 %v2220, %v2332
      %v2427 = vadd.f32 %v2221, %v2337
      %v2428 = vadd.f32 %v2222, %v2340
      %v2429 = vadd.f32 %v2223, %v2345
      %v2430 = vadd.f32 %v2224, %v2348
      %v2431 = vadd.f32 %v2225, %v2353
      %v2432 = vadd.f32 %v2226, %v2356
      %v2433 = vadd.f32 %v2227, %v2361
      %v2434 = vadd.f32 %v2228, %v2364
      %v2435 = vadd.f32 %v2229, %v2369
      %v2436 = vadd.f32 %v2230, %v2372
      %v2437 = vadd.f32 %v2231, %v2377
      %v2438 = vadd.f32 %v2232, %v2380
      %v2439 = vadd.f32 %v2233, %v2385
      %v2440 = vadd.f32 %v2234, %v2388
      %v2441 = vadd.f32 %v2235, %v2393
      %v2442 = vadd.f32 %v2236, %v2396
      %v2443 = vadd.f32 %v2237, %v2401
      %v2444 = vadd.f32 %v2238, %v2404
      %v2445 = vadd.f32 %v2239, %v2409
      %v2446 = vadd.f32 %v2240, %v2412
      %v2448 = vshrl.u32 %v223, 16
      %v2450 = vrot.slane %v2448, 4
      %v2451 = vshll.u32 %v223, 16
      %v2453 = vrot.slane %v2451, 5
      %v2454 = vor.u32 %v2450, %v2453
      %v2455 = vrot.slane %v2454, 4
      %v2457 = vshll.u32 %v224, 16
      %v2459 = vrot.slane %v2457, 5
      %v2460 = vsel %vm229, %v2455, %v2459
      %v2461 = vshrl.u32 %v224, 16
      %v2463 = vrot.slane %v2461, 4
      %v2464 = vor.u32 %v2463, %v2459
      %v2465 = vrot.slane %v2464, 4
      %v2467 = vshll.u32 %v225, 16
      %v2469 = vrot.slane %v2467, 5
      %v2470 = vsel %vm229, %v2465, %v2469
      %s2471 = scalar_lea.vmem %s1, 14
      %v2472 = vld [vmem:[%s2471] sm:$0x3]
      %v2473 = vunpack.c.l.b16 %v2460
      %v2474 = vunpack.c.l.b16 %v2470
      %v2475 = vpack.c.b16 %v2474, %v2473
      %v2477 = vsel %vm664, %v2475, 0
      %v2480 = vsel %vm713, %v2472, 0
      %2482 = vmatprep.subr.bf16.mxu0 0
      %2483 = vmatpush1.bf16.msra.mxu0 %v2480
      %2484 = vmatprep.subr.bf16.mxu0 0
      %2485 = vmatpush1.bf16.msra.mxu0 0
      %2486 = vmatprep.subr.bf16.mxu0 0
      %2487 = vmatpush1.bf16.msra.mxu0 0
      %2488 = vmatprep.subr.bf16.mxu0 0
      %2489 = vmatpush1.bf16.msra.mxu0 0
      %2490 = vmatprep.subr.bf16.mxu0 0
      %2491 = vmatpush1.bf16.msra.mxu0 0
      %2492 = vmatprep.subr.bf16.mxu0 0
      %2493 = vmatpush1.bf16.msra.mxu0 0
      %2494 = vmatprep.subr.bf16.mxu0 0
      %2495 = vmatpush1.bf16.msra.mxu0 0
      %2496 = vmatprep.subr.bf16.mxu0 0
      %2497 = vmatpush1.bf16.msra.mxu0 0
      %2498 = vmatprep.subr.bf16.mxu0 0
      %2499 = vmatpush1.bf16.msra.mxu0 0
      %2500 = vmatprep.subr.bf16.mxu0 0
      %2501 = vmatpush1.bf16.msra.mxu0 0
      %2502 = vmatprep.subr.bf16.mxu0 0
      %2503 = vmatpush1.bf16.msra.mxu0 0
      %2504 = vmatprep.subr.bf16.mxu0 0
      %2505 = vmatpush1.bf16.msra.mxu0 0
      %2506 = vmatprep.subr.bf16.mxu0 0
      %2507 = vmatpush1.bf16.msra.mxu0 0
      %2508 = vmatprep.subr.bf16.mxu0 0
      %2509 = vmatpush1.bf16.msra.mxu0 0
      %2510 = vmatprep.subr.bf16.mxu0 0
      %2511 = vmatpush1.bf16.msra.mxu0 0
      %2512 = vmatprep.subr.bf16.mxu0 0
      %2513 = vmatpush1.bf16.msra.mxu0 0
      %2514 = vmatprep.mubr.bf16.mxu0 0
      %2515 = vmatmul.mubr.bf16.gmra.mrb[0].mxu0 %v672
      %v2516 = vpop.f32.mrb[0].mxu0
      %v2517 = vadd.f32 0.0, %v2516
      %v2518 = vpop.f32.mrb[0].mxu0
      %v2519 = vpop.f32.mrb[0].mxu0
      %v2520 = vadd.f32 0.0, %v2519
      %v2521 = vpop.f32.mrb[0].mxu0
      %2522 = vmatprep.mubr.bf16.mxu0 0
      %2523 = vmatmul.mubr.bf16.gmra.mrb[0].mxu0 %v675
      %v2524 = vpop.f32.mrb[0].mxu0
      %v2525 = vadd.f32 0.0, %v2524
      %v2526 = vpop.f32.mrb[0].mxu0
      %v2527 = vpop.f32.mrb[0].mxu0
      %v2528 = vadd.f32 0.0, %v2527
      %v2529 = vpop.f32.mrb[0].mxu0
      %2530 = vmatprep.mubr.bf16.mxu0 0
      %2531 = vmatmul.mubr.bf16.gmra.mrb[0].mxu0 %v678
      %v2532 = vpop.f32.mrb[0].mxu0
      %v2533 = vadd.f32 0.0, %v2532
      %v2534 = vpop.f32.mrb[0].mxu0
      %v2535 = vpop.f32.mrb[0].mxu0
      %v2536 = vadd.f32 0.0, %v2535
      %v2537 = vpop.f32.mrb[0].mxu0
      %2538 = vmatprep.mubr.bf16.mxu0 0
      %2539 = vmatmul.mubr.bf16.gmra.mrb[0].mxu0 %v681
      %v2540 = vpop.f32.mrb[0].mxu0
      %v2541 = vadd.f32 0.0, %v2540
      %v2542 = vpop.f32.mrb[0].mxu0
      %v2543 = vpop.f32.mrb[0].mxu0
      %v2544 = vadd.f32 0.0, %v2543
      %v2545 = vpop.f32.mrb[0].mxu0
      %2546 = vmatprep.mubr.bf16.mxu0 0
      %2547 = vmatmul.mubr.bf16.gmra.mrb[0].mxu0 %v684
      %v2548 = vpop.f32.mrb[0].mxu0
      %v2549 = vadd.f32 0.0, %v2548
      %v2550 = vpop.f32.mrb[0].mxu0
      %v2551 = vpop.f32.mrb[0].mxu0
      %v2552 = vadd.f32 0.0, %v2551
      %v2553 = vpop.f32.mrb[0].mxu0
      %2554 = vmatprep.mubr.bf16.mxu0 0
      %2555 = vmatmul.mubr.bf16.gmra.mrb[0].mxu0 %v687
      %v2556 = vpop.f32.mrb[0].mxu0
      %v2557 = vadd.f32 0.0, %v2556
      %v2558 = vpop.f32.mrb[0].mxu0
      %v2559 = vpop.f32.mrb[0].mxu0
      %v2560 = vadd.f32 0.0, %v2559
      %v2561 = vpop.f32.mrb[0].mxu0
      %2562 = vmatprep.mubr.bf16.mxu0 0
      %2563 = vmatmul.mubr.bf16.gmra.mrb[0].mxu0 %v690
      %v2564 = vpop.f32.mrb[0].mxu0
      %v2565 = vadd.f32 0.0, %v2564
      %v2566 = vpop.f32.mrb[0].mxu0
      %v2567 = vpop.f32.mrb[0].mxu0
      %v2568 = vadd.f32 0.0, %v2567
      %v2569 = vpop.f32.mrb[0].mxu0
      %2570 = vmatprep.mubr.bf16.mxu0 0
      %2571 = vmatmul.mubr.bf16.gmra.mrb[0].mxu0 %v693
      %v2572 = vpop.f32.mrb[0].mxu0
      %v2573 = vadd.f32 0.0, %v2572
      %v2574 = vpop.f32.mrb[0].mxu0
      %v2575 = vpop.f32.mrb[0].mxu0
      %v2576 = vadd.f32 0.0, %v2575
      %v2577 = vpop.f32.mrb[0].mxu0
      %2578 = vmatprep.mubr.bf16.mxu0 0
      %2579 = vmatmul.mubr.bf16.gmra.mrb[0].mxu0 %v696
      %v2580 = vpop.f32.mrb[0].mxu0
      %v2581 = vadd.f32 0.0, %v2580
      %v2582 = vpop.f32.mrb[0].mxu0
      %v2583 = vpop.f32.mrb[0].mxu0
      %v2584 = vadd.f32 0.0, %v2583
      %v2585 = vpop.f32.mrb[0].mxu0
      %2586 = vmatprep.mubr.bf16.mxu0 0
      %2587 = vmatmul.mubr.bf16.gmra.mrb[0].mxu0 %v699
      %v2588 = vpop.f32.mrb[0].mxu0
      %v2589 = vadd.f32 0.0, %v2588
      %v2590 = vpop.f32.mrb[0].mxu0
      %v2591 = vpop.f32.mrb[0].mxu0
      %v2592 = vadd.f32 0.0, %v2591
      %v2593 = vpop.f32.mrb[0].mxu0
      %2594 = vmatprep.mubr.bf16.mxu0 0
      %2595 = vmatmul.mubr.bf16.gmra.mrb[0].mxu0 %v702
      %v2596 = vpop.f32.mrb[0].mxu0
      %v2597 = vadd.f32 0.0, %v2596
      %v2598 = vpop.f32.mrb[0].mxu0
      %v2599 = vpop.f32.mrb[0].mxu0
      %v2600 = vadd.f32 0.0, %v2599
      %v2601 = vpop.f32.mrb[0].mxu0
      %2602 = vmatprep.mubr.bf16.mxu0 0
      %2603 = vmatmul.mubr.bf16.gmra.mrb[0].mxu0 %v705
      %v2604 = vpop.f32.mrb[0].mxu0
      %v2605 = vadd.f32 0.0, %v2604
      %v2606 = vpop.f32.mrb[0].mxu0
      %v2607 = vpop.f32.mrb[0].mxu0
      %v2608 = vadd.f32 0.0, %v2607
      %v2609 = vpop.f32.mrb[0].mxu0
      %2610 = vmatprep.mubr.bf16.mxu0 0
      %2611 = vmatmul.mubr.bf16.gmra.mrb[0].mxu0 %v708
      %v2612 = vpop.f32.mrb[0].mxu0
      %v2613 = vadd.f32 0.0, %v2612
      %v2614 = vpop.f32.mrb[0].mxu0
      %v2615 = vpop.f32.mrb[0].mxu0
      %v2616 = vadd.f32 0.0, %v2615
      %v2617 = vpop.f32.mrb[0].mxu0
      %2618 = vmatprep.mubr.bf16.mxu0 0
      %2619 = vmatmul.mubr.bf16.gmra.mrb[0].mxu0 %v711
      %v2620 = vpop.f32.mrb[0].mxu0
      %v2621 = vadd.f32 0.0, %v2620
      %v2622 = vpop.f32.mrb[0].mxu0
      %v2623 = vpop.f32.mrb[0].mxu0
      %v2624 = vadd.f32 0.0, %v2623
      %v2625 = vpop.f32.mrb[0].mxu0
      %2626 = vmatprep.mubr.bf16.mxu0 0
      %2627 = vmatmul.mubr.bf16.gmra.mrb[0].mxu0 %v1831
      %v2628 = vpop.f32.mrb[0].mxu0
      %v2629 = vadd.f32 0.0, %v2628
      %v2630 = vpop.f32.mrb[0].mxu0
      %v2631 = vpop.f32.mrb[0].mxu0
      %v2632 = vadd.f32 0.0, %v2631
      %v2633 = vpop.f32.mrb[0].mxu0
      %2634 = vmatprep.mubr.bf16.mxu0 0
      %2635 = vmatmul.mubr.bf16.gmra.mrb[0].mxu0 %v2477
      %v2636 = vpop.f32.mrb[0].mxu0
      %v2637 = vadd.f32 0.0, %v2636
      %v2638 = vpop.f32.mrb[0].mxu0
      %v2639 = vpop.f32.mrb[0].mxu0
      %v2640 = vadd.f32 0.0, %v2639
      %v2641 = vpop.f32.mrb[0].mxu0
      %2642 = vdwg.mxu0
      %v2643 = vadd.f32 %v2415, %v2517
      %v2644 = vadd.f32 %v2416, %v2520
      %v2645 = vadd.f32 %v2417, %v2525
      %v2646 = vadd.f32 %v2418, %v2528
      %v2647 = vadd.f32 %v2419, %v2533
      %v2648 = vadd.f32 %v2420, %v2536
      %v2649 = vadd.f32 %v2421, %v2541
      %v2650 = vadd.f32 %v2422, %v2544
      %v2651 = vadd.f32 %v2423, %v2549
      %v2652 = vadd.f32 %v2424, %v2552
      %v2653 = vadd.f32 %v2425, %v2557
      %v2654 = vadd.f32 %v2426, %v2560
      %v2655 = vadd.f32 %v2427, %v2565
      %v2656 = vadd.f32 %v2428, %v2568
      %v2657 = vadd.f32 %v2429, %v2573
      %v2658 = vadd.f32 %v2430, %v2576
      %v2659 = vadd.f32 %v2431, %v2581
      %v2660 = vadd.f32 %v2432, %v2584
      %v2661 = vadd.f32 %v2433, %v2589
      %v2662 = vadd.f32 %v2434, %v2592
      %v2663 = vadd.f32 %v2435, %v2597
      %v2664 = vadd.f32 %v2436, %v2600
      %v2665 = vadd.f32 %v2437, %v2605
      %v2666 = vadd.f32 %v2438, %v2608
      %v2667 = vadd.f32 %v2439, %v2613
      %v2668 = vadd.f32 %v2440, %v2616
      %v2669 = vadd.f32 %v2441, %v2621
      %v2670 = vadd.f32 %v2442, %v2624
      %v2671 = vadd.f32 %v2443, %v2629
      %v2672 = vadd.f32 %v2444, %v2632
      %v2673 = vadd.f32 %v2445, %v2637
      %v2674 = vadd.f32 %v2446, %v2640
      %v2676 = vrot.slane %v223, 5
      %v2677 = vrot.slane %v2676, 4
      %v2678 = vrot.slane %v224, 5
      %v2679 = vsel %vm1188, %v2677, %v2678
      %v2680 = vrot.slane %v2678, 4
      %v2681 = vrot.slane %v225, 5
      %v2682 = vsel %vm1188, %v2680, %v2681
      %s2683 = scalar_lea.vmem %s1, 16
      %v2684 = vld [vmem:[%s2683] sm:$0x3]
      %v2685 = vunpack.c.l.b16 %v2679
      %v2686 = vunpack.c.l.b16 %v2682
      %v2687 = vpack.c.b16 %v2686, %v2685
      %v2689 = vsel %vm664, %v2687, 0
      %v2692 = vsel %vm713, %v2684, 0
      %2694 = vmatprep.subr.bf16.mxu0 0
      %2695 = vmatpush1.bf16.msra.mxu0 %v2692
      %2696 = vmatprep.subr.bf16.mxu0 0
      %2697 = vmatpush1.bf16.msra.mxu0 0
      %2698 = vmatprep.subr.bf16.mxu0 0
      %2699 = vmatpush1.bf16.msra.mxu0 0
      %2700 = vmatprep.subr.bf16.mxu0 0
      %2701 = vmatpush1.bf16.msra.mxu0 0
      %2702 = vmatprep.subr.bf16.mxu0 0
      %2703 = vmatpush1.bf16.msra.mxu0 0
      %2704 = vmatprep.subr.bf16.mxu0 0
      %2705 = vmatpush1.bf16.msra.mxu0 0
      %2706 = vmatprep.subr.bf16.mxu0 0
      %2707 = vmatpush1.bf16.msra.mxu0 0
      %2708 = vmatprep.subr.bf16.mxu0 0
      %2709 = vmatpush1.bf16.msra.mxu0 0
      %2710 = vmatprep.subr.bf16.mxu0 0
      %2711 = vmatpush1.bf16.msra.mxu0 0
      %2712 = vmatprep.subr.bf16.mxu0 0
      %2713 = vmatpush1.bf16.msra.mxu0 0
      %2714 = vmatprep.subr.bf16.mxu0 0
      %2715 = vmatpush1.bf16.msra.mxu0 0
      %2716 = vmatprep.subr.bf16.mxu0 0
      %2717 = vmatpush1.bf16.msra.mxu0 0
      %2718 = vmatprep.subr.bf16.mxu0 0
      %2719 = vmatpush1.bf16.msra.mxu0 0
      %2720 = vmatprep.subr.bf16.mxu0 0
      %2721 = vmatpush1.bf16.msra.mxu0 0
      %2722 = vmatprep.subr.bf16.mxu0 0
      %2723 = vmatpush1.bf16.msra.mxu0 0
      %2724 = vmatprep.subr.bf16.mxu0 0
      %2725 = vmatpush1.bf16.msra.mxu0 0
      %2726 = vmatprep.mubr.bf16.mxu0 0
      %2727 = vmatmul.mubr.bf16.gmra.mrb[0].mxu0 %v1358
      %v2728 = vpop.f32.mrb[0].mxu0
      %v2729 = vadd.f32 0.0, %v2728
      %v2730 = vpop.f32.mrb[0].mxu0
      %v2731 = vpop.f32.mrb[0].mxu0
      %v2732 = vadd.f32 0.0, %v2731
      %v2733 = vpop.f32.mrb[0].mxu0
      %2734 = vmatprep.mubr.bf16.mxu0 0
      %2735 = vmatmul.mubr.bf16.gmra.mrb[0].mxu0 %v1361
      %v2736 = vpop.f32.mrb[0].mxu0
      %v2737 = vadd.f32 0.0, %v2736
      %v2738 = vpop.f32.mrb[0].mxu0
      %v2739 = vpop.f32.mrb[0].mxu0
      %v2740 = vadd.f32 0.0, %v2739
      %v2741 = vpop.f32.mrb[0].mxu0
      %2742 = vmatprep.mubr.bf16.mxu0 0
      %2743 = vmatmul.mubr.bf16.gmra.mrb[0].mxu0 %v1364
      %v2744 = vpop.f32.mrb[0].mxu0
      %v2745 = vadd.f32 0.0, %v2744
      %v2746 = vpop.f32.mrb[0].mxu0
      %v2747 = vpop.f32.mrb[0].mxu0
      %v2748 = vadd.f32 0.0, %v2747
      %v2749 = vpop.f32.mrb[0].mxu0
      %2750 = vmatprep.mubr.bf16.mxu0 0
      %2751 = vmatmul.mubr.bf16.gmra.mrb[0].mxu0 %v1367
      %v2752 = vpop.f32.mrb[0].mxu0
      %v2753 = vadd.f32 0.0, %v2752
      %v2754 = vpop.f32.mrb[0].mxu0
      %v2755 = vpop.f32.mrb[0].mxu0
      %v2756 = vadd.f32 0.0, %v2755
      %v2757 = vpop.f32.mrb[0].mxu0
      %2758 = vmatprep.mubr.bf16.mxu0 0
      %2759 = vmatmul.mubr.bf16.gmra.mrb[0].mxu0 %v1370
      %v2760 = vpop.f32.mrb[0].mxu0
      %v2761 = vadd.f32 0.0, %v2760
      %v2762 = vpop.f32.mrb[0].mxu0
      %v2763 = vpop.f32.mrb[0].mxu0
      %v2764 = vadd.f32 0.0, %v2763
      %v2765 = vpop.f32.mrb[0].mxu0
      %2766 = vmatprep.mubr.bf16.mxu0 0
      %2767 = vmatmul.mubr.bf16.gmra.mrb[0].mxu0 %v1373
      %v2768 = vpop.f32.mrb[0].mxu0
      %v2769 = vadd.f32 0.0, %v2768
      %v2770 = vpop.f32.mrb[0].mxu0
      %v2771 = vpop.f32.mrb[0].mxu0
      %v2772 = vadd.f32 0.0, %v2771
      %v2773 = vpop.f32.mrb[0].mxu0
      %2774 = vmatprep.mubr.bf16.mxu0 0
      %2775 = vmatmul.mubr.bf16.gmra.mrb[0].mxu0 %v1376
      %v2776 = vpop.f32.mrb[0].mxu0
      %v2777 = vadd.f32 0.0, %v2776
      %v2778 = vpop.f32.mrb[0].mxu0
      %v2779 = vpop.f32.mrb[0].mxu0
      %v2780 = vadd.f32 0.0, %v2779
      %v2781 = vpop.f32.mrb[0].mxu0
      %2782 = vmatprep.mubr.bf16.mxu0 0
      %2783 = vmatmul.mubr.bf16.gmra.mrb[0].mxu0 %v1379
      %v2784 = vpop.f32.mrb[0].mxu0
      %v2785 = vadd.f32 0.0, %v2784
      %v2786 = vpop.f32.mrb[0].mxu0
      %v2787 = vpop.f32.mrb[0].mxu0
      %v2788 = vadd.f32 0.0, %v2787
      %v2789 = vpop.f32.mrb[0].mxu0
      %2790 = vmatprep.mubr.bf16.mxu0 0
      %2791 = vmatmul.mubr.bf16.gmra.mrb[0].mxu0 %v1382
      %v2792 = vpop.f32.mrb[0].mxu0
      %v2793 = vadd.f32 0.0, %v2792
      %v2794 = vpop.f32.mrb[0].mxu0
      %v2795 = vpop.f32.mrb[0].mxu0
      %v2796 = vadd.f32 0.0, %v2795
      %v2797 = vpop.f32.mrb[0].mxu0
      %2798 = vmatprep.mubr.bf16.mxu0 0
      %2799 = vmatmul.mubr.bf16.gmra.mrb[0].mxu0 %v1385
      %v2800 = vpop.f32.mrb[0].mxu0
      %v2801 = vadd.f32 0.0, %v2800
      %v2802 = vpop.f32.mrb[0].mxu0
      %v2803 = vpop.f32.mrb[0].mxu0
      %v2804 = vadd.f32 0.0, %v2803
      %v2805 = vpop.f32.mrb[0].mxu0
      %2806 = vmatprep.mubr.bf16.mxu0 0
      %2807 = vmatmul.mubr.bf16.gmra.mrb[0].mxu0 %v1388
      %v2808 = vpop.f32.mrb[0].mxu0
      %v2809 = vadd.f32 0.0, %v2808
      %v2810 = vpop.f32.mrb[0].mxu0
      %v2811 = vpop.f32.mrb[0].mxu0
      %v2812 = vadd.f32 0.0, %v2811
      %v2813 = vpop.f32.mrb[0].mxu0
      %2814 = vmatprep.mubr.bf16.mxu0 0
      %2815 = vmatmul.mubr.bf16.gmra.mrb[0].mxu0 %v1391
      %v2816 = vpop.f32.mrb[0].mxu0
      %v2817 = vadd.f32 0.0, %v2816
      %v2818 = vpop.f32.mrb[0].mxu0
      %v2819 = vpop.f32.mrb[0].mxu0
      %v2820 = vadd.f32 0.0, %v2819
      %v2821 = vpop.f32.mrb[0].mxu0
      %2822 = vmatprep.mubr.bf16.mxu0 0
      %2823 = vmatmul.mubr.bf16.gmra.mrb[0].mxu0 %v1394
      %v2824 = vpop.f32.mrb[0].mxu0
      %v2825 = vadd.f32 0.0, %v2824
      %v2826 = vpop.f32.mrb[0].mxu0
      %v2827 = vpop.f32.mrb[0].mxu0
      %v2828 = vadd.f32 0.0, %v2827
      %v2829 = vpop.f32.mrb[0].mxu0
      %2830 = vmatprep.mubr.bf16.mxu0 0
      %2831 = vmatmul.mubr.bf16.gmra.mrb[0].mxu0 %v1397
      %v2832 = vpop.f32.mrb[0].mxu0
      %v2833 = vadd.f32 0.0, %v2832
      %v2834 = vpop.f32.mrb[0].mxu0
      %v2835 = vpop.f32.mrb[0].mxu0
      %v2836 = vadd.f32 0.0, %v2835
      %v2837 = vpop.f32.mrb[0].mxu0
      %2838 = vmatprep.mubr.bf16.mxu0 0
      %2839 = vmatmul.mubr.bf16.gmra.mrb[0].mxu0 %v2043
      %v2840 = vpop.f32.mrb[0].mxu0
      %v2841 = vadd.f32 0.0, %v2840
      %v2842 = vpop.f32.mrb[0].mxu0
      %v2843 = vpop.f32.mrb[0].mxu0
      %v2844 = vadd.f32 0.0, %v2843
      %v2845 = vpop.f32.mrb[0].mxu0
      %2846 = vmatprep.mubr.bf16.mxu0 0
      %2847 = vmatmul.mubr.bf16.gmra.mrb[0].mxu0 %v2689
      %v2848 = vpop.f32.mrb[0].mxu0
      %v2849 = vadd.f32 0.0, %v2848
      %v2850 = vpop.f32.mrb[0].mxu0
      %v2851 = vpop.f32.mrb[0].mxu0
      %v2852 = vadd.f32 0.0, %v2851
      %v2853 = vpop.f32.mrb[0].mxu0
      %2854 = vdwg.mxu0
      %v2855 = vadd.f32 %v2643, %v2729
      %v2856 = vadd.f32 %v2644, %v2732
      %v2857 = vadd.f32 %v2645, %v2737
      %v2858 = vadd.f32 %v2646, %v2740
      %v2859 = vadd.f32 %v2647, %v2745
      %v2860 = vadd.f32 %v2648, %v2748
      %v2861 = vadd.f32 %v2649, %v2753
      %v2862 = vadd.f32 %v2650, %v2756
      %v2863 = vadd.f32 %v2651, %v2761
      %v2864 = vadd.f32 %v2652, %v2764
      %v2865 = vadd.f32 %v2653, %v2769
      %v2866 = vadd.f32 %v2654, %v2772
      %v2867 = vadd.f32 %v2655, %v2777
      %v2868 = vadd.f32 %v2656, %v2780
      %v2869 = vadd.f32 %v2657, %v2785
      %v2870 = vadd.f32 %v2658, %v2788
      %v2871 = vadd.f32 %v2659, %v2793
      %v2872 = vadd.f32 %v2660, %v2796
      %v2873 = vadd.f32 %v2661, %v2801
      %v2874 = vadd.f32 %v2662, %v2804
      %v2875 = vadd.f32 %v2663, %v2809
      %v2876 = vadd.f32 %v2664, %v2812
      %v2877 = vadd.f32 %v2665, %v2817
      %v2878 = vadd.f32 %v2666, %v2820
      %v2879 = vadd.f32 %v2667, %v2825
      %v2880 = vadd.f32 %v2668, %v2828
      %v2881 = vadd.f32 %v2669, %v2833
      %v2882 = vadd.f32 %v2670, %v2836
      %v2883 = vadd.f32 %v2671, %v2841
      %v2884 = vadd.f32 %v2672, %v2844
      %v2885 = vadd.f32 %v2673, %v2849
      %v2886 = vadd.f32 %v2674, %v2852
      %v2887 = vld [vmem:[%s2] sm:$0x1]
      %v2889 = vlaneseq
      %v2890 = vshrl.u32 %v2889, 7
      %v2891 = vsub.s32 0, %v2890
      %v2892 = vrot.slane %v2887, %v2891
      %v2894 = vadd.f32 %v2855, %v2892
      %v2895 = vadd.f32 %v2856, %v2892
      %v2896 = vadd.f32 %v2857, %v2892
      %v2897 = vadd.f32 %v2858, %v2892
      %v2898 = vadd.f32 %v2859, %v2892
      %v2899 = vadd.f32 %v2860, %v2892
      %v2900 = vadd.f32 %v2861, %v2892
      %v2901 = vadd.f32 %v2862, %v2892
      %v2902 = vadd.f32 %v2863, %v2892
      %v2903 = vadd.f32 %v2864, %v2892
      %v2904 = vadd.f32 %v2865, %v2892
      %v2905 = vadd.f32 %v2866, %v2892
      %v2906 = vadd.f32 %v2867, %v2892
      %v2907 = vadd.f32 %v2868, %v2892
      %v2908 = vadd.f32 %v2869, %v2892
      %v2909 = vadd.f32 %v2870, %v2892
      %v2910 = vadd.f32 %v2871, %v2892
      %v2911 = vadd.f32 %v2872, %v2892
      %v2912 = vadd.f32 %v2873, %v2892
      %v2913 = vadd.f32 %v2874, %v2892
      %v2914 = vadd.f32 %v2875, %v2892
      %v2915 = vadd.f32 %v2876, %v2892
      %v2916 = vadd.f32 %v2877, %v2892
      %v2917 = vadd.f32 %v2878, %v2892
      %v2918 = vadd.f32 %v2879, %v2892
      %v2919 = vadd.f32 %v2880, %v2892
      %v2920 = vadd.f32 %v2881, %v2892
      %v2921 = vadd.f32 %v2882, %v2892
      %v2922 = vadd.f32 %v2883, %v2892
      %v2923 = vadd.f32 %v2884, %v2892
      %v2924 = vadd.f32 %v2885, %v2892
      %v2925 = vadd.f32 %v2886, %v2892
      %vm2926 = vcmp.ge.f32.partialorder %v2894, 0.0
      %vm2927 = vcmp.ge.f32.partialorder %v2895, 0.0
      %vm2928 = vcmp.ge.f32.partialorder %v2896, 0.0
      %vm2929 = vcmp.ge.f32.partialorder %v2897, 0.0
      %vm2930 = vcmp.ge.f32.partialorder %v2898, 0.0
      %vm2931 = vcmp.ge.f32.partialorder %v2899, 0.0
      %vm2932 = vcmp.ge.f32.partialorder %v2900, 0.0
      %vm2933 = vcmp.ge.f32.partialorder %v2901, 0.0
      %vm2934 = vcmp.ge.f32.partialorder %v2902, 0.0
      %vm2935 = vcmp.ge.f32.partialorder %v2903, 0.0
      %vm2936 = vcmp.ge.f32.partialorder %v2904, 0.0
      %vm2937 = vcmp.ge.f32.partialorder %v2905, 0.0
      %vm2938 = vcmp.ge.f32.partialorder %v2906, 0.0
      %vm2939 = vcmp.ge.f32.partialorder %v2907, 0.0
      %vm2940 = vcmp.ge.f32.partialorder %v2908, 0.0
      %vm2941 = vcmp.ge.f32.partialorder %v2909, 0.0
      %vm2942 = vcmp.ge.f32.partialorder %v2910, 0.0
      %vm2943 = vcmp.ge.f32.partialorder %v2911, 0.0
      %vm2944 = vcmp.ge.f32.partialorder %v2912, 0.0
      %vm2945 = vcmp.ge.f32.partialorder %v2913, 0.0
      %vm2946 = vcmp.ge.f32.partialorder %v2914, 0.0
      %vm2947 = vcmp.ge.f32.partialorder %v2915, 0.0
      %vm2948 = vcmp.ge.f32.partialorder %v2916, 0.0
      %vm2949 = vcmp.ge.f32.partialorder %v2917, 0.0
      %vm2950 = vcmp.ge.f32.partialorder %v2918, 0.0
      %vm2951 = vcmp.ge.f32.partialorder %v2919, 0.0
      %vm2952 = vcmp.ge.f32.partialorder %v2920, 0.0
      %vm2953 = vcmp.ge.f32.partialorder %v2921, 0.0
      %vm2954 = vcmp.ge.f32.partialorder %v2922, 0.0
      %vm2955 = vcmp.ge.f32.partialorder %v2923, 0.0
      %vm2956 = vcmp.ge.f32.partialorder %v2924, 0.0
      %vm2957 = vcmp.ge.f32.partialorder %v2925, 0.0
      %v2958 = vmul.f32 %v2894, 0.1
      %v2959 = vmul.f32 %v2895, 0.1
      %v2960 = vmul.f32 %v2896, 0.1
      %v2961 = vmul.f32 %v2897, 0.1
      %v2962 = vmul.f32 %v2898, 0.1
      %v2963 = vmul.f32 %v2899, 0.1
      %v2964 = vmul.f32 %v2900, 0.1
      %v2965 = vmul.f32 %v2901, 0.1
      %v2966 = vmul.f32 %v2902, 0.1
      %v2967 = vmul.f32 %v2903, 0.1
      %v2968 = vmul.f32 %v2904, 0.1
      %v2969 = vmul.f32 %v2905, 0.1
      %v2970 = vmul.f32 %v2906, 0.1
      %v2971 = vmul.f32 %v2907, 0.1
      %v2972 = vmul.f32 %v2908, 0.1
      %v2973 = vmul.f32 %v2909, 0.1
      %v2974 = vmul.f32 %v2910, 0.1
      %v2975 = vmul.f32 %v2911, 0.1
      %v2976 = vmul.f32 %v2912, 0.1
      %v2977 = vmul.f32 %v2913, 0.1
      %v2978 = vmul.f32 %v2914, 0.1
      %v2979 = vmul.f32 %v2915, 0.1
      %v2980 = vmul.f32 %v2916, 0.1
      %v2981 = vmul.f32 %v2917, 0.1
      %v2982 = vmul.f32 %v2918, 0.1
      %v2983 = vmul.f32 %v2919, 0.1
      %v2984 = vmul.f32 %v2920, 0.1
      %v2985 = vmul.f32 %v2921, 0.1
      %v2986 = vmul.f32 %v2922, 0.1
      %v2987 = vmul.f32 %v2923, 0.1
      %v2988 = vmul.f32 %v2924, 0.1
      %v2989 = vmul.f32 %v2925, 0.1
      %v2990 = vsel %vm2926, %v2894, %v2958
      %v2991 = vsel %vm2927, %v2895, %v2959
      %v2992 = vsel %vm2928, %v2896, %v2960
      %v2993 = vsel %vm2929, %v2897, %v2961
      %v2994 = vsel %vm2930, %v2898, %v2962
      %v2995 = vsel %vm2931, %v2899, %v2963
      %v2996 = vsel %vm2932, %v2900, %v2964
      %v2997 = vsel %vm2933, %v2901, %v2965
      %v2998 = vsel %vm2934, %v2902, %v2966
      %v2999 = vsel %vm2935, %v2903, %v2967
      %v3000 = vsel %vm2936, %v2904, %v2968
      %v3001 = vsel %vm2937, %v2905, %v2969
      %v3002 = vsel %vm2938, %v2906, %v2970
      %v3003 = vsel %vm2939, %v2907, %v2971
      %v3004 = vsel %vm2940, %v2908, %v2972
      %v3005 = vsel %vm2941, %v2909, %v2973
      %v3006 = vsel %vm2942, %v2910, %v2974
      %v3007 = vsel %vm2943, %v2911, %v2975
      %v3008 = vsel %vm2944, %v2912, %v2976
      %v3009 = vsel %vm2945, %v2913, %v2977
      %v3010 = vsel %vm2946, %v2914, %v2978
      %v3011 = vsel %vm2947, %v2915, %v2979
      %v3012 = vsel %vm2948, %v2916, %v2980
      %v3013 = vsel %vm2949, %v2917, %v2981
      %v3014 = vsel %vm2950, %v2918, %v2982
      %v3015 = vsel %vm2951, %v2919, %v2983
      %v3016 = vsel %vm2952, %v2920, %v2984
      %v3017 = vsel %vm2953, %v2921, %v2985
      %v3018 = vsel %vm2954, %v2922, %v2986
      %v3019 = vsel %vm2955, %v2923, %v2987
      %v3020 = vsel %vm2956, %v2924, %v2988
      %v3021 = vsel %vm2957, %v2925, %v2989
      %v3022 = vpack.c.bf16 %v2991, %v2990
      %v3023 = vpack.c.bf16 %v2993, %v2992
      %v3024 = vpack.c.bf16 %v2995, %v2994
      %v3025 = vpack.c.bf16 %v2997, %v2996
      %v3026 = vpack.c.bf16 %v2999, %v2998
      %v3027 = vpack.c.bf16 %v3001, %v3000
      %v3028 = vpack.c.bf16 %v3003, %v3002
      %v3029 = vpack.c.bf16 %v3005, %v3004
      %v3030 = vpack.c.bf16 %v3007, %v3006
      %v3031 = vpack.c.bf16 %v3009, %v3008
      %v3032 = vpack.c.bf16 %v3011, %v3010
      %v3033 = vpack.c.bf16 %v3013, %v3012
      %v3034 = vpack.c.bf16 %v3015, %v3014
      %v3035 = vpack.c.bf16 %v3017, %v3016
      %v3036 = vpack.c.bf16 %v3019, %v3018
      %v3037 = vpack.c.bf16 %v3021, %v3020
      %v3054 = vunpack.c.l.b16 %v3022
      %v3055 = vunpack.c.h.b16 %v3022
      %v3056 = vunpack.c.l.b16 %v3023
      %v3057 = vunpack.c.h.b16 %v3023
      %v3058 = vunpack.c.l.b16 %v3024
      %v3059 = vunpack.c.h.b16 %v3024
      %v3060 = vunpack.c.l.b16 %v3025
      %v3061 = vunpack.c.h.b16 %v3025
      %v3062 = vunpack.c.l.b16 %v3026
      %v3063 = vunpack.c.h.b16 %v3026
      %v3064 = vunpack.c.l.b16 %v3027
      %v3065 = vunpack.c.h.b16 %v3027
      %v3066 = vunpack.c.l.b16 %v3028
      %v3067 = vunpack.c.h.b16 %v3028
      %v3068 = vunpack.c.l.b16 %v3029
      %v3069 = vunpack.c.h.b16 %v3029
      %v3070 = vunpack.c.l.b16 %v3030
      %v3071 = vunpack.c.h.b16 %v3030
      %v3072 = vunpack.c.l.b16 %v3031
      %v3073 = vunpack.c.h.b16 %v3031
      %v3074 = vunpack.c.l.b16 %v3032
      %v3075 = vunpack.c.h.b16 %v3032
      %v3076 = vunpack.c.l.b16 %v3033
      %v3077 = vunpack.c.h.b16 %v3033
      %v3078 = vunpack.c.l.b16 %v3034
      %v3079 = vunpack.c.h.b16 %v3034
      %v3080 = vunpack.c.l.b16 %v3035
      %v3081 = vunpack.c.h.b16 %v3035
      %v3082 = vunpack.c.l.b16 %v3036
      %v3083 = vunpack.c.h.b16 %v3036
      %v3084 = vunpack.c.l.b16 %v3037
      %v3085 = vunpack.c.h.b16 %v3037
      %v3086 = vpack.c.b16 %v3054, %v3054
      %v3087 = vpack.c.b16 %v3055, %v3055
      %v3088 = vpack.c.b16 %v3056, %v3056
      %v3089 = vpack.c.b16 %v3057, %v3057
      %v3090 = vpack.c.b16 %v3058, %v3058
      %v3091 = vpack.c.b16 %v3059, %v3059
      %v3092 = vpack.c.b16 %v3060, %v3060
      %v3093 = vpack.c.b16 %v3061, %v3061
      %v3094 = vpack.c.b16 %v3062, %v3062
      %v3095 = vpack.c.b16 %v3063, %v3063
      %v3096 = vpack.c.b16 %v3064, %v3064
      %v3097 = vpack.c.b16 %v3065, %v3065
      %v3098 = vpack.c.b16 %v3066, %v3066
      %v3099 = vpack.c.b16 %v3067, %v3067
      %v3100 = vpack.c.b16 %v3068, %v3068
      %v3101 = vpack.c.b16 %v3069, %v3069
      %v3102 = vpack.c.b16 %v3070, %v3070
      %v3103 = vpack.c.b16 %v3071, %v3071
      %v3104 = vpack.c.b16 %v3072, %v3072
      %v3105 = vpack.c.b16 %v3073, %v3073
      %v3106 = vpack.c.b16 %v3074, %v3074
      %v3107 = vpack.c.b16 %v3075, %v3075
      %v3108 = vpack.c.b16 %v3076, %v3076
      %v3109 = vpack.c.b16 %v3077, %v3077
      %v3110 = vpack.c.b16 %v3078, %v3078
      %v3111 = vpack.c.b16 %v3079, %v3079
      %v3112 = vpack.c.b16 %v3080, %v3080
      %v3113 = vpack.c.b16 %v3081, %v3081
      %v3114 = vpack.c.b16 %v3082, %v3082
      %v3115 = vpack.c.b16 %v3083, %v3083
      %v3116 = vpack.c.b16 %v3084, %v3084
      %v3117 = vpack.c.b16 %v3085, %v3085
      %vm3150 = vcmask 27648
      %3151 = vst.msk [vmem:[%s170] sm:$0xf] %vm3150, %v3086
      %3152 = vst.msk [vmem:[%s170 + $0x4] sm:$0xf] %vm3150, %v3087
      %3153 = vst.msk [vmem:[%s170 + $0x8] sm:$0xf] %vm3150, %v3088
      %3154 = vst.msk [vmem:[%s170 + $0xc] sm:$0xf] %vm3150, %v3089
      %3155 = vst.msk [vmem:[%s170 + $0x10] sm:$0xf] %vm3150, %v3090
      %3156 = vst.msk [vmem:[%s170 + $0x14] sm:$0xf] %vm3150, %v3091
      %3157 = vst.msk [vmem:[%s170 + $0x18] sm:$0xf] %vm3150, %v3092
      %3158 = vst.msk [vmem:[%s170 + $0x1c] sm:$0xf] %vm3150, %v3093
      %3159 = vst.msk [vmem:[%s170 + $0x20] sm:$0xf] %vm3150, %v3094
      %3160 = vst.msk [vmem:[%s170 + $0x24] sm:$0xf] %vm3150, %v3095
      %3161 = vst.msk [vmem:[%s170 + $0x28] sm:$0xf] %vm3150, %v3096
      %3162 = vst.msk [vmem:[%s170 + $0x2c] sm:$0xf] %vm3150, %v3097
      %3163 = vst.msk [vmem:[%s170 + $0x30] sm:$0xf] %vm3150, %v3098
      %3164 = vst.msk [vmem:[%s170 + $0x34] sm:$0xf] %vm3150, %v3099
      %3165 = vst.msk [vmem:[%s170 + $0x38] sm:$0xf] %vm3150, %v3100
      %3166 = vst.msk [vmem:[%s170 + $0x3c] sm:$0xf] %vm3150, %v3101
      %3167 = vst.msk [vmem:[%s170 + $0x40] sm:$0xf] %vm3150, %v3102
      %3168 = vst.msk [vmem:[%s170 + $0x44] sm:$0xf] %vm3150, %v3103
      %3169 = vst.msk [vmem:[%s170 + $0x48] sm:$0xf] %vm3150, %v3104
      %3170 = vst.msk [vmem:[%s170 + $0x4c] sm:$0xf] %vm3150, %v3105
      %3171 = vst.msk [vmem:[%s170 + $0x50] sm:$0xf] %vm3150, %v3106
      %3172 = vst.msk [vmem:[%s170 + $0x54] sm:$0xf] %vm3150, %v3107
      %3173 = vst.msk [vmem:[%s170 + $0x58] sm:$0xf] %vm3150, %v3108
      %3174 = vst.msk [vmem:[%s170 + $0x5c] sm:$0xf] %vm3150, %v3109
      %3175 = vst.msk [vmem:[%s170 + $0x60] sm:$0xf] %vm3150, %v3110
      %3176 = vst.msk [vmem:[%s170 + $0x64] sm:$0xf] %vm3150, %v3111
      %3177 = vst.msk [vmem:[%s170 + $0x68] sm:$0xf] %vm3150, %v3112
      %3178 = vst.msk [vmem:[%s170 + $0x6c] sm:$0xf] %vm3150, %v3113
      %3179 = vst.msk [vmem:[%s170 + $0x70] sm:$0xf] %vm3150, %v3114
      %3180 = vst.msk [vmem:[%s170 + $0x74] sm:$0xf] %vm3150, %v3115
      %3181 = vst.msk [vmem:[%s170 + $0x78] sm:$0xf] %vm3150, %v3116
      %3182 = vst.msk [vmem:[%s170 + $0x7c] sm:$0xf] %vm3150, %v3117
      %p3183 = scmp.lt.s32.totalorder %s14, 1
      %s3184 = scalar_select %p3183, %s14, 1
      %s3185 = smul.addr %s3184, 32
      %s3186 = smul.addr %s3185, 4
      %s3187 = scalar_lea.vmem %s3, %s3186
      // Predicated region
      $region33: #{encoder_apply.7} parent=31 // pred_check
        %p3188 = pneg %p100
      $region34: #{encoder_apply.7} parent=31 // pred_check_branch
        %3190 = sbr.rel (%p3188) target = $region36
      $region35: #{encoder_apply.7} parent=31 // pred_region
        _
      $region36: #{encoder_apply.7} parent=31 // pred_fallthru
        _
    $region32: #{encoder_apply.7} parent=5 // pred_fallthru
      _
    %p3191 = scmp.le.s32.totalorder 2, %s9
    // Predicated region
    $region37: #{encoder_apply.7} parent=5 // pred_check
      %p3192 = pneg %p3191
    $region38: #{encoder_apply.7} parent=5 // pred_check_branch
      %3194 = sbr.rel (%p3192) target = $region40
    $region39: #{encoder_apply.7} parent=5 // pred_region
      %s3195 = ssub.s32 %s9, 2
      // Predicated region
      $region41: #{encoder_apply.7} parent=39 // pred_check
        %p3196 = pneg %p106
      $region42: #{encoder_apply.7} parent=39 // pred_check_branch
        %3198 = sbr.rel (%p3196) target = $region44
      $region43: #{encoder_apply.7} parent=39 // pred_region
        %p3199 = scmp.lt.s32.totalorder %s15, 1
        %s3200 = scalar_select %p3199, %s15, 1
        %s3201 = smul.addr %s3200, 32
        %s3202 = smul.addr %s3201, 4
        %s3203 = scalar_lea.vmem %s3, %s3202
      $region44: #{encoder_apply.7} parent=39 // pred_fallthru
        _
    $region40: #{encoder_apply.7} parent=5 // pred_fallthru
      _
  $region6: #{encoder_apply.7} parent=0 // loop_footer
    %s13 = sadd.s32 1, %s9
  $region7: #{encoder_apply.7} parent=0 // loop_footer_branch
    %8 = sbr.rel target = $region3
  $region8: #{encoder_apply.7} parent=0 // loop_exit
    _

// kernel: encoder_apply.8
$region0: #{encoder_apply.8}
  #allocation0 [shape = 'u32[]', space=smem, size = 0x4, offset = 0x4, fixed_abs, tag = 'smem constant byte address 0x4 - core index']
  #allocation1 [shape = 'u32[144,128]{1,0:T(1,128)}', space=vmem, size = 0x12000, scoped, tag = 'internal scratch']
  %s0 = inlined_call_operand.vmem [shape: bf16[2,18,18,4], index: 0, kind: input, shape index: {}]
  %s1 = inlined_call_operand.vmem [shape: bf16[3,3,4,4], index: 1, kind: input, shape index: {}]
  %s2 = inlined_call_operand.vmem [shape: f32[1,4], index: 2, kind: input, shape index: {}]
  %s3 = inlined_call_operand.vmem [shape: bf16[2,256,4], index: 3, kind: input, shape index: {}]
  %s4 = inlined_call_operand.vmem [shape: bf16[2,256,4], index: 4, kind: output, shape index: {}]
  %s5 = sld [smem:[#allocation0]]
  $region49: #{encoder_apply.8} parent=0
    _
  %s7 = ssub.s32 1, %s5
  %s8 = scalar_select 0, %s7, %s5
  loop: start=0, step=1, limit=4
  $region2: #{encoder_apply.8} parent=0 // loop_pre_header
    _
  $region3: #{encoder_apply.8} parent=0 // loop_header
    %s10 = sphi 0, %s14
    %p11 = scmp.ge.s32.totalorder %s10, 4
    %s20 = sphi 0, %s22
    %s23 = sphi 0, %s20
    %s24 = sphi 0, %s23
    %s40 = sphi 0, %s24
    %s44 = sphi 0, %s44
    %s46 = sphi 0, %s44
    %s47 = sphi 0, %s46
    %s61 = sphi 0, %s47
    %s65 = sphi 0, %s65
    %s67 = sphi 0, %s65
    %s68 = sphi 0, %s67
    %s82 = sphi 0, %s68
    %s88 = sphi 0, %s90
    %s91 = sphi 0, %s88
    %s92 = sphi 0, %s91
    %s108 = sphi 0, %s92
    %s114 = sphi 0, %s116
    %s117 = sphi 0, %s114
    %s118 = sphi 0, %s117
    %s134 = sphi 0, %s118
  $region4: #{encoder_apply.8} parent=0 // loop_header_branch
    %13 = sbr.rel (%p11) target = $region8
  $region5: #{encoder_apply.8} parent=0 // loop_body
    %s15 = ssub.s32 %s10, 1
    %s16 = ssub.s32 %s10, 2
    %s17 = sadd.s32 %s10, 1
    %s18 = ssub.s32 %s10, %s17
    %p19 = scmp.eq.s32.totalorder %s18, 0
    %s21 = sadd.s32 %s20, 1
    %s22 = scalar_select %p19, %s20, %s21
    %p25 = pneg %p19
    %p26 = scmp.eq.s32.totalorder %s10, 1
    %p27 = por %p25, %p26
    %p28 = scmp.ne.s32.totalorder %s20, %s23
    %p29 = scmp.eq.s32.totalorder %s10, 0
    %p30 = por %p28, %p29
    %p31 = scmp.ne.s32.totalorder %s20, %s23
    %p32 = scmp.eq.s32.totalorder %s15, 1
    %p33 = por %p31, %p32
    %p34 = scmp.ne.s32.totalorder %s23, %s24
    %p35 = scmp.eq.s32.totalorder %s15, 0
    %p36 = por %p34, %p35
    %p37 = scmp.ne.s32.totalorder %s23, %s24
    %p38 = scmp.eq.s32.totalorder %s16, 1
    %p39 = por %p37, %p38
    %p41 = scmp.ne.s32.totalorder %s24, %s40
    %p42 = scmp.eq.s32.totalorder %s16, 0
    %p43 = por %p41, %p42
    %s45 = sadd.s32 %s44, 1
    %p48 = scmp.eq.s32.totalorder %s10, 1
    %p49 = scmp.ne.s32.totalorder %s44, %s46
    %p50 = scmp.eq.s32.totalorder %s10, 0
    %p51 = por %p49, %p50
    %p52 = scmp.ne.s32.totalorder %s44, %s46
    %p53 = scmp.eq.s32.totalorder %s15, 1
    %p54 = por %p52, %p53
    %p55 = scmp.ne.s32.totalorder %s46, %s47
    %p56 = scmp.eq.s32.totalorder %s15, 0
    %p57 = por %p55, %p56
    %p58 = scmp.ne.s32.totalorder %s46, %s47
    %p59 = scmp.eq.s32.totalorder %s16, 1
    %p60 = por %p58, %p59
    %p62 = scmp.ne.s32.totalorder %s47, %s61
    %p63 = scmp.eq.s32.totalorder %s16, 0
    %p64 = por %p62, %p63
    %s66 = sadd.s32 %s65, 1
    %p69 = scmp.eq.s32.totalorder %s10, 1
    %p70 = scmp.ne.s32.totalorder %s65, %s67
    %p71 = scmp.eq.s32.totalorder %s10, 0
    %p72 = por %p70, %p71
    %p73 = scmp.ne.s32.totalorder %s65, %s67
    %p74 = scmp.eq.s32.totalorder %s15, 1
    %p75 = por %p73, %p74
    %p76 = scmp.ne.s32.totalorder %s67, %s68
    %p77 = scmp.eq.s32.totalorder %s15, 0
    %p78 = por %p76, %p77
    %p79 = scmp.ne.s32.totalorder %s67, %s68
    %p80 = scmp.eq.s32.totalorder %s16, 1
    %p81 = por %p79, %p80
    %p83 = scmp.ne.s32.totalorder %s68, %s82
    %p84 = scmp.eq.s32.totalorder %s16, 0
    %p85 = por %p83, %p84
    %s86 = ssub.s32 %s10, %s17
    %p87 = scmp.eq.s32.totalorder %s86, 0
    %s89 = sadd.s32 %s88, 1
    %s90 = scalar_select %p87, %s88, %s89
    %p93 = pneg %p87
    %p94 = scmp.eq.s32.totalorder %s10, 1
    %p95 = por %p93, %p94
    %p96 = scmp.ne.s32.totalorder %s88, %s91
    %p97 = scmp.eq.s32.totalorder %s10, 0
    %p98 = por %p96, %p97
    %p99 = scmp.ne.s32.totalorder %s88, %s91
    %p100 = scmp.eq.s32.totalorder %s15, 1
    %p101 = por %p99, %p100
    %p102 = scmp.ne.s32.totalorder %s91, %s92
    %p103 = scmp.eq.s32.totalorder %s15, 0
    %p104 = por %p102, %p103
    %p105 = scmp.ne.s32.totalorder %s91, %s92
    %p106 = scmp.eq.s32.totalorder %s16, 1
    %p107 = por %p105, %p106
    %p109 = scmp.ne.s32.totalorder %s92, %s108
    %p110 = scmp.eq.s32.totalorder %s16, 0
    %p111 = por %p109, %p110
    %s112 = ssub.s32 %s10, %s17
    %p113 = scmp.eq.s32.totalorder %s112, 0
    %s115 = sadd.s32 %s114, 1
    %s116 = scalar_select %p113, %s114, %s115
    %p119 = pneg %p113
    %p120 = scmp.eq.s32.totalorder %s10, 1
    %p121 = por %p119, %p120
    %p122 = scmp.ne.s32.totalorder %s114, %s117
    %p123 = scmp.eq.s32.totalorder %s10, 0
    %p124 = por %p122, %p123
    %p125 = scmp.ne.s32.totalorder %s114, %s117
    %p126 = scmp.eq.s32.totalorder %s15, 1
    %p127 = por %p125, %p126
    %p128 = scmp.ne.s32.totalorder %s117, %s118
    %p129 = scmp.eq.s32.totalorder %s15, 0
    %p130 = por %p128, %p129
    %p131 = scmp.ne.s32.totalorder %s117, %s118
    %p132 = scmp.eq.s32.totalorder %s16, 1
    %p133 = por %p131, %p132
    %p135 = scmp.ne.s32.totalorder %s118, %s134
    %p136 = scmp.eq.s32.totalorder %s16, 0
    %p137 = por %p135, %p136
    %p138 = scmp.le.s32.totalorder 1, %s10
    %p139 = scmp.lt.s32.totalorder %s10, 3
    %p140 = pnand %p138, %p139
    %p141 = pneg %p140
    // Predicated region
    $region9: #{encoder_apply.8} parent=5 // pred_check
      _
    $region10: #{encoder_apply.8} parent=5 // pred_check_branch
      %143 = sbr.rel (%p140) target = $region12
    $region11: #{encoder_apply.8} parent=5 // pred_region
      %s144 = ssub.s32 %s10, 1
      // Predicated region
      $region13: #{encoder_apply.8} parent=11 // pred_check
        %p145 = pneg %p57
      $region14: #{encoder_apply.8} parent=11 // pred_check_branch
        %147 = sbr.rel (%p145) target = $region16
      $region15: #{encoder_apply.8} parent=11 // pred_region
        _
      $region16: #{encoder_apply.8} parent=11 // pred_fallthru
        _
      // Predicated region
      $region17: #{encoder_apply.8} parent=11 // pred_check
        %p148 = pneg %p78
      $region18: #{encoder_apply.8} parent=11 // pred_check_branch
        %150 = sbr.rel (%p148) target = $region20
      $region19: #{encoder_apply.8} parent=11 // pred_region
        _
      $region20: #{encoder_apply.8} parent=11 // pred_fallthru
        _
    $region12: #{encoder_apply.8} parent=5 // pred_fallthru
      _
    %p151 = scmp.lt.s32.totalorder %s10, 2
    // Predicated region
    $region21: #{encoder_apply.8} parent=5 // pred_check
      %p152 = pneg %p151
    $region22: #{encoder_apply.8} parent=5 // pred_check_branch
      %154 = sbr.rel (%p152) target = $region24
    $region23: #{encoder_apply.8} parent=5 // pred_region
      // Predicated region
      $region25: #{encoder_apply.8} parent=23 // pred_check
        %p155 = pneg %p30
      $region26: #{encoder_apply.8} parent=23 // pred_check_branch
        %157 = sbr.rel (%p155) target = $region28
      $region27: #{encoder_apply.8} parent=23 // pred_region
        %p158 = scmp.lt.s32.totalorder %s10, 1
        %s159 = scalar_select %p158, %s10, 1
        %s160 = smul.addr %s159, 54
        %s161 = smul.addr %s160, 4
        %s162 = scalar_lea.vmem %s0, %s161
      $region28: #{encoder_apply.8} parent=23 // pred_fallthru
        _
      // Predicated region
      $region29: #{encoder_apply.8} parent=23 // pred_check
        %p163 = pneg %p98
      $region30: #{encoder_apply.8} parent=23 // pred_check_branch
        %165 = sbr.rel (%p163) target = $region32
      $region31: #{encoder_apply.8} parent=23 // pred_region
        %p166 = scmp.lt.s32.totalorder %s10, 1
        %s167 = scalar_select %p166, %s10, 1
        %s168 = smul.addr %s167, 32
        %s169 = smul.addr %s168, 4
        %s170 = scalar_lea.vmem %s3, %s169
      $region32: #{encoder_apply.8} parent=23 // pred_fallthru
        _
    $region24: #{encoder_apply.8} parent=5 // pred_fallthru
      _
    %p171 = scmp.le.s32.totalorder 1, %s10
    %p172 = scmp.lt.s32.totalorder %s10, 3
    %p173 = pnand %p171, %p172
    %p174 = pneg %p173
    // Predicated region
    $region33: #{encoder_apply.8} parent=5 // pred_check
      _
    $region34: #{encoder_apply.8} parent=5 // pred_check_branch
      %176 = sbr.rel (%p173) target = $region36
    $region35: #{encoder_apply.8} parent=5 // pred_region
      %s177 = ssub.s32 %s10, 1
      %p178 = scmp.lt.s32.totalorder %s15, 1
      %s179 = scalar_select %p178, %s15, 1
      %s180 = smul.addr %s179, 54
      %s181 = smul.addr %s180, 4
      %s182 = scalar_lea.vmem %s0, %s181
      %p183 = pneg %p36
      %p184 = pneg %p33
      %p185 = pneg %p57
      %p186 = pneg %p54
      %p187 = pneg %p78
      %p188 = pneg %p75
      %p189 = scmp.lt.s32.totalorder %s15, 1
      %s190 = scalar_select %p189, %s15, 1
      %s191 = smul.addr %s190, 32
      %s192 = smul.addr %s191, 4
      %s193 = scalar_lea.vmem %s3, %s192
      %p194 = pneg %p104
      %p195 = pneg %p101
      %p196 = pneg %p130
      %p197 = pneg %p127
      %p198 = scmp.lt.s32.totalorder %s15, 1
      %s199 = scalar_select %p198, %s15, 1
      %s200 = smul.addr %s199, 32
      %s201 = smul.addr %s200, 4
      %s202 = scalar_lea.vmem %s4, %s201
      %p203 = scmp.lt.s32.totalorder %s15, 1
      %s204 = scalar_select %p203, %s15, 1
      %s205 = smul.addr %s204, 54
      %s206 = smul.addr %s205, 4
      %s207 = scalar_lea.vmem %s0, %s206
      %p208 = scmp.lt.s32.totalorder %s15, 1
      %s209 = scalar_select %p208, %s15, 1
      %s210 = smul.addr %s209, 32
      %s211 = smul.addr %s210, 4
      %s212 = scalar_lea.vmem %s3, %s211
      %p213 = scmp.lt.s32.totalorder %s15, 1
      %s214 = scalar_select %p213, %s15, 1
      %s215 = smul.addr %s214, 32
      %s216 = smul.addr %s215, 4
      %s217 = scalar_lea.vmem %s4, %s216
      %v219 = vld [vmem:[%s207] sm:$0xf]
      %v220 = vld [vmem:[%s207 + $0x4] sm:$0xf]
      %v221 = vld [vmem:[%s207 + $0x8] sm:$0x1]
      %v222 = vld [vmem:[%s207 + $0xc] sm:$0xf]
      %v223 = vld [vmem:[%s207 + $0x10] sm:$0xf]
      %v224 = vld [vmem:[%s207 + $0x14] sm:$0x1]
      %v225 = vld [vmem:[%s207 + $0x18] sm:$0xf]
      %v226 = vld [vmem:[%s207 + $0x1c] sm:$0xf]
      %v227 = vld [vmem:[%s207 + $0x20] sm:$0x1]
      %v228 = vld [vmem:[%s207 + $0x24] sm:$0xf]
      %v229 = vld [vmem:[%s207 + $0x28] sm:$0xf]
      %v230 = vld [vmem:[%s207 + $0x2c] sm:$0x1]
      %v231 = vld [vmem:[%s207 + $0x30] sm:$0xf]
      %v232 = vld [vmem:[%s207 + $0x34] sm:$0xf]
      %v233 = vld [vmem:[%s207 + $0x38] sm:$0x1]
      %v234 = vld [vmem:[%s207 + $0x3c] sm:$0xf]
      %v235 = vld [vmem:[%s207 + $0x40] sm:$0xf]
      %v236 = vld [vmem:[%s207 + $0x44] sm:$0x1]
      %v237 = vld [vmem:[%s207 + $0x48] sm:$0xf]
      %v238 = vld [vmem:[%s207 + $0x4c] sm:$0xf]
      %v239 = vld [vmem:[%s207 + $0x50] sm:$0x1]
      %v240 = vld [vmem:[%s207 + $0x54] sm:$0xf]
      %v241 = vld [vmem:[%s207 + $0x58] sm:$0xf]
      %v242 = vld [vmem:[%s207 + $0x5c] sm:$0x1]
      %v243 = vld [vmem:[%s207 + $0x60] sm:$0xf]
      %v244 = vld [vmem:[%s207 + $0x64] sm:$0xf]
      %v245 = vld [vmem:[%s207 + $0x68] sm:$0x1]
      %v246 = vld [vmem:[%s207 + $0x6c] sm:$0xf]
      %v247 = vld [vmem:[%s207 + $0x70] sm:$0xf]
      %v248 = vld [vmem:[%s207 + $0x74] sm:$0x1]
      %v249 = vld [vmem:[%s207 + $0x78] sm:$0xf]
      %v250 = vld [vmem:[%s207 + $0x7c] sm:$0xf]
      %v251 = vld [vmem:[%s207 + $0x80] sm:$0x1]
      %v252 = vld [vmem:[%s207 + $0x84] sm:$0xf]
      %v253 = vld [vmem:[%s207 + $0x88] sm:$0xf]
      %v254 = vld [vmem:[%s207 + $0x8c] sm:$0x1]
      %v255 = vld [vmem:[%s207 + $0x90] sm:$0xf]
      %v256 = vld [vmem:[%s207 + $0x94] sm:$0xf]
      %v257 = vld [vmem:[%s207 + $0x98] sm:$0x1]
      %v258 = vld [vmem:[%s207 + $0x9c] sm:$0xf]
      %v259 = vld [vmem:[%s207 + $0xa0] sm:$0xf]
      %v260 = vld [vmem:[%s207 + $0xa4] sm:$0x1]
      %v261 = vld [vmem:[%s207 + $0xa8] sm:$0xf]
      %v262 = vld [vmem:[%s207 + $0xac] sm:$0xf]
      %v263 = vld [vmem:[%s207 + $0xb0] sm:$0x1]
      %v264 = vld [vmem:[%s207 + $0xb4] sm:$0xf]
      %v265 = vld [vmem:[%s207 + $0xb8] sm:$0xf]
      %v266 = vld [vmem:[%s207 + $0xbc] sm:$0x1]
      %v267 = vld [vmem:[%s207 + $0xc0] sm:$0xf]
      %v268 = vld [vmem:[%s207 + $0xc4] sm:$0xf]
      %v269 = vld [vmem:[%s207 + $0xc8] sm:$0x1]
      %v270 = vld [vmem:[%s207 + $0xcc] sm:$0xf]
      %v271 = vld [vmem:[%s207 + $0xd0] sm:$0xf]
      %v272 = vld [vmem:[%s207 + $0xd4] sm:$0x1]
      %v273 = vld [vmem:[%s1] sm:$0x3]
      %vm274 = vsmask.f32 3328
      %vm275 = vsmask.f32 7440
      %vm276 = vmor %vm274, %vm275
      %v278 = vshrl.u32 %v219, 16
      %v280 = vrot.slane %v278, 4
      %v281 = vshll.u32 %v219, 16
      %v283 = vrot.slane %v281, 5
      %v284 = vor.u32 %v280, %v283
      %v285 = vrot.slane %v284, 4
      %v287 = vshll.u32 %v220, 16
      %v289 = vrot.slane %v287, 5
      %v290 = vsel %vm276, %v285, %v289
      %v291 = vshrl.u32 %v220, 16
      %v293 = vrot.slane %v291, 4
      %v294 = vor.u32 %v293, %v289
      %v295 = vrot.slane %v294, 4
      %v297 = vshll.u32 %v221, 16
      %v299 = vrot.slane %v297, 5
      %v300 = vsel %vm276, %v295, %v299
      %v302 = vshrl.u32 %v222, 16
      %v304 = vrot.slane %v302, 4
      %v305 = vshll.u32 %v222, 16
      %v307 = vrot.slane %v305, 5
      %v308 = vor.u32 %v304, %v307
      %v309 = vrot.slane %v308, 4
      %v311 = vshll.u32 %v223, 16
      %v313 = vrot.slane %v311, 5
      %v314 = vsel %vm276, %v309, %v313
      %v315 = vshrl.u32 %v223, 16
      %v317 = vrot.slane %v315, 4
      %v318 = vor.u32 %v317, %v313
      %v319 = vrot.slane %v318, 4
      %v321 = vshll.u32 %v224, 16
      %v323 = vrot.slane %v321, 5
      %v324 = vsel %vm276, %v319, %v323
      %v326 = vshrl.u32 %v225, 16
      %v328 = vrot.slane %v326, 4
      %v329 = vshll.u32 %v225, 16
      %v331 = vrot.slane %v329, 5
      %v332 = vor.u32 %v328, %v331
      %v333 = vrot.slane %v332, 4
      %v335 = vshll.u32 %v226, 16
      %v337 = vrot.slane %v335, 5
      %v338 = vsel %vm276, %v333, %v337
      %v339 = vshrl.u32 %v226, 16
      %v341 = vrot.slane %v339, 4
      %v342 = vor.u32 %v341, %v337
      %v343 = vrot.slane %v342, 4
      %v345 = vshll.u32 %v227, 16
      %v347 = vrot.slane %v345, 5
      %v348 = vsel %vm276, %v343, %v347
      %v350 = vshrl.u32 %v228, 16
      %v352 = vrot.slane %v350, 4
      %v353 = vshll.u32 %v228, 16
      %v355 = vrot.slane %v353, 5
      %v356 = vor.u32 %v352, %v355
      %v357 = vrot.slane %v356, 4
      %v359 = vshll.u32 %v229, 16
      %v361 = vrot.slane %v359, 5
      %v362 = vsel %vm276, %v357, %v361
      %v363 = vshrl.u32 %v229, 16
      %v365 = vrot.slane %v363, 4
      %v366 = vor.u32 %v365, %v361
      %v367 = vrot.slane %v366, 4
      %v369 = vshll.u32 %v230, 16
      %v371 = vrot.slane %v369, 5
      %v372 = vsel %vm276, %v367, %v371
      %v374 = vshrl.u32 %v231, 16
      %v376 = vrot.slane %v374, 4
      %v377 = vshll.u32 %v231, 16
      %v379 = vrot.slane %v377, 5
      %v380 = vor.u32 %v376, %v379
      %v381 = vrot.slane %v380, 4
      %v383 = vshll.u32 %v232, 16
      %v385 = vrot.slane %v383, 5
      %v386 = vsel %vm276, %v381, %v385
      %v387 = vshrl.u32 %v232, 16
      %v389 = vrot.slane %v387, 4
      %v390 = vor.u32 %v389, %v385
      %v391 = vrot.slane %v390, 4
      %v393 = vshll.u32 %v233, 16
      %v395 = vrot.slane %v393, 5
      %v396 = vsel %vm276, %v391, %v395
      %v398 = vshrl.u32 %v234, 16
      %v400 = vrot.slane %v398, 4
      %v401 = vshll.u32 %v234, 16
      %v403 = vrot.slane %v401, 5
      %v404 = vor.u32 %v400, %v403
      %v405 = vrot.slane %v404, 4
      %v407 = vshll.u32 %v235, 16
      %v409 = vrot.slane %v407, 5
      %v410 = vsel %vm276, %v405, %v409
      %v411 = vshrl.u32 %v235, 16
      %v413 = vrot.slane %v411, 4
      %v414 = vor.u32 %v413, %v409
      %v415 = vrot.slane %v414, 4
      %v417 = vshll.u32 %v236, 16
      %v419 = vrot.slane %v417, 5
      %v420 = vsel %vm276, %v415, %v419
      %v422 = vshrl.u32 %v237, 16
      %v424 = vrot.slane %v422, 4
      %v425 = vshll.u32 %v237, 16
      %v427 = vrot.slane %v425, 5
      %v428 = vor.u32 %v424, %v427
      %v429 = vrot.slane %v428, 4
      %v431 = vshll.u32 %v238, 16
      %v433 = vrot.slane %v431, 5
      %v434 = vsel %vm276, %v429, %v433
      %v435 = vshrl.u32 %v238, 16
      %v437 = vrot.slane %v435, 4
      %v438 = vor.u32 %v437, %v433
      %v439 = vrot.slane %v438, 4
      %v441 = vshll.u32 %v239, 16
      %v443 = vrot.slane %v441, 5
      %v444 = vsel %vm276, %v439, %v443
      %v446 = vshrl.u32 %v240, 16
      %v448 = vrot.slane %v446, 4
      %v449 = vshll.u32 %v240, 16
      %v451 = vrot.slane %v449, 5
      %v452 = vor.u32 %v448, %v451
      %v453 = vrot.slane %v452, 4
      %v455 = vshll.u32 %v241, 16
      %v457 = vrot.slane %v455, 5
      %v458 = vsel %vm276, %v453, %v457
      %v459 = vshrl.u32 %v241, 16
      %v461 = vrot.slane %v459, 4
      %v462 = vor.u32 %v461, %v457
      %v463 = vrot.slane %v462, 4
      %v465 = vshll.u32 %v242, 16
      %v467 = vrot.slane %v465, 5
      %v468 = vsel %vm276, %v463, %v467
      %v470 = vshrl.u32 %v243, 16
      %v472 = vrot.slane %v470, 4
      %v473 = vshll.u32 %v243, 16
      %v475 = vrot.slane %v473, 5
      %v476 = vor.u32 %v472, %v475
      %v477 = vrot.slane %v476, 4
      %v479 = vshll.u32 %v244, 16
      %v481 = vrot.slane %v479, 5
      %v482 = vsel %vm276, %v477, %v481
      %v483 = vshrl.u32 %v244, 16
      %v485 = vrot.slane %v483, 4
      %v486 = vor.u32 %v485, %v481
      %v487 = vrot.slane %v486, 4
      %v489 = vshll.u32 %v245, 16
      %v491 = vrot.slane %v489, 5
      %v492 = vsel %vm276, %v487, %v491
      %v494 = vshrl.u32 %v246, 16
      %v496 = vrot.slane %v494, 4
      %v497 = vshll.u32 %v246, 16
      %v499 = vrot.slane %v497, 5
      %v500 = vor.u32 %v496, %v499
      %v501 = vrot.slane %v500, 4
      %v503 = vshll.u32 %v247, 16
      %v505 = vrot.slane %v503, 5
      %v506 = vsel %vm276, %v501, %v505
      %v507 = vshrl.u32 %v247, 16
      %v509 = vrot.slane %v507, 4
      %v510 = vor.u32 %v509, %v505
      %v511 = vrot.slane %v510, 4
      %v513 = vshll.u32 %v248, 16
      %v515 = vrot.slane %v513, 5
      %v516 = vsel %vm276, %v511, %v515
      %v518 = vshrl.u32 %v249, 16
      %v520 = vrot.slane %v518, 4
      %v521 = vshll.u32 %v249, 16
      %v523 = vrot.slane %v521, 5
      %v524 = vor.u32 %v520, %v523
      %v525 = vrot.slane %v524, 4
      %v527 = vshll.u32 %v250, 16
      %v529 = vrot.slane %v527, 5
      %v530 = vsel %vm276, %v525, %v529
      %v531 = vshrl.u32 %v250, 16
      %v533 = vrot.slane %v531, 4
      %v534 = vor.u32 %v533, %v529
      %v535 = vrot.slane %v534, 4
      %v537 = vshll.u32 %v251, 16
      %v539 = vrot.slane %v537, 5
      %v540 = vsel %vm276, %v535, %v539
      %v542 = vshrl.u32 %v252, 16
      %v544 = vrot.slane %v542, 4
      %v545 = vshll.u32 %v252, 16
      %v547 = vrot.slane %v545, 5
      %v548 = vor.u32 %v544, %v547
      %v549 = vrot.slane %v548, 4
      %v551 = vshll.u32 %v253, 16
      %v553 = vrot.slane %v551, 5
      %v554 = vsel %vm276, %v549, %v553
      %v555 = vshrl.u32 %v253, 16
      %v557 = vrot.slane %v555, 4
      %v558 = vor.u32 %v557, %v553
      %v559 = vrot.slane %v558, 4
      %v561 = vshll.u32 %v254, 16
      %v563 = vrot.slane %v561, 5
      %v564 = vsel %vm276, %v559, %v563
      %v566 = vshrl.u32 %v255, 16
      %v568 = vrot.slane %v566, 4
      %v569 = vshll.u32 %v255, 16
      %v571 = vrot.slane %v569, 5
      %v572 = vor.u32 %v568, %v571
      %v573 = vrot.slane %v572, 4
      %v575 = vshll.u32 %v256, 16
      %v577 = vrot.slane %v575, 5
      %v578 = vsel %vm276, %v573, %v577
      %v579 = vshrl.u32 %v256, 16
      %v581 = vrot.slane %v579, 4
      %v582 = vor.u32 %v581, %v577
      %v583 = vrot.slane %v582, 4
      %v585 = vshll.u32 %v257, 16
      %v587 = vrot.slane %v585, 5
      %v588 = vsel %vm276, %v583, %v587
      %v590 = vshrl.u32 %v258, 16
      %v592 = vrot.slane %v590, 4
      %v593 = vshll.u32 %v258, 16
      %v595 = vrot.slane %v593, 5
      %v596 = vor.u32 %v592, %v595
      %v597 = vrot.slane %v596, 4
      %v599 = vshll.u32 %v259, 16
      %v601 = vrot.slane %v599, 5
      %v602 = vsel %vm276, %v597, %v601
      %v603 = vshrl.u32 %v259, 16
      %v605 = vrot.slane %v603, 4
      %v606 = vor.u32 %v605, %v601
      %v607 = vrot.slane %v606, 4
      %v609 = vshll.u32 %v260, 16
      %v611 = vrot.slane %v609, 5
      %v612 = vsel %vm276, %v607, %v611
      %v614 = vshrl.u32 %v261, 16
      %v616 = vrot.slane %v614, 4
      %v617 = vshll.u32 %v261, 16
      %v619 = vrot.slane %v617, 5
      %v620 = vor.u32 %v616, %v619
      %v621 = vrot.slane %v620, 4
      %v623 = vshll.u32 %v262, 16
      %v625 = vrot.slane %v623, 5
      %v626 = vsel %vm276, %v621, %v625
      %v627 = vshrl.u32 %v262, 16
      %v629 = vrot.slane %v627, 4
      %v630 = vor.u32 %v629, %v625
      %v631 = vrot.slane %v630, 4
      %v633 = vshll.u32 %v263, 16
      %v635 = vrot.slane %v633, 5
      %v636 = vsel %vm276, %v631, %v635
      %v638 = vshrl.u32 %v264, 16
      %v640 = vrot.slane %v638, 4
      %v641 = vshll.u32 %v264, 16
      %v643 = vrot.slane %v641, 5
      %v644 = vor.u32 %v640, %v643
      %v645 = vrot.slane %v644, 4
      %v647 = vshll.u32 %v265, 16
      %v649 = vrot.slane %v647, 5
      %v650 = vsel %vm276, %v645, %v649
      %v651 = vshrl.u32 %v265, 16
      %v653 = vrot.slane %v651, 4
      %v654 = vor.u32 %v653, %v649
      %v655 = vrot.slane %v654, 4
      %v657 = vshll.u32 %v266, 16
      %v659 = vrot.slane %v657, 5
      %v660 = vsel %vm276, %v655, %v659
      %s661 = scalar_lea.vmem %s1, 2
      %v662 = vld [vmem:[%s661] sm:$0x3]
      %v663 = vunpack.c.l.b16 %v290
      %v664 = vunpack.c.l.b16 %v300
      %v665 = vunpack.c.l.b16 %v314
      %v666 = vunpack.c.l.b16 %v324
      %v667 = vunpack.c.l.b16 %v338
      %v668 = vunpack.c.l.b16 %v348
      %v669 = vunpack.c.l.b16 %v362
      %v670 = vunpack.c.l.b16 %v372
      %v671 = vunpack.c.l.b16 %v386
      %v672 = vunpack.c.l.b16 %v396
      %v673 = vunpack.c.l.b16 %v410
      %v674 = vunpack.c.l.b16 %v420
      %v675 = vunpack.c.l.b16 %v434
      %v676 = vunpack.c.l.b16 %v444
      %v677 = vunpack.c.l.b16 %v458
      %v678 = vunpack.c.l.b16 %v468
      %v679 = vunpack.c.l.b16 %v482
      %v680 = vunpack.c.l.b16 %v492
      %v681 = vunpack.c.l.b16 %v506
      %v682 = vunpack.c.l.b16 %v516
      %v683 = vunpack.c.l.b16 %v530
      %v684 = vunpack.c.l.b16 %v540
      %v685 = vunpack.c.l.b16 %v554
      %v686 = vunpack.c.l.b16 %v564
      %v687 = vunpack.c.l.b16 %v578
      %v688 = vunpack.c.l.b16 %v588
      %v689 = vunpack.c.l.b16 %v602
      %v690 = vunpack.c.l.b16 %v612
      %v691 = vunpack.c.l.b16 %v626
      %v692 = vunpack.c.l.b16 %v636
      %v693 = vunpack.c.l.b16 %v650
      %v694 = vunpack.c.l.b16 %v660
      %v695 = vpack.c.b16 %v664, %v663
      %v696 = vpack.c.b16 %v666, %v665
      %v697 = vpack.c.b16 %v668, %v667
      %v698 = vpack.c.b16 %v670, %v669
      %v699 = vpack.c.b16 %v672, %v671
      %v700 = vpack.c.b16 %v674, %v673
      %v701 = vpack.c.b16 %v676, %v675
      %v702 = vpack.c.b16 %v678, %v677
      %v703 = vpack.c.b16 %v680, %v679
      %v704 = vpack.c.b16 %v682, %v681
      %v705 = vpack.c.b16 %v684, %v683
      %v706 = vpack.c.b16 %v686, %v685
      %v707 = vpack.c.b16 %v688, %v687
      %v708 = vpack.c.b16 %v690, %v689
      %v709 = vpack.c.b16 %v692, %v691
      %v710 = vpack.c.b16 %v694, %v693
      %vm711 = vcmask 31744
      %v713 = vsel %vm711, %v695, 0
      %v716 = vsel %vm711, %v696, 0
      %v719 = vsel %vm711, %v697, 0
      %v722 = vsel %vm711, %v698, 0
      %v725 = vsel %vm711, %v699, 0
      %v728 = vsel %vm711, %v700, 0
      %v731 = vsel %vm711, %v701, 0
      %v734 = vsel %vm711, %v702, 0
      %v737 = vsel %vm711, %v703, 0
      %v740 = vsel %vm711, %v704, 0
      %v743 = vsel %vm711, %v705, 0
      %v746 = vsel %vm711, %v706, 0
      %v749 = vsel %vm711, %v707, 0
      %v752 = vsel %vm711, %v708, 0
      %v755 = vsel %vm711, %v709, 0
      %v758 = vsel %vm711, %v710, 0
      %vm760 = vcmask 1041408
      %v762 = vsel %vm760, %v662, 0
      %764 = vmatprep.subr.bf16.mxu0 0
      %765 = vmatpush1.bf16.msra.mxu0 %v762
      %766 = vmatprep.subr.bf16.mxu0 0
      %767 = vmatpush1.bf16.msra.mxu0 0
      %768 = vmatprep.subr.bf16.mxu0 0
      %769 = vmatpush1.bf16.msra.mxu0 0
      %770 = vmatprep.subr.bf16.mxu0 0
      %771 = vmatpush1.bf16.msra.mxu0 0
      %772 = vmatprep.subr.bf16.mxu0 0
      %773 = vmatpush1.bf16.msra.mxu0 0
      %774 = vmatprep.subr.bf16.mxu0 0
      %775 = vmatpush1.bf16.msra.mxu0 0
      %776 = vmatprep.subr.bf16.mxu0 0
      %777 = vmatpush1.bf16.msra.mxu0 0
      %778 = vmatprep.subr.bf16.mxu0 0
      %779 = vmatpush1.bf16.msra.mxu0 0
      %780 = vmatprep.subr.bf16.mxu0 0
      %781 = vmatpush1.bf16.msra.mxu0 0
      %782 = vmatprep.subr.bf16.mxu0 0
      %783 = vmatpush1.bf16.msra.mxu0 0
      %784 = vmatprep.subr.bf16.mxu0 0
      %785 = vmatpush1.bf16.msra.mxu0 0
      %786 = vmatprep.subr.bf16.mxu0 0
      %787 = vmatpush1.bf16.msra.mxu0 0
      %788 = vmatprep.subr.bf16.mxu0 0
      %789 = vmatpush1.bf16.msra.mxu0 0
      %790 = vmatprep.subr.bf16.mxu0 0
      %791 = vmatpush1.bf16.msra.mxu0 0
      %792 = vmatprep.subr.bf16.mxu0 0
      %793 = vmatpush1.bf16.msra.mxu0 0
      %794 = vmatprep.subr.bf16.mxu0 0
      %795 = vmatpush1.bf16.msra.mxu0 0
      %796 = vmatprep.mubr.bf16.mxu0 0
      %797 = vmatmul.mubr.bf16.gmra.mrb[0].mxu0 %v713
      %v798 = vpop.f32.mrb[0].mxu0
      %v799 = vadd.f32 0.0, %v798
      %v800 = vpop.f32.mrb[0].mxu0
      %v801 = vpop.f32.mrb[0].mxu0
      %v802 = vadd.f32 0.0, %v801
      %v803 = vpop.f32.mrb[0].mxu0
      %804 = vmatprep.mubr.bf16.mxu0 0
      %805 = vmatmul.mubr.bf16.gmra.mrb[0].mxu0 %v716
      %v806 = vpop.f32.mrb[0].mxu0
      %v807 = vadd.f32 0.0, %v806
      %v808 = vpop.f32.mrb[0].mxu0
      %v809 = vpop.f32.mrb[0].mxu0
      %v810 = vadd.f32 0.0, %v809
      %v811 = vpop.f32.mrb[0].mxu0
      %812 = vmatprep.mubr.bf16.mxu0 0
      %813 = vmatmul.mubr.bf16.gmra.mrb[0].mxu0 %v719
      %v814 = vpop.f32.mrb[0].mxu0
      %v815 = vadd.f32 0.0, %v814
      %v816 = vpop.f32.mrb[0].mxu0
      %v817 = vpop.f32.mrb[0].mxu0
      %v818 = vadd.f32 0.0, %v817
      %v819 = vpop.f32.mrb[0].mxu0
      %820 = vmatprep.mubr.bf16.mxu0 0
      %821 = vmatmul.mubr.bf16.gmra.mrb[0].mxu0 %v722
      %v822 = vpop.f32.mrb[0].mxu0
      %v823 = vadd.f32 0.0, %v822
      %v824 = vpop.f32.mrb[0].mxu0
      %v825 = vpop.f32.mrb[0].mxu0
      %v826 = vadd.f32 0.0, %v825
      %v827 = vpop.f32.mrb[0].mxu0
      %828 = vmatprep.mubr.bf16.mxu0 0
      %829 = vmatmul.mubr.bf16.gmra.mrb[0].mxu0 %v725
      %v830 = vpop.f32.mrb[0].mxu0
      %v831 = vadd.f32 0.0, %v830
      %v832 = vpop.f32.mrb[0].mxu0
      %v833 = vpop.f32.mrb[0].mxu0
      %v834 = vadd.f32 0.0, %v833
      %v835 = vpop.f32.mrb[0].mxu0
      %836 = vmatprep.mubr.bf16.mxu0 0
      %837 = vmatmul.mubr.bf16.gmra.mrb[0].mxu0 %v728
      %v838 = vpop.f32.mrb[0].mxu0
      %v839 = vadd.f32 0.0, %v838
      %v840 = vpop.f32.mrb[0].mxu0
      %v841 = vpop.f32.mrb[0].mxu0
      %v842 = vadd.f32 0.0, %v841
      %v843 = vpop.f32.mrb[0].mxu0
      %844 = vmatprep.mubr.bf16.mxu0 0
      %845 = vmatmul.mubr.bf16.gmra.mrb[0].mxu0 %v731
      %v846 = vpop.f32.mrb[0].mxu0
      %v847 = vadd.f32 0.0, %v846
      %v848 = vpop.f32.mrb[0].mxu0
      %v849 = vpop.f32.mrb[0].mxu0
      %v850 = vadd.f32 0.0, %v849
      %v851 = vpop.f32.mrb[0].mxu0
      %852 = vmatprep.mubr.bf16.mxu0 0
      %853 = vmatmul.mubr.bf16.gmra.mrb[0].mxu0 %v734
      %v854 = vpop.f32.mrb[0].mxu0
      %v855 = vadd.f32 0.0, %v854
      %v856 = vpop.f32.mrb[0].mxu0
      %v857 = vpop.f32.mrb[0].mxu0
      %v858 = vadd.f32 0.0, %v857
      %v859 = vpop.f32.mrb[0].mxu0
      %860 = vmatprep.mubr.bf16.mxu0 0
      %861 = vmatmul.mubr.bf16.gmra.mrb[0].mxu0 %v737
      %v862 = vpop.f32.mrb[0].mxu0
      %v863 = vadd.f32 0.0, %v862
      %v864 = vpop.f32.mrb[0].mxu0
      %v865 = vpop.f32.mrb[0].mxu0
      %v866 = vadd.f32 0.0, %v865
      %v867 = vpop.f32.mrb[0].mxu0
      %868 = vmatprep.mubr.bf16.mxu0 0
      %869 = vmatmul.mubr.bf16.gmra.mrb[0].mxu0 %v740
      %v870 = vpop.f32.mrb[0].mxu0
      %v871 = vadd.f32 0.0, %v870
      %v872 = vpop.f32.mrb[0].mxu0
      %v873 = vpop.f32.mrb[0].mxu0
      %v874 = vadd.f32 0.0, %v873
      %v875 = vpop.f32.mrb[0].mxu0
      %876 = vmatprep.mubr.bf16.mxu0 0
      %877 = vmatmul.mubr.bf16.gmra.mrb[0].mxu0 %v743
      %v878 = vpop.f32.mrb[0].mxu0
      %v879 = vadd.f32 0.0, %v878
      %v880 = vpop.f32.mrb[0].mxu0
      %v881 = vpop.f32.mrb[0].mxu0
      %v882 = vadd.f32 0.0, %v881
      %v883 = vpop.f32.mrb[0].mxu0
      %884 = vmatprep.mubr.bf16.mxu0 0
      %885 = vmatmul.mubr.bf16.gmra.mrb[0].mxu0 %v746
      %v886 = vpop.f32.mrb[0].mxu0
      %v887 = vadd.f32 0.0, %v886
      %v888 = vpop.f32.mrb[0].mxu0
      %v889 = vpop.f32.mrb[0].mxu0
      %v890 = vadd.f32 0.0, %v889
      %v891 = vpop.f32.mrb[0].mxu0
      %892 = vmatprep.mubr.bf16.mxu0 0
      %893 = vmatmul.mubr.bf16.gmra.mrb[0].mxu0 %v749
      %v894 = vpop.f32.mrb[0].mxu0
      %v895 = vadd.f32 0.0, %v894
      %v896 = vpop.f32.mrb[0].mxu0
      %v897 = vpop.f32.mrb[0].mxu0
      %v898 = vadd.f32 0.0, %v897
      %v899 = vpop.f32.mrb[0].mxu0
      %900 = vmatprep.mubr.bf16.mxu0 0
      %901 = vmatmul.mubr.bf16.gmra.mrb[0].mxu0 %v752
      %v902 = vpop.f32.mrb[0].mxu0
      %v903 = vadd.f32 0.0, %v902
      %v904 = vpop.f32.mrb[0].mxu0
      %v905 = vpop.f32.mrb[0].mxu0
      %v906 = vadd.f32 0.0, %v905
      %v907 = vpop.f32.mrb[0].mxu0
      %908 = vmatprep.mubr.bf16.mxu0 0
      %909 = vmatmul.mubr.bf16.gmra.mrb[0].mxu0 %v755
      %v910 = vpop.f32.mrb[0].mxu0
      %v911 = vadd.f32 0.0, %v910
      %v912 = vpop.f32.mrb[0].mxu0
      %v913 = vpop.f32.mrb[0].mxu0
      %v914 = vadd.f32 0.0, %v913
      %v915 = vpop.f32.mrb[0].mxu0
      %916 = vmatprep.mubr.bf16.mxu0 0
      %917 = vmatmul.mubr.bf16.gmra.mrb[0].mxu0 %v758
      %v918 = vpop.f32.mrb[0].mxu0
      %v919 = vadd.f32 0.0, %v918
      %v920 = vpop.f32.mrb[0].mxu0
      %v921 = vpop.f32.mrb[0].mxu0
      %v922 = vadd.f32 0.0, %v921
      %v923 = vpop.f32.mrb[0].mxu0
      %924 = vdwg.mxu0
      %v957 = vunpack.c.l.b16 %v219
      %v958 = vunpack.c.l.b16 %v220
      %v959 = vunpack.c.l.b16 %v222
      %v960 = vunpack.c.l.b16 %v223
      %v961 = vunpack.c.l.b16 %v225
      %v962 = vunpack.c.l.b16 %v226
      %v963 = vunpack.c.l.b16 %v228
      %v964 = vunpack.c.l.b16 %v229
      %v965 = vunpack.c.l.b16 %v231
      %v966 = vunpack.c.l.b16 %v232
      %v967 = vunpack.c.l.b16 %v234
      %v968 = vunpack.c.l.b16 %v235
      %v969 = vunpack.c.l.b16 %v237
      %v970 = vunpack.c.l.b16 %v238
      %v971 = vunpack.c.l.b16 %v240
      %v972 = vunpack.c.l.b16 %v241
      %v973 = vunpack.c.l.b16 %v243
      %v974 = vunpack.c.l.b16 %v244
      %v975 = vunpack.c.l.b16 %v246
      %v976 = vunpack.c.l.b16 %v247
      %v977 = vunpack.c.l.b16 %v249
      %v978 = vunpack.c.l.b16 %v250
      %v979 = vunpack.c.l.b16 %v252
      %v980 = vunpack.c.l.b16 %v253
      %v981 = vunpack.c.l.b16 %v255
      %v982 = vunpack.c.l.b16 %v256
      %v983 = vunpack.c.l.b16 %v258
      %v984 = vunpack.c.l.b16 %v259
      %v985 = vunpack.c.l.b16 %v261
      %v986 = vunpack.c.l.b16 %v262
      %v987 = vunpack.c.l.b16 %v264
      %v988 = vunpack.c.l.b16 %v265
      %v989 = vpack.c.b16 %v958, %v957
      %v990 = vpack.c.b16 %v960, %v959
      %v991 = vpack.c.b16 %v962, %v961
      %v992 = vpack.c.b16 %v964, %v963
      %v993 = vpack.c.b16 %v966, %v965
      %v994 = vpack.c.b16 %v968, %v967
      %v995 = vpack.c.b16 %v970, %v969
      %v996 = vpack.c.b16 %v972, %v971
      %v997 = vpack.c.b16 %v974, %v973
      %v998 = vpack.c.b16 %v976, %v975
      %v999 = vpack.c.b16 %v978, %v977
      %v1000 = vpack.c.b16 %v980, %v979
      %v1001 = vpack.c.b16 %v982, %v981
      %v1002 = vpack.c.b16 %v984, %v983
      %v1003 = vpack.c.b16 %v986, %v985
      %v1004 = vpack.c.b16 %v988, %v987
      %v1006 = vsel %vm711, %v989, 0
      %v1009 = vsel %vm711, %v990, 0
      %v1012 = vsel %vm711, %v991, 0
      %v1015 = vsel %vm711, %v992, 0
      %v1018 = vsel %vm711, %v993, 0
      %v1021 = vsel %vm711, %v994, 0
      %v1024 = vsel %vm711, %v995, 0
      %v1027 = vsel %vm711, %v996, 0
      %v1030 = vsel %vm711, %v997, 0
      %v1033 = vsel %vm711, %v998, 0
      %v1036 = vsel %vm711, %v999, 0
      %v1039 = vsel %vm711, %v1000, 0
      %v1042 = vsel %vm711, %v1001, 0
      %v1045 = vsel %vm711, %v1002, 0
      %v1048 = vsel %vm711, %v1003, 0
      %v1051 = vsel %vm711, %v1004, 0
      %v1054 = vsel %vm760, %v273, 0
      %1056 = vmatprep.subr.bf16.mxu0 0
      %1057 = vmatpush1.bf16.msra.mxu0 %v1054
      %1058 = vmatprep.subr.bf16.mxu0 0
      %1059 = vmatpush1.bf16.msra.mxu0 0
      %1060 = vmatprep.subr.bf16.mxu0 0
      %1061 = vmatpush1.bf16.msra.mxu0 0
      %1062 = vmatprep.subr.bf16.mxu0 0
      %1063 = vmatpush1.bf16.msra.mxu0 0
      %1064 = vmatprep.subr.bf16.mxu0 0
      %1065 = vmatpush1.bf16.msra.mxu0 0
      %1066 = vmatprep.subr.bf16.mxu0 0
      %1067 = vmatpush1.bf16.msra.mxu0 0
      %1068 = vmatprep.subr.bf16.mxu0 0
      %1069 = vmatpush1.bf16.msra.mxu0 0
      %1070 = vmatprep.subr.bf16.mxu0 0
      %1071 = vmatpush1.bf16.msra.mxu0 0
      %1072 = vmatprep.subr.bf16.mxu0 0
      %1073 = vmatpush1.bf16.msra.mxu0 0
      %1074 = vmatprep.subr.bf16.mxu0 0
      %1075 = vmatpush1.bf16.msra.mxu0 0
      %1076 = vmatprep.subr.bf16.mxu0 0
      %1077 = vmatpush1.bf16.msra.mxu0 0
      %1078 = vmatprep.subr.bf16.mxu0 0
      %1079 = vmatpush1.bf16.msra.mxu0 0
      %1080 = vmatprep.subr.bf16.mxu0 0
      %1081 = vmatpush1.bf16.msra.mxu0 0
      %1082 = vmatprep.subr.bf16.mxu0 0
      %1083 = vmatpush1.bf16.msra.mxu0 0
      %1084 = vmatprep.subr.bf16.mxu0 0
      %1085 = vmatpush1.bf16.msra.mxu0 0
      %1086 = vmatprep.subr.bf16.mxu0 0
      %1087 = vmatpush1.bf16.msra.mxu0 0
      %1088 = vmatprep.mubr.bf16.mxu0 0
      %1089 = vmatmul.mubr.bf16.gmra.mrb[0].mxu0 %v1006
      %v1090 = vpop.f32.mrb[0].mxu0
      %v1091 = vadd.f32 %v799, %v1090
      %v1092 = vpop.f32.mrb[0].mxu0
      %v1093 = vpop.f32.mrb[0].mxu0
      %v1094 = vadd.f32 %v802, %v1093
      %v1095 = vpop.f32.mrb[0].mxu0
      %1096 = vmatprep.mubr.bf16.mxu0 0
      %1097 = vmatmul.mubr.bf16.gmra.mrb[0].mxu0 %v1009
      %v1098 = vpop.f32.mrb[0].mxu0
      %v1099 = vadd.f32 %v807, %v1098
      %v1100 = vpop.f32.mrb[0].mxu0
      %v1101 = vpop.f32.mrb[0].mxu0
      %v1102 = vadd.f32 %v810, %v1101
      %v1103 = vpop.f32.mrb[0].mxu0
      %1104 = vmatprep.mubr.bf16.mxu0 0
      %1105 = vmatmul.mubr.bf16.gmra.mrb[0].mxu0 %v1012
      %v1106 = vpop.f32.mrb[0].mxu0
      %v1107 = vadd.f32 %v815, %v1106
      %v1108 = vpop.f32.mrb[0].mxu0
      %v1109 = vpop.f32.mrb[0].mxu0
      %v1110 = vadd.f32 %v818, %v1109
      %v1111 = vpop.f32.mrb[0].mxu0
      %1112 = vmatprep.mubr.bf16.mxu0 0
      %1113 = vmatmul.mubr.bf16.gmra.mrb[0].mxu0 %v1015
      %v1114 = vpop.f32.mrb[0].mxu0
      %v1115 = vadd.f32 %v823, %v1114
      %v1116 = vpop.f32.mrb[0].mxu0
      %v1117 = vpop.f32.mrb[0].mxu0
      %v1118 = vadd.f32 %v826, %v1117
      %v1119 = vpop.f32.mrb[0].mxu0
      %1120 = vmatprep.mubr.bf16.mxu0 0
      %1121 = vmatmul.mubr.bf16.gmra.mrb[0].mxu0 %v1018
      %v1122 = vpop.f32.mrb[0].mxu0
      %v1123 = vadd.f32 %v831, %v1122
      %v1124 = vpop.f32.mrb[0].mxu0
      %v1125 = vpop.f32.mrb[0].mxu0
      %v1126 = vadd.f32 %v834, %v1125
      %v1127 = vpop.f32.mrb[0].mxu0
      %1128 = vmatprep.mubr.bf16.mxu0 0
      %1129 = vmatmul.mubr.bf16.gmra.mrb[0].mxu0 %v1021
      %v1130 = vpop.f32.mrb[0].mxu0
      %v1131 = vadd.f32 %v839, %v1130
      %v1132 = vpop.f32.mrb[0].mxu0
      %v1133 = vpop.f32.mrb[0].mxu0
      %v1134 = vadd.f32 %v842, %v1133
      %v1135 = vpop.f32.mrb[0].mxu0
      %1136 = vmatprep.mubr.bf16.mxu0 0
      %1137 = vmatmul.mubr.bf16.gmra.mrb[0].mxu0 %v1024
      %v1138 = vpop.f32.mrb[0].mxu0
      %v1139 = vadd.f32 %v847, %v1138
      %v1140 = vpop.f32.mrb[0].mxu0
      %v1141 = vpop.f32.mrb[0].mxu0
      %v1142 = vadd.f32 %v850, %v1141
      %v1143 = vpop.f32.mrb[0].mxu0
      %1144 = vmatprep.mubr.bf16.mxu0 0
      %1145 = vmatmul.mubr.bf16.gmra.mrb[0].mxu0 %v1027
      %v1146 = vpop.f32.mrb[0].mxu0
      %v1147 = vadd.f32 %v855, %v1146
      %v1148 = vpop.f32.mrb[0].mxu0
      %v1149 = vpop.f32.mrb[0].mxu0
      %v1150 = vadd.f32 %v858, %v1149
      %v1151 = vpop.f32.mrb[0].mxu0
      %1152 = vmatprep.mubr.bf16.mxu0 0
      %1153 = vmatmul.mubr.bf16.gmra.mrb[0].mxu0 %v1030
      %v1154 = vpop.f32.mrb[0].mxu0
      %v1155 = vadd.f32 %v863, %v1154
      %v1156 = vpop.f32.mrb[0].mxu0
      %v1157 = vpop.f32.mrb[0].mxu0
      %v1158 = vadd.f32 %v866, %v1157
      %v1159 = vpop.f32.mrb[0].mxu0
      %1160 = vmatprep.mubr.bf16.mxu0 0
      %1161 = vmatmul.mubr.bf16.gmra.mrb[0].mxu0 %v1033
      %v1162 = vpop.f32.mrb[0].mxu0
      %v1163 = vadd.f32 %v871, %v1162
      %v1164 = vpop.f32.mrb[0].mxu0
      %v1165 = vpop.f32.mrb[0].mxu0
      %v1166 = vadd.f32 %v874, %v1165
      %v1167 = vpop.f32.mrb[0].mxu0
      %1168 = vmatprep.mubr.bf16.mxu0 0
      %1169 = vmatmul.mubr.bf16.gmra.mrb[0].mxu0 %v1036
      %v1170 = vpop.f32.mrb[0].mxu0
      %v1171 = vadd.f32 %v879, %v1170
      %v1172 = vpop.f32.mrb[0].mxu0
      %v1173 = vpop.f32.mrb[0].mxu0
      %v1174 = vadd.f32 %v882, %v1173
      %v1175 = vpop.f32.mrb[0].mxu0
      %1176 = vmatprep.mubr.bf16.mxu0 0
      %1177 = vmatmul.mubr.bf16.gmra.mrb[0].mxu0 %v1039
      %v1178 = vpop.f32.mrb[0].mxu0
      %v1179 = vadd.f32 %v887, %v1178
      %v1180 = vpop.f32.mrb[0].mxu0
      %v1181 = vpop.f32.mrb[0].mxu0
      %v1182 = vadd.f32 %v890, %v1181
      %v1183 = vpop.f32.mrb[0].mxu0
      %1184 = vmatprep.mubr.bf16.mxu0 0
      %1185 = vmatmul.mubr.bf16.gmra.mrb[0].mxu0 %v1042
      %v1186 = vpop.f32.mrb[0].mxu0
      %v1187 = vadd.f32 %v895, %v1186
      %v1188 = vpop.f32.mrb[0].mxu0
      %v1189 = vpop.f32.mrb[0].mxu0
      %v1190 = vadd.f32 %v898, %v1189
      %v1191 = vpop.f32.mrb[0].mxu0
      %1192 = vmatprep.mubr.bf16.mxu0 0
      %1193 = vmatmul.mubr.bf16.gmra.mrb[0].mxu0 %v1045
      %v1194 = vpop.f32.mrb[0].mxu0
      %v1195 = vadd.f32 %v903, %v1194
      %v1196 = vpop.f32.mrb[0].mxu0
      %v1197 = vpop.f32.mrb[0].mxu0
      %v1198 = vadd.f32 %v906, %v1197
      %v1199 = vpop.f32.mrb[0].mxu0
      %1200 = vmatprep.mubr.bf16.mxu0 0
      %1201 = vmatmul.mubr.bf16.gmra.mrb[0].mxu0 %v1048
      %v1202 = vpop.f32.mrb[0].mxu0
      %v1203 = vadd.f32 %v911, %v1202
      %v1204 = vpop.f32.mrb[0].mxu0
      %v1205 = vpop.f32.mrb[0].mxu0
      %v1206 = vadd.f32 %v914, %v1205
      %v1207 = vpop.f32.mrb[0].mxu0
      %1208 = vmatprep.mubr.bf16.mxu0 0
      %1209 = vmatmul.mubr.bf16.gmra.mrb[0].mxu0 %v1051
      %v1210 = vpop.f32.mrb[0].mxu0
      %v1211 = vadd.f32 %v919, %v1210
      %v1212 = vpop.f32.mrb[0].mxu0
      %v1213 = vpop.f32.mrb[0].mxu0
      %v1214 = vadd.f32 %v922, %v1213
      %v1215 = vpop.f32.mrb[0].mxu0
      %1216 = vdwg.mxu0
      %vm1233 = vcmask 1042432
      %vm1234 = vcmask 1046532
      %vm1235 = vmor %vm1233, %vm1234
      %v1236 = vrot.slane %v219, 5
      %v1237 = vrot.slane %v1236, 4
      %v1238 = vrot.slane %v220, 5
      %v1239 = vsel %vm1235, %v1237, %v1238
      %v1240 = vrot.slane %v1238, 4
      %v1241 = vrot.slane %v221, 5
      %v1242 = vsel %vm1235, %v1240, %v1241
      %v1243 = vrot.slane %v222, 5
      %v1244 = vrot.slane %v1243, 4
      %v1245 = vrot.slane %v223, 5
      %v1246 = vsel %vm1235, %v1244, %v1245
      %v1247 = vrot.slane %v1245, 4
      %v1248 = vrot.slane %v224, 5
      %v1249 = vsel %vm1235, %v1247, %v1248
      %v1250 = vrot.slane %v225, 5
      %v1251 = vrot.slane %v1250, 4
      %v1252 = vrot.slane %v226, 5
      %v1253 = vsel %vm1235, %v1251, %v1252
      %v1254 = vrot.slane %v1252, 4
      %v1255 = vrot.slane %v227, 5
      %v1256 = vsel %vm1235, %v1254, %v1255
      %v1257 = vrot.slane %v228, 5
      %v1258 = vrot.slane %v1257, 4
      %v1259 = vrot.slane %v229, 5
      %v1260 = vsel %vm1235, %v1258, %v1259
      %v1261 = vrot.slane %v1259, 4
      %v1262 = vrot.slane %v230, 5
      %v1263 = vsel %vm1235, %v1261, %v1262
      %v1264 = vrot.slane %v231, 5
      %v1265 = vrot.slane %v1264, 4
      %v1266 = vrot.slane %v232, 5
      %v1267 = vsel %vm1235, %v1265, %v1266
      %v1268 = vrot.slane %v1266, 4
      %v1269 = vrot.slane %v233, 5
      %v1270 = vsel %vm1235, %v1268, %v1269
      %v1271 = vrot.slane %v234, 5
      %v1272 = vrot.slane %v1271, 4
      %v1273 = vrot.slane %v235, 5
      %v1274 = vsel %vm1235, %v1272, %v1273
      %v1275 = vrot.slane %v1273, 4
      %v1276 = vrot.slane %v236, 5
      %v1277 = vsel %vm1235, %v1275, %v1276
      %v1278 = vrot.slane %v237, 5
      %v1279 = vrot.slane %v1278, 4
      %v1280 = vrot.slane %v238, 5
      %v1281 = vsel %vm1235, %v1279, %v1280
      %v1282 = vrot.slane %v1280, 4
      %v1283 = vrot.slane %v239, 5
      %v1284 = vsel %vm1235, %v1282, %v1283
      %v1285 = vrot.slane %v240, 5
      %v1286 = vrot.slane %v1285, 4
      %v1287 = vrot.slane %v241, 5
      %v1288 = vsel %vm1235, %v1286, %v1287
      %v1289 = vrot.slane %v1287, 4
      %v1290 = vrot.slane %v242, 5
      %v1291 = vsel %vm1235, %v1289, %v1290
      %v1292 = vrot.slane %v243, 5
      %v1293 = vrot.slane %v1292, 4
      %v1294 = vrot.slane %v244, 5
      %v1295 = vsel %vm1235, %v1293, %v1294
      %v1296 = vrot.slane %v1294, 4
      %v1297 = vrot.slane %v245, 5
      %v1298 = vsel %vm1235, %v1296, %v1297
      %v1299 = vrot.slane %v246, 5
      %v1300 = vrot.slane %v1299, 4
      %v1301 = vrot.slane %v247, 5
      %v1302 = vsel %vm1235, %v1300, %v1301
      %v1303 = vrot.slane %v1301, 4
      %v1304 = vrot.slane %v248, 5
      %v1305 = vsel %vm1235, %v1303, %v1304
      %v1306 = vrot.slane %v249, 5
      %v1307 = vrot.slane %v1306, 4
      %v1308 = vrot.slane %v250, 5
      %v1309 = vsel %vm1235, %v1307, %v1308
      %v1310 = vrot.slane %v1308, 4
      %v1311 = vrot.slane %v251, 5
      %v1312 = vsel %vm1235, %v1310, %v1311
      %v1313 = vrot.slane %v252, 5
      %v1314 = vrot.slane %v1313, 4
      %v1315 = vrot.slane %v253, 5
      %v1316 = vsel %vm1235, %v1314, %v1315
      %v1317 = vrot.slane %v1315, 4
      %v1318 = vrot.slane %v254, 5
      %v1319 = vsel %vm1235, %v1317, %v1318
      %v1320 = vrot.slane %v255, 5
      %v1321 = vrot.slane %v1320, 4
      %v1322 = vrot.slane %v256, 5
      %v1323 = vsel %vm1235, %v1321, %v1322
      %v1324 = vrot.slane %v1322, 4
      %v1325 = vrot.slane %v257, 5
      %v1326 = vsel %vm1235, %v1324, %v1325
      %v1327 = vrot.slane %v258, 5
      %v1328 = vrot.slane %v1327, 4
      %v1329 = vrot.slane %v259, 5
      %v1330 = vsel %vm1235, %v1328, %v1329
      %v1331 = vrot.slane %v1329, 4
      %v1332 = vrot.slane %v260, 5
      %v1333 = vsel %vm1235, %v1331, %v1332
      %v1334 = vrot.slane %v261, 5
      %v1335 = vrot.slane %v1334, 4
      %v1336 = vrot.slane %v262, 5
      %v1337 = vsel %vm1235, %v1335, %v1336
      %v1338 = vrot.slane %v1336, 4
      %v1339 = vrot.slane %v263, 5
      %v1340 = vsel %vm1235, %v1338, %v1339
      %v1341 = vrot.slane %v264, 5
      %v1342 = vrot.slane %v1341, 4
      %v1343 = vrot.slane %v265, 5
      %v1344 = vsel %vm1235, %v1342, %v1343
      %v1345 = vrot.slane %v1343, 4
      %v1346 = vrot.slane %v266, 5
      %v1347 = vsel %vm1235, %v1345, %v1346
      %s1348 = scalar_lea.vmem %s1, 4
      %v1349 = vld [vmem:[%s1348] sm:$0x3]
      %v1350 = vunpack.c.l.b16 %v1239
      %v1351 = vunpack.c.l.b16 %v1242
      %v1352 = vunpack.c.l.b16 %v1246
      %v1353 = vunpack.c.l.b16 %v1249
      %v1354 = vunpack.c.l.b16 %v1253
      %v1355 = vunpack.c.l.b16 %v1256
      %v1356 = vunpack.c.l.b16 %v1260
      %v1357 = vunpack.c.l.b16 %v1263
      %v1358 = vunpack.c.l.b16 %v1267
      %v1359 = vunpack.c.l.b16 %v1270
      %v1360 = vunpack.c.l.b16 %v1274
      %v1361 = vunpack.c.l.b16 %v1277
      %v1362 = vunpack.c.l.b16 %v1281
      %v1363 = vunpack.c.l.b16 %v1284
      %v1364 = vunpack.c.l.b16 %v1288
      %v1365 = vunpack.c.l.b16 %v1291
      %v1366 = vunpack.c.l.b16 %v1295
      %v1367 = vunpack.c.l.b16 %v1298
      %v1368 = vunpack.c.l.b16 %v1302
      %v1369 = vunpack.c.l.b16 %v1305
      %v1370 = vunpack.c.l.b16 %v1309
      %v1371 = vunpack.c.l.b16 %v1312
      %v1372 = vunpack.c.l.b16 %v1316
      %v1373 = vunpack.c.l.b16 %v1319
      %v1374 = vunpack.c.l.b16 %v1323
      %v1375 = vunpack.c.l.b16 %v1326
      %v1376 = vunpack.c.l.b16 %v1330
      %v1377 = vunpack.c.l.b16 %v1333
      %v1378 = vunpack.c.l.b16 %v1337
      %v1379 = vunpack.c.l.b16 %v1340
      %v1380 = vunpack.c.l.b16 %v1344
      %v1381 = vunpack.c.l.b16 %v1347
      %v1382 = vpack.c.b16 %v1351, %v1350
      %v1383 = vpack.c.b16 %v1353, %v1352
      %v1384 = vpack.c.b16 %v1355, %v1354
      %v1385 = vpack.c.b16 %v1357, %v1356
      %v1386 = vpack.c.b16 %v1359, %v1358
      %v1387 = vpack.c.b16 %v1361, %v1360
      %v1388 = vpack.c.b16 %v1363, %v1362
      %v1389 = vpack.c.b16 %v1365, %v1364
      %v1390 = vpack.c.b16 %v1367, %v1366
      %v1391 = vpack.c.b16 %v1369, %v1368
      %v1392 = vpack.c.b16 %v1371, %v1370
      %v1393 = vpack.c.b16 %v1373, %v1372
      %v1394 = vpack.c.b16 %v1375, %v1374
      %v1395 = vpack.c.b16 %v1377, %v1376
      %v1396 = vpack.c.b16 %v1379, %v1378
      %v1397 = vpack.c.b16 %v1381, %v1380
      %v1399 = vsel %vm711, %v1382, 0
      %v1402 = vsel %vm711, %v1383, 0
      %v1405 = vsel %vm711, %v1384, 0
      %v1408 = vsel %vm711, %v1385, 0
      %v1411 = vsel %vm711, %v1386, 0
      %v1414 = vsel %vm711, %v1387, 0
      %v1417 = vsel %vm711, %v1388, 0
      %v1420 = vsel %vm711, %v1389, 0
      %v1423 = vsel %vm711, %v1390, 0
      %v1426 = vsel %vm711, %v1391, 0
      %v1429 = vsel %vm711, %v1392, 0
      %v1432 = vsel %vm711, %v1393, 0
      %v1435 = vsel %vm711, %v1394, 0
      %v1438 = vsel %vm711, %v1395, 0
      %v1441 = vsel %vm711, %v1396, 0
      %v1444 = vsel %vm711, %v1397, 0
      %v1447 = vsel %vm760, %v1349, 0
      %1449 = vmatprep.subr.bf16.mxu0 0
      %1450 = vmatpush1.bf16.msra.mxu0 %v1447
      %1451 = vmatprep.subr.bf16.mxu0 0
      %1452 = vmatpush1.bf16.msra.mxu0 0
      %1453 = vmatprep.subr.bf16.mxu0 0
      %1454 = vmatpush1.bf16.msra.mxu0 0
      %1455 = vmatprep.subr.bf16.mxu0 0
      %1456 = vmatpush1.bf16.msra.mxu0 0
      %1457 = vmatprep.subr.bf16.mxu0 0
      %1458 = vmatpush1.bf16.msra.mxu0 0
      %1459 = vmatprep.subr.bf16.mxu0 0
      %1460 = vmatpush1.bf16.msra.mxu0 0
      %1461 = vmatprep.subr.bf16.mxu0 0
      %1462 = vmatpush1.bf16.msra.mxu0 0
      %1463 = vmatprep.subr.bf16.mxu0 0
      %1464 = vmatpush1.bf16.msra.mxu0 0
      %1465 = vmatprep.subr.bf16.mxu0 0
      %1466 = vmatpush1.bf16.msra.mxu0 0
      %1467 = vmatprep.subr.bf16.mxu0 0
      %1468 = vmatpush1.bf16.msra.mxu0 0
      %1469 = vmatprep.subr.bf16.mxu0 0
      %1470 = vmatpush1.bf16.msra.mxu0 0
      %1471 = vmatprep.subr.bf16.mxu0 0
      %1472 = vmatpush1.bf16.msra.mxu0 0
      %1473 = vmatprep.subr.bf16.mxu0 0
      %1474 = vmatpush1.bf16.msra.mxu0 0
      %1475 = vmatprep.subr.bf16.mxu0 0
      %1476 = vmatpush1.bf16.msra.mxu0 0
      %1477 = vmatprep.subr.bf16.mxu0 0
      %1478 = vmatpush1.bf16.msra.mxu0 0
      %1479 = vmatprep.subr.bf16.mxu0 0
      %1480 = vmatpush1.bf16.msra.mxu0 0
      %1481 = vmatprep.mubr.bf16.mxu0 0
      %1482 = vmatmul.mubr.bf16.gmra.mrb[0].mxu0 %v1399
      %v1483 = vpop.f32.mrb[0].mxu0
      %v1484 = vadd.f32 0.0, %v1483
      %v1485 = vpop.f32.mrb[0].mxu0
      %v1486 = vpop.f32.mrb[0].mxu0
      %v1487 = vadd.f32 0.0, %v1486
      %v1488 = vpop.f32.mrb[0].mxu0
      %1489 = vmatprep.mubr.bf16.mxu0 0
      %1490 = vmatmul.mubr.bf16.gmra.mrb[0].mxu0 %v1402
      %v1491 = vpop.f32.mrb[0].mxu0
      %v1492 = vadd.f32 0.0, %v1491
      %v1493 = vpop.f32.mrb[0].mxu0
      %v1494 = vpop.f32.mrb[0].mxu0
      %v1495 = vadd.f32 0.0, %v1494
      %v1496 = vpop.f32.mrb[0].mxu0
      %1497 = vmatprep.mubr.bf16.mxu0 0
      %1498 = vmatmul.mubr.bf16.gmra.mrb[0].mxu0 %v1405
      %v1499 = vpop.f32.mrb[0].mxu0
      %v1500 = vadd.f32 0.0, %v1499
      %v1501 = vpop.f32.mrb[0].mxu0
      %v1502 = vpop.f32.mrb[0].mxu0
      %v1503 = vadd.f32 0.0, %v1502
      %v1504 = vpop.f32.mrb[0].mxu0
      %1505 = vmatprep.mubr.bf16.mxu0 0
      %1506 = vmatmul.mubr.bf16.gmra.mrb[0].mxu0 %v1408
      %v1507 = vpop.f32.mrb[0].mxu0
      %v1508 = vadd.f32 0.0, %v1507
      %v1509 = vpop.f32.mrb[0].mxu0
      %v1510 = vpop.f32.mrb[0].mxu0
      %v1511 = vadd.f32 0.0, %v1510
      %v1512 = vpop.f32.mrb[0].mxu0
      %1513 = vmatprep.mubr.bf16.mxu0 0
      %1514 = vmatmul.mubr.bf16.gmra.mrb[0].mxu0 %v1411
      %v1515 = vpop.f32.mrb[0].mxu0
      %v1516 = vadd.f32 0.0, %v1515
      %v1517 = vpop.f32.mrb[0].mxu0
      %v1518 = vpop.f32.mrb[0].mxu0
      %v1519 = vadd.f32 0.0, %v1518
      %v1520 = vpop.f32.mrb[0].mxu0
      %1521 = vmatprep.mubr.bf16.mxu0 0
      %1522 = vmatmul.mubr.bf16.gmra.mrb[0].mxu0 %v1414
      %v1523 = vpop.f32.mrb[0].mxu0
      %v1524 = vadd.f32 0.0, %v1523
      %v1525 = vpop.f32.mrb[0].mxu0
      %v1526 = vpop.f32.mrb[0].mxu0
      %v1527 = vadd.f32 0.0, %v1526
      %v1528 = vpop.f32.mrb[0].mxu0
      %1529 = vmatprep.mubr.bf16.mxu0 0
      %1530 = vmatmul.mubr.bf16.gmra.mrb[0].mxu0 %v1417
      %v1531 = vpop.f32.mrb[0].mxu0
      %v1532 = vadd.f32 0.0, %v1531
      %v1533 = vpop.f32.mrb[0].mxu0
      %v1534 = vpop.f32.mrb[0].mxu0
      %v1535 = vadd.f32 0.0, %v1534
      %v1536 = vpop.f32.mrb[0].mxu0
      %1537 = vmatprep.mubr.bf16.mxu0 0
      %1538 = vmatmul.mubr.bf16.gmra.mrb[0].mxu0 %v1420
      %v1539 = vpop.f32.mrb[0].mxu0
      %v1540 = vadd.f32 0.0, %v1539
      %v1541 = vpop.f32.mrb[0].mxu0
      %v1542 = vpop.f32.mrb[0].mxu0
      %v1543 = vadd.f32 0.0, %v1542
      %v1544 = vpop.f32.mrb[0].mxu0
      %1545 = vmatprep.mubr.bf16.mxu0 0
      %1546 = vmatmul.mubr.bf16.gmra.mrb[0].mxu0 %v1423
      %v1547 = vpop.f32.mrb[0].mxu0
      %v1548 = vadd.f32 0.0, %v1547
      %v1549 = vpop.f32.mrb[0].mxu0
      %v1550 = vpop.f32.mrb[0].mxu0
      %v1551 = vadd.f32 0.0, %v1550
      %v1552 = vpop.f32.mrb[0].mxu0
      %1553 = vmatprep.mubr.bf16.mxu0 0
      %1554 = vmatmul.mubr.bf16.gmra.mrb[0].mxu0 %v1426
      %v1555 = vpop.f32.mrb[0].mxu0
      %v1556 = vadd.f32 0.0, %v1555
      %v1557 = vpop.f32.mrb[0].mxu0
      %v1558 = vpop.f32.mrb[0].mxu0
      %v1559 = vadd.f32 0.0, %v1558
      %v1560 = vpop.f32.mrb[0].mxu0
      %1561 = vmatprep.mubr.bf16.mxu0 0
      %1562 = vmatmul.mubr.bf16.gmra.mrb[0].mxu0 %v1429
      %v1563 = vpop.f32.mrb[0].mxu0
      %v1564 = vadd.f32 0.0, %v1563
      %v1565 = vpop.f32.mrb[0].mxu0
      %v1566 = vpop.f32.mrb[0].mxu0
      %v1567 = vadd.f32 0.0, %v1566
      %v1568 = vpop.f32.mrb[0].mxu0
      %1569 = vmatprep.mubr.bf16.mxu0 0
      %1570 = vmatmul.mubr.bf16.gmra.mrb[0].mxu0 %v1432
      %v1571 = vpop.f32.mrb[0].mxu0
      %v1572 = vadd.f32 0.0, %v1571
      %v1573 = vpop.f32.mrb[0].mxu0
      %v1574 = vpop.f32.mrb[0].mxu0
      %v1575 = vadd.f32 0.0, %v1574
      %v1576 = vpop.f32.mrb[0].mxu0
      %1577 = vmatprep.mubr.bf16.mxu0 0
      %1578 = vmatmul.mubr.bf16.gmra.mrb[0].mxu0 %v1435
      %v1579 = vpop.f32.mrb[0].mxu0
      %v1580 = vadd.f32 0.0, %v1579
      %v1581 = vpop.f32.mrb[0].mxu0
      %v1582 = vpop.f32.mrb[0].mxu0
      %v1583 = vadd.f32 0.0, %v1582
      %v1584 = vpop.f32.mrb[0].mxu0
      %1585 = vmatprep.mubr.bf16.mxu0 0
      %1586 = vmatmul.mubr.bf16.gmra.mrb[0].mxu0 %v1438
      %v1587 = vpop.f32.mrb[0].mxu0
      %v1588 = vadd.f32 0.0, %v1587
      %v1589 = vpop.f32.mrb[0].mxu0
      %v1590 = vpop.f32.mrb[0].mxu0
      %v1591 = vadd.f32 0.0, %v1590
      %v1592 = vpop.f32.mrb[0].mxu0
      %1593 = vmatprep.mubr.bf16.mxu0 0
      %1594 = vmatmul.mubr.bf16.gmra.mrb[0].mxu0 %v1441
      %v1595 = vpop.f32.mrb[0].mxu0
      %v1596 = vadd.f32 0.0, %v1595
      %v1597 = vpop.f32.mrb[0].mxu0
      %v1598 = vpop.f32.mrb[0].mxu0
      %v1599 = vadd.f32 0.0, %v1598
      %v1600 = vpop.f32.mrb[0].mxu0
      %1601 = vmatprep.mubr.bf16.mxu0 0
      %1602 = vmatmul.mubr.bf16.gmra.mrb[0].mxu0 %v1444
      %v1603 = vpop.f32.mrb[0].mxu0
      %v1604 = vadd.f32 0.0, %v1603
      %v1605 = vpop.f32.mrb[0].mxu0
      %v1606 = vpop.f32.mrb[0].mxu0
      %v1607 = vadd.f32 0.0, %v1606
      %v1608 = vpop.f32.mrb[0].mxu0
      %1609 = vdwg.mxu0
      %v1610 = vadd.f32 %v1091, %v1484
      %v1611 = vadd.f32 %v1094, %v1487
      %v1612 = vadd.f32 %v1099, %v1492
      %v1613 = vadd.f32 %v1102, %v1495
      %v1614 = vadd.f32 %v1107, %v1500
      %v1615 = vadd.f32 %v1110, %v1503
      %v1616 = vadd.f32 %v1115, %v1508
      %v1617 = vadd.f32 %v1118, %v1511
      %v1618 = vadd.f32 %v1123, %v1516
      %v1619 = vadd.f32 %v1126, %v1519
      %v1620 = vadd.f32 %v1131, %v1524
      %v1621 = vadd.f32 %v1134, %v1527
      %v1622 = vadd.f32 %v1139, %v1532
      %v1623 = vadd.f32 %v1142, %v1535
      %v1624 = vadd.f32 %v1147, %v1540
      %v1625 = vadd.f32 %v1150, %v1543
      %v1626 = vadd.f32 %v1155, %v1548
      %v1627 = vadd.f32 %v1158, %v1551
      %v1628 = vadd.f32 %v1163, %v1556
      %v1629 = vadd.f32 %v1166, %v1559
      %v1630 = vadd.f32 %v1171, %v1564
      %v1631 = vadd.f32 %v1174, %v1567
      %v1632 = vadd.f32 %v1179, %v1572
      %v1633 = vadd.f32 %v1182, %v1575
      %v1634 = vadd.f32 %v1187, %v1580
      %v1635 = vadd.f32 %v1190, %v1583
      %v1636 = vadd.f32 %v1195, %v1588
      %v1637 = vadd.f32 %v1198, %v1591
      %v1638 = vadd.f32 %v1203, %v1596
      %v1639 = vadd.f32 %v1206, %v1599
      %v1640 = vadd.f32 %v1211, %v1604
      %v1641 = vadd.f32 %v1214, %v1607
      %s1642 = scalar_lea.vmem %s1, 6
      %v1643 = vld [vmem:[%s1642] sm:$0x3]
      %v1646 = vunpack.c.l.b16 %v267
      %v1647 = vunpack.c.l.b16 %v268
      %v1648 = vpack.c.b16 %v1647, %v1646
      %v1650 = vsel %vm711, %v1648, 0
      %v1653 = vsel %vm760, %v1643, 0
      %1655 = vmatprep.subr.bf16.mxu0 0
      %1656 = vmatpush1.bf16.msra.mxu0 %v1653
      %1657 = vmatprep.subr.bf16.mxu0 0
      %1658 = vmatpush1.bf16.msra.mxu0 0
      %1659 = vmatprep.subr.bf16.mxu0 0
      %1660 = vmatpush1.bf16.msra.mxu0 0
      %1661 = vmatprep.subr.bf16.mxu0 0
      %1662 = vmatpush1.bf16.msra.mxu0 0
      %1663 = vmatprep.subr.bf16.mxu0 0
      %1664 = vmatpush1.bf16.msra.mxu0 0
      %1665 = vmatprep.subr.bf16.mxu0 0
      %1666 = vmatpush1.bf16.msra.mxu0 0
      %1667 = vmatprep.subr.bf16.mxu0 0
      %1668 = vmatpush1.bf16.msra.mxu0 0
      %1669 = vmatprep.subr.bf16.mxu0 0
      %1670 = vmatpush1.bf16.msra.mxu0 0
      %1671 = vmatprep.subr.bf16.mxu0 0
      %1672 = vmatpush1.bf16.msra.mxu0 0
      %1673 = vmatprep.subr.bf16.mxu0 0
      %1674 = vmatpush1.bf16.msra.mxu0 0
      %1675 = vmatprep.subr.bf16.mxu0 0
      %1676 = vmatpush1.bf16.msra.mxu0 0
      %1677 = vmatprep.subr.bf16.mxu0 0
      %1678 = vmatpush1.bf16.msra.mxu0 0
      %1679 = vmatprep.subr.bf16.mxu0 0
      %1680 = vmatpush1.bf16.msra.mxu0 0
      %1681 = vmatprep.subr.bf16.mxu0 0
      %1682 = vmatpush1.bf16.msra.mxu0 0
      %1683 = vmatprep.subr.bf16.mxu0 0
      %1684 = vmatpush1.bf16.msra.mxu0 0
      %1685 = vmatprep.subr.bf16.mxu0 0
      %1686 = vmatpush1.bf16.msra.mxu0 0
      %1687 = vmatprep.mubr.bf16.mxu0 0
      %1688 = vmatmul.mubr.bf16.gmra.mrb[0].mxu0 %v1009
      %v1689 = vpop.f32.mrb[0].mxu0
      %v1690 = vadd.f32 0.0, %v1689
      %v1691 = vpop.f32.mrb[0].mxu0
      %v1692 = vpop.f32.mrb[0].mxu0
      %v1693 = vadd.f32 0.0, %v1692
      %v1694 = vpop.f32.mrb[0].mxu0
      %1695 = vmatprep.mubr.bf16.mxu0 0
      %1696 = vmatmul.mubr.bf16.gmra.mrb[0].mxu0 %v1012
      %v1697 = vpop.f32.mrb[0].mxu0
      %v1698 = vadd.f32 0.0, %v1697
      %v1699 = vpop.f32.mrb[0].mxu0
      %v1700 = vpop.f32.mrb[0].mxu0
      %v1701 = vadd.f32 0.0, %v1700
      %v1702 = vpop.f32.mrb[0].mxu0
      %1703 = vmatprep.mubr.bf16.mxu0 0
      %1704 = vmatmul.mubr.bf16.gmra.mrb[0].mxu0 %v1015
      %v1705 = vpop.f32.mrb[0].mxu0
      %v1706 = vadd.f32 0.0, %v1705
      %v1707 = vpop.f32.mrb[0].mxu0
      %v1708 = vpop.f32.mrb[0].mxu0
      %v1709 = vadd.f32 0.0, %v1708
      %v1710 = vpop.f32.mrb[0].mxu0
      %1711 = vmatprep.mubr.bf16.mxu0 0
      %1712 = vmatmul.mubr.bf16.gmra.mrb[0].mxu0 %v1018
      %v1713 = vpop.f32.mrb[0].mxu0
      %v1714 = vadd.f32 0.0, %v1713
      %v1715 = vpop.f32.mrb[0].mxu0
      %v1716 = vpop.f32.mrb[0].mxu0
      %v1717 = vadd.f32 0.0, %v1716
      %v1718 = vpop.f32.mrb[0].mxu0
      %1719 = vmatprep.mubr.bf16.mxu0 0
      %1720 = vmatmul.mubr.bf16.gmra.mrb[0].mxu0 %v1021
      %v1721 = vpop.f32.mrb[0].mxu0
      %v1722 = vadd.f32 0.0, %v1721
      %v1723 = vpop.f32.mrb[0].mxu0
      %v1724 = vpop.f32.mrb[0].mxu0
      %v1725 = vadd.f32 0.0, %v1724
      %v1726 = vpop.f32.mrb[0].mxu0
      %1727 = vmatprep.mubr.bf16.mxu0 0
      %1728 = vmatmul.mubr.bf16.gmra.mrb[0].mxu0 %v1024
      %v1729 = vpop.f32.mrb[0].mxu0
      %v1730 = vadd.f32 0.0, %v1729
      %v1731 = vpop.f32.mrb[0].mxu0
      %v1732 = vpop.f32.mrb[0].mxu0
      %v1733 = vadd.f32 0.0, %v1732
      %v1734 = vpop.f32.mrb[0].mxu0
      %1735 = vmatprep.mubr.bf16.mxu0 0
      %1736 = vmatmul.mubr.bf16.gmra.mrb[0].mxu0 %v1027
      %v1737 = vpop.f32.mrb[0].mxu0
      %v1738 = vadd.f32 0.0, %v1737
      %v1739 = vpop.f32.mrb[0].mxu0
      %v1740 = vpop.f32.mrb[0].mxu0
      %v1741 = vadd.f32 0.0, %v1740
      %v1742 = vpop.f32.mrb[0].mxu0
      %1743 = vmatprep.mubr.bf16.mxu0 0
      %1744 = vmatmul.mubr.bf16.gmra.mrb[0].mxu0 %v1030
      %v1745 = vpop.f32.mrb[0].mxu0
      %v1746 = vadd.f32 0.0, %v1745
      %v1747 = vpop.f32.mrb[0].mxu0
      %v1748 = vpop.f32.mrb[0].mxu0
      %v1749 = vadd.f32 0.0, %v1748
      %v1750 = vpop.f32.mrb[0].mxu0
      %1751 = vmatprep.mubr.bf16.mxu0 0
      %1752 = vmatmul.mubr.bf16.gmra.mrb[0].mxu0 %v1033
      %v1753 = vpop.f32.mrb[0].mxu0
      %v1754 = vadd.f32 0.0, %v1753
      %v1755 = vpop.f32.mrb[0].mxu0
      %v1756 = vpop.f32.mrb[0].mxu0
      %v1757 = vadd.f32 0.0, %v1756
      %v1758 = vpop.f32.mrb[0].mxu0
      %1759 = vmatprep.mubr.bf16.mxu0 0
      %1760 = vmatmul.mubr.bf16.gmra.mrb[0].mxu0 %v1036
      %v1761 = vpop.f32.mrb[0].mxu0
      %v1762 = vadd.f32 0.0, %v1761
      %v1763 = vpop.f32.mrb[0].mxu0
      %v1764 = vpop.f32.mrb[0].mxu0
      %v1765 = vadd.f32 0.0, %v1764
      %v1766 = vpop.f32.mrb[0].mxu0
      %1767 = vmatprep.mubr.bf16.mxu0 0
      %1768 = vmatmul.mubr.bf16.gmra.mrb[0].mxu0 %v1039
      %v1769 = vpop.f32.mrb[0].mxu0
      %v1770 = vadd.f32 0.0, %v1769
      %v1771 = vpop.f32.mrb[0].mxu0
      %v1772 = vpop.f32.mrb[0].mxu0
      %v1773 = vadd.f32 0.0, %v1772
      %v1774 = vpop.f32.mrb[0].mxu0
      %1775 = vmatprep.mubr.bf16.mxu0 0
      %1776 = vmatmul.mubr.bf16.gmra.mrb[0].mxu0 %v1042
      %v1777 = vpop.f32.mrb[0].mxu0
      %v1778 = vadd.f32 0.0, %v1777
      %v1779 = vpop.f32.mrb[0].mxu0
      %v1780 = vpop.f32.mrb[0].mxu0
      %v1781 = vadd.f32 0.0, %v1780
      %v1782 = vpop.f32.mrb[0].mxu0
      %1783 = vmatprep.mubr.bf16.mxu0 0
      %1784 = vmatmul.mubr.bf16.gmra.mrb[0].mxu0 %v1045
      %v1785 = vpop.f32.mrb[0].mxu0
      %v1786 = vadd.f32 0.0, %v1785
      %v1787 = vpop.f32.mrb[0].mxu0
      %v1788 = vpop.f32.mrb[0].mxu0
      %v1789 = vadd.f32 0.0, %v1788
      %v1790 = vpop.f32.mrb[0].mxu0
      %1791 = vmatprep.mubr.bf16.mxu0 0
      %1792 = vmatmul.mubr.bf16.gmra.mrb[0].mxu0 %v1048
      %v1793 = vpop.f32.mrb[0].mxu0
      %v1794 = vadd.f32 0.0, %v1793
      %v1795 = vpop.f32.mrb[0].mxu0
      %v1796 = vpop.f32.mrb[0].mxu0
      %v1797 = vadd.f32 0.0, %v1796
      %v1798 = vpop.f32.mrb[0].mxu0
      %1799 = vmatprep.mubr.bf16.mxu0 0
      %1800 = vmatmul.mubr.bf16.gmra.mrb[0].mxu0 %v1051
      %v1801 = vpop.f32.mrb[0].mxu0
      %v1802 = vadd.f32 0.0, %v1801
      %v1803 = vpop.f32.mrb[0].mxu0
      %v1804 = vpop.f32.mrb[0].mxu0
      %v1805 = vadd.f32 0.0, %v1804
      %v1806 = vpop.f32.mrb[0].mxu0
      %1807 = vmatprep.mubr.bf16.mxu0 0
      %1808 = vmatmul.mubr.bf16.gmra.mrb[0].mxu0 %v1650
      %v1809 = vpop.f32.mrb[0].mxu0
      %v1810 = vadd.f32 0.0, %v1809
      %v1811 = vpop.f32.mrb[0].mxu0
      %v1812 = vpop.f32.mrb[0].mxu0
      %v1813 = vadd.f32 0.0, %v1812
      %v1814 = vpop.f32.mrb[0].mxu0
      %1815 = vdwg.mxu0
      %v1816 = vadd.f32 %v1610, %v1690
      %v1817 = vadd.f32 %v1611, %v1693
      %v1818 = vadd.f32 %v1612, %v1698
      %v1819 = vadd.f32 %v1613, %v1701
      %v1820 = vadd.f32 %v1614, %v1706
      %v1821 = vadd.f32 %v1615, %v1709
      %v1822 = vadd.f32 %v1616, %v1714
      %v1823 = vadd.f32 %v1617, %v1717
      %v1824 = vadd.f32 %v1618, %v1722
      %v1825 = vadd.f32 %v1619, %v1725
      %v1826 = vadd.f32 %v1620, %v1730
      %v1827 = vadd.f32 %v1621, %v1733
      %v1828 = vadd.f32 %v1622, %v1738
      %v1829 = vadd.f32 %v1623, %v1741
      %v1830 = vadd.f32 %v1624, %v1746
      %v1831 = vadd.f32 %v1625, %v1749
      %v1832 = vadd.f32 %v1626, %v1754
      %v1833 = vadd.f32 %v1627, %v1757
      %v1834 = vadd.f32 %v1628, %v1762
      %v1835 = vadd.f32 %v1629, %v1765
      %v1836 = vadd.f32 %v1630, %v1770
      %v1837 = vadd.f32 %v1631, %v1773
      %v1838 = vadd.f32 %v1632, %v1778
      %v1839 = vadd.f32 %v1633, %v1781
      %v1840 = vadd.f32 %v1634, %v1786
      %v1841 = vadd.f32 %v1635, %v1789
      %v1842 = vadd.f32 %v1636, %v1794
      %v1843 = vadd.f32 %v1637, %v1797
      %v1844 = vadd.f32 %v1638, %v1802
      %v1845 = vadd.f32 %v1639, %v1805
      %v1846 = vadd.f32 %v1640, %v1810
      %v1847 = vadd.f32 %v1641, %v1813
      %v1849 = vshrl.u32 %v267, 16
      %v1851 = vrot.slane %v1849, 4
      %v1852 = vshll.u32 %v267, 16
      %v1854 = vrot.slane %v1852, 5
      %v1855 = vor.u32 %v1851, %v1854
      %v1856 = vrot.slane %v1855, 4
      %v1858 = vshll.u32 %v268, 16
      %v1860 = vrot.slane %v1858, 5
      %v1861 = vsel %vm276, %v1856, %v1860
      %v1862 = vshrl.u32 %v268, 16
      %v1864 = vrot.slane %v1862, 4
      %v1865 = vor.u32 %v1864, %v1860
      %v1866 = vrot.slane %v1865, 4
      %v1868 = vshll.u32 %v269, 16
      %v1870 = vrot.slane %v1868, 5
      %v1871 = vsel %vm276, %v1866, %v1870
      %s1872 = scalar_lea.vmem %s1, 8
      %v1873 = vld [vmem:[%s1872] sm:$0x3]
      %v1874 = vunpack.c.l.b16 %v1861
      %v1875 = vunpack.c.l.b16 %v1871
      %v1876 = vpack.c.b16 %v1875, %v1874
      %v1878 = vsel %vm711, %v1876, 0
      %v1881 = vsel %vm760, %v1873, 0
      %1883 = vmatprep.subr.bf16.mxu0 0
      %1884 = vmatpush1.bf16.msra.mxu0 %v1881
      %1885 = vmatprep.subr.bf16.mxu0 0
      %1886 = vmatpush1.bf16.msra.mxu0 0
      %1887 = vmatprep.subr.bf16.mxu0 0
      %1888 = vmatpush1.bf16.msra.mxu0 0
      %1889 = vmatprep.subr.bf16.mxu0 0
      %1890 = vmatpush1.bf16.msra.mxu0 0
      %1891 = vmatprep.subr.bf16.mxu0 0
      %1892 = vmatpush1.bf16.msra.mxu0 0
      %1893 = vmatprep.subr.bf16.mxu0 0
      %1894 = vmatpush1.bf16.msra.mxu0 0
      %1895 = vmatprep.subr.bf16.mxu0 0
      %1896 = vmatpush1.bf16.msra.mxu0 0
      %1897 = vmatprep.subr.bf16.mxu0 0
      %1898 = vmatpush1.bf16.msra.mxu0 0
      %1899 = vmatprep.subr.bf16.mxu0 0
      %1900 = vmatpush1.bf16.msra.mxu0 0
      %1901 = vmatprep.subr.bf16.mxu0 0
      %1902 = vmatpush1.bf16.msra.mxu0 0
      %1903 = vmatprep.subr.bf16.mxu0 0
      %1904 = vmatpush1.bf16.msra.mxu0 0
      %1905 = vmatprep.subr.bf16.mxu0 0
      %1906 = vmatpush1.bf16.msra.mxu0 0
      %1907 = vmatprep.subr.bf16.mxu0 0
      %1908 = vmatpush1.bf16.msra.mxu0 0
      %1909 = vmatprep.subr.bf16.mxu0 0
      %1910 = vmatpush1.bf16.msra.mxu0 0
      %1911 = vmatprep.subr.bf16.mxu0 0
      %1912 = vmatpush1.bf16.msra.mxu0 0
      %1913 = vmatprep.subr.bf16.mxu0 0
      %1914 = vmatpush1.bf16.msra.mxu0 0
      %1915 = vmatprep.mubr.bf16.mxu0 0
      %1916 = vmatmul.mubr.bf16.gmra.mrb[0].mxu0 %v716
      %v1917 = vpop.f32.mrb[0].mxu0
      %v1918 = vadd.f32 0.0, %v1917
      %v1919 = vpop.f32.mrb[0].mxu0
      %v1920 = vpop.f32.mrb[0].mxu0
      %v1921 = vadd.f32 0.0, %v1920
      %v1922 = vpop.f32.mrb[0].mxu0
      %1923 = vmatprep.mubr.bf16.mxu0 0
      %1924 = vmatmul.mubr.bf16.gmra.mrb[0].mxu0 %v719
      %v1925 = vpop.f32.mrb[0].mxu0
      %v1926 = vadd.f32 0.0, %v1925
      %v1927 = vpop.f32.mrb[0].mxu0
      %v1928 = vpop.f32.mrb[0].mxu0
      %v1929 = vadd.f32 0.0, %v1928
      %v1930 = vpop.f32.mrb[0].mxu0
      %1931 = vmatprep.mubr.bf16.mxu0 0
      %1932 = vmatmul.mubr.bf16.gmra.mrb[0].mxu0 %v722
      %v1933 = vpop.f32.mrb[0].mxu0
      %v1934 = vadd.f32 0.0, %v1933
      %v1935 = vpop.f32.mrb[0].mxu0
      %v1936 = vpop.f32.mrb[0].mxu0
      %v1937 = vadd.f32 0.0, %v1936
      %v1938 = vpop.f32.mrb[0].mxu0
      %1939 = vmatprep.mubr.bf16.mxu0 0
      %1940 = vmatmul.mubr.bf16.gmra.mrb[0].mxu0 %v725
      %v1941 = vpop.f32.mrb[0].mxu0
      %v1942 = vadd.f32 0.0, %v1941
      %v1943 = vpop.f32.mrb[0].mxu0
      %v1944 = vpop.f32.mrb[0].mxu0
      %v1945 = vadd.f32 0.0, %v1944
      %v1946 = vpop.f32.mrb[0].mxu0
      %1947 = vmatprep.mubr.bf16.mxu0 0
      %1948 = vmatmul.mubr.bf16.gmra.mrb[0].mxu0 %v728
      %v1949 = vpop.f32.mrb[0].mxu0
      %v1950 = vadd.f32 0.0, %v1949
      %v1951 = vpop.f32.mrb[0].mxu0
      %v1952 = vpop.f32.mrb[0].mxu0
      %v1953 = vadd.f32 0.0, %v1952
      %v1954 = vpop.f32.mrb[0].mxu0
      %1955 = vmatprep.mubr.bf16.mxu0 0
      %1956 = vmatmul.mubr.bf16.gmra.mrb[0].mxu0 %v731
      %v1957 = vpop.f32.mrb[0].mxu0
      %v1958 = vadd.f32 0.0, %v1957
      %v1959 = vpop.f32.mrb[0].mxu0
      %v1960 = vpop.f32.mrb[0].mxu0
      %v1961 = vadd.f32 0.0, %v1960
      %v1962 = vpop.f32.mrb[0].mxu0
      %1963 = vmatprep.mubr.bf16.mxu0 0
      %1964 = vmatmul.mubr.bf16.gmra.mrb[0].mxu0 %v734
      %v1965 = vpop.f32.mrb[0].mxu0
      %v1966 = vadd.f32 0.0, %v1965
      %v1967 = vpop.f32.mrb[0].mxu0
      %v1968 = vpop.f32.mrb[0].mxu0
      %v1969 = vadd.f32 0.0, %v1968
      %v1970 = vpop.f32.mrb[0].mxu0
      %1971 = vmatprep.mubr.bf16.mxu0 0
      %1972 = vmatmul.mubr.bf16.gmra.mrb[0].mxu0 %v737
      %v1973 = vpop.f32.mrb[0].mxu0
      %v1974 = vadd.f32 0.0, %v1973
      %v1975 = vpop.f32.mrb[0].mxu0
      %v1976 = vpop.f32.mrb[0].mxu0
      %v1977 = vadd.f32 0.0, %v1976
      %v1978 = vpop.f32.mrb[0].mxu0
      %1979 = vmatprep.mubr.bf16.mxu0 0
      %1980 = vmatmul.mubr.bf16.gmra.mrb[0].mxu0 %v740
      %v1981 = vpop.f32.mrb[0].mxu0
      %v1982 = vadd.f32 0.0, %v1981
      %v1983 = vpop.f32.mrb[0].mxu0
      %v1984 = vpop.f32.mrb[0].mxu0
      %v1985 = vadd.f32 0.0, %v1984
      %v1986 = vpop.f32.mrb[0].mxu0
      %1987 = vmatprep.mubr.bf16.mxu0 0
      %1988 = vmatmul.mubr.bf16.gmra.mrb[0].mxu0 %v743
      %v1989 = vpop.f32.mrb[0].mxu0
      %v1990 = vadd.f32 0.0, %v1989
      %v1991 = vpop.f32.mrb[0].mxu0
      %v1992 = vpop.f32.mrb[0].mxu0
      %v1993 = vadd.f32 0.0, %v1992
      %v1994 = vpop.f32.mrb[0].mxu0
      %1995 = vmatprep.mubr.bf16.mxu0 0
      %1996 = vmatmul.mubr.bf16.gmra.mrb[0].mxu0 %v746
      %v1997 = vpop.f32.mrb[0].mxu0
      %v1998 = vadd.f32 0.0, %v1997
      %v1999 = vpop.f32.mrb[0].mxu0
      %v2000 = vpop.f32.mrb[0].mxu0
      %v2001 = vadd.f32 0.0, %v2000
      %v2002 = vpop.f32.mrb[0].mxu0
      %2003 = vmatprep.mubr.bf16.mxu0 0
      %2004 = vmatmul.mubr.bf16.gmra.mrb[0].mxu0 %v749
      %v2005 = vpop.f32.mrb[0].mxu0
      %v2006 = vadd.f32 0.0, %v2005
      %v2007 = vpop.f32.mrb[0].mxu0
      %v2008 = vpop.f32.mrb[0].mxu0
      %v2009 = vadd.f32 0.0, %v2008
      %v2010 = vpop.f32.mrb[0].mxu0
      %2011 = vmatprep.mubr.bf16.mxu0 0
      %2012 = vmatmul.mubr.bf16.gmra.mrb[0].mxu0 %v752
      %v2013 = vpop.f32.mrb[0].mxu0
      %v2014 = vadd.f32 0.0, %v2013
      %v2015 = vpop.f32.mrb[0].mxu0
      %v2016 = vpop.f32.mrb[0].mxu0
      %v2017 = vadd.f32 0.0, %v2016
      %v2018 = vpop.f32.mrb[0].mxu0
      %2019 = vmatprep.mubr.bf16.mxu0 0
      %2020 = vmatmul.mubr.bf16.gmra.mrb[0].mxu0 %v755
      %v2021 = vpop.f32.mrb[0].mxu0
      %v2022 = vadd.f32 0.0, %v2021
      %v2023 = vpop.f32.mrb[0].mxu0
      %v2024 = vpop.f32.mrb[0].mxu0
      %v2025 = vadd.f32 0.0, %v2024
      %v2026 = vpop.f32.mrb[0].mxu0
      %2027 = vmatprep.mubr.bf16.mxu0 0
      %2028 = vmatmul.mubr.bf16.gmra.mrb[0].mxu0 %v758
      %v2029 = vpop.f32.mrb[0].mxu0
      %v2030 = vadd.f32 0.0, %v2029
      %v2031 = vpop.f32.mrb[0].mxu0
      %v2032 = vpop.f32.mrb[0].mxu0
      %v2033 = vadd.f32 0.0, %v2032
      %v2034 = vpop.f32.mrb[0].mxu0
      %2035 = vmatprep.mubr.bf16.mxu0 0
      %2036 = vmatmul.mubr.bf16.gmra.mrb[0].mxu0 %v1878
      %v2037 = vpop.f32.mrb[0].mxu0
      %v2038 = vadd.f32 0.0, %v2037
      %v2039 = vpop.f32.mrb[0].mxu0
      %v2040 = vpop.f32.mrb[0].mxu0
      %v2041 = vadd.f32 0.0, %v2040
      %v2042 = vpop.f32.mrb[0].mxu0
      %2043 = vdwg.mxu0
      %v2044 = vadd.f32 %v1816, %v1918
      %v2045 = vadd.f32 %v1817, %v1921
      %v2046 = vadd.f32 %v1818, %v1926
      %v2047 = vadd.f32 %v1819, %v1929
      %v2048 = vadd.f32 %v1820, %v1934
      %v2049 = vadd.f32 %v1821, %v1937
      %v2050 = vadd.f32 %v1822, %v1942
      %v2051 = vadd.f32 %v1823, %v1945
      %v2052 = vadd.f32 %v1824, %v1950
      %v2053 = vadd.f32 %v1825, %v1953
      %v2054 = vadd.f32 %v1826, %v1958
      %v2055 = vadd.f32 %v1827, %v1961
      %v2056 = vadd.f32 %v1828, %v1966
      %v2057 = vadd.f32 %v1829, %v1969
      %v2058 = vadd.f32 %v1830, %v1974
      %v2059 = vadd.f32 %v1831, %v1977
      %v2060 = vadd.f32 %v1832, %v1982
      %v2061 = vadd.f32 %v1833, %v1985
      %v2062 = vadd.f32 %v1834, %v1990
      %v2063 = vadd.f32 %v1835, %v1993
      %v2064 = vadd.f32 %v1836, %v1998
      %v2065 = vadd.f32 %v1837, %v2001
      %v2066 = vadd.f32 %v1838, %v2006
      %v2067 = vadd.f32 %v1839, %v2009
      %v2068 = vadd.f32 %v1840, %v2014
      %v2069 = vadd.f32 %v1841, %v2017
      %v2070 = vadd.f32 %v1842, %v2022
      %v2071 = vadd.f32 %v1843, %v2025
      %v2072 = vadd.f32 %v1844, %v2030
      %v2073 = vadd.f32 %v1845, %v2033
      %v2074 = vadd.f32 %v1846, %v2038
      %v2075 = vadd.f32 %v1847, %v2041
      %v2077 = vrot.slane %v267, 5
      %v2078 = vrot.slane %v2077, 4
      %v2079 = vrot.slane %v268, 5
      %v2080 = vsel %vm1235, %v2078, %v2079
      %v2081 = vrot.slane %v2079, 4
      %v2082 = vrot.slane %v269, 5
      %v2083 = vsel %vm1235, %v2081, %v2082
      %s2084 = scalar_lea.vmem %s1, 10
      %v2085 = vld [vmem:[%s2084] sm:$0x3]
      %v2086 = vunpack.c.l.b16 %v2080
      %v2087 = vunpack.c.l.b16 %v2083
      %v2088 = vpack.c.b16 %v2087, %v2086
      %v2090 = vsel %vm711, %v2088, 0
      %v2093 = vsel %vm760, %v2085, 0
      %2095 = vmatprep.subr.bf16.mxu0 0
      %2096 = vmatpush1.bf16.msra.mxu0 %v2093
      %2097 = vmatprep.subr.bf16.mxu0 0
      %2098 = vmatpush1.bf16.msra.mxu0 0
      %2099 = vmatprep.subr.bf16.mxu0 0
      %2100 = vmatpush1.bf16.msra.mxu0 0
      %2101 = vmatprep.subr.bf16.mxu0 0
      %2102 = vmatpush1.bf16.msra.mxu0 0
      %2103 = vmatprep.subr.bf16.mxu0 0
      %2104 = vmatpush1.bf16.msra.mxu0 0
      %2105 = vmatprep.subr.bf16.mxu0 0
      %2106 = vmatpush1.bf16.msra.mxu0 0
      %2107 = vmatprep.subr.bf16.mxu0 0
      %2108 = vmatpush1.bf16.msra.mxu0 0
      %2109 = vmatprep.subr.bf16.mxu0 0
      %2110 = vmatpush1.bf16.msra.mxu0 0
      %2111 = vmatprep.subr.bf16.mxu0 0
      %2112 = vmatpush1.bf16.msra.mxu0 0
      %2113 = vmatprep.subr.bf16.mxu0 0
      %2114 = vmatpush1.bf16.msra.mxu0 0
      %2115 = vmatprep.subr.bf16.mxu0 0
      %2116 = vmatpush1.bf16.msra.mxu0 0
      %2117 = vmatprep.subr.bf16.mxu0 0
      %2118 = vmatpush1.bf16.msra.mxu0 0
      %2119 = vmatprep.subr.bf16.mxu0 0
      %2120 = vmatpush1.bf16.msra.mxu0 0
      %2121 = vmatprep.subr.bf16.mxu0 0
      %2122 = vmatpush1.bf16.msra.mxu0 0
      %2123 = vmatprep.subr.bf16.mxu0 0
      %2124 = vmatpush1.bf16.msra.mxu0 0
      %2125 = vmatprep.subr.bf16.mxu0 0
      %2126 = vmatpush1.bf16.msra.mxu0 0
      %2127 = vmatprep.mubr.bf16.mxu0 0
      %2128 = vmatmul.mubr.bf16.gmra.mrb[0].mxu0 %v1402
      %v2129 = vpop.f32.mrb[0].mxu0
      %v2130 = vadd.f32 0.0, %v2129
      %v2131 = vpop.f32.mrb[0].mxu0
      %v2132 = vpop.f32.mrb[0].mxu0
      %v2133 = vadd.f32 0.0, %v2132
      %v2134 = vpop.f32.mrb[0].mxu0
      %2135 = vmatprep.mubr.bf16.mxu0 0
      %2136 = vmatmul.mubr.bf16.gmra.mrb[0].mxu0 %v1405
      %v2137 = vpop.f32.mrb[0].mxu0
      %v2138 = vadd.f32 0.0, %v2137
      %v2139 = vpop.f32.mrb[0].mxu0
      %v2140 = vpop.f32.mrb[0].mxu0
      %v2141 = vadd.f32 0.0, %v2140
      %v2142 = vpop.f32.mrb[0].mxu0
      %2143 = vmatprep.mubr.bf16.mxu0 0
      %2144 = vmatmul.mubr.bf16.gmra.mrb[0].mxu0 %v1408
      %v2145 = vpop.f32.mrb[0].mxu0
      %v2146 = vadd.f32 0.0, %v2145
      %v2147 = vpop.f32.mrb[0].mxu0
      %v2148 = vpop.f32.mrb[0].mxu0
      %v2149 = vadd.f32 0.0, %v2148
      %v2150 = vpop.f32.mrb[0].mxu0
      %2151 = vmatprep.mubr.bf16.mxu0 0
      %2152 = vmatmul.mubr.bf16.gmra.mrb[0].mxu0 %v1411
      %v2153 = vpop.f32.mrb[0].mxu0
      %v2154 = vadd.f32 0.0, %v2153
      %v2155 = vpop.f32.mrb[0].mxu0
      %v2156 = vpop.f32.mrb[0].mxu0
      %v2157 = vadd.f32 0.0, %v2156
      %v2158 = vpop.f32.mrb[0].mxu0
      %2159 = vmatprep.mubr.bf16.mxu0 0
      %2160 = vmatmul.mubr.bf16.gmra.mrb[0].mxu0 %v1414
      %v2161 = vpop.f32.mrb[0].mxu0
      %v2162 = vadd.f32 0.0, %v2161
      %v2163 = vpop.f32.mrb[0].mxu0
      %v2164 = vpop.f32.mrb[0].mxu0
      %v2165 = vadd.f32 0.0, %v2164
      %v2166 = vpop.f32.mrb[0].mxu0
      %2167 = vmatprep.mubr.bf16.mxu0 0
      %2168 = vmatmul.mubr.bf16.gmra.mrb[0].mxu0 %v1417
      %v2169 = vpop.f32.mrb[0].mxu0
      %v2170 = vadd.f32 0.0, %v2169
      %v2171 = vpop.f32.mrb[0].mxu0
      %v2172 = vpop.f32.mrb[0].mxu0
      %v2173 = vadd.f32 0.0, %v2172
      %v2174 = vpop.f32.mrb[0].mxu0
      %2175 = vmatprep.mubr.bf16.mxu0 0
      %2176 = vmatmul.mubr.bf16.gmra.mrb[0].mxu0 %v1420
      %v2177 = vpop.f32.mrb[0].mxu0
      %v2178 = vadd.f32 0.0, %v2177
      %v2179 = vpop.f32.mrb[0].mxu0
      %v2180 = vpop.f32.mrb[0].mxu0
      %v2181 = vadd.f32 0.0, %v2180
      %v2182 = vpop.f32.mrb[0].mxu0
      %2183 = vmatprep.mubr.bf16.mxu0 0
      %2184 = vmatmul.mubr.bf16.gmra.mrb[0].mxu0 %v1423
      %v2185 = vpop.f32.mrb[0].mxu0
      %v2186 = vadd.f32 0.0, %v2185
      %v2187 = vpop.f32.mrb[0].mxu0
      %v2188 = vpop.f32.mrb[0].mxu0
      %v2189 = vadd.f32 0.0, %v2188
      %v2190 = vpop.f32.mrb[0].mxu0
      %2191 = vmatprep.mubr.bf16.mxu0 0
      %2192 = vmatmul.mubr.bf16.gmra.mrb[0].mxu0 %v1426
      %v2193 = vpop.f32.mrb[0].mxu0
      %v2194 = vadd.f32 0.0, %v2193
      %v2195 = vpop.f32.mrb[0].mxu0
      %v2196 = vpop.f32.mrb[0].mxu0
      %v2197 = vadd.f32 0.0, %v2196
      %v2198 = vpop.f32.mrb[0].mxu0
      %2199 = vmatprep.mubr.bf16.mxu0 0
      %2200 = vmatmul.mubr.bf16.gmra.mrb[0].mxu0 %v1429
      %v2201 = vpop.f32.mrb[0].mxu0
      %v2202 = vadd.f32 0.0, %v2201
      %v2203 = vpop.f32.mrb[0].mxu0
      %v2204 = vpop.f32.mrb[0].mxu0
      %v2205 = vadd.f32 0.0, %v2204
      %v2206 = vpop.f32.mrb[0].mxu0
      %2207 = vmatprep.mubr.bf16.mxu0 0
      %2208 = vmatmul.mubr.bf16.gmra.mrb[0].mxu0 %v1432
      %v2209 = vpop.f32.mrb[0].mxu0
      %v2210 = vadd.f32 0.0, %v2209
      %v2211 = vpop.f32.mrb[0].mxu0
      %v2212 = vpop.f32.mrb[0].mxu0
      %v2213 = vadd.f32 0.0, %v2212
      %v2214 = vpop.f32.mrb[0].mxu0
      %2215 = vmatprep.mubr.bf16.mxu0 0
      %2216 = vmatmul.mubr.bf16.gmra.mrb[0].mxu0 %v1435
      %v2217 = vpop.f32.mrb[0].mxu0
      %v2218 = vadd.f32 0.0, %v2217
      %v2219 = vpop.f32.mrb[0].mxu0
      %v2220 = vpop.f32.mrb[0].mxu0
      %v2221 = vadd.f32 0.0, %v2220
      %v2222 = vpop.f32.mrb[0].mxu0
      %2223 = vmatprep.mubr.bf16.mxu0 0
      %2224 = vmatmul.mubr.bf16.gmra.mrb[0].mxu0 %v1438
      %v2225 = vpop.f32.mrb[0].mxu0
      %v2226 = vadd.f32 0.0, %v2225
      %v2227 = vpop.f32.mrb[0].mxu0
      %v2228 = vpop.f32.mrb[0].mxu0
      %v2229 = vadd.f32 0.0, %v2228
      %v2230 = vpop.f32.mrb[0].mxu0
      %2231 = vmatprep.mubr.bf16.mxu0 0
      %2232 = vmatmul.mubr.bf16.gmra.mrb[0].mxu0 %v1441
      %v2233 = vpop.f32.mrb[0].mxu0
      %v2234 = vadd.f32 0.0, %v2233
      %v2235 = vpop.f32.mrb[0].mxu0
      %v2236 = vpop.f32.mrb[0].mxu0
      %v2237 = vadd.f32 0.0, %v2236
      %v2238 = vpop.f32.mrb[0].mxu0
      %2239 = vmatprep.mubr.bf16.mxu0 0
      %2240 = vmatmul.mubr.bf16.gmra.mrb[0].mxu0 %v1444
      %v2241 = vpop.f32.mrb[0].mxu0
      %v2242 = vadd.f32 0.0, %v2241
      %v2243 = vpop.f32.mrb[0].mxu0
      %v2244 = vpop.f32.mrb[0].mxu0
      %v2245 = vadd.f32 0.0, %v2244
      %v2246 = vpop.f32.mrb[0].mxu0
      %2247 = vmatprep.mubr.bf16.mxu0 0
      %2248 = vmatmul.mubr.bf16.gmra.mrb[0].mxu0 %v2090
      %v2249 = vpop.f32.mrb[0].mxu0
      %v2250 = vadd.f32 0.0, %v2249
      %v2251 = vpop.f32.mrb[0].mxu0
      %v2252 = vpop.f32.mrb[0].mxu0
      %v2253 = vadd.f32 0.0, %v2252
      %v2254 = vpop.f32.mrb[0].mxu0
      %2255 = vdwg.mxu0
      %v2256 = vadd.f32 %v2044, %v2130
      %v2257 = vadd.f32 %v2045, %v2133
      %v2258 = vadd.f32 %v2046, %v2138
      %v2259 = vadd.f32 %v2047, %v2141
      %v2260 = vadd.f32 %v2048, %v2146
      %v2261 = vadd.f32 %v2049, %v2149
      %v2262 = vadd.f32 %v2050, %v2154
      %v2263 = vadd.f32 %v2051, %v2157
      %v2264 = vadd.f32 %v2052, %v2162
      %v2265 = vadd.f32 %v2053, %v2165
      %v2266 = vadd.f32 %v2054, %v2170
      %v2267 = vadd.f32 %v2055, %v2173
      %v2268 = vadd.f32 %v2056, %v2178
      %v2269 = vadd.f32 %v2057, %v2181
      %v2270 = vadd.f32 %v2058, %v2186
      %v2271 = vadd.f32 %v2059, %v2189
      %v2272 = vadd.f32 %v2060, %v2194
      %v2273 = vadd.f32 %v2061, %v2197
      %v2274 = vadd.f32 %v2062, %v2202
      %v2275 = vadd.f32 %v2063, %v2205
      %v2276 = vadd.f32 %v2064, %v2210
      %v2277 = vadd.f32 %v2065, %v2213
      %v2278 = vadd.f32 %v2066, %v2218
      %v2279 = vadd.f32 %v2067, %v2221
      %v2280 = vadd.f32 %v2068, %v2226
      %v2281 = vadd.f32 %v2069, %v2229
      %v2282 = vadd.f32 %v2070, %v2234
      %v2283 = vadd.f32 %v2071, %v2237
      %v2284 = vadd.f32 %v2072, %v2242
      %v2285 = vadd.f32 %v2073, %v2245
      %v2286 = vadd.f32 %v2074, %v2250
      %v2287 = vadd.f32 %v2075, %v2253
      %s2288 = scalar_lea.vmem %s1, 12
      %v2289 = vld [vmem:[%s2288] sm:$0x3]
      %v2292 = vunpack.c.l.b16 %v270
      %v2293 = vunpack.c.l.b16 %v271
      %v2294 = vpack.c.b16 %v2293, %v2292
      %v2296 = vsel %vm711, %v2294, 0
      %v2299 = vsel %vm760, %v2289, 0
      %2301 = vmatprep.subr.bf16.mxu0 0
      %2302 = vmatpush1.bf16.msra.mxu0 %v2299
      %2303 = vmatprep.subr.bf16.mxu0 0
      %2304 = vmatpush1.bf16.msra.mxu0 0
      %2305 = vmatprep.subr.bf16.mxu0 0
      %2306 = vmatpush1.bf16.msra.mxu0 0
      %2307 = vmatprep.subr.bf16.mxu0 0
      %2308 = vmatpush1.bf16.msra.mxu0 0
      %2309 = vmatprep.subr.bf16.mxu0 0
      %2310 = vmatpush1.bf16.msra.mxu0 0
      %2311 = vmatprep.subr.bf16.mxu0 0
      %2312 = vmatpush1.bf16.msra.mxu0 0
      %2313 = vmatprep.subr.bf16.mxu0 0
      %2314 = vmatpush1.bf16.msra.mxu0 0
      %2315 = vmatprep.subr.bf16.mxu0 0
      %2316 = vmatpush1.bf16.msra.mxu0 0
      %2317 = vmatprep.subr.bf16.mxu0 0
      %2318 = vmatpush1.bf16.msra.mxu0 0
      %2319 = vmatprep.subr.bf16.mxu0 0
      %2320 = vmatpush1.bf16.msra.mxu0 0
      %2321 = vmatprep.subr.bf16.mxu0 0
      %2322 = vmatpush1.bf16.msra.mxu0 0
      %2323 = vmatprep.subr.bf16.mxu0 0
      %2324 = vmatpush1.bf16.msra.mxu0 0
      %2325 = vmatprep.subr.bf16.mxu0 0
      %2326 = vmatpush1.bf16.msra.mxu0 0
      %2327 = vmatprep.subr.bf16.mxu0 0
      %2328 = vmatpush1.bf16.msra.mxu0 0
      %2329 = vmatprep.subr.bf16.mxu0 0
      %2330 = vmatpush1.bf16.msra.mxu0 0
      %2331 = vmatprep.subr.bf16.mxu0 0
      %2332 = vmatpush1.bf16.msra.mxu0 0
      %2333 = vmatprep.mubr.bf16.mxu0 0
      %2334 = vmatmul.mubr.bf16.gmra.mrb[0].mxu0 %v1012
      %v2335 = vpop.f32.mrb[0].mxu0
      %v2336 = vadd.f32 0.0, %v2335
      %v2337 = vpop.f32.mrb[0].mxu0
      %v2338 = vpop.f32.mrb[0].mxu0
      %v2339 = vadd.f32 0.0, %v2338
      %v2340 = vpop.f32.mrb[0].mxu0
      %2341 = vmatprep.mubr.bf16.mxu0 0
      %2342 = vmatmul.mubr.bf16.gmra.mrb[0].mxu0 %v1015
      %v2343 = vpop.f32.mrb[0].mxu0
      %v2344 = vadd.f32 0.0, %v2343
      %v2345 = vpop.f32.mrb[0].mxu0
      %v2346 = vpop.f32.mrb[0].mxu0
      %v2347 = vadd.f32 0.0, %v2346
      %v2348 = vpop.f32.mrb[0].mxu0
      %2349 = vmatprep.mubr.bf16.mxu0 0
      %2350 = vmatmul.mubr.bf16.gmra.mrb[0].mxu0 %v1018
      %v2351 = vpop.f32.mrb[0].mxu0
      %v2352 = vadd.f32 0.0, %v2351
      %v2353 = vpop.f32.mrb[0].mxu0
      %v2354 = vpop.f32.mrb[0].mxu0
      %v2355 = vadd.f32 0.0, %v2354
      %v2356 = vpop.f32.mrb[0].mxu0
      %2357 = vmatprep.mubr.bf16.mxu0 0
      %2358 = vmatmul.mubr.bf16.gmra.mrb[0].mxu0 %v1021
      %v2359 = vpop.f32.mrb[0].mxu0
      %v2360 = vadd.f32 0.0, %v2359
      %v2361 = vpop.f32.mrb[0].mxu0
      %v2362 = vpop.f32.mrb[0].mxu0
      %v2363 = vadd.f32 0.0, %v2362
      %v2364 = vpop.f32.mrb[0].mxu0
      %2365 = vmatprep.mubr.bf16.mxu0 0
      %2366 = vmatmul.mubr.bf16.gmra.mrb[0].mxu0 %v1024
      %v2367 = vpop.f32.mrb[0].mxu0
      %v2368 = vadd.f32 0.0, %v2367
      %v2369 = vpop.f32.mrb[0].mxu0
      %v2370 = vpop.f32.mrb[0].mxu0
      %v2371 = vadd.f32 0.0, %v2370
      %v2372 = vpop.f32.mrb[0].mxu0
      %2373 = vmatprep.mubr.bf16.mxu0 0
      %2374 = vmatmul.mubr.bf16.gmra.mrb[0].mxu0 %v1027
      %v2375 = vpop.f32.mrb[0].mxu0
      %v2376 = vadd.f32 0.0, %v2375
      %v2377 = vpop.f32.mrb[0].mxu0
      %v2378 = vpop.f32.mrb[0].mxu0
      %v2379 = vadd.f32 0.0, %v2378
      %v2380 = vpop.f32.mrb[0].mxu0
      %2381 = vmatprep.mubr.bf16.mxu0 0
      %2382 = vmatmul.mubr.bf16.gmra.mrb[0].mxu0 %v1030
      %v2383 = vpop.f32.mrb[0].mxu0
      %v2384 = vadd.f32 0.0, %v2383
      %v2385 = vpop.f32.mrb[0].mxu0
      %v2386 = vpop.f32.mrb[0].mxu0
      %v2387 = vadd.f32 0.0, %v2386
      %v2388 = vpop.f32.mrb[0].mxu0
      %2389 = vmatprep.mubr.bf16.mxu0 0
      %2390 = vmatmul.mubr.bf16.gmra.mrb[0].mxu0 %v1033
      %v2391 = vpop.f32.mrb[0].mxu0
      %v2392 = vadd.f32 0.0, %v2391
      %v2393 = vpop.f32.mrb[0].mxu0
      %v2394 = vpop.f32.mrb[0].mxu0
      %v2395 = vadd.f32 0.0, %v2394
      %v2396 = vpop.f32.mrb[0].mxu0
      %2397 = vmatprep.mubr.bf16.mxu0 0
      %2398 = vmatmul.mubr.bf16.gmra.mrb[0].mxu0 %v1036
      %v2399 = vpop.f32.mrb[0].mxu0
      %v2400 = vadd.f32 0.0, %v2399
      %v2401 = vpop.f32.mrb[0].mxu0
      %v2402 = vpop.f32.mrb[0].mxu0
      %v2403 = vadd.f32 0.0, %v2402
      %v2404 = vpop.f32.mrb[0].mxu0
      %2405 = vmatprep.mubr.bf16.mxu0 0
      %2406 = vmatmul.mubr.bf16.gmra.mrb[0].mxu0 %v1039
      %v2407 = vpop.f32.mrb[0].mxu0
      %v2408 = vadd.f32 0.0, %v2407
      %v2409 = vpop.f32.mrb[0].mxu0
      %v2410 = vpop.f32.mrb[0].mxu0
      %v2411 = vadd.f32 0.0, %v2410
      %v2412 = vpop.f32.mrb[0].mxu0
      %2413 = vmatprep.mubr.bf16.mxu0 0
      %2414 = vmatmul.mubr.bf16.gmra.mrb[0].mxu0 %v1042
      %v2415 = vpop.f32.mrb[0].mxu0
      %v2416 = vadd.f32 0.0, %v2415
      %v2417 = vpop.f32.mrb[0].mxu0
      %v2418 = vpop.f32.mrb[0].mxu0
      %v2419 = vadd.f32 0.0, %v2418
      %v2420 = vpop.f32.mrb[0].mxu0
      %2421 = vmatprep.mubr.bf16.mxu0 0
      %2422 = vmatmul.mubr.bf16.gmra.mrb[0].mxu0 %v1045
      %v2423 = vpop.f32.mrb[0].mxu0
      %v2424 = vadd.f32 0.0, %v2423
      %v2425 = vpop.f32.mrb[0].mxu0
      %v2426 = vpop.f32.mrb[0].mxu0
      %v2427 = vadd.f32 0.0, %v2426
      %v2428 = vpop.f32.mrb[0].mxu0
      %2429 = vmatprep.mubr.bf16.mxu0 0
      %2430 = vmatmul.mubr.bf16.gmra.mrb[0].mxu0 %v1048
      %v2431 = vpop.f32.mrb[0].mxu0
      %v2432 = vadd.f32 0.0, %v2431
      %v2433 = vpop.f32.mrb[0].mxu0
      %v2434 = vpop.f32.mrb[0].mxu0
      %v2435 = vadd.f32 0.0, %v2434
      %v2436 = vpop.f32.mrb[0].mxu0
      %2437 = vmatprep.mubr.bf16.mxu0 0
      %2438 = vmatmul.mubr.bf16.gmra.mrb[0].mxu0 %v1051
      %v2439 = vpop.f32.mrb[0].mxu0
      %v2440 = vadd.f32 0.0, %v2439
      %v2441 = vpop.f32.mrb[0].mxu0
      %v2442 = vpop.f32.mrb[0].mxu0
      %v2443 = vadd.f32 0.0, %v2442
      %v2444 = vpop.f32.mrb[0].mxu0
      %2445 = vmatprep.mubr.bf16.mxu0 0
      %2446 = vmatmul.mubr.bf16.gmra.mrb[0].mxu0 %v1650
      %v2447 = vpop.f32.mrb[0].mxu0
      %v2448 = vadd.f32 0.0, %v2447
      %v2449 = vpop.f32.mrb[0].mxu0
      %v2450 = vpop.f32.mrb[0].mxu0
      %v2451 = vadd.f32 0.0, %v2450
      %v2452 = vpop.f32.mrb[0].mxu0
      %2453 = vmatprep.mubr.bf16.mxu0 0
      %2454 = vmatmul.mubr.bf16.gmra.mrb[0].mxu0 %v2296
      %v2455 = vpop.f32.mrb[0].mxu0
      %v2456 = vadd.f32 0.0, %v2455
      %v2457 = vpop.f32.mrb[0].mxu0
      %v2458 = vpop.f32.mrb[0].mxu0
      %v2459 = vadd.f32 0.0, %v2458
      %v2460 = vpop.f32.mrb[0].mxu0
      %2461 = vdwg.mxu0
      %v2462 = vadd.f32 %v2256, %v2336
      %v2463 = vadd.f32 %v2257, %v2339
      %v2464 = vadd.f32 %v2258, %v2344
      %v2465 = vadd.f32 %v2259, %v2347
      %v2466 = vadd.f32 %v2260, %v2352
      %v2467 = vadd.f32 %v2261, %v2355
      %v2468 = vadd.f32 %v2262, %v2360
      %v2469 = vadd.f32 %v2263, %v2363
      %v2470 = vadd.f32 %v2264, %v2368
      %v2471 = vadd.f32 %v2265, %v2371
      %v2472 = vadd.f32 %v2266, %v2376
      %v2473 = vadd.f32 %v2267, %v2379
      %v2474 = vadd.f32 %v2268, %v2384
      %v2475 = vadd.f32 %v2269, %v2387
      %v2476 = vadd.f32 %v2270, %v2392
      %v2477 = vadd.f32 %v2271, %v2395
      %v2478 = vadd.f32 %v2272, %v2400
      %v2479 = vadd.f32 %v2273, %v2403
      %v2480 = vadd.f32 %v2274, %v2408
      %v2481 = vadd.f32 %v2275, %v2411
      %v2482 = vadd.f32 %v2276, %v2416
      %v2483 = vadd.f32 %v2277, %v2419
      %v2484 = vadd.f32 %v2278, %v2424
      %v2485 = vadd.f32 %v2279, %v2427
      %v2486 = vadd.f32 %v2280, %v2432
      %v2487 = vadd.f32 %v2281, %v2435
      %v2488 = vadd.f32 %v2282, %v2440
      %v2489 = vadd.f32 %v2283, %v2443
      %v2490 = vadd.f32 %v2284, %v2448
      %v2491 = vadd.f32 %v2285, %v2451
      %v2492 = vadd.f32 %v2286, %v2456
      %v2493 = vadd.f32 %v2287, %v2459
      %v2495 = vshrl.u32 %v270, 16
      %v2497 = vrot.slane %v2495, 4
      %v2498 = vshll.u32 %v270, 16
      %v2500 = vrot.slane %v2498, 5
      %v2501 = vor.u32 %v2497, %v2500
      %v2502 = vrot.slane %v2501, 4
      %v2504 = vshll.u32 %v271, 16
      %v2506 = vrot.slane %v2504, 5
      %v2507 = vsel %vm276, %v2502, %v2506
      %v2508 = vshrl.u32 %v271, 16
      %v2510 = vrot.slane %v2508, 4
      %v2511 = vor.u32 %v2510, %v2506
      %v2512 = vrot.slane %v2511, 4
      %v2514 = vshll.u32 %v272, 16
      %v2516 = vrot.slane %v2514, 5
      %v2517 = vsel %vm276, %v2512, %v2516
      %s2518 = scalar_lea.vmem %s1, 14
      %v2519 = vld [vmem:[%s2518] sm:$0x3]
      %v2520 = vunpack.c.l.b16 %v2507
      %v2521 = vunpack.c.l.b16 %v2517
      %v2522 = vpack.c.b16 %v2521, %v2520
      %v2524 = vsel %vm711, %v2522, 0
      %v2527 = vsel %vm760, %v2519, 0
      %2529 = vmatprep.subr.bf16.mxu0 0
      %2530 = vmatpush1.bf16.msra.mxu0 %v2527
      %2531 = vmatprep.subr.bf16.mxu0 0
      %2532 = vmatpush1.bf16.msra.mxu0 0
      %2533 = vmatprep.subr.bf16.mxu0 0
      %2534 = vmatpush1.bf16.msra.mxu0 0
      %2535 = vmatprep.subr.bf16.mxu0 0
      %2536 = vmatpush1.bf16.msra.mxu0 0
      %2537 = vmatprep.subr.bf16.mxu0 0
      %2538 = vmatpush1.bf16.msra.mxu0 0
      %2539 = vmatprep.subr.bf16.mxu0 0
      %2540 = vmatpush1.bf16.msra.mxu0 0
      %2541 = vmatprep.subr.bf16.mxu0 0
      %2542 = vmatpush1.bf16.msra.mxu0 0
      %2543 = vmatprep.subr.bf16.mxu0 0
      %2544 = vmatpush1.bf16.msra.mxu0 0
      %2545 = vmatprep.subr.bf16.mxu0 0
      %2546 = vmatpush1.bf16.msra.mxu0 0
      %2547 = vmatprep.subr.bf16.mxu0 0
      %2548 = vmatpush1.bf16.msra.mxu0 0
      %2549 = vmatprep.subr.bf16.mxu0 0
      %2550 = vmatpush1.bf16.msra.mxu0 0
      %2551 = vmatprep.subr.bf16.mxu0 0
      %2552 = vmatpush1.bf16.msra.mxu0 0
      %2553 = vmatprep.subr.bf16.mxu0 0
      %2554 = vmatpush1.bf16.msra.mxu0 0
      %2555 = vmatprep.subr.bf16.mxu0 0
      %2556 = vmatpush1.bf16.msra.mxu0 0
      %2557 = vmatprep.subr.bf16.mxu0 0
      %2558 = vmatpush1.bf16.msra.mxu0 0
      %2559 = vmatprep.subr.bf16.mxu0 0
      %2560 = vmatpush1.bf16.msra.mxu0 0
      %2561 = vmatprep.mubr.bf16.mxu0 0
      %2562 = vmatmul.mubr.bf16.gmra.mrb[0].mxu0 %v719
      %v2563 = vpop.f32.mrb[0].mxu0
      %v2564 = vadd.f32 0.0, %v2563
      %v2565 = vpop.f32.mrb[0].mxu0
      %v2566 = vpop.f32.mrb[0].mxu0
      %v2567 = vadd.f32 0.0, %v2566
      %v2568 = vpop.f32.mrb[0].mxu0
      %2569 = vmatprep.mubr.bf16.mxu0 0
      %2570 = vmatmul.mubr.bf16.gmra.mrb[0].mxu0 %v722
      %v2571 = vpop.f32.mrb[0].mxu0
      %v2572 = vadd.f32 0.0, %v2571
      %v2573 = vpop.f32.mrb[0].mxu0
      %v2574 = vpop.f32.mrb[0].mxu0
      %v2575 = vadd.f32 0.0, %v2574
      %v2576 = vpop.f32.mrb[0].mxu0
      %2577 = vmatprep.mubr.bf16.mxu0 0
      %2578 = vmatmul.mubr.bf16.gmra.mrb[0].mxu0 %v725
      %v2579 = vpop.f32.mrb[0].mxu0
      %v2580 = vadd.f32 0.0, %v2579
      %v2581 = vpop.f32.mrb[0].mxu0
      %v2582 = vpop.f32.mrb[0].mxu0
      %v2583 = vadd.f32 0.0, %v2582
      %v2584 = vpop.f32.mrb[0].mxu0
      %2585 = vmatprep.mubr.bf16.mxu0 0
      %2586 = vmatmul.mubr.bf16.gmra.mrb[0].mxu0 %v728
      %v2587 = vpop.f32.mrb[0].mxu0
      %v2588 = vadd.f32 0.0, %v2587
      %v2589 = vpop.f32.mrb[0].mxu0
      %v2590 = vpop.f32.mrb[0].mxu0
      %v2591 = vadd.f32 0.0, %v2590
      %v2592 = vpop.f32.mrb[0].mxu0
      %2593 = vmatprep.mubr.bf16.mxu0 0
      %2594 = vmatmul.mubr.bf16.gmra.mrb[0].mxu0 %v731
      %v2595 = vpop.f32.mrb[0].mxu0
      %v2596 = vadd.f32 0.0, %v2595
      %v2597 = vpop.f32.mrb[0].mxu0
      %v2598 = vpop.f32.mrb[0].mxu0
      %v2599 = vadd.f32 0.0, %v2598
      %v2600 = vpop.f32.mrb[0].mxu0
      %2601 = vmatprep.mubr.bf16.mxu0 0
      %2602 = vmatmul.mubr.bf16.gmra.mrb[0].mxu0 %v734
      %v2603 = vpop.f32.mrb[0].mxu0
      %v2604 = vadd.f32 0.0, %v2603
      %v2605 = vpop.f32.mrb[0].mxu0
      %v2606 = vpop.f32.mrb[0].mxu0
      %v2607 = vadd.f32 0.0, %v2606
      %v2608 = vpop.f32.mrb[0].mxu0
      %2609 = vmatprep.mubr.bf16.mxu0 0
      %2610 = vmatmul.mubr.bf16.gmra.mrb[0].mxu0 %v737
      %v2611 = vpop.f32.mrb[0].mxu0
      %v2612 = vadd.f32 0.0, %v2611
      %v2613 = vpop.f32.mrb[0].mxu0
      %v2614 = vpop.f32.mrb[0].mxu0
      %v2615 = vadd.f32 0.0, %v2614
      %v2616 = vpop.f32.mrb[0].mxu0
      %2617 = vmatprep.mubr.bf16.mxu0 0
      %2618 = vmatmul.mubr.bf16.gmra.mrb[0].mxu0 %v740
      %v2619 = vpop.f32.mrb[0].mxu0
      %v2620 = vadd.f32 0.0, %v2619
      %v2621 = vpop.f32.mrb[0].mxu0
      %v2622 = vpop.f32.mrb[0].mxu0
      %v2623 = vadd.f32 0.0, %v2622
      %v2624 = vpop.f32.mrb[0].mxu0
      %2625 = vmatprep.mubr.bf16.mxu0 0
      %2626 = vmatmul.mubr.bf16.gmra.mrb[0].mxu0 %v743
      %v2627 = vpop.f32.mrb[0].mxu0
      %v2628 = vadd.f32 0.0, %v2627
      %v2629 = vpop.f32.mrb[0].mxu0
      %v2630 = vpop.f32.mrb[0].mxu0
      %v2631 = vadd.f32 0.0, %v2630
      %v2632 = vpop.f32.mrb[0].mxu0
      %2633 = vmatprep.mubr.bf16.mxu0 0
      %2634 = vmatmul.mubr.bf16.gmra.mrb[0].mxu0 %v746
      %v2635 = vpop.f32.mrb[0].mxu0
      %v2636 = vadd.f32 0.0, %v2635
      %v2637 = vpop.f32.mrb[0].mxu0
      %v2638 = vpop.f32.mrb[0].mxu0
      %v2639 = vadd.f32 0.0, %v2638
      %v2640 = vpop.f32.mrb[0].mxu0
      %2641 = vmatprep.mubr.bf16.mxu0 0
      %2642 = vmatmul.mubr.bf16.gmra.mrb[0].mxu0 %v749
      %v2643 = vpop.f32.mrb[0].mxu0
      %v2644 = vadd.f32 0.0, %v2643
      %v2645 = vpop.f32.mrb[0].mxu0
      %v2646 = vpop.f32.mrb[0].mxu0
      %v2647 = vadd.f32 0.0, %v2646
      %v2648 = vpop.f32.mrb[0].mxu0
      %2649 = vmatprep.mubr.bf16.mxu0 0
      %2650 = vmatmul.mubr.bf16.gmra.mrb[0].mxu0 %v752
      %v2651 = vpop.f32.mrb[0].mxu0
      %v2652 = vadd.f32 0.0, %v2651
      %v2653 = vpop.f32.mrb[0].mxu0
      %v2654 = vpop.f32.mrb[0].mxu0
      %v2655 = vadd.f32 0.0, %v2654
      %v2656 = vpop.f32.mrb[0].mxu0
      %2657 = vmatprep.mubr.bf16.mxu0 0
      %2658 = vmatmul.mubr.bf16.gmra.mrb[0].mxu0 %v755
      %v2659 = vpop.f32.mrb[0].mxu0
      %v2660 = vadd.f32 0.0, %v2659
      %v2661 = vpop.f32.mrb[0].mxu0
      %v2662 = vpop.f32.mrb[0].mxu0
      %v2663 = vadd.f32 0.0, %v2662
      %v2664 = vpop.f32.mrb[0].mxu0
      %2665 = vmatprep.mubr.bf16.mxu0 0
      %2666 = vmatmul.mubr.bf16.gmra.mrb[0].mxu0 %v758
      %v2667 = vpop.f32.mrb[0].mxu0
      %v2668 = vadd.f32 0.0, %v2667
      %v2669 = vpop.f32.mrb[0].mxu0
      %v2670 = vpop.f32.mrb[0].mxu0
      %v2671 = vadd.f32 0.0, %v2670
      %v2672 = vpop.f32.mrb[0].mxu0
      %2673 = vmatprep.mubr.bf16.mxu0 0
      %2674 = vmatmul.mubr.bf16.gmra.mrb[0].mxu0 %v1878
      %v2675 = vpop.f32.mrb[0].mxu0
      %v2676 = vadd.f32 0.0, %v2675
      %v2677 = vpop.f32.mrb[0].mxu0
      %v2678 = vpop.f32.mrb[0].mxu0
      %v2679 = vadd.f32 0.0, %v2678
      %v2680 = vpop.f32.mrb[0].mxu0
      %2681 = vmatprep.mubr.bf16.mxu0 0
      %2682 = vmatmul.mubr.bf16.gmra.mrb[0].mxu0 %v2524
      %v2683 = vpop.f32.mrb[0].mxu0
      %v2684 = vadd.f32 0.0, %v2683
      %v2685 = vpop.f32.mrb[0].mxu0
      %v2686 = vpop.f32.mrb[0].mxu0
      %v2687 = vadd.f32 0.0, %v2686
      %v2688 = vpop.f32.mrb[0].mxu0
      %2689 = vdwg.mxu0
      %v2690 = vadd.f32 %v2462, %v2564
      %v2691 = vadd.f32 %v2463, %v2567
      %v2692 = vadd.f32 %v2464, %v2572
      %v2693 = vadd.f32 %v2465, %v2575
      %v2694 = vadd.f32 %v2466, %v2580
      %v2695 = vadd.f32 %v2467, %v2583
      %v2696 = vadd.f32 %v2468, %v2588
      %v2697 = vadd.f32 %v2469, %v2591
      %v2698 = vadd.f32 %v2470, %v2596
      %v2699 = vadd.f32 %v2471, %v2599
      %v2700 = vadd.f32 %v2472, %v2604
      %v2701 = vadd.f32 %v2473, %v2607
      %v2702 = vadd.f32 %v2474, %v2612
      %v2703 = vadd.f32 %v2475, %v2615
      %v2704 = vadd.f32 %v2476, %v2620
      %v2705 = vadd.f32 %v2477, %v2623
      %v2706 = vadd.f32 %v2478, %v2628
      %v2707 = vadd.f32 %v2479, %v2631
      %v2708 = vadd.f32 %v2480, %v2636
      %v2709 = vadd.f32 %v2481, %v2639
      %v2710 = vadd.f32 %v2482, %v2644
      %v2711 = vadd.f32 %v2483, %v2647
      %v2712 = vadd.f32 %v2484, %v2652
      %v2713 = vadd.f32 %v2485, %v2655
      %v2714 = vadd.f32 %v2486, %v2660
      %v2715 = vadd.f32 %v2487, %v2663
      %v2716 = vadd.f32 %v2488, %v2668
      %v2717 = vadd.f32 %v2489, %v2671
      %v2718 = vadd.f32 %v2490, %v2676
      %v2719 = vadd.f32 %v2491, %v2679
      %v2720 = vadd.f32 %v2492, %v2684
      %v2721 = vadd.f32 %v2493, %v2687
      %v2723 = vrot.slane %v270, 5
      %v2724 = vrot.slane %v2723, 4
      %v2725 = vrot.slane %v271, 5
      %v2726 = vsel %vm1235, %v2724, %v2725
      %v2727 = vrot.slane %v2725, 4
      %v2728 = vrot.slane %v272, 5
      %v2729 = vsel %vm1235, %v2727, %v2728
      %s2730 = scalar_lea.vmem %s1, 16
      %v2731 = vld [vmem:[%s2730] sm:$0x3]
      %v2732 = vunpack.c.l.b16 %v2726
      %v2733 = vunpack.c.l.b16 %v2729
      %v2734 = vpack.c.b16 %v2733, %v2732
      %v2736 = vsel %vm711, %v2734, 0
      %v2739 = vsel %vm760, %v2731, 0
      %2741 = vmatprep.subr.bf16.mxu0 0
      %2742 = vmatpush1.bf16.msra.mxu0 %v2739
      %2743 = vmatprep.subr.bf16.mxu0 0
      %2744 = vmatpush1.bf16.msra.mxu0 0
      %2745 = vmatprep.subr.bf16.mxu0 0
      %2746 = vmatpush1.bf16.msra.mxu0 0
      %2747 = vmatprep.subr.bf16.mxu0 0
      %2748 = vmatpush1.bf16.msra.mxu0 0
      %2749 = vmatprep.subr.bf16.mxu0 0
      %2750 = vmatpush1.bf16.msra.mxu0 0
      %2751 = vmatprep.subr.bf16.mxu0 0
      %2752 = vmatpush1.bf16.msra.mxu0 0
      %2753 = vmatprep.subr.bf16.mxu0 0
      %2754 = vmatpush1.bf16.msra.mxu0 0
      %2755 = vmatprep.subr.bf16.mxu0 0
      %2756 = vmatpush1.bf16.msra.mxu0 0
      %2757 = vmatprep.subr.bf16.mxu0 0
      %2758 = vmatpush1.bf16.msra.mxu0 0
      %2759 = vmatprep.subr.bf16.mxu0 0
      %2760 = vmatpush1.bf16.msra.mxu0 0
      %2761 = vmatprep.subr.bf16.mxu0 0
      %2762 = vmatpush1.bf16.msra.mxu0 0
      %2763 = vmatprep.subr.bf16.mxu0 0
      %2764 = vmatpush1.bf16.msra.mxu0 0
      %2765 = vmatprep.subr.bf16.mxu0 0
      %2766 = vmatpush1.bf16.msra.mxu0 0
      %2767 = vmatprep.subr.bf16.mxu0 0
      %2768 = vmatpush1.bf16.msra.mxu0 0
      %2769 = vmatprep.subr.bf16.mxu0 0
      %2770 = vmatpush1.bf16.msra.mxu0 0
      %2771 = vmatprep.subr.bf16.mxu0 0
      %2772 = vmatpush1.bf16.msra.mxu0 0
      %2773 = vmatprep.mubr.bf16.mxu0 0
      %2774 = vmatmul.mubr.bf16.gmra.mrb[0].mxu0 %v1405
      %v2775 = vpop.f32.mrb[0].mxu0
      %v2776 = vadd.f32 0.0, %v2775
      %v2777 = vpop.f32.mrb[0].mxu0
      %v2778 = vpop.f32.mrb[0].mxu0
      %v2779 = vadd.f32 0.0, %v2778
      %v2780 = vpop.f32.mrb[0].mxu0
      %2781 = vmatprep.mubr.bf16.mxu0 0
      %2782 = vmatmul.mubr.bf16.gmra.mrb[0].mxu0 %v1408
      %v2783 = vpop.f32.mrb[0].mxu0
      %v2784 = vadd.f32 0.0, %v2783
      %v2785 = vpop.f32.mrb[0].mxu0
      %v2786 = vpop.f32.mrb[0].mxu0
      %v2787 = vadd.f32 0.0, %v2786
      %v2788 = vpop.f32.mrb[0].mxu0
      %2789 = vmatprep.mubr.bf16.mxu0 0
      %2790 = vmatmul.mubr.bf16.gmra.mrb[0].mxu0 %v1411
      %v2791 = vpop.f32.mrb[0].mxu0
      %v2792 = vadd.f32 0.0, %v2791
      %v2793 = vpop.f32.mrb[0].mxu0
      %v2794 = vpop.f32.mrb[0].mxu0
      %v2795 = vadd.f32 0.0, %v2794
      %v2796 = vpop.f32.mrb[0].mxu0
      %2797 = vmatprep.mubr.bf16.mxu0 0
      %2798 = vmatmul.mubr.bf16.gmra.mrb[0].mxu0 %v1414
      %v2799 = vpop.f32.mrb[0].mxu0
      %v2800 = vadd.f32 0.0, %v2799
      %v2801 = vpop.f32.mrb[0].mxu0
      %v2802 = vpop.f32.mrb[0].mxu0
      %v2803 = vadd.f32 0.0, %v2802
      %v2804 = vpop.f32.mrb[0].mxu0
      %2805 = vmatprep.mubr.bf16.mxu0 0
      %2806 = vmatmul.mubr.bf16.gmra.mrb[0].mxu0 %v1417
      %v2807 = vpop.f32.mrb[0].mxu0
      %v2808 = vadd.f32 0.0, %v2807
      %v2809 = vpop.f32.mrb[0].mxu0
      %v2810 = vpop.f32.mrb[0].mxu0
      %v2811 = vadd.f32 0.0, %v2810
      %v2812 = vpop.f32.mrb[0].mxu0
      %2813 = vmatprep.mubr.bf16.mxu0 0
      %2814 = vmatmul.mubr.bf16.gmra.mrb[0].mxu0 %v1420
      %v2815 = vpop.f32.mrb[0].mxu0
      %v2816 = vadd.f32 0.0, %v2815
      %v2817 = vpop.f32.mrb[0].mxu0
      %v2818 = vpop.f32.mrb[0].mxu0
      %v2819 = vadd.f32 0.0, %v2818
      %v2820 = vpop.f32.mrb[0].mxu0
      %2821 = vmatprep.mubr.bf16.mxu0 0
      %2822 = vmatmul.mubr.bf16.gmra.mrb[0].mxu0 %v1423
      %v2823 = vpop.f32.mrb[0].mxu0
      %v2824 = vadd.f32 0.0, %v2823
      %v2825 = vpop.f32.mrb[0].mxu0
      %v2826 = vpop.f32.mrb[0].mxu0
      %v2827 = vadd.f32 0.0, %v2826
      %v2828 = vpop.f32.mrb[0].mxu0
      %2829 = vmatprep.mubr.bf16.mxu0 0
      %2830 = vmatmul.mubr.bf16.gmra.mrb[0].mxu0 %v1426
      %v2831 = vpop.f32.mrb[0].mxu0
      %v2832 = vadd.f32 0.0, %v2831
      %v2833 = vpop.f32.mrb[0].mxu0
      %v2834 = vpop.f32.mrb[0].mxu0
      %v2835 = vadd.f32 0.0, %v2834
      %v2836 = vpop.f32.mrb[0].mxu0
      %2837 = vmatprep.mubr.bf16.mxu0 0
      %2838 = vmatmul.mubr.bf16.gmra.mrb[0].mxu0 %v1429
      %v2839 = vpop.f32.mrb[0].mxu0
      %v2840 = vadd.f32 0.0, %v2839
      %v2841 = vpop.f32.mrb[0].mxu0
      %v2842 = vpop.f32.mrb[0].mxu0
      %v2843 = vadd.f32 0.0, %v2842
      %v2844 = vpop.f32.mrb[0].mxu0
      %2845 = vmatprep.mubr.bf16.mxu0 0
      %2846 = vmatmul.mubr.bf16.gmra.mrb[0].mxu0 %v1432
      %v2847 = vpop.f32.mrb[0].mxu0
      %v2848 = vadd.f32 0.0, %v2847
      %v2849 = vpop.f32.mrb[0].mxu0
      %v2850 = vpop.f32.mrb[0].mxu0
      %v2851 = vadd.f32 0.0, %v2850
      %v2852 = vpop.f32.mrb[0].mxu0
      %2853 = vmatprep.mubr.bf16.mxu0 0
      %2854 = vmatmul.mubr.bf16.gmra.mrb[0].mxu0 %v1435
      %v2855 = vpop.f32.mrb[0].mxu0
      %v2856 = vadd.f32 0.0, %v2855
      %v2857 = vpop.f32.mrb[0].mxu0
      %v2858 = vpop.f32.mrb[0].mxu0
      %v2859 = vadd.f32 0.0, %v2858
      %v2860 = vpop.f32.mrb[0].mxu0
      %2861 = vmatprep.mubr.bf16.mxu0 0
      %2862 = vmatmul.mubr.bf16.gmra.mrb[0].mxu0 %v1438
      %v2863 = vpop.f32.mrb[0].mxu0
      %v2864 = vadd.f32 0.0, %v2863
      %v2865 = vpop.f32.mrb[0].mxu0
      %v2866 = vpop.f32.mrb[0].mxu0
      %v2867 = vadd.f32 0.0, %v2866
      %v2868 = vpop.f32.mrb[0].mxu0
      %2869 = vmatprep.mubr.bf16.mxu0 0
      %2870 = vmatmul.mubr.bf16.gmra.mrb[0].mxu0 %v1441
      %v2871 = vpop.f32.mrb[0].mxu0
      %v2872 = vadd.f32 0.0, %v2871
      %v2873 = vpop.f32.mrb[0].mxu0
      %v2874 = vpop.f32.mrb[0].mxu0
      %v2875 = vadd.f32 0.0, %v2874
      %v2876 = vpop.f32.mrb[0].mxu0
      %2877 = vmatprep.mubr.bf16.mxu0 0
      %2878 = vmatmul.mubr.bf16.gmra.mrb[0].mxu0 %v1444
      %v2879 = vpop.f32.mrb[0].mxu0
      %v2880 = vadd.f32 0.0, %v2879
      %v2881 = vpop.f32.mrb[0].mxu0
      %v2882 = vpop.f32.mrb[0].mxu0
      %v2883 = vadd.f32 0.0, %v2882
      %v2884 = vpop.f32.mrb[0].mxu0
      %2885 = vmatprep.mubr.bf16.mxu0 0
      %2886 = vmatmul.mubr.bf16.gmra.mrb[0].mxu0 %v2090
      %v2887 = vpop.f32.mrb[0].mxu0
      %v2888 = vadd.f32 0.0, %v2887
      %v2889 = vpop.f32.mrb[0].mxu0
      %v2890 = vpop.f32.mrb[0].mxu0
      %v2891 = vadd.f32 0.0, %v2890
      %v2892 = vpop.f32.mrb[0].mxu0
      %2893 = vmatprep.mubr.bf16.mxu0 0
      %2894 = vmatmul.mubr.bf16.gmra.mrb[0].mxu0 %v2736
      %v2895 = vpop.f32.mrb[0].mxu0
      %v2896 = vadd.f32 0.0, %v2895
      %v2897 = vpop.f32.mrb[0].mxu0
      %v2898 = vpop.f32.mrb[0].mxu0
      %v2899 = vadd.f32 0.0, %v2898
      %v2900 = vpop.f32.mrb[0].mxu0
      %2901 = vdwg.mxu0
      %v2902 = vadd.f32 %v2690, %v2776
      %v2903 = vadd.f32 %v2691, %v2779
      %v2904 = vadd.f32 %v2692, %v2784
      %v2905 = vadd.f32 %v2693, %v2787
      %v2906 = vadd.f32 %v2694, %v2792
      %v2907 = vadd.f32 %v2695, %v2795
      %v2908 = vadd.f32 %v2696, %v2800
      %v2909 = vadd.f32 %v2697, %v2803
      %v2910 = vadd.f32 %v2698, %v2808
      %v2911 = vadd.f32 %v2699, %v2811
      %v2912 = vadd.f32 %v2700, %v2816
      %v2913 = vadd.f32 %v2701, %v2819
      %v2914 = vadd.f32 %v2702, %v2824
      %v2915 = vadd.f32 %v2703, %v2827
      %v2916 = vadd.f32 %v2704, %v2832
      %v2917 = vadd.f32 %v2705, %v2835
      %v2918 = vadd.f32 %v2706, %v2840
      %v2919 = vadd.f32 %v2707, %v2843
      %v2920 = vadd.f32 %v2708, %v2848
      %v2921 = vadd.f32 %v2709, %v2851
      %v2922 = vadd.f32 %v2710, %v2856
      %v2923 = vadd.f32 %v2711, %v2859
      %v2924 = vadd.f32 %v2712, %v2864
      %v2925 = vadd.f32 %v2713, %v2867
      %v2926 = vadd.f32 %v2714, %v2872
      %v2927 = vadd.f32 %v2715, %v2875
      %v2928 = vadd.f32 %v2716, %v2880
      %v2929 = vadd.f32 %v2717, %v2883
      %v2930 = vadd.f32 %v2718, %v2888
      %v2931 = vadd.f32 %v2719, %v2891
      %v2932 = vadd.f32 %v2720, %v2896
      %v2933 = vadd.f32 %v2721, %v2899
      %v2934 = vld [vmem:[%s2] sm:$0x1]
      %v2936 = vlaneseq
      %v2937 = vshrl.u32 %v2936, 7
      %v2938 = vsub.s32 0, %v2937
      %v2939 = vrot.slane %v2934, %v2938
      %v2941 = vadd.f32 %v2902, %v2939
      %v2942 = vadd.f32 %v2903, %v2939
      %v2943 = vadd.f32 %v2904, %v2939
      %v2944 = vadd.f32 %v2905, %v2939
      %v2945 = vadd.f32 %v2906, %v2939
      %v2946 = vadd.f32 %v2907, %v2939
      %v2947 = vadd.f32 %v2908, %v2939
      %v2948 = vadd.f32 %v2909, %v2939
      %v2949 = vadd.f32 %v2910, %v2939
      %v2950 = vadd.f32 %v2911, %v2939
      %v2951 = vadd.f32 %v2912, %v2939
      %v2952 = vadd.f32 %v2913, %v2939
      %v2953 = vadd.f32 %v2914, %v2939
      %v2954 = vadd.f32 %v2915, %v2939
      %v2955 = vadd.f32 %v2916, %v2939
      %v2956 = vadd.f32 %v2917, %v2939
      %v2957 = vadd.f32 %v2918, %v2939
      %v2958 = vadd.f32 %v2919, %v2939
      %v2959 = vadd.f32 %v2920, %v2939
      %v2960 = vadd.f32 %v2921, %v2939
      %v2961 = vadd.f32 %v2922, %v2939
      %v2962 = vadd.f32 %v2923, %v2939
      %v2963 = vadd.f32 %v2924, %v2939
      %v2964 = vadd.f32 %v2925, %v2939
      %v2965 = vadd.f32 %v2926, %v2939
      %v2966 = vadd.f32 %v2927, %v2939
      %v2967 = vadd.f32 %v2928, %v2939
      %v2968 = vadd.f32 %v2929, %v2939
      %v2969 = vadd.f32 %v2930, %v2939
      %v2970 = vadd.f32 %v2931, %v2939
      %v2971 = vadd.f32 %v2932, %v2939
      %v2972 = vadd.f32 %v2933, %v2939
      %vm2973 = vcmp.ge.f32.partialorder %v2941, 0.0
      %vm2974 = vcmp.ge.f32.partialorder %v2942, 0.0
      %vm2975 = vcmp.ge.f32.partialorder %v2943, 0.0
      %vm2976 = vcmp.ge.f32.partialorder %v2944, 0.0
      %vm2977 = vcmp.ge.f32.partialorder %v2945, 0.0
      %vm2978 = vcmp.ge.f32.partialorder %v2946, 0.0
      %vm2979 = vcmp.ge.f32.partialorder %v2947, 0.0
      %vm2980 = vcmp.ge.f32.partialorder %v2948, 0.0
      %vm2981 = vcmp.ge.f32.partialorder %v2949, 0.0
      %vm2982 = vcmp.ge.f32.partialorder %v2950, 0.0
      %vm2983 = vcmp.ge.f32.partialorder %v2951, 0.0
      %vm2984 = vcmp.ge.f32.partialorder %v2952, 0.0
      %vm2985 = vcmp.ge.f32.partialorder %v2953, 0.0
      %vm2986 = vcmp.ge.f32.partialorder %v2954, 0.0
      %vm2987 = vcmp.ge.f32.partialorder %v2955, 0.0
      %vm2988 = vcmp.ge.f32.partialorder %v2956, 0.0
      %vm2989 = vcmp.ge.f32.partialorder %v2957, 0.0
      %vm2990 = vcmp.ge.f32.partialorder %v2958, 0.0
      %vm2991 = vcmp.ge.f32.partialorder %v2959, 0.0
      %vm2992 = vcmp.ge.f32.partialorder %v2960, 0.0
      %vm2993 = vcmp.ge.f32.partialorder %v2961, 0.0
      %vm2994 = vcmp.ge.f32.partialorder %v2962, 0.0
      %vm2995 = vcmp.ge.f32.partialorder %v2963, 0.0
      %vm2996 = vcmp.ge.f32.partialorder %v2964, 0.0
      %vm2997 = vcmp.ge.f32.partialorder %v2965, 0.0
      %vm2998 = vcmp.ge.f32.partialorder %v2966, 0.0
      %vm2999 = vcmp.ge.f32.partialorder %v2967, 0.0
      %vm3000 = vcmp.ge.f32.partialorder %v2968, 0.0
      %vm3001 = vcmp.ge.f32.partialorder %v2969, 0.0
      %vm3002 = vcmp.ge.f32.partialorder %v2970, 0.0
      %vm3003 = vcmp.ge.f32.partialorder %v2971, 0.0
      %vm3004 = vcmp.ge.f32.partialorder %v2972, 0.0
      %v3005 = vmul.f32 %v2941, 0.1
      %v3006 = vmul.f32 %v2942, 0.1
      %v3007 = vmul.f32 %v2943, 0.1
      %v3008 = vmul.f32 %v2944, 0.1
      %v3009 = vmul.f32 %v2945, 0.1
      %v3010 = vmul.f32 %v2946, 0.1
      %v3011 = vmul.f32 %v2947, 0.1
      %v3012 = vmul.f32 %v2948, 0.1
      %v3013 = vmul.f32 %v2949, 0.1
      %v3014 = vmul.f32 %v2950, 0.1
      %v3015 = vmul.f32 %v2951, 0.1
      %v3016 = vmul.f32 %v2952, 0.1
      %v3017 = vmul.f32 %v2953, 0.1
      %v3018 = vmul.f32 %v2954, 0.1
      %v3019 = vmul.f32 %v2955, 0.1
      %v3020 = vmul.f32 %v2956, 0.1
      %v3021 = vmul.f32 %v2957, 0.1
      %v3022 = vmul.f32 %v2958, 0.1
      %v3023 = vmul.f32 %v2959, 0.1
      %v3024 = vmul.f32 %v2960, 0.1
      %v3025 = vmul.f32 %v2961, 0.1
      %v3026 = vmul.f32 %v2962, 0.1
      %v3027 = vmul.f32 %v2963, 0.1
      %v3028 = vmul.f32 %v2964, 0.1
      %v3029 = vmul.f32 %v2965, 0.1
      %v3030 = vmul.f32 %v2966, 0.1
      %v3031 = vmul.f32 %v2967, 0.1
      %v3032 = vmul.f32 %v2968, 0.1
      %v3033 = vmul.f32 %v2969, 0.1
      %v3034 = vmul.f32 %v2970, 0.1
      %v3035 = vmul.f32 %v2971, 0.1
      %v3036 = vmul.f32 %v2972, 0.1
      %v3037 = vsel %vm2973, %v2941, %v3005
      %v3038 = vsel %vm2974, %v2942, %v3006
      %v3039 = vsel %vm2975, %v2943, %v3007
      %v3040 = vsel %vm2976, %v2944, %v3008
      %v3041 = vsel %vm2977, %v2945, %v3009
      %v3042 = vsel %vm2978, %v2946, %v3010
      %v3043 = vsel %vm2979, %v2947, %v3011
      %v3044 = vsel %vm2980, %v2948, %v3012
      %v3045 = vsel %vm2981, %v2949, %v3013
      %v3046 = vsel %vm2982, %v2950, %v3014
      %v3047 = vsel %vm2983, %v2951, %v3015
      %v3048 = vsel %vm2984, %v2952, %v3016
      %v3049 = vsel %vm2985, %v2953, %v3017
      %v3050 = vsel %vm2986, %v2954, %v3018
      %v3051 = vsel %vm2987, %v2955, %v3019
      %v3052 = vsel %vm2988, %v2956, %v3020
      %v3053 = vsel %vm2989, %v2957, %v3021
      %v3054 = vsel %vm2990, %v2958, %v3022
      %v3055 = vsel %vm2991, %v2959, %v3023
      %v3056 = vsel %vm2992, %v2960, %v3024
      %v3057 = vsel %vm2993, %v2961, %v3025
      %v3058 = vsel %vm2994, %v2962, %v3026
      %v3059 = vsel %vm2995, %v2963, %v3027
      %v3060 = vsel %vm2996, %v2964, %v3028
      %v3061 = vsel %vm2997, %v2965, %v3029
      %v3062 = vsel %vm2998, %v2966, %v3030
      %v3063 = vsel %vm2999, %v2967, %v3031
      %v3064 = vsel %vm3000, %v2968, %v3032
      %v3065 = vsel %vm3001, %v2969, %v3033
      %v3066 = vsel %vm3002, %v2970, %v3034
      %v3067 = vsel %vm3003, %v2971, %v3035
      %v3068 = vsel %vm3004, %v2972, %v3036
      %v3069 = vld [vmem:[%s212] sm:$0xf]
      %v3070 = vld [vmem:[%s212 + $0x4] sm:$0xf]
      %v3071 = vld [vmem:[%s212 + $0x8] sm:$0xf]
      %v3072 = vld [vmem:[%s212 + $0xc] sm:$0xf]
      %v3073 = vld [vmem:[%s212 + $0x10] sm:$0xf]
      %v3074 = vld [vmem:[%s212 + $0x14] sm:$0xf]
      %v3075 = vld [vmem:[%s212 + $0x18] sm:$0xf]
      %v3076 = vld [vmem:[%s212 + $0x1c] sm:$0xf]
      %v3077 = vld [vmem:[%s212 + $0x20] sm:$0xf]
      %v3078 = vld [vmem:[%s212 + $0x24] sm:$0xf]
      %v3079 = vld [vmem:[%s212 + $0x28] sm:$0xf]
      %v3080 = vld [vmem:[%s212 + $0x2c] sm:$0xf]
      %v3081 = vld [vmem:[%s212 + $0x30] sm:$0xf]
      %v3082 = vld [vmem:[%s212 + $0x34] sm:$0xf]
      %v3083 = vld [vmem:[%s212 + $0x38] sm:$0xf]
      %v3084 = vld [vmem:[%s212 + $0x3c] sm:$0xf]
      %v3085 = vld [vmem:[%s212 + $0x40] sm:$0xf]
      %v3086 = vld [vmem:[%s212 + $0x44] sm:$0xf]
      %v3087 = vld [vmem:[%s212 + $0x48] sm:$0xf]
      %v3088 = vld [vmem:[%s212 + $0x4c] sm:$0xf]
      %v3089 = vld [vmem:[%s212 + $0x50] sm:$0xf]
      %v3090 = vld [vmem:[%s212 + $0x54] sm:$0xf]
      %v3091 = vld [vmem:[%s212 + $0x58] sm:$0xf]
      %v3092 = vld [vmem:[%s212 + $0x5c] sm:$0xf]
      %v3093 = vld [vmem:[%s212 + $0x60] sm:$0xf]
      %v3094 = vld [vmem:[%s212 + $0x64] sm:$0xf]
      %v3095 = vld [vmem:[%s212 + $0x68] sm:$0xf]
      %v3096 = vld [vmem:[%s212 + $0x6c] sm:$0xf]
      %v3097 = vld [vmem:[%s212 + $0x70] sm:$0xf]
      %v3098 = vld [vmem:[%s212 + $0x74] sm:$0xf]
      %v3099 = vld [vmem:[%s212 + $0x78] sm:$0xf]
      %v3100 = vld [vmem:[%s212 + $0x7c] sm:$0xf]
      %v3101 = vunpack.c.l.bf16 %v3069
      %v3102 = vunpack.c.l.bf16 %v3070
      %v3103 = vunpack.c.l.bf16 %v3071
      %v3104 = vunpack.c.l.bf16 %v3072
      %v3105 = vunpack.c.l.bf16 %v3073
      %v3106 = vunpack.c.l.bf16 %v3074
      %v3107 = vunpack.c.l.bf16 %v3075
      %v3108 = vunpack.c.l.bf16 %v3076
      %v3109 = vunpack.c.l.bf16 %v3077
      %v3110 = vunpack.c.l.bf16 %v3078
      %v3111 = vunpack.c.l.bf16 %v3079
      %v3112 = vunpack.c.l.bf16 %v3080
      %v3113 = vunpack.c.l.bf16 %v3081
      %v3114 = vunpack.c.l.bf16 %v3082
      %v3115 = vunpack.c.l.bf16 %v3083
      %v3116 = vunpack.c.l.bf16 %v3084
      %v3117 = vunpack.c.l.bf16 %v3085
      %v3118 = vunpack.c.l.bf16 %v3086
      %v3119 = vunpack.c.l.bf16 %v3087
      %v3120 = vunpack.c.l.bf16 %v3088
      %v3121 = vunpack.c.l.bf16 %v3089
      %v3122 = vunpack.c.l.bf16 %v3090
      %v3123 = vunpack.c.l.bf16 %v3091
      %v3124 = vunpack.c.l.bf16 %v3092
      %v3125 = vunpack.c.l.bf16 %v3093
      %v3126 = vunpack.c.l.bf16 %v3094
      %v3127 = vunpack.c.l.bf16 %v3095
      %v3128 = vunpack.c.l.bf16 %v3096
      %v3129 = vunpack.c.l.bf16 %v3097
      %v3130 = vunpack.c.l.bf16 %v3098
      %v3131 = vunpack.c.l.bf16 %v3099
      %v3132 = vunpack.c.l.bf16 %v3100
      %v3133 = vadd.f32 %v3037, %v3101
      %v3134 = vadd.f32 %v3038, %v3102
      %v3135 = vadd.f32 %v3039, %v3103
      %v3136 = vadd.f32 %v3040, %v3104
      %v3137 = vadd.f32 %v3041, %v3105
      %v3138 = vadd.f32 %v3042, %v3106
      %v3139 = vadd.f32 %v3043, %v3107
      %v3140 = vadd.f32 %v3044, %v3108
      %v3141 = vadd.f32 %v3045, %v3109
      %v3142 = vadd.f32 %v3046, %v3110
      %v3143 = vadd.f32 %v3047, %v3111
      %v3144 = vadd.f32 %v3048, %v3112
      %v3145 = vadd.f32 %v3049, %v3113
      %v3146 = vadd.f32 %v3050, %v3114
      %v3147 = vadd.f32 %v3051, %v3115
      %v3148 = vadd.f32 %v3052, %v3116
      %v3149 = vadd.f32 %v3053, %v3117
      %v3150 = vadd.f32 %v3054, %v3118
      %v3151 = vadd.f32 %v3055, %v3119
      %v3152 = vadd.f32 %v3056, %v3120
      %v3153 = vadd.f32 %v3057, %v3121
      %v3154 = vadd.f32 %v3058, %v3122
      %v3155 = vadd.f32 %v3059, %v3123
      %v3156 = vadd.f32 %v3060, %v3124
      %v3157 = vadd.f32 %v3061, %v3125
      %v3158 = vadd.f32 %v3062, %v3126
      %v3159 = vadd.f32 %v3063, %v3127
      %v3160 = vadd.f32 %v3064, %v3128
      %v3161 = vadd.f32 %v3065, %v3129
      %v3162 = vadd.f32 %v3066, %v3130
      %v3163 = vadd.f32 %v3067, %v3131
      %v3164 = vadd.f32 %v3068, %v3132
      %v3165 = vpack.c.bf16 %v3134, %v3133
      %v3166 = vpack.c.bf16 %v3136, %v3135
      %v3167 = vpack.c.bf16 %v3138, %v3137
      %v3168 = vpack.c.bf16 %v3140, %v3139
      %v3169 = vpack.c.bf16 %v3142, %v3141
      %v3170 = vpack.c.bf16 %v3144, %v3143
      %v3171 = vpack.c.bf16 %v3146, %v3145
      %v3172 = vpack.c.bf16 %v3148, %v3147
      %v3173 = vpack.c.bf16 %v3150, %v3149
      %v3174 = vpack.c.bf16 %v3152, %v3151
      %v3175 = vpack.c.bf16 %v3154, %v3153
      %v3176 = vpack.c.bf16 %v3156, %v3155
      %v3177 = vpack.c.bf16 %v3158, %v3157
      %v3178 = vpack.c.bf16 %v3160, %v3159
      %v3179 = vpack.c.bf16 %v3162, %v3161
      %v3180 = vpack.c.bf16 %v3164, %v3163
      %v3197 = vunpack.c.l.b16 %v3165
      %v3198 = vunpack.c.h.b16 %v3165
      %v3199 = vunpack.c.l.b16 %v3166
      %v3200 = vunpack.c.h.b16 %v3166
      %v3201 = vunpack.c.l.b16 %v3167
      %v3202 = vunpack.c.h.b16 %v3167
      %v3203 = vunpack.c.l.b16 %v3168
      %v3204 = vunpack.c.h.b16 %v3168
      %v3205 = vunpack.c.l.b16 %v3169
      %v3206 = vunpack.c.h.b16 %v3169
      %v3207 = vunpack.c.l.b16 %v3170
      %v3208 = vunpack.c.h.b16 %v3170
      %v3209 = vunpack.c.l.b16 %v3171
      %v3210 = vunpack.c.h.b16 %v3171
      %v3211 = vunpack.c.l.b16 %v3172
      %v3212 = vunpack.c.h.b16 %v3172
      %v3213 = vunpack.c.l.b16 %v3173
      %v3214 = vunpack.c.h.b16 %v3173
      %v3215 = vunpack.c.l.b16 %v3174
      %v3216 = vunpack.c.h.b16 %v3174
      %v3217 = vunpack.c.l.b16 %v3175
      %v3218 = vunpack.c.h.b16 %v3175
      %v3219 = vunpack.c.l.b16 %v3176
      %v3220 = vunpack.c.h.b16 %v3176
      %v3221 = vunpack.c.l.b16 %v3177
      %v3222 = vunpack.c.h.b16 %v3177
      %v3223 = vunpack.c.l.b16 %v3178
      %v3224 = vunpack.c.h.b16 %v3178
      %v3225 = vunpack.c.l.b16 %v3179
      %v3226 = vunpack.c.h.b16 %v3179
      %v3227 = vunpack.c.l.b16 %v3180
      %v3228 = vunpack.c.h.b16 %v3180
      %v3229 = vpack.c.b16 %v3197, %v3197
      %v3230 = vpack.c.b16 %v3198, %v3198
      %v3231 = vpack.c.b16 %v3199, %v3199
      %v3232 = vpack.c.b16 %v3200, %v3200
      %v3233 = vpack.c.b16 %v3201, %v3201
      %v3234 = vpack.c.b16 %v3202, %v3202
      %v3235 = vpack.c.b16 %v3203, %v3203
      %v3236 = vpack.c.b16 %v3204, %v3204
      %v3237 = vpack.c.b16 %v3205, %v3205
      %v3238 = vpack.c.b16 %v3206, %v3206
      %v3239 = vpack.c.b16 %v3207, %v3207
      %v3240 = vpack.c.b16 %v3208, %v3208
      %v3241 = vpack.c.b16 %v3209, %v3209
      %v3242 = vpack.c.b16 %v3210, %v3210
      %v3243 = vpack.c.b16 %v3211, %v3211
      %v3244 = vpack.c.b16 %v3212, %v3212
      %v3245 = vpack.c.b16 %v3213, %v3213
      %v3246 = vpack.c.b16 %v3214, %v3214
      %v3247 = vpack.c.b16 %v3215, %v3215
      %v3248 = vpack.c.b16 %v3216, %v3216
      %v3249 = vpack.c.b16 %v3217, %v3217
      %v3250 = vpack.c.b16 %v3218, %v3218
      %v3251 = vpack.c.b16 %v3219, %v3219
      %v3252 = vpack.c.b16 %v3220, %v3220
      %v3253 = vpack.c.b16 %v3221, %v3221
      %v3254 = vpack.c.b16 %v3222, %v3222
      %v3255 = vpack.c.b16 %v3223, %v3223
      %v3256 = vpack.c.b16 %v3224, %v3224
      %v3257 = vpack.c.b16 %v3225, %v3225
      %v3258 = vpack.c.b16 %v3226, %v3226
      %v3259 = vpack.c.b16 %v3227, %v3227
      %v3260 = vpack.c.b16 %v3228, %v3228
      %vm3293 = vcmask 27648
      %3294 = vst.msk [vmem:[%s217] sm:$0xf] %vm3293, %v3229
      %3295 = vst.msk [vmem:[%s217 + $0x4] sm:$0xf] %vm3293, %v3230
      %3296 = vst.msk [vmem:[%s217 + $0x8] sm:$0xf] %vm3293, %v3231
      %3297 = vst.msk [vmem:[%s217 + $0xc] sm:$0xf] %vm3293, %v3232
      %3298 = vst.msk [vmem:[%s217 + $0x10] sm:$0xf] %vm3293, %v3233
      %3299 = vst.msk [vmem:[%s217 + $0x14] sm:$0xf] %vm3293, %v3234
      %3300 = vst.msk [vmem:[%s217 + $0x18] sm:$0xf] %vm3293, %v3235
      %3301 = vst.msk [vmem:[%s217 + $0x1c] sm:$0xf] %vm3293, %v3236
      %3302 = vst.msk [vmem:[%s217 + $0x20] sm:$0xf] %vm3293, %v3237
      %3303 = vst.msk [vmem:[%s217 + $0x24] sm:$0xf] %vm3293, %v3238
      %3304 = vst.msk [vmem:[%s217 + $0x28] sm:$0xf] %vm3293, %v3239
      %3305 = vst.msk [vmem:[%s217 + $0x2c] sm:$0xf] %vm3293, %v3240
      %3306 = vst.msk [vmem:[%s217 + $0x30] sm:$0xf] %vm3293, %v3241
      %3307 = vst.msk [vmem:[%s217 + $0x34] sm:$0xf] %vm3293, %v3242
      %3308 = vst.msk [vmem:[%s217 + $0x38] sm:$0xf] %vm3293, %v3243
      %3309 = vst.msk [vmem:[%s217 + $0x3c] sm:$0xf] %vm3293, %v3244
      %3310 = vst.msk [vmem:[%s217 + $0x40] sm:$0xf] %vm3293, %v3245
      %3311 = vst.msk [vmem:[%s217 + $0x44] sm:$0xf] %vm3293, %v3246
      %3312 = vst.msk [vmem:[%s217 + $0x48] sm:$0xf] %vm3293, %v3247
      %3313 = vst.msk [vmem:[%s217 + $0x4c] sm:$0xf] %vm3293, %v3248
      %3314 = vst.msk [vmem:[%s217 + $0x50] sm:$0xf] %vm3293, %v3249
      %3315 = vst.msk [vmem:[%s217 + $0x54] sm:$0xf] %vm3293, %v3250
      %3316 = vst.msk [vmem:[%s217 + $0x58] sm:$0xf] %vm3293, %v3251
      %3317 = vst.msk [vmem:[%s217 + $0x5c] sm:$0xf] %vm3293, %v3252
      %3318 = vst.msk [vmem:[%s217 + $0x60] sm:$0xf] %vm3293, %v3253
      %3319 = vst.msk [vmem:[%s217 + $0x64] sm:$0xf] %vm3293, %v3254
      %3320 = vst.msk [vmem:[%s217 + $0x68] sm:$0xf] %vm3293, %v3255
      %3321 = vst.msk [vmem:[%s217 + $0x6c] sm:$0xf] %vm3293, %v3256
      %3322 = vst.msk [vmem:[%s217 + $0x70] sm:$0xf] %vm3293, %v3257
      %3323 = vst.msk [vmem:[%s217 + $0x74] sm:$0xf] %vm3293, %v3258
      %3324 = vst.msk [vmem:[%s217 + $0x78] sm:$0xf] %vm3293, %v3259
      %3325 = vst.msk [vmem:[%s217 + $0x7c] sm:$0xf] %vm3293, %v3260
      %p3326 = scmp.lt.s32.totalorder %s15, 1
      %s3327 = scalar_select %p3326, %s15, 1
      %s3328 = smul.addr %s3327, 32
      %s3329 = smul.addr %s3328, 4
      %s3330 = scalar_lea.vmem %s4, %s3329
      // Predicated region
      $region37: #{encoder_apply.8} parent=35 // pred_check
        %p3331 = pneg %p127
      $region38: #{encoder_apply.8} parent=35 // pred_check_branch
        %3333 = sbr.rel (%p3331) target = $region40
      $region39: #{encoder_apply.8} parent=35 // pred_region
        _
      $region40: #{encoder_apply.8} parent=35 // pred_fallthru
        _
    $region36: #{encoder_apply.8} parent=5 // pred_fallthru
      _
    %p3334 = scmp.le.s32.totalorder 2, %s10
    // Predicated region
    $region41: #{encoder_apply.8} parent=5 // pred_check
      %p3335 = pneg %p3334
    $region42: #{encoder_apply.8} parent=5 // pred_check_branch
      %3337 = sbr.rel (%p3335) target = $region44
    $region43: #{encoder_apply.8} parent=5 // pred_region
      %s3338 = ssub.s32 %s10, 2
      // Predicated region
      $region45: #{encoder_apply.8} parent=43 // pred_check
        %p3339 = pneg %p133
      $region46: #{encoder_apply.8} parent=43 // pred_check_branch
        %3341 = sbr.rel (%p3339) target = $region48
      $region47: #{encoder_apply.8} parent=43 // pred_region
        %p3342 = scmp.lt.s32.totalorder %s16, 1
        %s3343 = scalar_select %p3342, %s16, 1
        %s3344 = smul.addr %s3343, 32
        %s3345 = smul.addr %s3344, 4
        %s3346 = scalar_lea.vmem %s4, %s3345
      $region48: #{encoder_apply.8} parent=43 // pred_fallthru
        _
    $region44: #{encoder_apply.8} parent=5 // pred_fallthru
      _
  $region6: #{encoder_apply.8} parent=0 // loop_footer
    %s14 = sadd.s32 1, %s10
  $region7: #{encoder_apply.8} parent=0 // loop_footer_branch
    %9 = sbr.rel target = $region3
  $region8: #{encoder_apply.8} parent=0 // loop_exit
    _

// kernel: encoder_apply.12
$region0: #{encoder_apply.12}
  #allocation0 [shape = 'u32[]', space=smem, size = 0x4, offset = 0x4, fixed_abs, tag = 'smem constant byte address 0x4 - core index']
  #allocation1 [shape = 'u32[144,128]{1,0:T(1,128)}', space=vmem, size = 0x12000, scoped, tag = 'internal scratch']
  #allocation2 [shape = 'f32[16,16]{1,0:T(8,128)}', space=vmem, size = 0x2000, scoped, tag = 'scratch operand']
  %s0 = inlined_call_operand.vmem [shape: bf16[32,8], index: 0, kind: input, shape index: {}]
  %s1 = inlined_call_operand.vmem [shape: bf16[8,16], index: 1, kind: input, shape index: {}]
  %s2 = inlined_call_operand.vmem [shape: f32[1,16], index: 2, kind: input, shape index: {}]
  %s3 = inlined_call_operand.vmem [shape: bf16[32,16], index: 3, kind: output, shape index: {}]
  %s4 = sld [smem:[#allocation0]]
  $region53: #{encoder_apply.12} parent=0
    _
  %s6 = ssub.s32 1, %s4
  %s7 = scalar_select 0, %s6, %s4
  loop: start=0, step=1, limit=4
  $region2: #{encoder_apply.12} parent=0 // loop_pre_header
    _
  $region3: #{encoder_apply.12} parent=0 // loop_header
    %s9 = sphi 0, %s13
    %p10 = scmp.ge.s32.totalorder %s9, 4
    %s16 = sphi 0, %s28
    %s17 = sphi 0, %s24
    %s18 = sphi 0, %s16
    %s19 = sphi 0, %s17
    %s20 = sphi 0, %s18
    %s21 = sphi 0, %s19
    %s33 = sphi 0, %s35
    %s36 = sphi 0, %s33
    %s37 = sphi 0, %s36
    %s53 = sphi 0, %s37
    %s59 = sphi 0, %s61
    %s62 = sphi 0, %s59
    %s63 = sphi 0, %s62
    %s79 = sphi 0, %s63
    %s83 = sphi 0, %s83
    %s85 = sphi 0, %s83
    %s86 = sphi 0, %s85
    %s100 = sphi 0, %s86
    %s106 = sphi 0, %s108
    %s109 = sphi 0, %s106
    %s110 = sphi 0, %s109
    %s126 = sphi 0, %s110
  $region4: #{encoder_apply.12} parent=0 // loop_header_branch
    %12 = sbr.rel (%p10) target = $region8
  $region5: #{encoder_apply.12} parent=0 // loop_body
    %s14 = ssub.s32 %s9, 1
    %s15 = ssub.s32 %s9, 2
    %s22 = sadd.s32 1, %s17
    %p23 = scmp.ge.s32.totalorder %s22, 1
    %s24 = scalar_select %p23, 0, %s22
    %s25 = sadd.s32 1, %s16
    %s26 = scalar_select %p23, %s25, %s16
    %p27 = scmp.ge.s32.totalorder %s26, 2
    %s28 = scalar_select %p27, 0, %s26
    %s29 = ssub.s32 %s16, %s28
    %s30 = ssub.s32 %s17, %s24
    %s31 = sor.u32 %s29, %s30
    %p32 = scmp.eq.s32.totalorder %s31, 0
    %s34 = sadd.s32 %s33, 1
    %s35 = scalar_select %p32, %s33, %s34
    %p38 = pneg %p32
    %p39 = scmp.eq.s32.totalorder %s9, 1
    %p40 = por %p38, %p39
    %p41 = scmp.ne.s32.totalorder %s33, %s36
    %p42 = scmp.eq.s32.totalorder %s9, 0
    %p43 = por %p41, %p42
    %p44 = scmp.ne.s32.totalorder %s33, %s36
    %p45 = scmp.eq.s32.totalorder %s14, 1
    %p46 = por %p44, %p45
    %p47 = scmp.ne.s32.totalorder %s36, %s37
    %p48 = scmp.eq.s32.totalorder %s14, 0
    %p49 = por %p47, %p48
    %p50 = scmp.ne.s32.totalorder %s36, %s37
    %p51 = scmp.eq.s32.totalorder %s15, 1
    %p52 = por %p50, %p51
    %p54 = scmp.ne.s32.totalorder %s37, %s53
    %p55 = scmp.eq.s32.totalorder %s15, 0
    %p56 = por %p54, %p55
    %s57 = ssub.s32 %s17, %s24
    %p58 = scmp.eq.s32.totalorder %s57, 0
    %s60 = sadd.s32 %s59, 1
    %s61 = scalar_select %p58, %s59, %s60
    %p64 = pneg %p58
    %p65 = scmp.eq.s32.totalorder %s9, 1
    %p66 = por %p64, %p65
    %p67 = scmp.ne.s32.totalorder %s59, %s62
    %p68 = scmp.eq.s32.totalorder %s9, 0
    %p69 = por %p67, %p68
    %p70 = scmp.ne.s32.totalorder %s59, %s62
    %p71 = scmp.eq.s32.totalorder %s14, 1
    %p72 = por %p70, %p71
    %p73 = scmp.ne.s32.totalorder %s62, %s63
    %p74 = scmp.eq.s32.totalorder %s14, 0
    %p75 = por %p73, %p74
    %p76 = scmp.ne.s32.totalorder %s62, %s63
    %p77 = scmp.eq.s32.totalorder %s15, 1
    %p78 = por %p76, %p77
    %p80 = scmp.ne.s32.totalorder %s63, %s79
    %p81 = scmp.eq.s32.totalorder %s15, 0
    %p82 = por %p80, %p81
    %s84 = sadd.s32 %s83, 1
    %p87 = scmp.eq.s32.totalorder %s9, 1
    %p88 = scmp.ne.s32.totalorder %s83, %s85
    %p89 = scmp.eq.s32.totalorder %s9, 0
    %p90 = por %p88, %p89
    %p91 = scmp.ne.s32.totalorder %s83, %s85
    %p92 = scmp.eq.s32.totalorder %s14, 1
    %p93 = por %p91, %p92
    %p94 = scmp.ne.s32.totalorder %s85, %s86
    %p95 = scmp.eq.s32.totalorder %s14, 0
    %p96 = por %p94, %p95
    %p97 = scmp.ne.s32.totalorder %s85, %s86
    %p98 = scmp.eq.s32.totalorder %s15, 1
    %p99 = por %p97, %p98
    %p101 = scmp.ne.s32.totalorder %s86, %s100
    %p102 = scmp.eq.s32.totalorder %s15, 0
    %p103 = por %p101, %p102
    %s104 = ssub.s32 %s16, %s28
    %p105 = scmp.eq.s32.totalorder %s104, 0
    %s107 = sadd.s32 %s106, 1
    %s108 = scalar_select %p105, %s106, %s107
    %p111 = pneg %p105
    %p112 = scmp.eq.s32.totalorder %s9, 1
    %p113 = por %p111, %p112
    %p114 = scmp.ne.s32.totalorder %s106, %s109
    %p115 = scmp.eq.s32.totalorder %s9, 0
    %p116 = por %p114, %p115
    %p117 = scmp.ne.s32.totalorder %s106, %s109
    %p118 = scmp.eq.s32.totalorder %s14, 1
    %p119 = por %p117, %p118
    %p120 = scmp.ne.s32.totalorder %s109, %s110
    %p121 = scmp.eq.s32.totalorder %s14, 0
    %p122 = por %p120, %p121
    %p123 = scmp.ne.s32.totalorder %s109, %s110
    %p124 = scmp.eq.s32.totalorder %s15, 1
    %p125 = por %p123, %p124
    %p127 = scmp.ne.s32.totalorder %s110, %s126
    %p128 = scmp.eq.s32.totalorder %s15, 0
    %p129 = por %p127, %p128
    %p130 = scmp.le.s32.totalorder 1, %s9
    %p131 = scmp.lt.s32.totalorder %s9, 3
    %p132 = pnand %p130, %p131
    %p133 = pneg %p132
    // Predicated region
    $region9: #{encoder_apply.12} parent=5 // pred_check
      _
    $region10: #{encoder_apply.12} parent=5 // pred_check_branch
      %135 = sbr.rel (%p132) target = $region12
    $region11: #{encoder_apply.12} parent=5 // pred_region
      %s136 = ssub.s32 %s9, 1
      // Predicated region
      $region13: #{encoder_apply.12} parent=11 // pred_check
        %p137 = pneg %p75
      $region14: #{encoder_apply.12} parent=11 // pred_check_branch
        %139 = sbr.rel (%p137) target = $region16
      $region15: #{encoder_apply.12} parent=11 // pred_region
        %p140 = scmp.lt.s32.totalorder %s19, 0
        %s141 = scalar_select %p140, %s19, 0
        %s142 = smul.addr %s141, 4
        %s143 = scalar_lea.vmem %s1, %s142
      $region16: #{encoder_apply.12} parent=11 // pred_fallthru
        _
      // Predicated region
      $region17: #{encoder_apply.12} parent=11 // pred_check
        %p144 = pneg %p96
      $region18: #{encoder_apply.12} parent=11 // pred_check_branch
        %146 = sbr.rel (%p144) target = $region20
      $region19: #{encoder_apply.12} parent=11 // pred_region
        _
      $region20: #{encoder_apply.12} parent=11 // pred_fallthru
        _
    $region12: #{encoder_apply.12} parent=5 // pred_fallthru
      _
    %p147 = scmp.lt.s32.totalorder %s9, 2
    // Predicated region
    $region21: #{encoder_apply.12} parent=5 // pred_check
      %p148 = pneg %p147
    $region22: #{encoder_apply.12} parent=5 // pred_check_branch
      %150 = sbr.rel (%p148) target = $region24
    $region23: #{encoder_apply.12} parent=5 // pred_region
      // Predicated region
      $region25: #{encoder_apply.12} parent=23 // pred_check
        %p151 = pneg %p43
      $region26: #{encoder_apply.12} parent=23 // pred_check_branch
        %153 = sbr.rel (%p151) target = $region28
      $region27: #{encoder_apply.12} parent=23 // pred_region
        %s154 = smul.u32 2, %s16
        %p155 = scmp.lt.s32.totalorder %s154, 3
        %s156 = scalar_select %p155, %s154, 3
        %p157 = scmp.lt.s32.totalorder %s17, 0
        %s158 = scalar_select %p157, %s17, 0
        %s159 = sadd.s32 %s158, %s156
        %s160 = smul.addr %s159, 4
        %s161 = scalar_lea.vmem %s0, %s160
        %s162 = smul.u32 2, %s16
      $region28: #{encoder_apply.12} parent=23 // pred_fallthru
        _
    $region24: #{encoder_apply.12} parent=5 // pred_fallthru
      _
    %p163 = scmp.le.s32.totalorder 1, %s9
    %p164 = scmp.lt.s32.totalorder %s9, 3
    %p165 = pnand %p163, %p164
    %p166 = pneg %p165
    // Predicated region
    $region29: #{encoder_apply.12} parent=5 // pred_check
      _
    $region30: #{encoder_apply.12} parent=5 // pred_check_branch
      %168 = sbr.rel (%p165) target = $region32
    $region31: #{encoder_apply.12} parent=5 // pred_region
      %s169 = ssub.s32 %s9, 1
      %s170 = smul.u32 2, %s18
      %p171 = scmp.lt.s32.totalorder %s170, 3
      %s172 = scalar_select %p171, %s170, 3
      %p173 = scmp.lt.s32.totalorder %s19, 0
      %s174 = scalar_select %p173, %s19, 0
      %s175 = sadd.s32 %s174, %s172
      %s176 = smul.addr %s175, 4
      %s177 = scalar_lea.vmem %s0, %s176
      %p178 = pneg %p49
      %p179 = pneg %p46
      %p180 = scmp.lt.s32.totalorder %s19, 0
      %s181 = scalar_select %p180, %s19, 0
      %s182 = smul.addr %s181, 4
      %s183 = scalar_lea.vmem %s1, %s182
      %p184 = pneg %p75
      %p185 = pneg %p72
      %p186 = pneg %p96
      %p187 = pneg %p93
      %p188 = pneg %p122
      %p189 = pneg %p119
      %s190 = smul.u32 2, %s18
      %p191 = scmp.lt.s32.totalorder %s190, 3
      %s192 = scalar_select %p191, %s190, 3
      %s193 = smul.addr %s192, 4
      %s194 = scalar_lea.vmem %s3, %s193
      %s195 = smul.u32 2, %s18
      %p196 = scmp.lt.s32.totalorder %s195, 3
      %s197 = scalar_select %p196, %s195, 3
      %p198 = scmp.lt.s32.totalorder %s19, 0
      %s199 = scalar_select %p198, %s19, 0
      %s200 = sadd.s32 %s199, %s197
      %s201 = smul.addr %s200, 4
      %s202 = scalar_lea.vmem %s0, %s201
      %s203 = smul.u32 2, %s18
      %p204 = scmp.lt.s32.totalorder %s19, 0
      %s205 = scalar_select %p204, %s19, 0
      %s206 = smul.addr %s205, 4
      %s207 = scalar_lea.vmem %s1, %s206
      %s208 = smul.u32 2, %s18
      %p209 = scmp.lt.s32.totalorder %s208, 3
      %s210 = scalar_select %p209, %s208, 3
      %s211 = smul.addr %s210, 4
      %s212 = scalar_lea.vmem %s3, %s211
      %s213 = smul.u32 2, %s18
      %p215 = scmp.eq.s32.totalorder %s19, 0
      // Predicated region
      $region33: #{encoder_apply.12} parent=31 // pred_check
        %p216 = pneg %p215
      $region34: #{encoder_apply.12} parent=31 // pred_check_branch
        %218 = sbr.rel (%p216) target = $region36
      $region35: #{encoder_apply.12} parent=31 // pred_region
        %vm219 = vcmask 130048
        %220 = vst.msk [vmem:[#allocation2] sm:$0xff] %vm219, 0.0
        %221 = vst.msk [vmem:[#allocation2 + $0x8] sm:$0xff] %vm219, 0.0
      $region36: #{encoder_apply.12} parent=31 // pred_fallthru
        _
      %v222 = vld [vmem:[#allocation2] sm:$0xff]
      %v223 = vld [vmem:[#allocation2 + $0x8] sm:$0xff]
      %v224 = vld [vmem:[%s202] sm:$0xf]
      %v225 = vld [vmem:[%s202 + $0x4] sm:$0xf]
      %v226 = vld [vmem:[%s207] sm:$0xf]
      %v229 = vunpack.c.l.b16 %v224
      %v230 = vunpack.c.l.b16 %v225
      %v231 = vpack.c.b16 %v230, %v229
      %vm232 = vcmask 64512
      %v234 = vsel %vm232, %v231, 0
      %vm236 = vcmask 1043456
      %v238 = vsel %vm236, %v226, 0
      %240 = vmatprep.subr.bf16.mxu0 0
      %241 = vmatpush1.bf16.msra.mxu0 %v238
      %242 = vmatprep.subr.bf16.mxu0 0
      %243 = vmatpush1.bf16.msra.mxu0 0
      %244 = vmatprep.subr.bf16.mxu0 0
      %245 = vmatpush1.bf16.msra.mxu0 0
      %246 = vmatprep.subr.bf16.mxu0 0
      %247 = vmatpush1.bf16.msra.mxu0 0
      %248 = vmatprep.subr.bf16.mxu0 0
      %249 = vmatpush1.bf16.msra.mxu0 0
      %250 = vmatprep.subr.bf16.mxu0 0
      %251 = vmatpush1.bf16.msra.mxu0 0
      %252 = vmatprep.subr.bf16.mxu0 0
      %253 = vmatpush1.bf16.msra.mxu0 0
      %254 = vmatprep.subr.bf16.mxu0 0
      %255 = vmatpush1.bf16.msra.mxu0 0
      %256 = vmatprep.subr.bf16.mxu0 0
      %257 = vmatpush1.bf16.msra.mxu0 0
      %258 = vmatprep.subr.bf16.mxu0 0
      %259 = vmatpush1.bf16.msra.mxu0 0
      %260 = vmatprep.subr.bf16.mxu0 0
      %261 = vmatpush1.bf16.msra.mxu0 0
      %262 = vmatprep.subr.bf16.mxu0 0
      %263 = vmatpush1.bf16.msra.mxu0 0
      %264 = vmatprep.subr.bf16.mxu0 0
      %265 = vmatpush1.bf16.msra.mxu0 0
      %266 = vmatprep.subr.bf16.mxu0 0
      %267 = vmatpush1.bf16.msra.mxu0 0
      %268 = vmatprep.subr.bf16.mxu0 0
      %269 = vmatpush1.bf16.msra.mxu0 0
      %270 = vmatprep.subr.bf16.mxu0 0
      %271 = vmatpush1.bf16.msra.mxu0 0
      %272 = vmatprep.mubr.bf16.mxu0 0
      %273 = vmatmul.mubr.bf16.gmra.mrb[0].mxu0 %v234
      %v274 = vpop.f32.mrb[0].mxu0
      %v275 = vadd.f32 0.0, %v274
      %v276 = vpop.f32.mrb[0].mxu0
      %v277 = vpop.f32.mrb[0].mxu0
      %v278 = vadd.f32 0.0, %v277
      %v279 = vpop.f32.mrb[0].mxu0
      %280 = vdwg.mxu0
      %v281 = vadd.f32 %v222, %v275
      %v282 = vadd.f32 %v223, %v278
      %vm283 = vcmask 130048
      %284 = vst.msk [vmem:[#allocation2] sm:$0xff] %vm283, %v281
      %285 = vst.msk [vmem:[#allocation2 + $0x8] sm:$0xff] %vm283, %v282
      // Predicated region
      $region37: #{encoder_apply.12} parent=31 // pred_check
        %p286 = pneg %p215
      $region38: #{encoder_apply.12} parent=31 // pred_check_branch
        %288 = sbr.rel (%p286) target = $region40
      $region39: #{encoder_apply.12} parent=31 // pred_region
        %v289 = vld [vmem:[#allocation2] sm:$0xff]
        %v290 = vld [vmem:[#allocation2 + $0x8] sm:$0xff]
        %v291 = vld [vmem:[%s2] sm:$0x1]
        %v293 = vlaneseq
        %v294 = vshrl.u32 %v293, 7
        %v295 = vsub.s32 0, %v294
        %v296 = vrot.slane %v291, %v295
        %v298 = vadd.f32 %v289, %v296
        %v299 = vadd.f32 %v290, %v296
        %vm300 = vcmp.ge.f32.partialorder %v298, 0.0
        %vm301 = vcmp.ge.f32.partialorder %v299, 0.0
        %v302 = vmul.f32 %v298, 0.1
        %v303 = vmul.f32 %v299, 0.1
        %v304 = vsel %vm300, %v298, %v302
        %v305 = vsel %vm301, %v299, %v303
        %v306 = vpack.c.bf16 %v305, %v304
        %v308 = vunpack.c.l.b16 %v306
        %v309 = vunpack.c.h.b16 %v306
        %v310 = vpack.c.b16 %v308, %v308
        %v311 = vpack.c.b16 %v309, %v309
        %vm314 = vcmask 125952
        %315 = vst.msk [vmem:[%s212] sm:$0xf] %vm314, %v310
        %316 = vst.msk [vmem:[%s212 + $0x4] sm:$0xf] %vm314, %v311
      $region40: #{encoder_apply.12} parent=31 // pred_fallthru
        _
      %s317 = smul.u32 2, %s18
      %p318 = scmp.lt.s32.totalorder %s317, 3
      %s319 = scalar_select %p318, %s317, 3
      %s320 = smul.addr %s319, 4
      %s321 = scalar_lea.vmem %s3, %s320
      // Predicated region
      $region41: #{encoder_apply.12} parent=31 // pred_check
        %p322 = pneg %p119
      $region42: #{encoder_apply.12} parent=31 // pred_check_branch
        %324 = sbr.rel (%p322) target = $region44
      $region43: #{encoder_apply.12} parent=31 // pred_region
        %s325 = smul.u32 2, %s18
      $region44: #{encoder_apply.12} parent=31 // pred_fallthru
        _
    $region32: #{encoder_apply.12} parent=5 // pred_fallthru
      _
    %p326 = scmp.le.s32.totalorder 2, %s9
    // Predicated region
    $region45: #{encoder_apply.12} parent=5 // pred_check
      %p327 = pneg %p326
    $region46: #{encoder_apply.12} parent=5 // pred_check_branch
      %329 = sbr.rel (%p327) target = $region48
    $region47: #{encoder_apply.12} parent=5 // pred_region
      %s330 = ssub.s32 %s9, 2
      // Predicated region
      $region49: #{encoder_apply.12} parent=47 // pred_check
        %p331 = pneg %p125
      $region50: #{encoder_apply.12} parent=47 // pred_check_branch
        %333 = sbr.rel (%p331) target = $region52
      $region51: #{encoder_apply.12} parent=47 // pred_region
        %s334 = smul.u32 2, %s20
        %p335 = scmp.lt.s32.totalorder %s334, 3
        %s336 = scalar_select %p335, %s334, 3
        %s337 = smul.addr %s336, 4
        %s338 = scalar_lea.vmem %s3, %s337
      $region52: #{encoder_apply.12} parent=47 // pred_fallthru
        _
    $region48: #{encoder_apply.12} parent=5 // pred_fallthru
      _
  $region6: #{encoder_apply.12} parent=0 // loop_footer
    %s13 = sadd.s32 1, %s9
  $region7: #{encoder_apply.12} parent=0 // loop_footer_branch
    %8 = sbr.rel target = $region3
  $region8: #{encoder_apply.12} parent=0 // loop_exit
    _

// kernel: encoder_apply.13
$region0: #{encoder_apply.13}
  #allocation0 [shape = 'u32[]', space=smem, size = 0x4, offset = 0x4, fixed_abs, tag = 'smem constant byte address 0x4 - core index']
  #allocation1 [shape = 'u32[144,128]{1,0:T(1,128)}', space=vmem, size = 0x12000, scoped, tag = 'internal scratch']
  #allocation2 [shape = 'f32[8,64]{1,0:T(8,128)}', space=vmem, size = 0x1000, scoped, tag = 'scratch operand']
  %s0 = inlined_call_operand.vmem [shape: bf16[8,256], index: 0, kind: input, shape index: {}]
  %s1 = inlined_call_operand.vmem [shape: bf16[256,64], index: 1, kind: input, shape index: {}]
  %s2 = inlined_call_operand.vmem [shape: f32[1,64], index: 2, kind: input, shape index: {}]
  %s3 = inlined_call_operand.vmem [shape: f32[8,64], index: 3, kind: output, shape index: {}]
  %s4 = sld [smem:[#allocation0]]
  $region30: #{encoder_apply.13} parent=0
    _
  %s6 = ssub.s32 1, %s4
  %s7 = scalar_select 0, %s6, %s4
  // Predicated region
  $region2: #{encoder_apply.13} parent=0 // pred_check
    _
  $region3: #{encoder_apply.13} parent=0 // pred_check_branch
    %9 = sbr.rel (0) target = $region5
  $region4: #{encoder_apply.13} parent=0 // pred_region
    _
  $region5: #{encoder_apply.13} parent=0 // pred_fallthru
    _
  // Predicated region
  $region6: #{encoder_apply.13} parent=0 // pred_check
    _
  $region7: #{encoder_apply.13} parent=0 // pred_check_branch
    %11 = sbr.rel (0) target = $region9
  $region8: #{encoder_apply.13} parent=0 // pred_region
    _
  $region9: #{encoder_apply.13} parent=0 // pred_fallthru
    _
  // Predicated region
  $region10: #{encoder_apply.13} parent=0 // pred_check
    _
  $region11: #{encoder_apply.13} parent=0 // pred_check_branch
    %13 = sbr.rel (0) target = $region13
  $region12: #{encoder_apply.13} parent=0 // pred_region
    _
  $region13: #{encoder_apply.13} parent=0 // pred_fallthru
    _
  %p15 = scmp.eq.s32.totalorder 0, 0
  // Predicated region
  $region14: #{encoder_apply.13} parent=0 // pred_check
    %p16 = pneg %p15
  $region15: #{encoder_apply.13} parent=0 // pred_check_branch
    %18 = sbr.rel (%p16) target = $region17
  $region16: #{encoder_apply.13} parent=0 // pred_region
    %vm19 = vcmask 523264
    %20 = vst.msk [vmem:[#allocation2] sm:$0xff] %vm19, 0.0
  $region17: #{encoder_apply.13} parent=0 // pred_fallthru
    _
  %v21 = vld [vmem:[#allocation2] sm:$0xff]
  %v22 = vld [vmem:[%s0] sm:$0xff]
  %v23 = vld [vmem:[%s1] sm:$0xf]
  %v24 = vld [vmem:[%s1 + $0x4] sm:$0xf]
  %v25 = vld [vmem:[%s1 + $0x8] sm:$0xf]
  %v26 = vld [vmem:[%s1 + $0xc] sm:$0xf]
  %v27 = vld [vmem:[%s1 + $0x10] sm:$0xf]
  %v28 = vld [vmem:[%s1 + $0x14] sm:$0xf]
  %v29 = vld [vmem:[%s1 + $0x18] sm:$0xf]
  %v30 = vld [vmem:[%s1 + $0x1c] sm:$0xf]
  %v31 = vld [vmem:[%s1 + $0x20] sm:$0xf]
  %v32 = vld [vmem:[%s1 + $0x24] sm:$0xf]
  %v33 = vld [vmem:[%s1 + $0x28] sm:$0xf]
  %v34 = vld [vmem:[%s1 + $0x2c] sm:$0xf]
  %v35 = vld [vmem:[%s1 + $0x30] sm:$0xf]
  %v36 = vld [vmem:[%s1 + $0x34] sm:$0xf]
  %v37 = vld [vmem:[%s1 + $0x38] sm:$0xf]
  %v38 = vld [vmem:[%s1 + $0x3c] sm:$0xf]
  %v39 = vld [vmem:[%s1 + $0x40] sm:$0xf]
  %v40 = vld [vmem:[%s1 + $0x44] sm:$0xf]
  %v41 = vld [vmem:[%s1 + $0x48] sm:$0xf]
  %v42 = vld [vmem:[%s1 + $0x4c] sm:$0xf]
  %v43 = vld [vmem:[%s1 + $0x50] sm:$0xf]
  %v44 = vld [vmem:[%s1 + $0x54] sm:$0xf]
  %v45 = vld [vmem:[%s1 + $0x58] sm:$0xf]
  %v46 = vld [vmem:[%s1 + $0x5c] sm:$0xf]
  %v47 = vld [vmem:[%s1 + $0x60] sm:$0xf]
  %v48 = vld [vmem:[%s1 + $0x64] sm:$0xf]
  %v49 = vld [vmem:[%s1 + $0x68] sm:$0xf]
  %v50 = vld [vmem:[%s1 + $0x6c] sm:$0xf]
  %v51 = vld [vmem:[%s1 + $0x70] sm:$0xf]
  %v52 = vld [vmem:[%s1 + $0x74] sm:$0xf]
  %v53 = vld [vmem:[%s1 + $0x78] sm:$0xf]
  %v54 = vld [vmem:[%s1 + $0x7c] sm:$0xf]
  %v56 = vunpack.c.l.b16 %v22
  %v57 = vunpack.c.h.b16 %v22
  %v58 = vpack.c.b16 %v56, %v56
  %v59 = vpack.c.b16 %v57, %v57
  %v94 = vunpack.c.l.b16 %v23
  %v95 = vunpack.c.l.b16 %v24
  %v96 = vunpack.c.l.b16 %v25
  %v97 = vunpack.c.l.b16 %v26
  %v98 = vunpack.c.l.b16 %v27
  %v99 = vunpack.c.l.b16 %v28
  %v100 = vunpack.c.l.b16 %v29
  %v101 = vunpack.c.l.b16 %v30
  %v102 = vunpack.c.l.b16 %v31
  %v103 = vunpack.c.l.b16 %v32
  %v104 = vunpack.c.l.b16 %v33
  %v105 = vunpack.c.l.b16 %v34
  %v106 = vunpack.c.l.b16 %v35
  %v107 = vunpack.c.l.b16 %v36
  %v108 = vunpack.c.l.b16 %v37
  %v109 = vunpack.c.l.b16 %v38
  %v110 = vunpack.c.l.b16 %v39
  %v111 = vunpack.c.l.b16 %v40
  %v112 = vunpack.c.l.b16 %v41
  %v113 = vunpack.c.l.b16 %v42
  %v114 = vunpack.c.l.b16 %v43
  %v115 = vunpack.c.l.b16 %v44
  %v116 = vunpack.c.l.b16 %v45
  %v117 = vunpack.c.l.b16 %v46
  %v118 = vunpack.c.l.b16 %v47
  %v119 = vunpack.c.l.b16 %v48
  %v120 = vunpack.c.l.b16 %v49
  %v121 = vunpack.c.l.b16 %v50
  %v122 = vunpack.c.l.b16 %v51
  %v123 = vunpack.c.l.b16 %v52
  %v124 = vunpack.c.l.b16 %v53
  %v125 = vunpack.c.l.b16 %v54
  %v126 = vpack.c.b16 %v95, %v94
  %v127 = vpack.c.b16 %v97, %v96
  %v128 = vpack.c.b16 %v99, %v98
  %v129 = vpack.c.b16 %v101, %v100
  %v130 = vpack.c.b16 %v103, %v102
  %v131 = vpack.c.b16 %v105, %v104
  %v132 = vpack.c.b16 %v107, %v106
  %v133 = vpack.c.b16 %v109, %v108
  %v134 = vpack.c.b16 %v111, %v110
  %v135 = vpack.c.b16 %v113, %v112
  %v136 = vpack.c.b16 %v115, %v114
  %v137 = vpack.c.b16 %v117, %v116
  %v138 = vpack.c.b16 %v119, %v118
  %v139 = vpack.c.b16 %v121, %v120
  %v140 = vpack.c.b16 %v123, %v122
  %v141 = vpack.c.b16 %v125, %v124
  %158 = vmatprep.subr.bf16.mxu0 0
  %159 = vmatpush1.bf16.msra.mxu0 %v126
  %160 = vmatprep.subr.bf16.mxu0 0
  %161 = vmatpush1.bf16.msra.mxu0 %v127
  %162 = vmatprep.subr.bf16.mxu0 0
  %163 = vmatpush1.bf16.msra.mxu0 %v128
  %164 = vmatprep.subr.bf16.mxu0 0
  %165 = vmatpush1.bf16.msra.mxu0 %v129
  %166 = vmatprep.subr.bf16.mxu0 0
  %167 = vmatpush1.bf16.msra.mxu0 %v130
  %168 = vmatprep.subr.bf16.mxu0 0
  %169 = vmatpush1.bf16.msra.mxu0 %v131
  %170 = vmatprep.subr.bf16.mxu0 0
  %171 = vmatpush1.bf16.msra.mxu0 %v132
  %172 = vmatprep.subr.bf16.mxu0 0
  %173 = vmatpush1.bf16.msra.mxu0 %v133
  %174 = vmatprep.subr.bf16.mxu0 0
  %175 = vmatpush1.bf16.msra.mxu0 %v134
  %176 = vmatprep.subr.bf16.mxu0 0
  %177 = vmatpush1.bf16.msra.mxu0 %v135
  %178 = vmatprep.subr.bf16.mxu0 0
  %179 = vmatpush1.bf16.msra.mxu0 %v136
  %180 = vmatprep.subr.bf16.mxu0 0
  %181 = vmatpush1.bf16.msra.mxu0 %v137
  %182 = vmatprep.subr.bf16.mxu0 0
  %183 = vmatpush1.bf16.msra.mxu0 %v138
  %184 = vmatprep.subr.bf16.mxu0 0
  %185 = vmatpush1.bf16.msra.mxu0 %v139
  %186 = vmatprep.subr.bf16.mxu0 0
  %187 = vmatpush1.bf16.msra.mxu0 %v140
  %188 = vmatprep.subr.bf16.mxu0 0
  %189 = vmatpush1.bf16.msra.mxu0 %v141
  %190 = vmatprep.mubr.bf16.mxu0 %v59
  %191 = vmatmul.mubr.bf16.gmra.mrb[0].mxu0 %v58
  %v192 = vpop.f32.mrb[0].mxu0
  %v193 = vadd.f32 0.0, %v192
  %v194 = vpop.f32.mrb[0].mxu0
  %v195 = vpop.f32.mrb[0].mxu0
  %v196 = vpop.f32.mrb[0].mxu0
  %197 = vdwg.mxu0
  %v198 = vadd.f32 %v21, %v193
  %vm199 = vcmask 523264
  %200 = vst.msk [vmem:[#allocation2] sm:$0xff] %vm199, %v198
  // Predicated region
  $region18: #{encoder_apply.13} parent=0 // pred_check
    %p201 = pneg %p15
  $region19: #{encoder_apply.13} parent=0 // pred_check_branch
    %203 = sbr.rel (%p201) target = $region21
  $region20: #{encoder_apply.13} parent=0 // pred_region
    %v204 = vld [vmem:[#allocation2] sm:$0xff]
    %v205 = vld [vmem:[%s2] sm:$0x1]
    %v207 = vlaneseq
    %v208 = vshrl.u32 %v207, 7
    %v209 = vsub.s32 0, %v208
    %v210 = vrot.slane %v205, %v209
    %v212 = vadd.f32 %v204, %v210
    %213 = vst.msk [vmem:[%s3] sm:$0xff] %vm199, %v212
  $region21: #{encoder_apply.13} parent=0 // pred_fallthru
    _
  // Predicated region
  $region22: #{encoder_apply.13} parent=0 // pred_check
    _
  $region23: #{encoder_apply.13} parent=0 // pred_check_branch
    %215 = sbr.rel (0) target = $region25
  $region24: #{encoder_apply.13} parent=0 // pred_region
    _
  $region25: #{encoder_apply.13} parent=0 // pred_fallthru
    _
  // Predicated region
  $region26: #{encoder_apply.13} parent=0 // pred_check
    _
  $region27: #{encoder_apply.13} parent=0 // pred_check_branch
    %217 = sbr.rel (0) target = $region29
  $region28: #{encoder_apply.13} parent=0 // pred_region
    _
  $region29: #{encoder_apply.13} parent=0 // pred_fallthru
    _

</llo_original>
